<compile_context>
chip_gen: v6e
topology: v6e:2x2x1
jax: 0.10.0
libtpu: 0.0.40
codegen_flags: <defaults>
</compile_context>

<pallas_src>
import functools
import math

import numpy as np
import jax
import jax.numpy as jnp
from jax import lax
from jax.experimental import pallas as pl
from jax.experimental.pallas import tpu as pltpu


# ----------------------------------------------------------------------------
# Shared math helpers (used inside the Pallas kernel and in the XLA reference)
# ----------------------------------------------------------------------------
def _bmm(a, b):
    """MXU matmul: bf16 operands, f32 accumulator."""
    return jnp.dot(a.astype(jnp.bfloat16), b.astype(jnp.bfloat16),
                   preferred_element_type=jnp.float32)


def _f32mm(a, b):
    return jnp.dot(a, b, preferred_element_type=jnp.float32)


def _layernorm(x, g, b, eps=1e-5):
    mu = jnp.mean(x, axis=-1, keepdims=True)
    xc = x - mu
    var = jnp.mean(xc * xc, axis=-1, keepdims=True)
    return xc * lax.rsqrt(var + eps) * g + b


def positional_embedding(L, d_model):
    position = jnp.arange(L, dtype=jnp.float32)[:, None]
    div_term = jnp.exp(
        jnp.arange(0, d_model, 2, dtype=jnp.float32) * -(math.log(10000.0) / d_model))
    pe = jnp.zeros((L, d_model), jnp.float32)
    pe = pe.at[:, 0::2].set(jnp.sin(position * div_term))
    pe = pe.at[:, 1::2].set(jnp.cos(position * div_term))
    return pe


# ----------------------------------------------------------------------------
# Host-side operator-matrix builders (exact 0/1 or banded-average matrices)
# ----------------------------------------------------------------------------
def _blockdiag(M, Bb):
    if Bb == 1:
        return M
    return np.kron(np.eye(Bb, dtype=M.dtype), M)


def _ma_matrix(L, k):
    """AvgPool1d(kernel=k, stride=1) with replicate padding, as an (L, L) matrix."""
    pad = (k - 1) // 2
    M = np.zeros((L, L), np.float32)
    for t in range(L):
        for o in range(k):
            s = min(max(t + o - pad, 0), L - 1)
            M[t, s] += 1.0 / k
    return M


def _row(v):
    return jnp.asarray(v, jnp.float32).reshape(1, -1)


# ----------------------------------------------------------------------------
# The single fused kernel: decomp_multi + embedding -> MIC layers -> head
# ----------------------------------------------------------------------------
def _micn_kernel(*refs, names, n_br, d_layers):
    x_ref, marks_ref = refs[0], refs[1]
    o_ref = refs[-1]
    p = dict(zip(names, refs[2:-1]))

    x = x_ref[...]                        # (BL, C_in) f32
    marks = marks_ref[...]                # (BL, n_marks) f32

    # ---- series_decomp_multi: trend = mean_k MA_k(x); seasonal = x - trend -----
    trend = None
    for i in range(n_br):
        t = _f32mm(p["ma"][i], x)
        trend = t if trend is None else trend + t
    trend = trend / float(n_br)
    seasonal = x - trend

    # ---- DataEmbedding: circular token conv + time linear + positional ---------
    dec = p["pos"][...]
    for j in range(3):
        rolled = seasonal if j == 1 else _bmm(p["tok_shift"][j], seasonal)
        dec = dec + _bmm(rolled, p["tok_w"][j])
    dec = dec + _bmm(marks, p["time_w"][...])

    # ---- MIC layers --------------------------------------------------------------
    src = dec
    for l in range(d_layers):
        ng = p[f"ng_{l}"][...]
        nb = p[f"nb_{l}"][...]
        merged = None
        for i in range(n_br):
            gdn = p[f"gdn_{l}_{i}"]       # (ck,  BL1, BL)  bf16 row gathers
            cw = p[f"cw_{l}_{i}"]         # (ck,  d,   d)   bf16
            gis = p[f"gis_{l}_{i}"]       # (ntap,BL1, BL1) bf16 (zeros dropped, bcast folded)
            iw = p[f"iw_{l}_{i}"]         # (ntap,d,   d)   bf16
            ptm = p[f"pt_{l}_{i}"]        # (ck,  BL,  BL1) bf16 placement + crop
            tw = p[f"tw_{l}_{i}"]         # (ck,  d,   d)   bf16
            ck = gdn.shape[0]
            ntap = gis.shape[0]

            # series_decomp inside the branch
            x_in = src - _f32mm(p["ma"][i], src)

            # downsampling conv (kernel=stride=ck, pad=ck//2) + bias + tanh
            acc = None
            for j in range(ck):
                v = _bmm(_bmm(gdn[j], x_in), cw[j])
                acc = v if acc is None else acc + v
            x1 = jnp.tanh(acc + p[f"cb_{l}_{i}"][...])

            # isometric conv on concat(zeros(L1-1), x1) + bias + tanh
            acc2 = None
            for j in range(ntap):
                v = _bmm(_bmm(gis[j], x1), iw[j])
                acc2 = v if acc2 is None else acc2 + v
            xi = jnp.tanh(acc2 + p[f"ib_{l}_{i}"][...])

            xn = _layernorm(xi + x1, ng, nb)

            # ConvTranspose1d (kernel=stride=ck), crop to L, bias, tanh
            accT = None
            for r in range(ck):
                v = _bmm(ptm[r], _bmm(xn, tw[r]))
                accT = v if accT is None else accT + v
            xt = jnp.tanh(accT + p[f"tb_{l}_{i}"][...])

            xb = _layernorm(xt + x_in, ng, nb)

            v = _bmm(xb, p[f"mw_{l}"][i])
            merged = v if merged is None else merged + v

        mg = merged + p[f"mb_{l}"][...]
        y = _layernorm(mg, p[f"n1g_{l}"][...], p[f"n1b_{l}"][...])
        h = _bmm(y, p[f"c1w_{l}"][...]) + p[f"c1b_{l}"][...]
        h = _bmm(h, p[f"c2w_{l}"][...]) + p[f"c2b_{l}"][...]
        src = _layernorm(mg + h, p[f"n2g_{l}"][...], p[f"n2b_{l}"][...])

    # ---- head: SeasonalPrediction projection + trend + OutputBlock ---------------
    t1 = _bmm(src, p["proj_w"][...]) + p["proj_b"][...] + trend
    o_ref[...] = _bmm(t1, p["out_w"][...]) + p["out_b"][...]


# ----------------------------------------------------------------------------
# Operand construction (torch layouts -> matmul-ready bf16 / f32 arrays)
# ----------------------------------------------------------------------------
def _build_operands(params, cfg, L, Bb):
    n_br = len(cfg["conv_kernel"])
    d = cfg["d_model"]
    C_in = cfg["enc_in"]
    c_out = cfg["c_out"]
    out_pad = ((c_out + 127) // 128) * 128

    names, arrays = [], []

    def add(name, arr):
        names.append(name)
        arrays.append(arr)

    # moving-average (banded) matrices; kept f32 since trend feeds the output directly
    ma = np.stack([_blockdiag(_ma_matrix(L, k), Bb) for k in cfg["decomp_kernel"]], 0)
    add("ma", jnp.asarray(ma, jnp.float32))

    # circular-shift matrices for the token conv (taps -1, 0, +1)
    sh = np.zeros((3, L, L), np.float32)
    for j in range(3):
        for t in range(L):
            sh[j, t, (t + j - 1) % L] = 1.0
    add("tok_shift", jnp.asarray(
        np.stack([_blockdiag(sh[j], Bb) for j in range(3)], 0), jnp.bfloat16))

    add("tok_w", jnp.transpose(params["token_w"], (2, 1, 0)).astype(jnp.bfloat16))
    add("time_w", params["time_w"].astype(jnp.bfloat16))
    add("pos", jnp.tile(positional_embedding(L, d), (Bb, 1)).astype(jnp.float32))

    for l in range(cfg["d_layers"]):
        p = params["mic"][l]
        for i, ck in enumerate(cfg["conv_kernel"]):
            pad = ck // 2
            L1 = (L + 2 * pad - ck) // ck + 1
            ik = cfg["iso_kernel"][i]
            Li = 2 * L1 - ik
            assert Li in (1, L1), "unsupported isometric-conv broadcast shape"

            # strided-conv row gathers (ck, L1, L)
            G = np.zeros((ck, L1, L), np.float32)
            for j in range(ck):
                for t in range(L1):
                    s = t * ck + j - pad
                    if 0 <= s < L:
                        G[j, t, s] = 1.0
            add(f"gdn_{l}_{i}", jnp.asarray(
                np.stack([_blockdiag(G[j], Bb) for j in range(ck)], 0), jnp.bfloat16))
            add(f"cw_{l}_{i}", jnp.transpose(p[f"conv_w_{i}"], (2, 1, 0)).astype(jnp.bfloat16))
            add(f"cb_{l}_{i}", _row(p[f"conv_b_{i}"]))

            # isometric-conv gathers: zero-prefix taps dropped, Li->L1 broadcast folded in
            mats, taps = [], []
            for j in range(ik):
                M = np.zeros((L1, L1), np.float32)
                for t in range(L1):
                    te = 0 if Li == 1 else t
                    s = te + j - (L1 - 1)
                    if te < Li and 0 <= s < L1:
                        M[t, s] = 1.0
                if M.any():
                    mats.append(_blockdiag(M, Bb))
                    taps.append(j)
            add(f"gis_{l}_{i}", jnp.asarray(np.stack(mats, 0), jnp.bfloat16))
            iso_w = jnp.transpose(p[f"iso_w_{i}"], (2, 1, 0))         # (ik, Cin, Cout)
            add(f"iw_{l}_{i}", jnp.stack([iso_w[j] for j in taps], 0).astype(jnp.bfloat16))
            add(f"ib_{l}_{i}", _row(p[f"iso_b_{i}"]))

            # conv-transpose placement (ck, L, L1) with the crop-to-L built in
            P = np.zeros((ck, L, L1), np.float32)
            for r in range(ck):
                for t in range(L1):
                    u = t * ck + r
                    if u < L:
                        P[r, u, t] = 1.0
            add(f"pt_{l}_{i}", jnp.asarray(
                np.stack([_blockdiag(P[r], Bb) for r in range(ck)], 0), jnp.bfloat16))
            add(f"tw_{l}_{i}", jnp.transpose(p[f"convt_w_{i}"], (2, 0, 1)).astype(jnp.bfloat16))
            add(f"tb_{l}_{i}", _row(p[f"convt_b_{i}"]))

        add(f"ng_{l}", _row(p["norm_g"]))
        add(f"nb_{l}", _row(p["norm_b"]))
        add(f"mw_{l}", jnp.transpose(p["merge_w"][..., 0], (2, 1, 0)).astype(jnp.bfloat16))
        add(f"mb_{l}", _row(p["merge_b"]))
        add(f"n1g_{l}", _row(p["norm1_g"]))
        add(f"n1b_{l}", _row(p["norm1_b"]))
        add(f"c1w_{l}", p["conv1_w"][:, :, 0].T.astype(jnp.bfloat16))
        add(f"c1b_{l}", _row(p["conv1_b"]))
        add(f"c2w_{l}", p["conv2_w"][:, :, 0].T.astype(jnp.bfloat16))
        add(f"c2b_{l}", _row(p["conv2_b"]))
        add(f"n2g_{l}", _row(p["norm2_g"]))
        add(f"n2b_{l}", _row(p["norm2_b"]))

    add("proj_w", params["proj_w"].astype(jnp.bfloat16))
    add("proj_b", _row(params["proj_b"]))
    out_w = jnp.zeros((C_in, out_pad), jnp.float32).at[:, :c_out].set(params["out_w"])
    add("out_w", out_w.astype(jnp.bfloat16))
    out_b = jnp.zeros((1, out_pad), jnp.float32).at[:, :c_out].set(params["out_b"][None, :])
    add("out_b", out_b)

    return names, arrays, out_pad


# ----------------------------------------------------------------------------
# Full model forward (mirrors Model.forward) — ONE pallas_call
# ----------------------------------------------------------------------------
def model_forward(params, x_enc, x_mark_enc, x_dec, x_mark_dec, cfg, *, num_blocks=None):
    del x_mark_enc, x_dec                    # unused by MICN.Model.forward
    B, L, C_in = x_enc.shape
    c_out = cfg["c_out"]
    n_br = len(cfg["conv_kernel"])
    n_marks = x_mark_dec.shape[-1]

    # One grid step per TensorCore (2 on v7x); extra batch folds into sublanes per step.
    if num_blocks is None:
        num_blocks = min(B, 2)
    assert B % num_blocks == 0
    Bb = B // num_blocks
    BL = Bb * L

    names, shared, out_pad = _build_operands(params, cfg, L, Bb)

    x2d = x_enc.reshape(B * L, C_in)
    m2d = x_mark_dec.reshape(B * L, n_marks)

    def _const_spec(a):
        nd = a.ndim
        return pl.BlockSpec(tuple(a.shape), lambda b, _nd=nd: (0,) * _nd)

    in_specs = [
        pl.BlockSpec((BL, C_in), lambda b: (b, 0)),
        pl.BlockSpec((BL, n_marks), lambda b: (b, 0)),
    ] + [_const_spec(a) for a in shared]

    out = pl.pallas_call(
        functools.partial(_micn_kernel, names=tuple(names),
                          n_br=n_br, d_layers=cfg["d_layers"]),
        grid=(num_blocks,),
        in_specs=in_specs,
        out_specs=pl.BlockSpec((BL, out_pad), lambda b: (b, 0)),
        out_shape=jax.ShapeDtypeStruct((B * L, out_pad), jnp.float32),
        compiler_params=pltpu.CompilerParams(
            dimension_semantics=("parallel",)),
    )(x2d, m2d, *shared)

    return out.reshape(B, L, out_pad)[:, :, :c_out]


# ----------------------------------------------------------------------------
# Deterministic parameter init (PyTorch-style weight layouts)
# ----------------------------------------------------------------------------
def init_params(key, cfg):
    d = cfg["d_model"]
    C_in = cfg["enc_in"]
    n_br = len(cfg["conv_kernel"])
    keys = jax.random.split(key, 128)
    kit = iter(keys)

    def w(shape, scale=0.05):
        return jax.random.normal(next(kit), shape, jnp.float32) * scale

    params = {
        "token_w": w((d, C_in, 3)),              # Conv1d weight (C_out, C_in, 3), no bias
        "time_w": w((cfg["n_marks"], d)),        # Linear(n_marks, d_model), no bias
        "proj_w": w((d, C_in)),
        "proj_b": w((C_in,)),
        "out_w": w((C_in, cfg["c_out"])),
        "out_b": w((cfg["c_out"],)),
        "mic": [],
    }
    for _ in range(cfg["d_layers"]):
        p = {
            "norm_g": jnp.ones((d,), jnp.float32), "norm_b": jnp.zeros((d,), jnp.float32),
            "norm1_g": jnp.ones((d,), jnp.float32), "norm1_b": jnp.zeros((d,), jnp.float32),
            "norm2_g": jnp.ones((d,), jnp.float32), "norm2_b": jnp.zeros((d,), jnp.float32),
            "merge_w": w((d, d, n_br, 1)), "merge_b": w((d,)),
            "conv1_w": w((4 * d, d, 1)), "conv1_b": w((4 * d,)),
            "conv2_w": w((d, 4 * d, 1)), "conv2_b": w((d,)),
        }
        for i, (ck, ik) in enumerate(zip(cfg["conv_kernel"], cfg["iso_kernel"])):
            p[f"conv_w_{i}"] = w((d, d, ck));  p[f"conv_b_{i}"] = w((d,))
            p[f"iso_w_{i}"] = w((d, d, ik));   p[f"iso_b_{i}"] = w((d,))
            p[f"convt_w_{i}"] = w((d, d, ck)); p[f"convt_b_{i}"] = w((d,))  # (C_in, C_out, K)
        params["mic"].append(p)
    return params


# ----------------------------------------------------------------------------
# Pure-JAX (XLA) f32 reference of the same forward, used for validation
# ----------------------------------------------------------------------------
def _ref_moving_avg(x, k):
    pad = (k - 1) // 2
    xp = jnp.concatenate(
        [jnp.repeat(x[:, :1], pad, axis=1), x, jnp.repeat(x[:, -1:], pad, axis=1)], axis=1)
    L = x.shape[1]
    return jnp.mean(jnp.stack([xp[:, o:o + L] for o in range(k)], axis=0), axis=0)


def _ref_conv1d(x, w, b, stride, padding, circular=False):
    B, L, Cin = x.shape
    Cout, _, K = w.shape
    if circular and padding > 0:
        xp = jnp.concatenate([x[:, L - padding:], x, x[:, :padding]], axis=1)
    else:
        xp = jnp.pad(x, ((0, 0), (padding, padding), (0, 0)))
    Lo = (xp.shape[1] - K) // stride + 1
    idx = jnp.arange(Lo)[:, None] * stride + jnp.arange(K)[None, :]
    patches = xp[:, idx, :]                           # (B, Lo, K, Cin)
    out = jnp.einsum("blkc,ock->blo", patches, w)
    return out if b is None else out + b


def _ref_convt1d(x, w, b):
    B, L, Cin = x.shape
    _, Cout, K = w.shape
    y = jnp.einsum("blc,cok->blko", x, w).reshape(B, L * K, Cout)
    return y + b


def _ref_mic(src, p, conv_kernels, decomp_kernels, seq_len):
    multi = []
    for i, (ck, dk) in enumerate(zip(conv_kernels, decomp_kernels)):
        x_in = src - _ref_moving_avg(src, dk)
        x1 = jnp.tanh(_ref_conv1d(x_in, p[f"conv_w_{i}"], p[f"conv_b_{i}"], ck, ck // 2))
        B, L1, C = x1.shape
        xz = jnp.concatenate([jnp.zeros((B, L1 - 1, C), x1.dtype), x1], axis=1)
        xi = jnp.tanh(_ref_conv1d(xz, p[f"iso_w_{i}"], p[f"iso_b_{i}"], 1, 0))
        x = _layernorm(xi + x1, p["norm_g"], p["norm_b"])
        x = jnp.tanh(_ref_convt1d(x, p[f"convt_w_{i}"], p[f"convt_b_{i}"]))[:, :seq_len]
        x = _layernorm(x + x_in, p["norm_g"], p["norm_b"])
        multi.append(x)
    mg = sum(jnp.einsum("blc,oc->blo", m, p["merge_w"][:, :, i, 0])
             for i, m in enumerate(multi)) + p["merge_b"]
    y = _layernorm(mg, p["norm1_g"], p["norm1_b"])
    h = y @ p["conv1_w"][:, :, 0].T + p["conv1_b"]
    h = h @ p["conv2_w"][:, :, 0].T + p["conv2_b"]
    return _layernorm(mg + h, p["norm2_g"], p["norm2_b"])


def ref_forward(params, x_enc, x_mark_dec, cfg):
    B, L, _ = x_enc.shape
    mas = [_ref_moving_avg(x_enc, k) for k in cfg["decomp_kernel"]]
    trend = sum(mas) / float(len(mas))
    seasonal = x_enc - trend
    val = _ref_conv1d(seasonal, params["token_w"], None, 1, 1, circular=True)
    dec = val + x_mark_dec @ params["time_w"] + positional_embedding(L, cfg["d_model"])[None]
    for l in range(cfg["d_layers"]):
        dec = _ref_mic(dec, params["mic"][l], cfg["conv_kernel"],
                       cfg["decomp_kernel"], cfg["seq_len"])
    dec = dec @ params["proj_w"] + params["proj_b"]
    dec = dec + trend
    return dec @ params["out_w"] + params["out_b"]


# ----------------------------------------------------------------------------
if __name__ == "__main__":
    cfg = dict(seq_len=16, pred_len=16, enc_in=4, c_out=2, d_model=32,
               n_heads=4, d_layers=1, conv_kernel=[2, 4], n_marks=4)

    # derive decomp / isometric kernels exactly like Model.__init__
    decomp_kernel, iso_kernel = [], []
    for ii in cfg["conv_kernel"]:
        if ii % 2 == 0:
            decomp_kernel.append(ii + 1)
            iso_kernel.append((cfg["seq_len"] + cfg["seq_len"] + ii) // ii)
        else:
            decomp_kernel.append(ii)
            iso_kernel.append((cfg["seq_len"] + cfg["seq_len"] + ii - 1) // ii)
    cfg["decomp_kernel"] = decomp_kernel
    cfg["iso_kernel"] = iso_kernel

    key = jax.random.PRNGKey(0)
    k1, k2, k3, k4 = jax.random.split(key, 4)
    B = 2
    x_enc = jax.random.normal(k1, (B, cfg["seq_len"], cfg["enc_in"]), jnp.float32)
    x_mark_enc = jax.random.normal(k2, (B, cfg["seq_len"], cfg["n_marks"]), jnp.float32)
    x_dec = jnp.zeros((B, cfg["seq_len"], cfg["enc_in"]), jnp.float32)  # unused by forward
    x_mark_dec = jax.random.normal(k4, (B, cfg["seq_len"], cfg["n_marks"]), jnp.float32)

    params = init_params(k3, cfg)

    fwd = jax.jit(lambda p, a, b, c, d: model_forward(p, a, b, c, d, cfg))
    out = jax.block_until_ready(fwd(params, x_enc, x_mark_enc, x_dec, x_mark_dec))

    assert out.shape == (B, cfg["seq_len"], cfg["c_out"]), out.shape
    assert bool(jnp.all(jnp.isfinite(out)))

    # validate the fused bf16-MXU kernel against a plain-XLA f32 reference
    ref = jax.block_until_ready(
        jax.jit(lambda p, xe, xm: ref_forward(p, xe, xm, cfg))(params, x_enc, x_mark_dec))
    max_err = float(jnp.max(jnp.abs(out - ref)))
    assert max_err < 5e-2, f"mismatch vs reference: {max_err}"

    print("KERNEL_OK")
</pallas_src>

<mosaic_0001>
module attributes {stable_mosaic.version = 11 : i64} {
  func.func @_micn_kernel(%arg0: i32, %arg1: memref<16x4xf32, #tpu.memory_space<vmem>>, %arg2: memref<16x4xf32, #tpu.memory_space<vmem>>, %arg3: memref<2x16x16xf32, #tpu.memory_space<vmem>>, %arg4: memref<3x16x16xbf16, #tpu.memory_space<vmem>>, %arg5: memref<3x4x32xbf16, #tpu.memory_space<vmem>>, %arg6: memref<4x32xbf16, #tpu.memory_space<vmem>>, %arg7: memref<16x32xf32, #tpu.memory_space<vmem>>, %arg8: memref<2x9x16xbf16, #tpu.memory_space<vmem>>, %arg9: memref<2x32x32xbf16, #tpu.memory_space<vmem>>, %arg10: memref<1x32xf32, #tpu.memory_space<vmem>>, %arg11: memref<9x9x9xbf16, #tpu.memory_space<vmem>>, %arg12: memref<9x32x32xbf16, #tpu.memory_space<vmem>>, %arg13: memref<1x32xf32, #tpu.memory_space<vmem>>, %arg14: memref<2x16x9xbf16, #tpu.memory_space<vmem>>, %arg15: memref<2x32x32xbf16, #tpu.memory_space<vmem>>, %arg16: memref<1x32xf32, #tpu.memory_space<vmem>>, %arg17: memref<4x5x16xbf16, #tpu.memory_space<vmem>>, %arg18: memref<4x32x32xbf16, #tpu.memory_space<vmem>>, %arg19: memref<1x32xf32, #tpu.memory_space<vmem>>, %arg20: memref<5x5x5xbf16, #tpu.memory_space<vmem>>, %arg21: memref<5x32x32xbf16, #tpu.memory_space<vmem>>, %arg22: memref<1x32xf32, #tpu.memory_space<vmem>>, %arg23: memref<4x16x5xbf16, #tpu.memory_space<vmem>>, %arg24: memref<4x32x32xbf16, #tpu.memory_space<vmem>>, %arg25: memref<1x32xf32, #tpu.memory_space<vmem>>, %arg26: memref<1x32xf32, #tpu.memory_space<vmem>>, %arg27: memref<1x32xf32, #tpu.memory_space<vmem>>, %arg28: memref<2x32x32xbf16, #tpu.memory_space<vmem>>, %arg29: memref<1x32xf32, #tpu.memory_space<vmem>>, %arg30: memref<1x32xf32, #tpu.memory_space<vmem>>, %arg31: memref<1x32xf32, #tpu.memory_space<vmem>>, %arg32: memref<32x128xbf16, #tpu.memory_space<vmem>>, %arg33: memref<1x128xf32, #tpu.memory_space<vmem>>, %arg34: memref<128x32xbf16, #tpu.memory_space<vmem>>, %arg35: memref<1x32xf32, #tpu.memory_space<vmem>>, %arg36: memref<1x32xf32, #tpu.memory_space<vmem>>, %arg37: memref<1x32xf32, #tpu.memory_space<vmem>>, %arg38: memref<32x4xbf16, #tpu.memory_space<vmem>>, %arg39: memref<1x4xf32, #tpu.memory_space<vmem>>, %arg40: memref<4x128xbf16, #tpu.memory_space<vmem>>, %arg41: memref<1x128xf32, #tpu.memory_space<vmem>>, %arg42: memref<16x128xf32, #tpu.memory_space<vmem>>) attributes {dimension_semantics = [#tpu.dimension_semantics<parallel>], iteration_bounds = array<i64: 2>, scalar_prefetch = 0 : i64, scratch_operands = 0 : i64, tpu.core_type = #tpu.core_type<tc>, window_params = [{transform_indices = @transform_0, window_bounds = array<i64: 16, 4>}, {transform_indices = @transform_1, window_bounds = array<i64: 16, 4>}, {pipeline_mode = #tpu.pipeline_mode<synchronous>, transform_indices = @transform_2, window_bounds = array<i64: 2, 16, 16>}, {pipeline_mode = #tpu.pipeline_mode<synchronous>, transform_indices = @transform_3, window_bounds = array<i64: 3, 16, 16>}, {pipeline_mode = #tpu.pipeline_mode<synchronous>, transform_indices = @transform_4, window_bounds = array<i64: 3, 4, 32>}, {pipeline_mode = #tpu.pipeline_mode<synchronous>, transform_indices = @transform_5, window_bounds = array<i64: 4, 32>}, {pipeline_mode = #tpu.pipeline_mode<synchronous>, transform_indices = @transform_6, window_bounds = array<i64: 16, 32>}, {pipeline_mode = #tpu.pipeline_mode<synchronous>, transform_indices = @transform_7, window_bounds = array<i64: 2, 9, 16>}, {pipeline_mode = #tpu.pipeline_mode<synchronous>, transform_indices = @transform_8, window_bounds = array<i64: 2, 32, 32>}, {pipeline_mode = #tpu.pipeline_mode<synchronous>, transform_indices = @transform_9, window_bounds = array<i64: 1, 32>}, {pipeline_mode = #tpu.pipeline_mode<synchronous>, transform_indices = @transform_10, window_bounds = array<i64: 9, 9, 9>}, {pipeline_mode = #tpu.pipeline_mode<synchronous>, transform_indices = @transform_11, window_bounds = array<i64: 9, 32, 32>}, {pipeline_mode = #tpu.pipeline_mode<synchronous>, transform_indices = @transform_12, window_bounds = array<i64: 1, 32>}, {pipeline_mode = #tpu.pipeline_mode<synchronous>, transform_indices = @transform_13, window_bounds = array<i64: 2, 16, 9>}, {pipeline_mode = #tpu.pipeline_mode<synchronous>, transform_indices = @transform_14, window_bounds = array<i64: 2, 32, 32>}, {pipeline_mode = #tpu.pipeline_mode<synchronous>, transform_indices = @transform_15, window_bounds = array<i64: 1, 32>}, {pipeline_mode = #tpu.pipeline_mode<synchronous>, transform_indices = @transform_16, window_bounds = array<i64: 4, 5, 16>}, {pipeline_mode = #tpu.pipeline_mode<synchronous>, transform_indices = @transform_17, window_bounds = array<i64: 4, 32, 32>}, {pipeline_mode = #tpu.pipeline_mode<synchronous>, transform_indices = @transform_18, window_bounds = array<i64: 1, 32>}, {pipeline_mode = #tpu.pipeline_mode<synchronous>, transform_indices = @transform_19, window_bounds = array<i64: 5, 5, 5>}, {pipeline_mode = #tpu.pipeline_mode<synchronous>, transform_indices = @transform_20, window_bounds = array<i64: 5, 32, 32>}, {pipeline_mode = #tpu.pipeline_mode<synchronous>, transform_indices = @transform_21, window_bounds = array<i64: 1, 32>}, {pipeline_mode = #tpu.pipeline_mode<synchronous>, transform_indices = @transform_22, window_bounds = array<i64: 4, 16, 5>}, {pipeline_mode = #tpu.pipeline_mode<synchronous>, transform_indices = @transform_23, window_bounds = array<i64: 4, 32, 32>}, {pipeline_mode = #tpu.pipeline_mode<synchronous>, transform_indices = @transform_24, window_bounds = array<i64: 1, 32>}, {pipeline_mode = #tpu.pipeline_mode<synchronous>, transform_indices = @transform_25, window_bounds = array<i64: 1, 32>}, {pipeline_mode = #tpu.pipeline_mode<synchronous>, transform_indices = @transform_26, window_bounds = array<i64: 1, 32>}, {pipeline_mode = #tpu.pipeline_mode<synchronous>, transform_indices = @transform_27, window_bounds = array<i64: 2, 32, 32>}, {pipeline_mode = #tpu.pipeline_mode<synchronous>, transform_indices = @transform_28, window_bounds = array<i64: 1, 32>}, {pipeline_mode = #tpu.pipeline_mode<synchronous>, transform_indices = @transform_29, window_bounds = array<i64: 1, 32>}, {pipeline_mode = #tpu.pipeline_mode<synchronous>, transform_indices = @transform_30, window_bounds = array<i64: 1, 32>}, {pipeline_mode = #tpu.pipeline_mode<synchronous>, transform_indices = @transform_31, window_bounds = array<i64: 32, 128>}, {pipeline_mode = #tpu.pipeline_mode<synchronous>, transform_indices = @transform_32, window_bounds = array<i64: 1, 128>}, {pipeline_mode = #tpu.pipeline_mode<synchronous>, transform_indices = @transform_33, window_bounds = array<i64: 128, 32>}, {pipeline_mode = #tpu.pipeline_mode<synchronous>, transform_indices = @transform_34, window_bounds = array<i64: 1, 32>}, {pipeline_mode = #tpu.pipeline_mode<synchronous>, transform_indices = @transform_35, window_bounds = array<i64: 1, 32>}, {pipeline_mode = #tpu.pipeline_mode<synchronous>, transform_indices = @transform_36, window_bounds = array<i64: 1, 32>}, {pipeline_mode = #tpu.pipeline_mode<synchronous>, transform_indices = @transform_37, window_bounds = array<i64: 32, 4>}, {pipeline_mode = #tpu.pipeline_mode<synchronous>, transform_indices = @transform_38, window_bounds = array<i64: 1, 4>}, {pipeline_mode = #tpu.pipeline_mode<synchronous>, transform_indices = @transform_39, window_bounds = array<i64: 4, 128>}, {pipeline_mode = #tpu.pipeline_mode<synchronous>, transform_indices = @transform_40, window_bounds = array<i64: 1, 128>}, {transform_indices = @transform_41, window_bounds = array<i64: 16, 128>}]} {
    %c0 = arith.constant 0 : index
    %c0_0 = arith.constant 0 : index
    %0 = vector.load %arg1[%c0, %c0_0] : memref<16x4xf32, #tpu.memory_space<vmem>>, vector<16x4xf32>
    %c0_1 = arith.constant 0 : index
    %c0_2 = arith.constant 0 : index
    %1 = vector.load %arg2[%c0_1, %c0_2] : memref<16x4xf32, #tpu.memory_space<vmem>>, vector<16x4xf32>
    %c0_3 = arith.constant 0 : index
    %c0_4 = arith.constant 0 : index
    %c0_5 = arith.constant 0 : index
    %2 = vector.load %arg3[%c0_3, %c0_4, %c0_5] : memref<2x16x16xf32, #tpu.memory_space<vmem>>, vector<1x16x16xf32>
    %3 = vector.shape_cast %2 : vector<1x16x16xf32> to vector<16x16xf32>
    %cst = arith.constant dense<0.000000e+00> : vector<16x4xf32>
    %4 = tpu.matmul %3, %0, %cst {dimension_numbers = #tpu.dot_dimension_numbers<[1], [0], [0], [1], [0, 0, 1, 1], [], []>} : vector<16x16xf32>, vector<16x4xf32>, vector<16x4xf32> -> vector<16x4xf32>
    %c1 = arith.constant 1 : index
    %c0_6 = arith.constant 0 : index
    %c0_7 = arith.constant 0 : index
    %5 = vector.load %arg3[%c1, %c0_6, %c0_7] : memref<2x16x16xf32, #tpu.memory_space<vmem>>, vector<1x16x16xf32>
    %6 = vector.shape_cast %5 : vector<1x16x16xf32> to vector<16x16xf32>
    %cst_8 = arith.constant dense<0.000000e+00> : vector<16x4xf32>
    %7 = tpu.matmul %6, %0, %cst_8 {dimension_numbers = #tpu.dot_dimension_numbers<[1], [0], [0], [1], [0, 0, 1, 1], [], []>} : vector<16x16xf32>, vector<16x4xf32>, vector<16x4xf32> -> vector<16x4xf32>
    %8 = arith.addf %4, %7 : vector<16x4xf32>
    %cst_9 = arith.constant 2.000000e+00 : f32
    %9 = vector.broadcast %cst_9 : f32 to vector<16x4xf32>
    %10 = arith.divf %8, %9 : vector<16x4xf32>
    %11 = arith.subf %0, %10 : vector<16x4xf32>
    %c0_10 = arith.constant 0 : index
    %c0_11 = arith.constant 0 : index
    %12 = vector.load %arg7[%c0_10, %c0_11] : memref<16x32xf32, #tpu.memory_space<vmem>>, vector<16x32xf32>
    %c0_12 = arith.constant 0 : index
    %c0_13 = arith.constant 0 : index
    %c0_14 = arith.constant 0 : index
    %13 = vector.load %arg4[%c0_12, %c0_13, %c0_14] : memref<3x16x16xbf16, #tpu.memory_space<vmem>>, vector<1x16x16xbf16>
    %14 = vector.shape_cast %13 : vector<1x16x16xbf16> to vector<16x16xbf16>
    %15 = arith.truncf %11 : vector<16x4xf32> to vector<16x4xbf16>
    %cst_15 = arith.constant dense<0.000000e+00> : vector<16x4xf32>
    %16 = tpu.matmul %14, %15, %cst_15 {dimension_numbers = #tpu.dot_dimension_numbers<[1], [0], [0], [1], [0, 0, 1, 1], [], []>} : vector<16x16xbf16>, vector<16x4xbf16>, vector<16x4xf32> -> vector<16x4xf32>
    %c0_16 = arith.constant 0 : index
    %c0_17 = arith.constant 0 : index
    %c0_18 = arith.constant 0 : index
    %17 = vector.load %arg5[%c0_16, %c0_17, %c0_18] : memref<3x4x32xbf16, #tpu.memory_space<vmem>>, vector<1x4x32xbf16>
    %18 = vector.shape_cast %17 : vector<1x4x32xbf16> to vector<4x32xbf16>
    %19 = arith.truncf %16 : vector<16x4xf32> to vector<16x4xbf16>
    %cst_19 = arith.constant dense<0.000000e+00> : vector<16x32xf32>
    %20 = tpu.matmul %19, %18, %cst_19 {dimension_numbers = #tpu.dot_dimension_numbers<[1], [0], [0], [1], [0, 0, 1, 1], [], []>} : vector<16x4xbf16>, vector<4x32xbf16>, vector<16x32xf32> -> vector<16x32xf32>
    %21 = arith.addf %12, %20 : vector<16x32xf32>
    %c1_20 = arith.constant 1 : index
    %c0_21 = arith.constant 0 : index
    %c0_22 = arith.constant 0 : index
    %22 = vector.load %arg5[%c1_20, %c0_21, %c0_22] : memref<3x4x32xbf16, #tpu.memory_space<vmem>>, vector<1x4x32xbf16>
    %23 = vector.shape_cast %22 : vector<1x4x32xbf16> to vector<4x32xbf16>
    %24 = arith.truncf %11 : vector<16x4xf32> to vector<16x4xbf16>
    %cst_23 = arith.constant dense<0.000000e+00> : vector<16x32xf32>
    %25 = tpu.matmul %24, %23, %cst_23 {dimension_numbers = #tpu.dot_dimension_numbers<[1], [0], [0], [1], [0, 0, 1, 1], [], []>} : vector<16x4xbf16>, vector<4x32xbf16>, vector<16x32xf32> -> vector<16x32xf32>
    %26 = arith.addf %21, %25 : vector<16x32xf32>
    %c2 = arith.constant 2 : index
    %c0_24 = arith.constant 0 : index
    %c0_25 = arith.constant 0 : index
    %27 = vector.load %arg4[%c2, %c0_24, %c0_25] : memref<3x16x16xbf16, #tpu.memory_space<vmem>>, vector<1x16x16xbf16>
    %28 = vector.shape_cast %27 : vector<1x16x16xbf16> to vector<16x16xbf16>
    %29 = arith.truncf %11 : vector<16x4xf32> to vector<16x4xbf16>
    %cst_26 = arith.constant dense<0.000000e+00> : vector<16x4xf32>
    %30 = tpu.matmul %28, %29, %cst_26 {dimension_numbers = #tpu.dot_dimension_numbers<[1], [0], [0], [1], [0, 0, 1, 1], [], []>} : vector<16x16xbf16>, vector<16x4xbf16>, vector<16x4xf32> -> vector<16x4xf32>
    %c2_27 = arith.constant 2 : index
    %c0_28 = arith.constant 0 : index
    %c0_29 = arith.constant 0 : index
    %31 = vector.load %arg5[%c2_27, %c0_28, %c0_29] : memref<3x4x32xbf16, #tpu.memory_space<vmem>>, vector<1x4x32xbf16>
    %32 = vector.shape_cast %31 : vector<1x4x32xbf16> to vector<4x32xbf16>
    %33 = arith.truncf %30 : vector<16x4xf32> to vector<16x4xbf16>
    %cst_30 = arith.constant dense<0.000000e+00> : vector<16x32xf32>
    %34 = tpu.matmul %33, %32, %cst_30 {dimension_numbers = #tpu.dot_dimension_numbers<[1], [0], [0], [1], [0, 0, 1, 1], [], []>} : vector<16x4xbf16>, vector<4x32xbf16>, vector<16x32xf32> -> vector<16x32xf32>
    %35 = arith.addf %26, %34 : vector<16x32xf32>
    %c0_31 = arith.constant 0 : index
    %c0_32 = arith.constant 0 : index
    %36 = vector.load %arg6[%c0_31, %c0_32] : memref<4x32xbf16, #tpu.memory_space<vmem>>, vector<4x32xbf16>
    %37 = arith.truncf %1 : vector<16x4xf32> to vector<16x4xbf16>
    %cst_33 = arith.constant dense<0.000000e+00> : vector<16x32xf32>
    %38 = tpu.matmul %37, %36, %cst_33 {dimension_numbers = #tpu.dot_dimension_numbers<[1], [0], [0], [1], [0, 0, 1, 1], [], []>} : vector<16x4xbf16>, vector<4x32xbf16>, vector<16x32xf32> -> vector<16x32xf32>
    %39 = arith.addf %35, %38 : vector<16x32xf32>
    %c0_34 = arith.constant 0 : index
    %c0_35 = arith.constant 0 : index
    %40 = vector.load %arg26[%c0_34, %c0_35] : memref<1x32xf32, #tpu.memory_space<vmem>>, vector<1x32xf32>
    %c0_36 = arith.constant 0 : index
    %c0_37 = arith.constant 0 : index
    %41 = vector.load %arg27[%c0_36, %c0_37] : memref<1x32xf32, #tpu.memory_space<vmem>>, vector<1x32xf32>
    %c0_38 = arith.constant 0 : index
    %c0_39 = arith.constant 0 : index
    %c0_40 = arith.constant 0 : index
    %42 = vector.load %arg3[%c0_38, %c0_39, %c0_40] : memref<2x16x16xf32, #tpu.memory_space<vmem>>, vector<1x16x16xf32>
    %43 = vector.shape_cast %42 : vector<1x16x16xf32> to vector<16x16xf32>
    %cst_41 = arith.constant dense<0.000000e+00> : vector<16x32xf32>
    %44 = tpu.matmul %43, %39, %cst_41 {dimension_numbers = #tpu.dot_dimension_numbers<[1], [0], [0], [1], [0, 0, 1, 1], [], []>} : vector<16x16xf32>, vector<16x32xf32>, vector<16x32xf32> -> vector<16x32xf32>
    %45 = arith.subf %39, %44 : vector<16x32xf32>
    %c0_42 = arith.constant 0 : index
    %c0_43 = arith.constant 0 : index
    %c0_44 = arith.constant 0 : index
    %46 = vector.load %arg8[%c0_42, %c0_43, %c0_44] : memref<2x9x16xbf16, #tpu.memory_space<vmem>>, vector<1x9x16xbf16>
    %47 = vector.shape_cast %46 : vector<1x9x16xbf16> to vector<9x16xbf16>
    %48 = arith.truncf %45 : vector<16x32xf32> to vector<16x32xbf16>
    %cst_45 = arith.constant dense<0.000000e+00> : vector<9x32xf32>
    %49 = tpu.matmul %47, %48, %cst_45 {dimension_numbers = #tpu.dot_dimension_numbers<[1], [0], [0], [1], [0, 0, 1, 1], [], []>} : vector<9x16xbf16>, vector<16x32xbf16>, vector<9x32xf32> -> vector<9x32xf32>
    %c0_46 = arith.constant 0 : index
    %c0_47 = arith.constant 0 : index
    %c0_48 = arith.constant 0 : index
    %50 = vector.load %arg9[%c0_46, %c0_47, %c0_48] : memref<2x32x32xbf16, #tpu.memory_space<vmem>>, vector<1x32x32xbf16>
    %51 = vector.shape_cast %50 : vector<1x32x32xbf16> to vector<32x32xbf16>
    %52 = arith.truncf %49 : vector<9x32xf32> to vector<9x32xbf16>
    %cst_49 = arith.constant dense<0.000000e+00> : vector<9x32xf32>
    %53 = tpu.matmul %52, %51, %cst_49 {dimension_numbers = #tpu.dot_dimension_numbers<[1], [0], [0], [1], [0, 0, 1, 1], [], []>} : vector<9x32xbf16>, vector<32x32xbf16>, vector<9x32xf32> -> vector<9x32xf32>
    %c1_50 = arith.constant 1 : index
    %c0_51 = arith.constant 0 : index
    %c0_52 = arith.constant 0 : index
    %54 = vector.load %arg8[%c1_50, %c0_51, %c0_52] : memref<2x9x16xbf16, #tpu.memory_space<vmem>>, vector<1x9x16xbf16>
    %55 = vector.shape_cast %54 : vector<1x9x16xbf16> to vector<9x16xbf16>
    %56 = arith.truncf %45 : vector<16x32xf32> to vector<16x32xbf16>
    %cst_53 = arith.constant dense<0.000000e+00> : vector<9x32xf32>
    %57 = tpu.matmul %55, %56, %cst_53 {dimension_numbers = #tpu.dot_dimension_numbers<[1], [0], [0], [1], [0, 0, 1, 1], [], []>} : vector<9x16xbf16>, vector<16x32xbf16>, vector<9x32xf32> -> vector<9x32xf32>
    %c1_54 = arith.constant 1 : index
    %c0_55 = arith.constant 0 : index
    %c0_56 = arith.constant 0 : index
    %58 = vector.load %arg9[%c1_54, %c0_55, %c0_56] : memref<2x32x32xbf16, #tpu.memory_space<vmem>>, vector<1x32x32xbf16>
    %59 = vector.shape_cast %58 : vector<1x32x32xbf16> to vector<32x32xbf16>
    %60 = arith.truncf %57 : vector<9x32xf32> to vector<9x32xbf16>
    %cst_57 = arith.constant dense<0.000000e+00> : vector<9x32xf32>
    %61 = tpu.matmul %60, %59, %cst_57 {dimension_numbers = #tpu.dot_dimension_numbers<[1], [0], [0], [1], [0, 0, 1, 1], [], []>} : vector<9x32xbf16>, vector<32x32xbf16>, vector<9x32xf32> -> vector<9x32xf32>
    %62 = arith.addf %53, %61 : vector<9x32xf32>
    %c0_58 = arith.constant 0 : index
    %c0_59 = arith.constant 0 : index
    %63 = vector.load %arg10[%c0_58, %c0_59] : memref<1x32xf32, #tpu.memory_space<vmem>>, vector<1x32xf32>
    %64 = vector.broadcast %63 : vector<1x32xf32> to vector<9x32xf32>
    %65 = arith.addf %62, %64 : vector<9x32xf32>
    %66 = math.tanh %65 : vector<9x32xf32>
    %c0_60 = arith.constant 0 : index
    %c0_61 = arith.constant 0 : index
    %c0_62 = arith.constant 0 : index
    %67 = vector.load %arg11[%c0_60, %c0_61, %c0_62] : memref<9x9x9xbf16, #tpu.memory_space<vmem>>, vector<1x9x9xbf16>
    %68 = vector.shape_cast %67 : vector<1x9x9xbf16> to vector<9x9xbf16>
    %69 = arith.truncf %66 : vector<9x32xf32> to vector<9x32xbf16>
    %cst_63 = arith.constant dense<0.000000e+00> : vector<9x32xf32>
    %70 = tpu.matmul %68, %69, %cst_63 {dimension_numbers = #tpu.dot_dimension_numbers<[1], [0], [0], [1], [0, 0, 1, 1], [], []>} : vector<9x9xbf16>, vector<9x32xbf16>, vector<9x32xf32> -> vector<9x32xf32>
    %c0_64 = arith.constant 0 : index
    %c0_65 = arith.constant 0 : index
    %c0_66 = arith.constant 0 : index
    %71 = vector.load %arg12[%c0_64, %c0_65, %c0_66] : memref<9x32x32xbf16, #tpu.memory_space<vmem>>, vector<1x32x32xbf16>
    %72 = vector.shape_cast %71 : vector<1x32x32xbf16> to vector<32x32xbf16>
    %73 = arith.truncf %70 : vector<9x32xf32> to vector<9x32xbf16>
    %cst_67 = arith.constant dense<0.000000e+00> : vector<9x32xf32>
    %74 = tpu.matmul %73, %72, %cst_67 {dimension_numbers = #tpu.dot_dimension_numbers<[1], [0], [0], [1], [0, 0, 1, 1], [], []>} : vector<9x32xbf16>, vector<32x32xbf16>, vector<9x32xf32> -> vector<9x32xf32>
    %c1_68 = arith.constant 1 : index
    %c0_69 = arith.constant 0 : index
    %c0_70 = arith.constant 0 : index
    %75 = vector.load %arg11[%c1_68, %c0_69, %c0_70] : memref<9x9x9xbf16, #tpu.memory_space<vmem>>, vector<1x9x9xbf16>
    %76 = vector.shape_cast %75 : vector<1x9x9xbf16> to vector<9x9xbf16>
    %77 = arith.truncf %66 : vector<9x32xf32> to vector<9x32xbf16>
    %cst_71 = arith.constant dense<0.000000e+00> : vector<9x32xf32>
    %78 = tpu.matmul %76, %77, %cst_71 {dimension_numbers = #tpu.dot_dimension_numbers<[1], [0], [0], [1], [0, 0, 1, 1], [], []>} : vector<9x9xbf16>, vector<9x32xbf16>, vector<9x32xf32> -> vector<9x32xf32>
    %c1_72 = arith.constant 1 : index
    %c0_73 = arith.constant 0 : index
    %c0_74 = arith.constant 0 : index
    %79 = vector.load %arg12[%c1_72, %c0_73, %c0_74] : memref<9x32x32xbf16, #tpu.memory_space<vmem>>, vector<1x32x32xbf16>
    %80 = vector.shape_cast %79 : vector<1x32x32xbf16> to vector<32x32xbf16>
    %81 = arith.truncf %78 : vector<9x32xf32> to vector<9x32xbf16>
    %cst_75 = arith.constant dense<0.000000e+00> : vector<9x32xf32>
    %82 = tpu.matmul %81, %80, %cst_75 {dimension_numbers = #tpu.dot_dimension_numbers<[1], [0], [0], [1], [0, 0, 1, 1], [], []>} : vector<9x32xbf16>, vector<32x32xbf16>, vector<9x32xf32> -> vector<9x32xf32>
    %83 = arith.addf %74, %82 : vector<9x32xf32>
    %c2_76 = arith.constant 2 : index
    %c0_77 = arith.constant 0 : index
    %c0_78 = arith.constant 0 : index
    %84 = vector.load %arg11[%c2_76, %c0_77, %c0_78] : memref<9x9x9xbf16, #tpu.memory_space<vmem>>, vector<1x9x9xbf16>
    %85 = vector.shape_cast %84 : vector<1x9x9xbf16> to vector<9x9xbf16>
    %86 = arith.truncf %66 : vector<9x32xf32> to vector<9x32xbf16>
    %cst_79 = arith.constant dense<0.000000e+00> : vector<9x32xf32>
    %87 = tpu.matmul %85, %86, %cst_79 {dimension_numbers = #tpu.dot_dimension_numbers<[1], [0], [0], [1], [0, 0, 1, 1], [], []>} : vector<9x9xbf16>, vector<9x32xbf16>, vector<9x32xf32> -> vector<9x32xf32>
    %c2_80 = arith.constant 2 : index
    %c0_81 = arith.constant 0 : index
    %c0_82 = arith.constant 0 : index
    %88 = vector.load %arg12[%c2_80, %c0_81, %c0_82] : memref<9x32x32xbf16, #tpu.memory_space<vmem>>, vector<1x32x32xbf16>
    %89 = vector.shape_cast %88 : vector<1x32x32xbf16> to vector<32x32xbf16>
    %90 = arith.truncf %87 : vector<9x32xf32> to vector<9x32xbf16>
    %cst_83 = arith.constant dense<0.000000e+00> : vector<9x32xf32>
    %91 = tpu.matmul %90, %89, %cst_83 {dimension_numbers = #tpu.dot_dimension_numbers<[1], [0], [0], [1], [0, 0, 1, 1], [], []>} : vector<9x32xbf16>, vector<32x32xbf16>, vector<9x32xf32> -> vector<9x32xf32>
    %92 = arith.addf %83, %91 : vector<9x32xf32>
    %c3 = arith.constant 3 : index
    %c0_84 = arith.constant 0 : index
    %c0_85 = arith.constant 0 : index
    %93 = vector.load %arg11[%c3, %c0_84, %c0_85] : memref<9x9x9xbf16, #tpu.memory_space<vmem>>, vector<1x9x9xbf16>
    %94 = vector.shape_cast %93 : vector<1x9x9xbf16> to vector<9x9xbf16>
    %95 = arith.truncf %66 : vector<9x32xf32> to vector<9x32xbf16>
    %cst_86 = arith.constant dense<0.000000e+00> : vector<9x32xf32>
    %96 = tpu.matmul %94, %95, %cst_86 {dimension_numbers = #tpu.dot_dimension_numbers<[1], [0], [0], [1], [0, 0, 1, 1], [], []>} : vector<9x9xbf16>, vector<9x32xbf16>, vector<9x32xf32> -> vector<9x32xf32>
    %c3_87 = arith.constant 3 : index
    %c0_88 = arith.constant 0 : index
    %c0_89 = arith.constant 0 : index
    %97 = vector.load %arg12[%c3_87, %c0_88, %c0_89] : memref<9x32x32xbf16, #tpu.memory_space<vmem>>, vector<1x32x32xbf16>
    %98 = vector.shape_cast %97 : vector<1x32x32xbf16> to vector<32x32xbf16>
    %99 = arith.truncf %96 : vector<9x32xf32> to vector<9x32xbf16>
    %cst_90 = arith.constant dense<0.000000e+00> : vector<9x32xf32>
    %100 = tpu.matmul %99, %98, %cst_90 {dimension_numbers = #tpu.dot_dimension_numbers<[1], [0], [0], [1], [0, 0, 1, 1], [], []>} : vector<9x32xbf16>, vector<32x32xbf16>, vector<9x32xf32> -> vector<9x32xf32>
    %101 = arith.addf %92, %100 : vector<9x32xf32>
    %c4 = arith.constant 4 : index
    %c0_91 = arith.constant 0 : index
    %c0_92 = arith.constant 0 : index
    %102 = vector.load %arg11[%c4, %c0_91, %c0_92] : memref<9x9x9xbf16, #tpu.memory_space<vmem>>, vector<1x9x9xbf16>
    %103 = vector.shape_cast %102 : vector<1x9x9xbf16> to vector<9x9xbf16>
    %104 = arith.truncf %66 : vector<9x32xf32> to vector<9x32xbf16>
    %cst_93 = arith.constant dense<0.000000e+00> : vector<9x32xf32>
    %105 = tpu.matmul %103, %104, %cst_93 {dimension_numbers = #tpu.dot_dimension_numbers<[1], [0], [0], [1], [0, 0, 1, 1], [], []>} : vector<9x9xbf16>, vector<9x32xbf16>, vector<9x32xf32> -> vector<9x32xf32>
    %c4_94 = arith.constant 4 : index
    %c0_95 = arith.constant 0 : index
    %c0_96 = arith.constant 0 : index
    %106 = vector.load %arg12[%c4_94, %c0_95, %c0_96] : memref<9x32x32xbf16, #tpu.memory_space<vmem>>, vector<1x32x32xbf16>
    %107 = vector.shape_cast %106 : vector<1x32x32xbf16> to vector<32x32xbf16>
    %108 = arith.truncf %105 : vector<9x32xf32> to vector<9x32xbf16>
    %cst_97 = arith.constant dense<0.000000e+00> : vector<9x32xf32>
    %109 = tpu.matmul %108, %107, %cst_97 {dimension_numbers = #tpu.dot_dimension_numbers<[1], [0], [0], [1], [0, 0, 1, 1], [], []>} : vector<9x32xbf16>, vector<32x32xbf16>, vector<9x32xf32> -> vector<9x32xf32>
    %110 = arith.addf %101, %109 : vector<9x32xf32>
    %c5 = arith.constant 5 : index
    %c0_98 = arith.constant 0 : index
    %c0_99 = arith.constant 0 : index
    %111 = vector.load %arg11[%c5, %c0_98, %c0_99] : memref<9x9x9xbf16, #tpu.memory_space<vmem>>, vector<1x9x9xbf16>
    %112 = vector.shape_cast %111 : vector<1x9x9xbf16> to vector<9x9xbf16>
    %113 = arith.truncf %66 : vector<9x32xf32> to vector<9x32xbf16>
    %cst_100 = arith.constant dense<0.000000e+00> : vector<9x32xf32>
    %114 = tpu.matmul %112, %113, %cst_100 {dimension_numbers = #tpu.dot_dimension_numbers<[1], [0], [0], [1], [0, 0, 1, 1], [], []>} : vector<9x9xbf16>, vector<9x32xbf16>, vector<9x32xf32> -> vector<9x32xf32>
    %c5_101 = arith.constant 5 : index
    %c0_102 = arith.constant 0 : index
    %c0_103 = arith.constant 0 : index
    %115 = vector.load %arg12[%c5_101, %c0_102, %c0_103] : memref<9x32x32xbf16, #tpu.memory_space<vmem>>, vector<1x32x32xbf16>
    %116 = vector.shape_cast %115 : vector<1x32x32xbf16> to vector<32x32xbf16>
    %117 = arith.truncf %114 : vector<9x32xf32> to vector<9x32xbf16>
    %cst_104 = arith.constant dense<0.000000e+00> : vector<9x32xf32>
    %118 = tpu.matmul %117, %116, %cst_104 {dimension_numbers = #tpu.dot_dimension_numbers<[1], [0], [0], [1], [0, 0, 1, 1], [], []>} : vector<9x32xbf16>, vector<32x32xbf16>, vector<9x32xf32> -> vector<9x32xf32>
    %119 = arith.addf %110, %118 : vector<9x32xf32>
    %c6 = arith.constant 6 : index
    %c0_105 = arith.constant 0 : index
    %c0_106 = arith.constant 0 : index
    %120 = vector.load %arg11[%c6, %c0_105, %c0_106] : memref<9x9x9xbf16, #tpu.memory_space<vmem>>, vector<1x9x9xbf16>
    %121 = vector.shape_cast %120 : vector<1x9x9xbf16> to vector<9x9xbf16>
    %122 = arith.truncf %66 : vector<9x32xf32> to vector<9x32xbf16>
    %cst_107 = arith.constant dense<0.000000e+00> : vector<9x32xf32>
    %123 = tpu.matmul %121, %122, %cst_107 {dimension_numbers = #tpu.dot_dimension_numbers<[1], [0], [0], [1], [0, 0, 1, 1], [], []>} : vector<9x9xbf16>, vector<9x32xbf16>, vector<9x32xf32> -> vector<9x32xf32>
    %c6_108 = arith.constant 6 : index
    %c0_109 = arith.constant 0 : index
    %c0_110 = arith.constant 0 : index
    %124 = vector.load %arg12[%c6_108, %c0_109, %c0_110] : memref<9x32x32xbf16, #tpu.memory_space<vmem>>, vector<1x32x32xbf16>
    %125 = vector.shape_cast %124 : vector<1x32x32xbf16> to vector<32x32xbf16>
    %126 = arith.truncf %123 : vector<9x32xf32> to vector<9x32xbf16>
    %cst_111 = arith.constant dense<0.000000e+00> : vector<9x32xf32>
    %127 = tpu.matmul %126, %125, %cst_111 {dimension_numbers = #tpu.dot_dimension_numbers<[1], [0], [0], [1], [0, 0, 1, 1], [], []>} : vector<9x32xbf16>, vector<32x32xbf16>, vector<9x32xf32> -> vector<9x32xf32>
    %128 = arith.addf %119, %127 : vector<9x32xf32>
    %c7 = arith.constant 7 : index
    %c0_112 = arith.constant 0 : index
    %c0_113 = arith.constant 0 : index
    %129 = vector.load %arg11[%c7, %c0_112, %c0_113] : memref<9x9x9xbf16, #tpu.memory_space<vmem>>, vector<1x9x9xbf16>
    %130 = vector.shape_cast %129 : vector<1x9x9xbf16> to vector<9x9xbf16>
    %131 = arith.truncf %66 : vector<9x32xf32> to vector<9x32xbf16>
    %cst_114 = arith.constant dense<0.000000e+00> : vector<9x32xf32>
    %132 = tpu.matmul %130, %131, %cst_114 {dimension_numbers = #tpu.dot_dimension_numbers<[1], [0], [0], [1], [0, 0, 1, 1], [], []>} : vector<9x9xbf16>, vector<9x32xbf16>, vector<9x32xf32> -> vector<9x32xf32>
    %c7_115 = arith.constant 7 : index
    %c0_116 = arith.constant 0 : index
    %c0_117 = arith.constant 0 : index
    %133 = vector.load %arg12[%c7_115, %c0_116, %c0_117] : memref<9x32x32xbf16, #tpu.memory_space<vmem>>, vector<1x32x32xbf16>
    %134 = vector.shape_cast %133 : vector<1x32x32xbf16> to vector<32x32xbf16>
    %135 = arith.truncf %132 : vector<9x32xf32> to vector<9x32xbf16>
    %cst_118 = arith.constant dense<0.000000e+00> : vector<9x32xf32>
    %136 = tpu.matmul %135, %134, %cst_118 {dimension_numbers = #tpu.dot_dimension_numbers<[1], [0], [0], [1], [0, 0, 1, 1], [], []>} : vector<9x32xbf16>, vector<32x32xbf16>, vector<9x32xf32> -> vector<9x32xf32>
    %137 = arith.addf %128, %136 : vector<9x32xf32>
    %c8 = arith.constant 8 : index
    %c0_119 = arith.constant 0 : index
    %c0_120 = arith.constant 0 : index
    %138 = vector.load %arg11[%c8, %c0_119, %c0_120] : memref<9x9x9xbf16, #tpu.memory_space<vmem>>, vector<1x9x9xbf16>
    %139 = vector.shape_cast %138 : vector<1x9x9xbf16> to vector<9x9xbf16>
    %140 = arith.truncf %66 : vector<9x32xf32> to vector<9x32xbf16>
    %cst_121 = arith.constant dense<0.000000e+00> : vector<9x32xf32>
    %141 = tpu.matmul %139, %140, %cst_121 {dimension_numbers = #tpu.dot_dimension_numbers<[1], [0], [0], [1], [0, 0, 1, 1], [], []>} : vector<9x9xbf16>, vector<9x32xbf16>, vector<9x32xf32> -> vector<9x32xf32>
    %c8_122 = arith.constant 8 : index
    %c0_123 = arith.constant 0 : index
    %c0_124 = arith.constant 0 : index
    %142 = vector.load %arg12[%c8_122, %c0_123, %c0_124] : memref<9x32x32xbf16, #tpu.memory_space<vmem>>, vector<1x32x32xbf16>
    %143 = vector.shape_cast %142 : vector<1x32x32xbf16> to vector<32x32xbf16>
    %144 = arith.truncf %141 : vector<9x32xf32> to vector<9x32xbf16>
    %cst_125 = arith.constant dense<0.000000e+00> : vector<9x32xf32>
    %145 = tpu.matmul %144, %143, %cst_125 {dimension_numbers = #tpu.dot_dimension_numbers<[1], [0], [0], [1], [0, 0, 1, 1], [], []>} : vector<9x32xbf16>, vector<32x32xbf16>, vector<9x32xf32> -> vector<9x32xf32>
    %146 = arith.addf %137, %145 : vector<9x32xf32>
    %c0_126 = arith.constant 0 : index
    %c0_127 = arith.constant 0 : index
    %147 = vector.load %arg13[%c0_126, %c0_127] : memref<1x32xf32, #tpu.memory_space<vmem>>, vector<1x32xf32>
    %148 = vector.broadcast %147 : vector<1x32xf32> to vector<9x32xf32>
    %149 = arith.addf %146, %148 : vector<9x32xf32>
    %150 = math.tanh %149 : vector<9x32xf32>
    %151 = arith.addf %150, %66 : vector<9x32xf32>
    %cst_128 = arith.constant dense<0.000000e+00> : vector<9xf32>
    %152 = vector.multi_reduction <add>, %151, %cst_128 [1] : vector<9x32xf32> to vector<9xf32>
    %153 = vector.shape_cast %152 : vector<9xf32> to vector<9x1xf32>
    %cst_129 = arith.constant 3.200000e+01 : f32
    %154 = vector.broadcast %cst_129 : f32 to vector<9x1xf32>
    %155 = arith.divf %153, %154 : vector<9x1xf32>
    %156 = vector.broadcast %155 : vector<9x1xf32> to vector<9x32xf32>
    %157 = arith.subf %151, %156 : vector<9x32xf32>
    %158 = arith.mulf %157, %157 : vector<9x32xf32>
    %cst_130 = arith.constant dense<0.000000e+00> : vector<9xf32>
    %159 = vector.multi_reduction <add>, %158, %cst_130 [1] : vector<9x32xf32> to vector<9xf32>
    %160 = vector.shape_cast %159 : vector<9xf32> to vector<9x1xf32>
    %cst_131 = arith.constant 3.200000e+01 : f32
    %161 = vector.broadcast %cst_131 : f32 to vector<9x1xf32>
    %162 = arith.divf %160, %161 : vector<9x1xf32>
    %cst_132 = arith.constant 9.99999974E-6 : f32
    %163 = vector.broadcast %cst_132 : f32 to vector<9x1xf32>
    %164 = arith.addf %162, %163 : vector<9x1xf32>
    %165 = math.rsqrt %164 : vector<9x1xf32>
    %166 = vector.broadcast %165 : vector<9x1xf32> to vector<9x32xf32>
    %167 = arith.mulf %157, %166 : vector<9x32xf32>
    %168 = vector.broadcast %40 : vector<1x32xf32> to vector<9x32xf32>
    %169 = arith.mulf %167, %168 : vector<9x32xf32>
    %170 = vector.broadcast %41 : vector<1x32xf32> to vector<9x32xf32>
    %171 = arith.addf %169, %170 : vector<9x32xf32>
    %c0_133 = arith.constant 0 : index
    %c0_134 = arith.constant 0 : index
    %c0_135 = arith.constant 0 : index
    %172 = vector.load %arg14[%c0_133, %c0_134, %c0_135] : memref<2x16x9xbf16, #tpu.memory_space<vmem>>, vector<1x16x9xbf16>
    %173 = vector.shape_cast %172 : vector<1x16x9xbf16> to vector<16x9xbf16>
    %c0_136 = arith.constant 0 : index
    %c0_137 = arith.constant 0 : index
    %c0_138 = arith.constant 0 : index
    %174 = vector.load %arg15[%c0_136, %c0_137, %c0_138] : memref<2x32x32xbf16, #tpu.memory_space<vmem>>, vector<1x32x32xbf16>
    %175 = vector.shape_cast %174 : vector<1x32x32xbf16> to vector<32x32xbf16>
    %176 = arith.truncf %171 : vector<9x32xf32> to vector<9x32xbf16>
    %cst_139 = arith.constant dense<0.000000e+00> : vector<9x32xf32>
    %177 = tpu.matmul %176, %175, %cst_139 {dimension_numbers = #tpu.dot_dimension_numbers<[1], [0], [0], [1], [0, 0, 1, 1], [], []>} : vector<9x32xbf16>, vector<32x32xbf16>, vector<9x32xf32> -> vector<9x32xf32>
    %178 = arith.truncf %177 : vector<9x32xf32> to vector<9x32xbf16>
    %cst_140 = arith.constant dense<0.000000e+00> : vector<16x32xf32>
    %179 = tpu.matmul %173, %178, %cst_140 {dimension_numbers = #tpu.dot_dimension_numbers<[1], [0], [0], [1], [0, 0, 1, 1], [], []>} : vector<16x9xbf16>, vector<9x32xbf16>, vector<16x32xf32> -> vector<16x32xf32>
    %c1_141 = arith.constant 1 : index
    %c0_142 = arith.constant 0 : index
    %c0_143 = arith.constant 0 : index
    %180 = vector.load %arg14[%c1_141, %c0_142, %c0_143] : memref<2x16x9xbf16, #tpu.memory_space<vmem>>, vector<1x16x9xbf16>
    %181 = vector.shape_cast %180 : vector<1x16x9xbf16> to vector<16x9xbf16>
    %c1_144 = arith.constant 1 : index
    %c0_145 = arith.constant 0 : index
    %c0_146 = arith.constant 0 : index
    %182 = vector.load %arg15[%c1_144, %c0_145, %c0_146] : memref<2x32x32xbf16, #tpu.memory_space<vmem>>, vector<1x32x32xbf16>
    %183 = vector.shape_cast %182 : vector<1x32x32xbf16> to vector<32x32xbf16>
    %184 = arith.truncf %171 : vector<9x32xf32> to vector<9x32xbf16>
    %cst_147 = arith.constant dense<0.000000e+00> : vector<9x32xf32>
    %185 = tpu.matmul %184, %183, %cst_147 {dimension_numbers = #tpu.dot_dimension_numbers<[1], [0], [0], [1], [0, 0, 1, 1], [], []>} : vector<9x32xbf16>, vector<32x32xbf16>, vector<9x32xf32> -> vector<9x32xf32>
    %186 = arith.truncf %185 : vector<9x32xf32> to vector<9x32xbf16>
    %cst_148 = arith.constant dense<0.000000e+00> : vector<16x32xf32>
    %187 = tpu.matmul %181, %186, %cst_148 {dimension_numbers = #tpu.dot_dimension_numbers<[1], [0], [0], [1], [0, 0, 1, 1], [], []>} : vector<16x9xbf16>, vector<9x32xbf16>, vector<16x32xf32> -> vector<16x32xf32>
    %188 = arith.addf %179, %187 : vector<16x32xf32>
    %c0_149 = arith.constant 0 : index
    %c0_150 = arith.constant 0 : index
    %189 = vector.load %arg16[%c0_149, %c0_150] : memref<1x32xf32, #tpu.memory_space<vmem>>, vector<1x32xf32>
    %190 = vector.broadcast %189 : vector<1x32xf32> to vector<16x32xf32>
    %191 = arith.addf %188, %190 : vector<16x32xf32>
    %192 = math.tanh %191 : vector<16x32xf32>
    %193 = arith.addf %192, %45 : vector<16x32xf32>
    %cst_151 = arith.constant dense<0.000000e+00> : vector<16xf32>
    %194 = vector.multi_reduction <add>, %193, %cst_151 [1] : vector<16x32xf32> to vector<16xf32>
    %195 = vector.shape_cast %194 : vector<16xf32> to vector<16x1xf32>
    %cst_152 = arith.constant 3.200000e+01 : f32
    %196 = vector.broadcast %cst_152 : f32 to vector<16x1xf32>
    %197 = arith.divf %195, %196 : vector<16x1xf32>
    %198 = vector.broadcast %197 : vector<16x1xf32> to vector<16x32xf32>
    %199 = arith.subf %193, %198 : vector<16x32xf32>
    %200 = arith.mulf %199, %199 : vector<16x32xf32>
    %cst_153 = arith.constant dense<0.000000e+00> : vector<16xf32>
    %201 = vector.multi_reduction <add>, %200, %cst_153 [1] : vector<16x32xf32> to vector<16xf32>
    %202 = vector.shape_cast %201 : vector<16xf32> to vector<16x1xf32>
    %cst_154 = arith.constant 3.200000e+01 : f32
    %203 = vector.broadcast %cst_154 : f32 to vector<16x1xf32>
    %204 = arith.divf %202, %203 : vector<16x1xf32>
    %cst_155 = arith.constant 9.99999974E-6 : f32
    %205 = vector.broadcast %cst_155 : f32 to vector<16x1xf32>
    %206 = arith.addf %204, %205 : vector<16x1xf32>
    %207 = math.rsqrt %206 : vector<16x1xf32>
    %208 = vector.broadcast %207 : vector<16x1xf32> to vector<16x32xf32>
    %209 = arith.mulf %199, %208 : vector<16x32xf32>
    %210 = vector.broadcast %40 : vector<1x32xf32> to vector<16x32xf32>
    %211 = arith.mulf %209, %210 : vector<16x32xf32>
    %212 = vector.broadcast %41 : vector<1x32xf32> to vector<16x32xf32>
    %213 = arith.addf %211, %212 : vector<16x32xf32>
    %c0_156 = arith.constant 0 : index
    %c0_157 = arith.constant 0 : index
    %c0_158 = arith.constant 0 : index
    %214 = vector.load %arg28[%c0_156, %c0_157, %c0_158] : memref<2x32x32xbf16, #tpu.memory_space<vmem>>, vector<1x32x32xbf16>
    %215 = vector.shape_cast %214 : vector<1x32x32xbf16> to vector<32x32xbf16>
    %216 = arith.truncf %213 : vector<16x32xf32> to vector<16x32xbf16>
    %cst_159 = arith.constant dense<0.000000e+00> : vector<16x32xf32>
    %217 = tpu.matmul %216, %215, %cst_159 {dimension_numbers = #tpu.dot_dimension_numbers<[1], [0], [0], [1], [0, 0, 1, 1], [], []>} : vector<16x32xbf16>, vector<32x32xbf16>, vector<16x32xf32> -> vector<16x32xf32>
    %c1_160 = arith.constant 1 : index
    %c0_161 = arith.constant 0 : index
    %c0_162 = arith.constant 0 : index
    %218 = vector.load %arg3[%c1_160, %c0_161, %c0_162] : memref<2x16x16xf32, #tpu.memory_space<vmem>>, vector<1x16x16xf32>
    %219 = vector.shape_cast %218 : vector<1x16x16xf32> to vector<16x16xf32>
    %cst_163 = arith.constant dense<0.000000e+00> : vector<16x32xf32>
    %220 = tpu.matmul %219, %39, %cst_163 {dimension_numbers = #tpu.dot_dimension_numbers<[1], [0], [0], [1], [0, 0, 1, 1], [], []>} : vector<16x16xf32>, vector<16x32xf32>, vector<16x32xf32> -> vector<16x32xf32>
    %221 = arith.subf %39, %220 : vector<16x32xf32>
    %c0_164 = arith.constant 0 : index
    %c0_165 = arith.constant 0 : index
    %c0_166 = arith.constant 0 : index
    %222 = vector.load %arg17[%c0_164, %c0_165, %c0_166] : memref<4x5x16xbf16, #tpu.memory_space<vmem>>, vector<1x5x16xbf16>
    %223 = vector.shape_cast %222 : vector<1x5x16xbf16> to vector<5x16xbf16>
    %224 = arith.truncf %221 : vector<16x32xf32> to vector<16x32xbf16>
    %cst_167 = arith.constant dense<0.000000e+00> : vector<5x32xf32>
    %225 = tpu.matmul %223, %224, %cst_167 {dimension_numbers = #tpu.dot_dimension_numbers<[1], [0], [0], [1], [0, 0, 1, 1], [], []>} : vector<5x16xbf16>, vector<16x32xbf16>, vector<5x32xf32> -> vector<5x32xf32>
    %c0_168 = arith.constant 0 : index
    %c0_169 = arith.constant 0 : index
    %c0_170 = arith.constant 0 : index
    %226 = vector.load %arg18[%c0_168, %c0_169, %c0_170] : memref<4x32x32xbf16, #tpu.memory_space<vmem>>, vector<1x32x32xbf16>
    %227 = vector.shape_cast %226 : vector<1x32x32xbf16> to vector<32x32xbf16>
    %228 = arith.truncf %225 : vector<5x32xf32> to vector<5x32xbf16>
    %cst_171 = arith.constant dense<0.000000e+00> : vector<5x32xf32>
    %229 = tpu.matmul %228, %227, %cst_171 {dimension_numbers = #tpu.dot_dimension_numbers<[1], [0], [0], [1], [0, 0, 1, 1], [], []>} : vector<5x32xbf16>, vector<32x32xbf16>, vector<5x32xf32> -> vector<5x32xf32>
    %c1_172 = arith.constant 1 : index
    %c0_173 = arith.constant 0 : index
    %c0_174 = arith.constant 0 : index
    %230 = vector.load %arg17[%c1_172, %c0_173, %c0_174] : memref<4x5x16xbf16, #tpu.memory_space<vmem>>, vector<1x5x16xbf16>
    %231 = vector.shape_cast %230 : vector<1x5x16xbf16> to vector<5x16xbf16>
    %232 = arith.truncf %221 : vector<16x32xf32> to vector<16x32xbf16>
    %cst_175 = arith.constant dense<0.000000e+00> : vector<5x32xf32>
    %233 = tpu.matmul %231, %232, %cst_175 {dimension_numbers = #tpu.dot_dimension_numbers<[1], [0], [0], [1], [0, 0, 1, 1], [], []>} : vector<5x16xbf16>, vector<16x32xbf16>, vector<5x32xf32> -> vector<5x32xf32>
    %c1_176 = arith.constant 1 : index
    %c0_177 = arith.constant 0 : index
    %c0_178 = arith.constant 0 : index
    %234 = vector.load %arg18[%c1_176, %c0_177, %c0_178] : memref<4x32x32xbf16, #tpu.memory_space<vmem>>, vector<1x32x32xbf16>
    %235 = vector.shape_cast %234 : vector<1x32x32xbf16> to vector<32x32xbf16>
    %236 = arith.truncf %233 : vector<5x32xf32> to vector<5x32xbf16>
    %cst_179 = arith.constant dense<0.000000e+00> : vector<5x32xf32>
    %237 = tpu.matmul %236, %235, %cst_179 {dimension_numbers = #tpu.dot_dimension_numbers<[1], [0], [0], [1], [0, 0, 1, 1], [], []>} : vector<5x32xbf16>, vector<32x32xbf16>, vector<5x32xf32> -> vector<5x32xf32>
    %238 = arith.addf %229, %237 : vector<5x32xf32>
    %c2_180 = arith.constant 2 : index
    %c0_181 = arith.constant 0 : index
    %c0_182 = arith.constant 0 : index
    %239 = vector.load %arg17[%c2_180, %c0_181, %c0_182] : memref<4x5x16xbf16, #tpu.memory_space<vmem>>, vector<1x5x16xbf16>
    %240 = vector.shape_cast %239 : vector<1x5x16xbf16> to vector<5x16xbf16>
    %241 = arith.truncf %221 : vector<16x32xf32> to vector<16x32xbf16>
    %cst_183 = arith.constant dense<0.000000e+00> : vector<5x32xf32>
    %242 = tpu.matmul %240, %241, %cst_183 {dimension_numbers = #tpu.dot_dimension_numbers<[1], [0], [0], [1], [0, 0, 1, 1], [], []>} : vector<5x16xbf16>, vector<16x32xbf16>, vector<5x32xf32> -> vector<5x32xf32>
    %c2_184 = arith.constant 2 : index
    %c0_185 = arith.constant 0 : index
    %c0_186 = arith.constant 0 : index
    %243 = vector.load %arg18[%c2_184, %c0_185, %c0_186] : memref<4x32x32xbf16, #tpu.memory_space<vmem>>, vector<1x32x32xbf16>
    %244 = vector.shape_cast %243 : vector<1x32x32xbf16> to vector<32x32xbf16>
    %245 = arith.truncf %242 : vector<5x32xf32> to vector<5x32xbf16>
    %cst_187 = arith.constant dense<0.000000e+00> : vector<5x32xf32>
    %246 = tpu.matmul %245, %244, %cst_187 {dimension_numbers = #tpu.dot_dimension_numbers<[1], [0], [0], [1], [0, 0, 1, 1], [], []>} : vector<5x32xbf16>, vector<32x32xbf16>, vector<5x32xf32> -> vector<5x32xf32>
    %247 = arith.addf %238, %246 : vector<5x32xf32>
    %c3_188 = arith.constant 3 : index
    %c0_189 = arith.constant 0 : index
    %c0_190 = arith.constant 0 : index
    %248 = vector.load %arg17[%c3_188, %c0_189, %c0_190] : memref<4x5x16xbf16, #tpu.memory_space<vmem>>, vector<1x5x16xbf16>
    %249 = vector.shape_cast %248 : vector<1x5x16xbf16> to vector<5x16xbf16>
    %250 = arith.truncf %221 : vector<16x32xf32> to vector<16x32xbf16>
    %cst_191 = arith.constant dense<0.000000e+00> : vector<5x32xf32>
    %251 = tpu.matmul %249, %250, %cst_191 {dimension_numbers = #tpu.dot_dimension_numbers<[1], [0], [0], [1], [0, 0, 1, 1], [], []>} : vector<5x16xbf16>, vector<16x32xbf16>, vector<5x32xf32> -> vector<5x32xf32>
    %c3_192 = arith.constant 3 : index
    %c0_193 = arith.constant 0 : index
    %c0_194 = arith.constant 0 : index
    %252 = vector.load %arg18[%c3_192, %c0_193, %c0_194] : memref<4x32x32xbf16, #tpu.memory_space<vmem>>, vector<1x32x32xbf16>
    %253 = vector.shape_cast %252 : vector<1x32x32xbf16> to vector<32x32xbf16>
    %254 = arith.truncf %251 : vector<5x32xf32> to vector<5x32xbf16>
    %cst_195 = arith.constant dense<0.000000e+00> : vector<5x32xf32>
    %255 = tpu.matmul %254, %253, %cst_195 {dimension_numbers = #tpu.dot_dimension_numbers<[1], [0], [0], [1], [0, 0, 1, 1], [], []>} : vector<5x32xbf16>, vector<32x32xbf16>, vector<5x32xf32> -> vector<5x32xf32>
    %256 = arith.addf %247, %255 : vector<5x32xf32>
    %c0_196 = arith.constant 0 : index
    %c0_197 = arith.constant 0 : index
    %257 = vector.load %arg19[%c0_196, %c0_197] : memref<1x32xf32, #tpu.memory_space<vmem>>, vector<1x32xf32>
    %258 = vector.broadcast %257 : vector<1x32xf32> to vector<5x32xf32>
    %259 = arith.addf %256, %258 : vector<5x32xf32>
    %260 = math.tanh %259 : vector<5x32xf32>
    %c0_198 = arith.constant 0 : index
    %c0_199 = arith.constant 0 : index
    %c0_200 = arith.constant 0 : index
    %261 = vector.load %arg20[%c0_198, %c0_199, %c0_200] : memref<5x5x5xbf16, #tpu.memory_space<vmem>>, vector<1x5x5xbf16>
    %262 = vector.shape_cast %261 : vector<1x5x5xbf16> to vector<5x5xbf16>
    %263 = arith.truncf %260 : vector<5x32xf32> to vector<5x32xbf16>
    %cst_201 = arith.constant dense<0.000000e+00> : vector<5x32xf32>
    %264 = tpu.matmul %262, %263, %cst_201 {dimension_numbers = #tpu.dot_dimension_numbers<[1], [0], [0], [1], [0, 0, 1, 1], [], []>} : vector<5x5xbf16>, vector<5x32xbf16>, vector<5x32xf32> -> vector<5x32xf32>
    %c0_202 = arith.constant 0 : index
    %c0_203 = arith.constant 0 : index
    %c0_204 = arith.constant 0 : index
    %265 = vector.load %arg21[%c0_202, %c0_203, %c0_204] : memref<5x32x32xbf16, #tpu.memory_space<vmem>>, vector<1x32x32xbf16>
    %266 = vector.shape_cast %265 : vector<1x32x32xbf16> to vector<32x32xbf16>
    %267 = arith.truncf %264 : vector<5x32xf32> to vector<5x32xbf16>
    %cst_205 = arith.constant dense<0.000000e+00> : vector<5x32xf32>
    %268 = tpu.matmul %267, %266, %cst_205 {dimension_numbers = #tpu.dot_dimension_numbers<[1], [0], [0], [1], [0, 0, 1, 1], [], []>} : vector<5x32xbf16>, vector<32x32xbf16>, vector<5x32xf32> -> vector<5x32xf32>
    %c1_206 = arith.constant 1 : index
    %c0_207 = arith.constant 0 : index
    %c0_208 = arith.constant 0 : index
    %269 = vector.load %arg20[%c1_206, %c0_207, %c0_208] : memref<5x5x5xbf16, #tpu.memory_space<vmem>>, vector<1x5x5xbf16>
    %270 = vector.shape_cast %269 : vector<1x5x5xbf16> to vector<5x5xbf16>
    %271 = arith.truncf %260 : vector<5x32xf32> to vector<5x32xbf16>
    %cst_209 = arith.constant dense<0.000000e+00> : vector<5x32xf32>
    %272 = tpu.matmul %270, %271, %cst_209 {dimension_numbers = #tpu.dot_dimension_numbers<[1], [0], [0], [1], [0, 0, 1, 1], [], []>} : vector<5x5xbf16>, vector<5x32xbf16>, vector<5x32xf32> -> vector<5x32xf32>
    %c1_210 = arith.constant 1 : index
    %c0_211 = arith.constant 0 : index
    %c0_212 = arith.constant 0 : index
    %273 = vector.load %arg21[%c1_210, %c0_211, %c0_212] : memref<5x32x32xbf16, #tpu.memory_space<vmem>>, vector<1x32x32xbf16>
    %274 = vector.shape_cast %273 : vector<1x32x32xbf16> to vector<32x32xbf16>
    %275 = arith.truncf %272 : vector<5x32xf32> to vector<5x32xbf16>
    %cst_213 = arith.constant dense<0.000000e+00> : vector<5x32xf32>
    %276 = tpu.matmul %275, %274, %cst_213 {dimension_numbers = #tpu.dot_dimension_numbers<[1], [0], [0], [1], [0, 0, 1, 1], [], []>} : vector<5x32xbf16>, vector<32x32xbf16>, vector<5x32xf32> -> vector<5x32xf32>
    %277 = arith.addf %268, %276 : vector<5x32xf32>
    %c2_214 = arith.constant 2 : index
    %c0_215 = arith.constant 0 : index
    %c0_216 = arith.constant 0 : index
    %278 = vector.load %arg20[%c2_214, %c0_215, %c0_216] : memref<5x5x5xbf16, #tpu.memory_space<vmem>>, vector<1x5x5xbf16>
    %279 = vector.shape_cast %278 : vector<1x5x5xbf16> to vector<5x5xbf16>
    %280 = arith.truncf %260 : vector<5x32xf32> to vector<5x32xbf16>
    %cst_217 = arith.constant dense<0.000000e+00> : vector<5x32xf32>
    %281 = tpu.matmul %279, %280, %cst_217 {dimension_numbers = #tpu.dot_dimension_numbers<[1], [0], [0], [1], [0, 0, 1, 1], [], []>} : vector<5x5xbf16>, vector<5x32xbf16>, vector<5x32xf32> -> vector<5x32xf32>
    %c2_218 = arith.constant 2 : index
    %c0_219 = arith.constant 0 : index
    %c0_220 = arith.constant 0 : index
    %282 = vector.load %arg21[%c2_218, %c0_219, %c0_220] : memref<5x32x32xbf16, #tpu.memory_space<vmem>>, vector<1x32x32xbf16>
    %283 = vector.shape_cast %282 : vector<1x32x32xbf16> to vector<32x32xbf16>
    %284 = arith.truncf %281 : vector<5x32xf32> to vector<5x32xbf16>
    %cst_221 = arith.constant dense<0.000000e+00> : vector<5x32xf32>
    %285 = tpu.matmul %284, %283, %cst_221 {dimension_numbers = #tpu.dot_dimension_numbers<[1], [0], [0], [1], [0, 0, 1, 1], [], []>} : vector<5x32xbf16>, vector<32x32xbf16>, vector<5x32xf32> -> vector<5x32xf32>
    %286 = arith.addf %277, %285 : vector<5x32xf32>
    %c3_222 = arith.constant 3 : index
    %c0_223 = arith.constant 0 : index
    %c0_224 = arith.constant 0 : index
    %287 = vector.load %arg20[%c3_222, %c0_223, %c0_224] : memref<5x5x5xbf16, #tpu.memory_space<vmem>>, vector<1x5x5xbf16>
    %288 = vector.shape_cast %287 : vector<1x5x5xbf16> to vector<5x5xbf16>
    %289 = arith.truncf %260 : vector<5x32xf32> to vector<5x32xbf16>
    %cst_225 = arith.constant dense<0.000000e+00> : vector<5x32xf32>
    %290 = tpu.matmul %288, %289, %cst_225 {dimension_numbers = #tpu.dot_dimension_numbers<[1], [0], [0], [1], [0, 0, 1, 1], [], []>} : vector<5x5xbf16>, vector<5x32xbf16>, vector<5x32xf32> -> vector<5x32xf32>
    %c3_226 = arith.constant 3 : index
    %c0_227 = arith.constant 0 : index
    %c0_228 = arith.constant 0 : index
    %291 = vector.load %arg21[%c3_226, %c0_227, %c0_228] : memref<5x32x32xbf16, #tpu.memory_space<vmem>>, vector<1x32x32xbf16>
    %292 = vector.shape_cast %291 : vector<1x32x32xbf16> to vector<32x32xbf16>
    %293 = arith.truncf %290 : vector<5x32xf32> to vector<5x32xbf16>
    %cst_229 = arith.constant dense<0.000000e+00> : vector<5x32xf32>
    %294 = tpu.matmul %293, %292, %cst_229 {dimension_numbers = #tpu.dot_dimension_numbers<[1], [0], [0], [1], [0, 0, 1, 1], [], []>} : vector<5x32xbf16>, vector<32x32xbf16>, vector<5x32xf32> -> vector<5x32xf32>
    %295 = arith.addf %286, %294 : vector<5x32xf32>
    %c4_230 = arith.constant 4 : index
    %c0_231 = arith.constant 0 : index
    %c0_232 = arith.constant 0 : index
    %296 = vector.load %arg20[%c4_230, %c0_231, %c0_232] : memref<5x5x5xbf16, #tpu.memory_space<vmem>>, vector<1x5x5xbf16>
    %297 = vector.shape_cast %296 : vector<1x5x5xbf16> to vector<5x5xbf16>
    %298 = arith.truncf %260 : vector<5x32xf32> to vector<5x32xbf16>
    %cst_233 = arith.constant dense<0.000000e+00> : vector<5x32xf32>
    %299 = tpu.matmul %297, %298, %cst_233 {dimension_numbers = #tpu.dot_dimension_numbers<[1], [0], [0], [1], [0, 0, 1, 1], [], []>} : vector<5x5xbf16>, vector<5x32xbf16>, vector<5x32xf32> -> vector<5x32xf32>
    %c4_234 = arith.constant 4 : index
    %c0_235 = arith.constant 0 : index
    %c0_236 = arith.constant 0 : index
    %300 = vector.load %arg21[%c4_234, %c0_235, %c0_236] : memref<5x32x32xbf16, #tpu.memory_space<vmem>>, vector<1x32x32xbf16>
    %301 = vector.shape_cast %300 : vector<1x32x32xbf16> to vector<32x32xbf16>
    %302 = arith.truncf %299 : vector<5x32xf32> to vector<5x32xbf16>
    %cst_237 = arith.constant dense<0.000000e+00> : vector<5x32xf32>
    %303 = tpu.matmul %302, %301, %cst_237 {dimension_numbers = #tpu.dot_dimension_numbers<[1], [0], [0], [1], [0, 0, 1, 1], [], []>} : vector<5x32xbf16>, vector<32x32xbf16>, vector<5x32xf32> -> vector<5x32xf32>
    %304 = arith.addf %295, %303 : vector<5x32xf32>
    %c0_238 = arith.constant 0 : index
    %c0_239 = arith.constant 0 : index
    %305 = vector.load %arg22[%c0_238, %c0_239] : memref<1x32xf32, #tpu.memory_space<vmem>>, vector<1x32xf32>
    %306 = vector.broadcast %305 : vector<1x32xf32> to vector<5x32xf32>
    %307 = arith.addf %304, %306 : vector<5x32xf32>
    %308 = math.tanh %307 : vector<5x32xf32>
    %309 = arith.addf %308, %260 : vector<5x32xf32>
    %cst_240 = arith.constant dense<0.000000e+00> : vector<5xf32>
    %310 = vector.multi_reduction <add>, %309, %cst_240 [1] : vector<5x32xf32> to vector<5xf32>
    %311 = vector.shape_cast %310 : vector<5xf32> to vector<5x1xf32>
    %cst_241 = arith.constant 3.200000e+01 : f32
    %312 = vector.broadcast %cst_241 : f32 to vector<5x1xf32>
    %313 = arith.divf %311, %312 : vector<5x1xf32>
    %314 = vector.broadcast %313 : vector<5x1xf32> to vector<5x32xf32>
    %315 = arith.subf %309, %314 : vector<5x32xf32>
    %316 = arith.mulf %315, %315 : vector<5x32xf32>
    %cst_242 = arith.constant dense<0.000000e+00> : vector<5xf32>
    %317 = vector.multi_reduction <add>, %316, %cst_242 [1] : vector<5x32xf32> to vector<5xf32>
    %318 = vector.shape_cast %317 : vector<5xf32> to vector<5x1xf32>
    %cst_243 = arith.constant 3.200000e+01 : f32
    %319 = vector.broadcast %cst_243 : f32 to vector<5x1xf32>
    %320 = arith.divf %318, %319 : vector<5x1xf32>
    %cst_244 = arith.constant 9.99999974E-6 : f32
    %321 = vector.broadcast %cst_244 : f32 to vector<5x1xf32>
    %322 = arith.addf %320, %321 : vector<5x1xf32>
    %323 = math.rsqrt %322 : vector<5x1xf32>
    %324 = vector.broadcast %323 : vector<5x1xf32> to vector<5x32xf32>
    %325 = arith.mulf %315, %324 : vector<5x32xf32>
    %326 = vector.broadcast %40 : vector<1x32xf32> to vector<5x32xf32>
    %327 = arith.mulf %325, %326 : vector<5x32xf32>
    %328 = vector.broadcast %41 : vector<1x32xf32> to vector<5x32xf32>
    %329 = arith.addf %327, %328 : vector<5x32xf32>
    %c0_245 = arith.constant 0 : index
    %c0_246 = arith.constant 0 : index
    %c0_247 = arith.constant 0 : index
    %330 = vector.load %arg23[%c0_245, %c0_246, %c0_247] : memref<4x16x5xbf16, #tpu.memory_space<vmem>>, vector<1x16x5xbf16>
    %331 = vector.shape_cast %330 : vector<1x16x5xbf16> to vector<16x5xbf16>
    %c0_248 = arith.constant 0 : index
    %c0_249 = arith.constant 0 : index
    %c0_250 = arith.constant 0 : index
    %332 = vector.load %arg24[%c0_248, %c0_249, %c0_250] : memref<4x32x32xbf16, #tpu.memory_space<vmem>>, vector<1x32x32xbf16>
    %333 = vector.shape_cast %332 : vector<1x32x32xbf16> to vector<32x32xbf16>
    %334 = arith.truncf %329 : vector<5x32xf32> to vector<5x32xbf16>
    %cst_251 = arith.constant dense<0.000000e+00> : vector<5x32xf32>
    %335 = tpu.matmul %334, %333, %cst_251 {dimension_numbers = #tpu.dot_dimension_numbers<[1], [0], [0], [1], [0, 0, 1, 1], [], []>} : vector<5x32xbf16>, vector<32x32xbf16>, vector<5x32xf32> -> vector<5x32xf32>
    %336 = arith.truncf %335 : vector<5x32xf32> to vector<5x32xbf16>
    %cst_252 = arith.constant dense<0.000000e+00> : vector<16x32xf32>
    %337 = tpu.matmul %331, %336, %cst_252 {dimension_numbers = #tpu.dot_dimension_numbers<[1], [0], [0], [1], [0, 0, 1, 1], [], []>} : vector<16x5xbf16>, vector<5x32xbf16>, vector<16x32xf32> -> vector<16x32xf32>
    %c1_253 = arith.constant 1 : index
    %c0_254 = arith.constant 0 : index
    %c0_255 = arith.constant 0 : index
    %338 = vector.load %arg23[%c1_253, %c0_254, %c0_255] : memref<4x16x5xbf16, #tpu.memory_space<vmem>>, vector<1x16x5xbf16>
    %339 = vector.shape_cast %338 : vector<1x16x5xbf16> to vector<16x5xbf16>
    %c1_256 = arith.constant 1 : index
    %c0_257 = arith.constant 0 : index
    %c0_258 = arith.constant 0 : index
    %340 = vector.load %arg24[%c1_256, %c0_257, %c0_258] : memref<4x32x32xbf16, #tpu.memory_space<vmem>>, vector<1x32x32xbf16>
    %341 = vector.shape_cast %340 : vector<1x32x32xbf16> to vector<32x32xbf16>
    %342 = arith.truncf %329 : vector<5x32xf32> to vector<5x32xbf16>
    %cst_259 = arith.constant dense<0.000000e+00> : vector<5x32xf32>
    %343 = tpu.matmul %342, %341, %cst_259 {dimension_numbers = #tpu.dot_dimension_numbers<[1], [0], [0], [1], [0, 0, 1, 1], [], []>} : vector<5x32xbf16>, vector<32x32xbf16>, vector<5x32xf32> -> vector<5x32xf32>
    %344 = arith.truncf %343 : vector<5x32xf32> to vector<5x32xbf16>
    %cst_260 = arith.constant dense<0.000000e+00> : vector<16x32xf32>
    %345 = tpu.matmul %339, %344, %cst_260 {dimension_numbers = #tpu.dot_dimension_numbers<[1], [0], [0], [1], [0, 0, 1, 1], [], []>} : vector<16x5xbf16>, vector<5x32xbf16>, vector<16x32xf32> -> vector<16x32xf32>
    %346 = arith.addf %337, %345 : vector<16x32xf32>
    %c2_261 = arith.constant 2 : index
    %c0_262 = arith.constant 0 : index
    %c0_263 = arith.constant 0 : index
    %347 = vector.load %arg23[%c2_261, %c0_262, %c0_263] : memref<4x16x5xbf16, #tpu.memory_space<vmem>>, vector<1x16x5xbf16>
    %348 = vector.shape_cast %347 : vector<1x16x5xbf16> to vector<16x5xbf16>
    %c2_264 = arith.constant 2 : index
    %c0_265 = arith.constant 0 : index
    %c0_266 = arith.constant 0 : index
    %349 = vector.load %arg24[%c2_264, %c0_265, %c0_266] : memref<4x32x32xbf16, #tpu.memory_space<vmem>>, vector<1x32x32xbf16>
    %350 = vector.shape_cast %349 : vector<1x32x32xbf16> to vector<32x32xbf16>
    %351 = arith.truncf %329 : vector<5x32xf32> to vector<5x32xbf16>
    %cst_267 = arith.constant dense<0.000000e+00> : vector<5x32xf32>
    %352 = tpu.matmul %351, %350, %cst_267 {dimension_numbers = #tpu.dot_dimension_numbers<[1], [0], [0], [1], [0, 0, 1, 1], [], []>} : vector<5x32xbf16>, vector<32x32xbf16>, vector<5x32xf32> -> vector<5x32xf32>
    %353 = arith.truncf %352 : vector<5x32xf32> to vector<5x32xbf16>
    %cst_268 = arith.constant dense<0.000000e+00> : vector<16x32xf32>
    %354 = tpu.matmul %348, %353, %cst_268 {dimension_numbers = #tpu.dot_dimension_numbers<[1], [0], [0], [1], [0, 0, 1, 1], [], []>} : vector<16x5xbf16>, vector<5x32xbf16>, vector<16x32xf32> -> vector<16x32xf32>
    %355 = arith.addf %346, %354 : vector<16x32xf32>
    %c3_269 = arith.constant 3 : index
    %c0_270 = arith.constant 0 : index
    %c0_271 = arith.constant 0 : index
    %356 = vector.load %arg23[%c3_269, %c0_270, %c0_271] : memref<4x16x5xbf16, #tpu.memory_space<vmem>>, vector<1x16x5xbf16>
    %357 = vector.shape_cast %356 : vector<1x16x5xbf16> to vector<16x5xbf16>
    %c3_272 = arith.constant 3 : index
    %c0_273 = arith.constant 0 : index
    %c0_274 = arith.constant 0 : index
    %358 = vector.load %arg24[%c3_272, %c0_273, %c0_274] : memref<4x32x32xbf16, #tpu.memory_space<vmem>>, vector<1x32x32xbf16>
    %359 = vector.shape_cast %358 : vector<1x32x32xbf16> to vector<32x32xbf16>
    %360 = arith.truncf %329 : vector<5x32xf32> to vector<5x32xbf16>
    %cst_275 = arith.constant dense<0.000000e+00> : vector<5x32xf32>
    %361 = tpu.matmul %360, %359, %cst_275 {dimension_numbers = #tpu.dot_dimension_numbers<[1], [0], [0], [1], [0, 0, 1, 1], [], []>} : vector<5x32xbf16>, vector<32x32xbf16>, vector<5x32xf32> -> vector<5x32xf32>
    %362 = arith.truncf %361 : vector<5x32xf32> to vector<5x32xbf16>
    %cst_276 = arith.constant dense<0.000000e+00> : vector<16x32xf32>
    %363 = tpu.matmul %357, %362, %cst_276 {dimension_numbers = #tpu.dot_dimension_numbers<[1], [0], [0], [1], [0, 0, 1, 1], [], []>} : vector<16x5xbf16>, vector<5x32xbf16>, vector<16x32xf32> -> vector<16x32xf32>
    %364 = arith.addf %355, %363 : vector<16x32xf32>
    %c0_277 = arith.constant 0 : index
    %c0_278 = arith.constant 0 : index
    %365 = vector.load %arg25[%c0_277, %c0_278] : memref<1x32xf32, #tpu.memory_space<vmem>>, vector<1x32xf32>
    %366 = vector.broadcast %365 : vector<1x32xf32> to vector<16x32xf32>
    %367 = arith.addf %364, %366 : vector<16x32xf32>
    %368 = math.tanh %367 : vector<16x32xf32>
    %369 = arith.addf %368, %221 : vector<16x32xf32>
    %cst_279 = arith.constant dense<0.000000e+00> : vector<16xf32>
    %370 = vector.multi_reduction <add>, %369, %cst_279 [1] : vector<16x32xf32> to vector<16xf32>
    %371 = vector.shape_cast %370 : vector<16xf32> to vector<16x1xf32>
    %cst_280 = arith.constant 3.200000e+01 : f32
    %372 = vector.broadcast %cst_280 : f32 to vector<16x1xf32>
    %373 = arith.divf %371, %372 : vector<16x1xf32>
    %374 = vector.broadcast %373 : vector<16x1xf32> to vector<16x32xf32>
    %375 = arith.subf %369, %374 : vector<16x32xf32>
    %376 = arith.mulf %375, %375 : vector<16x32xf32>
    %cst_281 = arith.constant dense<0.000000e+00> : vector<16xf32>
    %377 = vector.multi_reduction <add>, %376, %cst_281 [1] : vector<16x32xf32> to vector<16xf32>
    %378 = vector.shape_cast %377 : vector<16xf32> to vector<16x1xf32>
    %cst_282 = arith.constant 3.200000e+01 : f32
    %379 = vector.broadcast %cst_282 : f32 to vector<16x1xf32>
    %380 = arith.divf %378, %379 : vector<16x1xf32>
    %cst_283 = arith.constant 9.99999974E-6 : f32
    %381 = vector.broadcast %cst_283 : f32 to vector<16x1xf32>
    %382 = arith.addf %380, %381 : vector<16x1xf32>
    %383 = math.rsqrt %382 : vector<16x1xf32>
    %384 = vector.broadcast %383 : vector<16x1xf32> to vector<16x32xf32>
    %385 = arith.mulf %375, %384 : vector<16x32xf32>
    %386 = vector.broadcast %40 : vector<1x32xf32> to vector<16x32xf32>
    %387 = arith.mulf %385, %386 : vector<16x32xf32>
    %388 = vector.broadcast %41 : vector<1x32xf32> to vector<16x32xf32>
    %389 = arith.addf %387, %388 : vector<16x32xf32>
    %c1_284 = arith.constant 1 : index
    %c0_285 = arith.constant 0 : index
    %c0_286 = arith.constant 0 : index
    %390 = vector.load %arg28[%c1_284, %c0_285, %c0_286] : memref<2x32x32xbf16, #tpu.memory_space<vmem>>, vector<1x32x32xbf16>
    %391 = vector.shape_cast %390 : vector<1x32x32xbf16> to vector<32x32xbf16>
    %392 = arith.truncf %389 : vector<16x32xf32> to vector<16x32xbf16>
    %cst_287 = arith.constant dense<0.000000e+00> : vector<16x32xf32>
    %393 = tpu.matmul %392, %391, %cst_287 {dimension_numbers = #tpu.dot_dimension_numbers<[1], [0], [0], [1], [0, 0, 1, 1], [], []>} : vector<16x32xbf16>, vector<32x32xbf16>, vector<16x32xf32> -> vector<16x32xf32>
    %394 = arith.addf %217, %393 : vector<16x32xf32>
    %c0_288 = arith.constant 0 : index
    %c0_289 = arith.constant 0 : index
    %395 = vector.load %arg29[%c0_288, %c0_289] : memref<1x32xf32, #tpu.memory_space<vmem>>, vector<1x32xf32>
    %396 = vector.broadcast %395 : vector<1x32xf32> to vector<16x32xf32>
    %397 = arith.addf %394, %396 : vector<16x32xf32>
    %c0_290 = arith.constant 0 : index
    %c0_291 = arith.constant 0 : index
    %398 = vector.load %arg30[%c0_290, %c0_291] : memref<1x32xf32, #tpu.memory_space<vmem>>, vector<1x32xf32>
    %c0_292 = arith.constant 0 : index
    %c0_293 = arith.constant 0 : index
    %399 = vector.load %arg31[%c0_292, %c0_293] : memref<1x32xf32, #tpu.memory_space<vmem>>, vector<1x32xf32>
    %cst_294 = arith.constant dense<0.000000e+00> : vector<16xf32>
    %400 = vector.multi_reduction <add>, %397, %cst_294 [1] : vector<16x32xf32> to vector<16xf32>
    %401 = vector.shape_cast %400 : vector<16xf32> to vector<16x1xf32>
    %cst_295 = arith.constant 3.200000e+01 : f32
    %402 = vector.broadcast %cst_295 : f32 to vector<16x1xf32>
    %403 = arith.divf %401, %402 : vector<16x1xf32>
    %404 = vector.broadcast %403 : vector<16x1xf32> to vector<16x32xf32>
    %405 = arith.subf %397, %404 : vector<16x32xf32>
    %406 = arith.mulf %405, %405 : vector<16x32xf32>
    %cst_296 = arith.constant dense<0.000000e+00> : vector<16xf32>
    %407 = vector.multi_reduction <add>, %406, %cst_296 [1] : vector<16x32xf32> to vector<16xf32>
    %408 = vector.shape_cast %407 : vector<16xf32> to vector<16x1xf32>
    %cst_297 = arith.constant 3.200000e+01 : f32
    %409 = vector.broadcast %cst_297 : f32 to vector<16x1xf32>
    %410 = arith.divf %408, %409 : vector<16x1xf32>
    %cst_298 = arith.constant 9.99999974E-6 : f32
    %411 = vector.broadcast %cst_298 : f32 to vector<16x1xf32>
    %412 = arith.addf %410, %411 : vector<16x1xf32>
    %413 = math.rsqrt %412 : vector<16x1xf32>
    %414 = vector.broadcast %413 : vector<16x1xf32> to vector<16x32xf32>
    %415 = arith.mulf %405, %414 : vector<16x32xf32>
    %416 = vector.broadcast %398 : vector<1x32xf32> to vector<16x32xf32>
    %417 = arith.mulf %415, %416 : vector<16x32xf32>
    %418 = vector.broadcast %399 : vector<1x32xf32> to vector<16x32xf32>
    %419 = arith.addf %417, %418 : vector<16x32xf32>
    %c0_299 = arith.constant 0 : index
    %c0_300 = arith.constant 0 : index
    %420 = vector.load %arg32[%c0_299, %c0_300] : memref<32x128xbf16, #tpu.memory_space<vmem>>, vector<32x128xbf16>
    %421 = arith.truncf %419 : vector<16x32xf32> to vector<16x32xbf16>
    %cst_301 = arith.constant dense<0.000000e+00> : vector<16x128xf32>
    %422 = tpu.matmul %421, %420, %cst_301 {dimension_numbers = #tpu.dot_dimension_numbers<[1], [0], [0], [1], [0, 0, 1, 1], [], []>} : vector<16x32xbf16>, vector<32x128xbf16>, vector<16x128xf32> -> vector<16x128xf32>
    %c0_302 = arith.constant 0 : index
    %c0_303 = arith.constant 0 : index
    %423 = vector.load %arg33[%c0_302, %c0_303] : memref<1x128xf32, #tpu.memory_space<vmem>>, vector<1x128xf32>
    %424 = vector.broadcast %423 : vector<1x128xf32> to vector<16x128xf32>
    %425 = arith.addf %422, %424 : vector<16x128xf32>
    %c0_304 = arith.constant 0 : index
    %c0_305 = arith.constant 0 : index
    %426 = vector.load %arg34[%c0_304, %c0_305] : memref<128x32xbf16, #tpu.memory_space<vmem>>, vector<128x32xbf16>
    %427 = arith.truncf %425 : vector<16x128xf32> to vector<16x128xbf16>
    %cst_306 = arith.constant dense<0.000000e+00> : vector<16x32xf32>
    %428 = tpu.matmul %427, %426, %cst_306 {dimension_numbers = #tpu.dot_dimension_numbers<[1], [0], [0], [1], [0, 0, 1, 1], [], []>} : vector<16x128xbf16>, vector<128x32xbf16>, vector<16x32xf32> -> vector<16x32xf32>
    %c0_307 = arith.constant 0 : index
    %c0_308 = arith.constant 0 : index
    %429 = vector.load %arg35[%c0_307, %c0_308] : memref<1x32xf32, #tpu.memory_space<vmem>>, vector<1x32xf32>
    %430 = vector.broadcast %429 : vector<1x32xf32> to vector<16x32xf32>
    %431 = arith.addf %428, %430 : vector<16x32xf32>
    %432 = arith.addf %397, %431 : vector<16x32xf32>
    %c0_309 = arith.constant 0 : index
    %c0_310 = arith.constant 0 : index
    %433 = vector.load %arg36[%c0_309, %c0_310] : memref<1x32xf32, #tpu.memory_space<vmem>>, vector<1x32xf32>
    %c0_311 = arith.constant 0 : index
    %c0_312 = arith.constant 0 : index
    %434 = vector.load %arg37[%c0_311, %c0_312] : memref<1x32xf32, #tpu.memory_space<vmem>>, vector<1x32xf32>
    %cst_313 = arith.constant dense<0.000000e+00> : vector<16xf32>
    %435 = vector.multi_reduction <add>, %432, %cst_313 [1] : vector<16x32xf32> to vector<16xf32>
    %436 = vector.shape_cast %435 : vector<16xf32> to vector<16x1xf32>
    %cst_314 = arith.constant 3.200000e+01 : f32
    %437 = vector.broadcast %cst_314 : f32 to vector<16x1xf32>
    %438 = arith.divf %436, %437 : vector<16x1xf32>
    %439 = vector.broadcast %438 : vector<16x1xf32> to vector<16x32xf32>
    %440 = arith.subf %432, %439 : vector<16x32xf32>
    %441 = arith.mulf %440, %440 : vector<16x32xf32>
    %cst_315 = arith.constant dense<0.000000e+00> : vector<16xf32>
    %442 = vector.multi_reduction <add>, %441, %cst_315 [1] : vector<16x32xf32> to vector<16xf32>
    %443 = vector.shape_cast %442 : vector<16xf32> to vector<16x1xf32>
    %cst_316 = arith.constant 3.200000e+01 : f32
    %444 = vector.broadcast %cst_316 : f32 to vector<16x1xf32>
    %445 = arith.divf %443, %444 : vector<16x1xf32>
    %cst_317 = arith.constant 9.99999974E-6 : f32
    %446 = vector.broadcast %cst_317 : f32 to vector<16x1xf32>
    %447 = arith.addf %445, %446 : vector<16x1xf32>
    %448 = math.rsqrt %447 : vector<16x1xf32>
    %449 = vector.broadcast %448 : vector<16x1xf32> to vector<16x32xf32>
    %450 = arith.mulf %440, %449 : vector<16x32xf32>
    %451 = vector.broadcast %433 : vector<1x32xf32> to vector<16x32xf32>
    %452 = arith.mulf %450, %451 : vector<16x32xf32>
    %453 = vector.broadcast %434 : vector<1x32xf32> to vector<16x32xf32>
    %454 = arith.addf %452, %453 : vector<16x32xf32>
    %c0_318 = arith.constant 0 : index
    %c0_319 = arith.constant 0 : index
    %455 = vector.load %arg38[%c0_318, %c0_319] : memref<32x4xbf16, #tpu.memory_space<vmem>>, vector<32x4xbf16>
    %456 = arith.truncf %454 : vector<16x32xf32> to vector<16x32xbf16>
    %cst_320 = arith.constant dense<0.000000e+00> : vector<16x4xf32>
    %457 = tpu.matmul %456, %455, %cst_320 {dimension_numbers = #tpu.dot_dimension_numbers<[1], [0], [0], [1], [0, 0, 1, 1], [], []>} : vector<16x32xbf16>, vector<32x4xbf16>, vector<16x4xf32> -> vector<16x4xf32>
    %c0_321 = arith.constant 0 : index
    %c0_322 = arith.constant 0 : index
    %458 = vector.load %arg39[%c0_321, %c0_322] : memref<1x4xf32, #tpu.memory_space<vmem>>, vector<1x4xf32>
    %459 = vector.broadcast %458 : vector<1x4xf32> to vector<16x4xf32>
    %460 = arith.addf %457, %459 : vector<16x4xf32>
    %461 = arith.addf %460, %10 : vector<16x4xf32>
    %c0_323 = arith.constant 0 : index
    %c0_324 = arith.constant 0 : index
    %462 = vector.load %arg40[%c0_323, %c0_324] : memref<4x128xbf16, #tpu.memory_space<vmem>>, vector<4x128xbf16>
    %463 = arith.truncf %461 : vector<16x4xf32> to vector<16x4xbf16>
    %cst_325 = arith.constant dense<0.000000e+00> : vector<16x128xf32>
    %464 = tpu.matmul %463, %462, %cst_325 {dimension_numbers = #tpu.dot_dimension_numbers<[1], [0], [0], [1], [0, 0, 1, 1], [], []>} : vector<16x4xbf16>, vector<4x128xbf16>, vector<16x128xf32> -> vector<16x128xf32>
    %c0_326 = arith.constant 0 : index
    %c0_327 = arith.constant 0 : index
    %465 = vector.load %arg41[%c0_326, %c0_327] : memref<1x128xf32, #tpu.memory_space<vmem>>, vector<1x128xf32>
    %466 = vector.broadcast %465 : vector<1x128xf32> to vector<16x128xf32>
    %467 = arith.addf %464, %466 : vector<16x128xf32>
    %c0_328 = arith.constant 0 : index
    %c0_329 = arith.constant 0 : index
    %468 = vector.load %arg42[%c0_328, %c0_329] : memref<16x128xf32, #tpu.memory_space<vmem>>, vector<16x128xf32>
    tpu.vector_store %arg42[%c0_328, %c0_329], %467 {strides = array<i32>} : memref<16x128xf32, #tpu.memory_space<vmem>>, vector<16x128xf32>,
    return
  }
  func.func @transform_0(%arg0: i32) -> (i32, i32) {
    %c0_i32 = arith.constant 0 : i32
    %c0_i32_0 = arith.constant 0 : i32
    return %arg0, %c0_i32 : i32, i32
  }
  func.func @transform_1(%arg0: i32) -> (i32, i32) {
    %c0_i32 = arith.constant 0 : i32
    %c0_i32_0 = arith.constant 0 : i32
    return %arg0, %c0_i32 : i32, i32
  }
  func.func @transform_2(%arg0: i32) -> (i32, i32, i32) {
    %c0_i32 = arith.constant 0 : i32
    %c0_i32_0 = arith.constant 0 : i32
    %c0_i32_1 = arith.constant 0 : i32
    %c0_i32_2 = arith.constant 0 : i32
    return %c0_i32, %c0_i32_0, %c0_i32_1 : i32, i32, i32
  }
  func.func @transform_3(%arg0: i32) -> (i32, i32, i32) {
    %c0_i32 = arith.constant 0 : i32
    %c0_i32_0 = arith.constant 0 : i32
    %c0_i32_1 = arith.constant 0 : i32
    %c0_i32_2 = arith.constant 0 : i32
    return %c0_i32, %c0_i32_0, %c0_i32_1 : i32, i32, i32
  }
  func.func @transform_4(%arg0: i32) -> (i32, i32, i32) {
    %c0_i32 = arith.constant 0 : i32
    %c0_i32_0 = arith.constant 0 : i32
    %c0_i32_1 = arith.constant 0 : i32
    %c0_i32_2 = arith.constant 0 : i32
    return %c0_i32, %c0_i32_0, %c0_i32_1 : i32, i32, i32
  }
  func.func @transform_5(%arg0: i32) -> (i32, i32) {
    %c0_i32 = arith.constant 0 : i32
    %c0_i32_0 = arith.constant 0 : i32
    %c0_i32_1 = arith.constant 0 : i32
    return %c0_i32, %c0_i32_0 : i32, i32
  }
  func.func @transform_6(%arg0: i32) -> (i32, i32) {
    %c0_i32 = arith.constant 0 : i32
    %c0_i32_0 = arith.constant 0 : i32
    %c0_i32_1 = arith.constant 0 : i32
    return %c0_i32, %c0_i32_0 : i32, i32
  }
  func.func @transform_7(%arg0: i32) -> (i32, i32, i32) {
    %c0_i32 = arith.constant 0 : i32
    %c0_i32_0 = arith.constant 0 : i32
    %c0_i32_1 = arith.constant 0 : i32
    %c0_i32_2 = arith.constant 0 : i32
    return %c0_i32, %c0_i32_0, %c0_i32_1 : i32, i32, i32
  }
  func.func @transform_8(%arg0: i32) -> (i32, i32, i32) {
    %c0_i32 = arith.constant 0 : i32
    %c0_i32_0 = arith.constant 0 : i32
    %c0_i32_1 = arith.constant 0 : i32
    %c0_i32_2 = arith.constant 0 : i32
    return %c0_i32, %c0_i32_0, %c0_i32_1 : i32, i32, i32
  }
  func.func @transform_9(%arg0: i32) -> (i32, i32) {
    %c0_i32 = arith.constant 0 : i32
    %c0_i32_0 = arith.constant 0 : i32
    %c0_i32_1 = arith.constant 0 : i32
    return %c0_i32, %c0_i32_0 : i32, i32
  }
  func.func @transform_10(%arg0: i32) -> (i32, i32, i32) {
    %c0_i32 = arith.constant 0 : i32
    %c0_i32_0 = arith.constant 0 : i32
    %c0_i32_1 = arith.constant 0 : i32
    %c0_i32_2 = arith.constant 0 : i32
    return %c0_i32, %c0_i32_0, %c0_i32_1 : i32, i32, i32
  }
  func.func @transform_11(%arg0: i32) -> (i32, i32, i32) {
    %c0_i32 = arith.constant 0 : i32
    %c0_i32_0 = arith.constant 0 : i32
    %c0_i32_1 = arith.constant 0 : i32
    %c0_i32_2 = arith.constant 0 : i32
    return %c0_i32, %c0_i32_0, %c0_i32_1 : i32, i32, i32
  }
  func.func @transform_12(%arg0: i32) -> (i32, i32) {
    %c0_i32 = arith.constant 0 : i32
    %c0_i32_0 = arith.constant 0 : i32
    %c0_i32_1 = arith.constant 0 : i32
    return %c0_i32, %c0_i32_0 : i32, i32
  }
  func.func @transform_13(%arg0: i32) -> (i32, i32, i32) {
    %c0_i32 = arith.constant 0 : i32
    %c0_i32_0 = arith.constant 0 : i32
    %c0_i32_1 = arith.constant 0 : i32
    %c0_i32_2 = arith.constant 0 : i32
    return %c0_i32, %c0_i32_0, %c0_i32_1 : i32, i32, i32
  }
  func.func @transform_14(%arg0: i32) -> (i32, i32, i32) {
    %c0_i32 = arith.constant 0 : i32
    %c0_i32_0 = arith.constant 0 : i32
    %c0_i32_1 = arith.constant 0 : i32
    %c0_i32_2 = arith.constant 0 : i32
    return %c0_i32, %c0_i32_0, %c0_i32_1 : i32, i32, i32
  }
  func.func @transform_15(%arg0: i32) -> (i32, i32) {
    %c0_i32 = arith.constant 0 : i32
    %c0_i32_0 = arith.constant 0 : i32
    %c0_i32_1 = arith.constant 0 : i32
    return %c0_i32, %c0_i32_0 : i32, i32
  }
  func.func @transform_16(%arg0: i32) -> (i32, i32, i32) {
    %c0_i32 = arith.constant 0 : i32
    %c0_i32_0 = arith.constant 0 : i32
    %c0_i32_1 = arith.constant 0 : i32
    %c0_i32_2 = arith.constant 0 : i32
    return %c0_i32, %c0_i32_0, %c0_i32_1 : i32, i32, i32
  }
  func.func @transform_17(%arg0: i32) -> (i32, i32, i32) {
    %c0_i32 = arith.constant 0 : i32
    %c0_i32_0 = arith.constant 0 : i32
    %c0_i32_1 = arith.constant 0 : i32
    %c0_i32_2 = arith.constant 0 : i32
    return %c0_i32, %c0_i32_0, %c0_i32_1 : i32, i32, i32
  }
  func.func @transform_18(%arg0: i32) -> (i32, i32) {
    %c0_i32 = arith.constant 0 : i32
    %c0_i32_0 = arith.constant 0 : i32
    %c0_i32_1 = arith.constant 0 : i32
    return %c0_i32, %c0_i32_0 : i32, i32
  }
  func.func @transform_19(%arg0: i32) -> (i32, i32, i32) {
    %c0_i32 = arith.constant 0 : i32
    %c0_i32_0 = arith.constant 0 : i32
    %c0_i32_1 = arith.constant 0 : i32
    %c0_i32_2 = arith.constant 0 : i32
    return %c0_i32, %c0_i32_0, %c0_i32_1 : i32, i32, i32
  }
  func.func @transform_20(%arg0: i32) -> (i32, i32, i32) {
    %c0_i32 = arith.constant 0 : i32
    %c0_i32_0 = arith.constant 0 : i32
    %c0_i32_1 = arith.constant 0 : i32
    %c0_i32_2 = arith.constant 0 : i32
    return %c0_i32, %c0_i32_0, %c0_i32_1 : i32, i32, i32
  }
  func.func @transform_21(%arg0: i32) -> (i32, i32) {
    %c0_i32 = arith.constant 0 : i32
    %c0_i32_0 = arith.constant 0 : i32
    %c0_i32_1 = arith.constant 0 : i32
    return %c0_i32, %c0_i32_0 : i32, i32
  }
  func.func @transform_22(%arg0: i32) -> (i32, i32, i32) {
    %c0_i32 = arith.constant 0 : i32
    %c0_i32_0 = arith.constant 0 : i32
    %c0_i32_1 = arith.constant 0 : i32
    %c0_i32_2 = arith.constant 0 : i32
    return %c0_i32, %c0_i32_0, %c0_i32_1 : i32, i32, i32
  }
  func.func @transform_23(%arg0: i32) -> (i32, i32, i32) {
    %c0_i32 = arith.constant 0 : i32
    %c0_i32_0 = arith.constant 0 : i32
    %c0_i32_1 = arith.constant 0 : i32
    %c0_i32_2 = arith.constant 0 : i32
    return %c0_i32, %c0_i32_0, %c0_i32_1 : i32, i32, i32
  }
  func.func @transform_24(%arg0: i32) -> (i32, i32) {
    %c0_i32 = arith.constant 0 : i32
    %c0_i32_0 = arith.constant 0 : i32
    %c0_i32_1 = arith.constant 0 : i32
    return %c0_i32, %c0_i32_0 : i32, i32
  }
  func.func @transform_25(%arg0: i32) -> (i32, i32) {
    %c0_i32 = arith.constant 0 : i32
    %c0_i32_0 = arith.constant 0 : i32
    %c0_i32_1 = arith.constant 0 : i32
    return %c0_i32, %c0_i32_0 : i32, i32
  }
  func.func @transform_26(%arg0: i32) -> (i32, i32) {
    %c0_i32 = arith.constant 0 : i32
    %c0_i32_0 = arith.constant 0 : i32
    %c0_i32_1 = arith.constant 0 : i32
    return %c0_i32, %c0_i32_0 : i32, i32
  }
  func.func @transform_27(%arg0: i32) -> (i32, i32, i32) {
    %c0_i32 = arith.constant 0 : i32
    %c0_i32_0 = arith.constant 0 : i32
    %c0_i32_1 = arith.constant 0 : i32
    %c0_i32_2 = arith.constant 0 : i32
    return %c0_i32, %c0_i32_0, %c0_i32_1 : i32, i32, i32
  }
  func.func @transform_28(%arg0: i32) -> (i32, i32) {
    %c0_i32 = arith.constant 0 : i32
    %c0_i32_0 = arith.constant 0 : i32
    %c0_i32_1 = arith.constant 0 : i32
    return %c0_i32, %c0_i32_0 : i32, i32
  }
  func.func @transform_29(%arg0: i32) -> (i32, i32) {
    %c0_i32 = arith.constant 0 : i32
    %c0_i32_0 = arith.constant 0 : i32
    %c0_i32_1 = arith.constant 0 : i32
    return %c0_i32, %c0_i32_0 : i32, i32
  }
  func.func @transform_30(%arg0: i32) -> (i32, i32) {
    %c0_i32 = arith.constant 0 : i32
    %c0_i32_0 = arith.constant 0 : i32
    %c0_i32_1 = arith.constant 0 : i32
    return %c0_i32, %c0_i32_0 : i32, i32
  }
  func.func @transform_31(%arg0: i32) -> (i32, i32) {
    %c0_i32 = arith.constant 0 : i32
    %c0_i32_0 = arith.constant 0 : i32
    %c0_i32_1 = arith.constant 0 : i32
    return %c0_i32, %c0_i32_0 : i32, i32
  }
  func.func @transform_32(%arg0: i32) -> (i32, i32) {
    %c0_i32 = arith.constant 0 : i32
    %c0_i32_0 = arith.constant 0 : i32
    %c0_i32_1 = arith.constant 0 : i32
    return %c0_i32, %c0_i32_0 : i32, i32
  }
  func.func @transform_33(%arg0: i32) -> (i32, i32) {
    %c0_i32 = arith.constant 0 : i32
    %c0_i32_0 = arith.constant 0 : i32
    %c0_i32_1 = arith.constant 0 : i32
    return %c0_i32, %c0_i32_0 : i32, i32
  }
  func.func @transform_34(%arg0: i32) -> (i32, i32) {
    %c0_i32 = arith.constant 0 : i32
    %c0_i32_0 = arith.constant 0 : i32
    %c0_i32_1 = arith.constant 0 : i32
    return %c0_i32, %c0_i32_0 : i32, i32
  }
  func.func @transform_35(%arg0: i32) -> (i32, i32) {
    %c0_i32 = arith.constant 0 : i32
    %c0_i32_0 = arith.constant 0 : i32
    %c0_i32_1 = arith.constant 0 : i32
    return %c0_i32, %c0_i32_0 : i32, i32
  }
  func.func @transform_36(%arg0: i32) -> (i32, i32) {
    %c0_i32 = arith.constant 0 : i32
    %c0_i32_0 = arith.constant 0 : i32
    %c0_i32_1 = arith.constant 0 : i32
    return %c0_i32, %c0_i32_0 : i32, i32
  }
  func.func @transform_37(%arg0: i32) -> (i32, i32) {
    %c0_i32 = arith.constant 0 : i32
    %c0_i32_0 = arith.constant 0 : i32
    %c0_i32_1 = arith.constant 0 : i32
    return %c0_i32, %c0_i32_0 : i32, i32
  }
  func.func @transform_38(%arg0: i32) -> (i32, i32) {
    %c0_i32 = arith.constant 0 : i32
    %c0_i32_0 = arith.constant 0 : i32
    %c0_i32_1 = arith.constant 0 : i32
    return %c0_i32, %c0_i32_0 : i32, i32
  }
  func.func @transform_39(%arg0: i32) -> (i32, i32) {
    %c0_i32 = arith.constant 0 : i32
    %c0_i32_0 = arith.constant 0 : i32
    %c0_i32_1 = arith.constant 0 : i32
    return %c0_i32, %c0_i32_0 : i32, i32
  }
  func.func @transform_40(%arg0: i32) -> (i32, i32) {
    %c0_i32 = arith.constant 0 : i32
    %c0_i32_0 = arith.constant 0 : i32
    %c0_i32_1 = arith.constant 0 : i32
    return %c0_i32, %c0_i32_0 : i32, i32
  }
  func.func @transform_41(%arg0: i32) -> (i32, i32) {
    %c0_i32 = arith.constant 0 : i32
    %c0_i32_0 = arith.constant 0 : i32
    return %arg0, %c0_i32 : i32, i32
  }
}

</mosaic_0001>

<llo_original>
// kernel: _lambda_.1
$region0: #{_lambda_.1}
  #allocation0 [shape = 'u32[]', space=smem, size = 0x4, offset = 0x4, fixed_abs, tag = 'smem constant byte address 0x4 - core index']
  #allocation1 [shape = 'u32[144,128]{1,0:T(1,128)}', space=vmem, size = 0x12000, scoped, tag = 'internal scratch']
  %s0 = inlined_call_operand.smem [shape: u32[42], index: -1, kind: input, shape index: {}]
  %s1 = sld [smem:[%s0]]
  %s2 = scalar_lea.smem %s0, 1
  %s3 = sld [smem:[%s2]]
  %s4 = scalar_lea.smem %s0, 2
  %s5 = sld [smem:[%s4]]
  %s6 = scalar_lea.smem %s0, 3
  %s7 = sld [smem:[%s6]]
  %s8 = scalar_lea.smem %s0, 4
  %s9 = sld [smem:[%s8]]
  %s10 = scalar_lea.smem %s0, 5
  %s11 = sld [smem:[%s10]]
  %s12 = scalar_lea.smem %s0, 6
  %s13 = sld [smem:[%s12]]
  %s14 = scalar_lea.smem %s0, 7
  %s15 = sld [smem:[%s14]]
  %s16 = scalar_lea.smem %s0, 8
  %s17 = sld [smem:[%s16]]
  %s18 = scalar_lea.smem %s0, 9
  %s19 = sld [smem:[%s18]]
  %s20 = scalar_lea.smem %s0, 10
  %s21 = sld [smem:[%s20]]
  %s22 = scalar_lea.smem %s0, 11
  %s23 = sld [smem:[%s22]]
  %s24 = scalar_lea.smem %s0, 12
  %s25 = sld [smem:[%s24]]
  %s26 = scalar_lea.smem %s0, 13
  %s27 = sld [smem:[%s26]]
  %s28 = scalar_lea.smem %s0, 14
  %s29 = sld [smem:[%s28]]
  %s30 = scalar_lea.smem %s0, 15
  %s31 = sld [smem:[%s30]]
  %s32 = scalar_lea.smem %s0, 16
  %s33 = sld [smem:[%s32]]
  %s34 = scalar_lea.smem %s0, 17
  %s35 = sld [smem:[%s34]]
  %s36 = scalar_lea.smem %s0, 18
  %s37 = sld [smem:[%s36]]
  %s38 = scalar_lea.smem %s0, 19
  %s39 = sld [smem:[%s38]]
  %s40 = scalar_lea.smem %s0, 20
  %s41 = sld [smem:[%s40]]
  %s42 = scalar_lea.smem %s0, 21
  %s43 = sld [smem:[%s42]]
  %s44 = scalar_lea.smem %s0, 22
  %s45 = sld [smem:[%s44]]
  %s46 = scalar_lea.smem %s0, 23
  %s47 = sld [smem:[%s46]]
  %s48 = scalar_lea.smem %s0, 24
  %s49 = sld [smem:[%s48]]
  %s50 = scalar_lea.smem %s0, 25
  %s51 = sld [smem:[%s50]]
  %s52 = scalar_lea.smem %s0, 26
  %s53 = sld [smem:[%s52]]
  %s54 = scalar_lea.smem %s0, 27
  %s55 = sld [smem:[%s54]]
  %s56 = scalar_lea.smem %s0, 28
  %s57 = sld [smem:[%s56]]
  %s58 = scalar_lea.smem %s0, 29
  %s59 = sld [smem:[%s58]]
  %s60 = scalar_lea.smem %s0, 30
  %s61 = sld [smem:[%s60]]
  %s62 = scalar_lea.smem %s0, 31
  %s63 = sld [smem:[%s62]]
  %s64 = scalar_lea.smem %s0, 32
  %s65 = sld [smem:[%s64]]
  %s66 = scalar_lea.smem %s0, 33
  %s67 = sld [smem:[%s66]]
  %s68 = scalar_lea.smem %s0, 34
  %s69 = sld [smem:[%s68]]
  %s70 = scalar_lea.smem %s0, 35
  %s71 = sld [smem:[%s70]]
  %s72 = scalar_lea.smem %s0, 36
  %s73 = sld [smem:[%s72]]
  %s74 = scalar_lea.smem %s0, 37
  %s75 = sld [smem:[%s74]]
  %s76 = scalar_lea.smem %s0, 38
  %s77 = sld [smem:[%s76]]
  %s78 = scalar_lea.smem %s0, 39
  %s79 = sld [smem:[%s78]]
  %s80 = scalar_lea.smem %s0, 40
  %s81 = sld [smem:[%s80]]
  %s82 = scalar_lea.smem %s0, 41
  %s83 = sld [smem:[%s82]]
  %s84 = sld [smem:[#allocation0]]
  $region197: #{_lambda_.1} parent=0
    _
  %s86 = ssub.s32 1, %s84
  %s87 = scalar_select 0, %s86, %s84
  loop: start=0, step=1, limit=4
  $region2: #{_lambda_.1} parent=0 // loop_pre_header
    _
  $region3: #{_lambda_.1} parent=0 // loop_header
    %s89 = sphi 0, %s93
    %p90 = scmp.ge.s32.totalorder %s89, 4
    %s99 = sphi 0, %s101
    %s102 = sphi 0, %s99
    %s103 = sphi 0, %s102
    %s119 = sphi 0, %s103
    %s125 = sphi 0, %s127
    %s128 = sphi 0, %s125
    %s129 = sphi 0, %s128
    %s145 = sphi 0, %s129
    %s149 = sphi 0, %s149
    %s151 = sphi 0, %s149
    %s152 = sphi 0, %s151
    %s166 = sphi 0, %s152
    %s170 = sphi 0, %s170
    %s172 = sphi 0, %s170
    %s173 = sphi 0, %s172
    %s187 = sphi 0, %s173
    %s191 = sphi 0, %s191
    %s193 = sphi 0, %s191
    %s194 = sphi 0, %s193
    %s208 = sphi 0, %s194
    %s212 = sphi 0, %s212
    %s214 = sphi 0, %s212
    %s215 = sphi 0, %s214
    %s229 = sphi 0, %s215
    %s233 = sphi 0, %s233
    %s235 = sphi 0, %s233
    %s236 = sphi 0, %s235
    %s250 = sphi 0, %s236
    %s254 = sphi 0, %s254
    %s256 = sphi 0, %s254
    %s257 = sphi 0, %s256
    %s271 = sphi 0, %s257
    %s275 = sphi 0, %s275
    %s277 = sphi 0, %s275
    %s278 = sphi 0, %s277
    %s292 = sphi 0, %s278
    %s296 = sphi 0, %s296
    %s298 = sphi 0, %s296
    %s299 = sphi 0, %s298
    %s313 = sphi 0, %s299
    %s317 = sphi 0, %s317
    %s319 = sphi 0, %s317
    %s320 = sphi 0, %s319
    %s334 = sphi 0, %s320
    %s338 = sphi 0, %s338
    %s340 = sphi 0, %s338
    %s341 = sphi 0, %s340
    %s355 = sphi 0, %s341
    %s359 = sphi 0, %s359
    %s361 = sphi 0, %s359
    %s362 = sphi 0, %s361
    %s376 = sphi 0, %s362
    %s380 = sphi 0, %s380
    %s382 = sphi 0, %s380
    %s383 = sphi 0, %s382
    %s397 = sphi 0, %s383
    %s401 = sphi 0, %s401
    %s403 = sphi 0, %s401
    %s404 = sphi 0, %s403
    %s418 = sphi 0, %s404
    %s422 = sphi 0, %s422
    %s424 = sphi 0, %s422
    %s425 = sphi 0, %s424
    %s439 = sphi 0, %s425
    %s443 = sphi 0, %s443
    %s445 = sphi 0, %s443
    %s446 = sphi 0, %s445
    %s460 = sphi 0, %s446
    %s464 = sphi 0, %s464
    %s466 = sphi 0, %s464
    %s467 = sphi 0, %s466
    %s481 = sphi 0, %s467
    %s485 = sphi 0, %s485
    %s487 = sphi 0, %s485
    %s488 = sphi 0, %s487
    %s502 = sphi 0, %s488
    %s506 = sphi 0, %s506
    %s508 = sphi 0, %s506
    %s509 = sphi 0, %s508
    %s523 = sphi 0, %s509
    %s527 = sphi 0, %s527
    %s529 = sphi 0, %s527
    %s530 = sphi 0, %s529
    %s544 = sphi 0, %s530
    %s548 = sphi 0, %s548
    %s550 = sphi 0, %s548
    %s551 = sphi 0, %s550
    %s565 = sphi 0, %s551
    %s569 = sphi 0, %s569
    %s571 = sphi 0, %s569
    %s572 = sphi 0, %s571
    %s586 = sphi 0, %s572
    %s590 = sphi 0, %s590
    %s592 = sphi 0, %s590
    %s593 = sphi 0, %s592
    %s607 = sphi 0, %s593
    %s611 = sphi 0, %s611
    %s613 = sphi 0, %s611
    %s614 = sphi 0, %s613
    %s628 = sphi 0, %s614
    %s632 = sphi 0, %s632
    %s634 = sphi 0, %s632
    %s635 = sphi 0, %s634
    %s649 = sphi 0, %s635
    %s653 = sphi 0, %s653
    %s655 = sphi 0, %s653
    %s656 = sphi 0, %s655
    %s670 = sphi 0, %s656
    %s674 = sphi 0, %s674
    %s676 = sphi 0, %s674
    %s677 = sphi 0, %s676
    %s691 = sphi 0, %s677
    %s695 = sphi 0, %s695
    %s697 = sphi 0, %s695
    %s698 = sphi 0, %s697
    %s712 = sphi 0, %s698
    %s716 = sphi 0, %s716
    %s718 = sphi 0, %s716
    %s719 = sphi 0, %s718
    %s733 = sphi 0, %s719
    %s737 = sphi 0, %s737
    %s739 = sphi 0, %s737
    %s740 = sphi 0, %s739
    %s754 = sphi 0, %s740
    %s758 = sphi 0, %s758
    %s760 = sphi 0, %s758
    %s761 = sphi 0, %s760
    %s775 = sphi 0, %s761
    %s779 = sphi 0, %s779
    %s781 = sphi 0, %s779
    %s782 = sphi 0, %s781
    %s796 = sphi 0, %s782
    %s800 = sphi 0, %s800
    %s802 = sphi 0, %s800
    %s803 = sphi 0, %s802
    %s817 = sphi 0, %s803
    %s821 = sphi 0, %s821
    %s823 = sphi 0, %s821
    %s824 = sphi 0, %s823
    %s838 = sphi 0, %s824
    %s842 = sphi 0, %s842
    %s844 = sphi 0, %s842
    %s845 = sphi 0, %s844
    %s859 = sphi 0, %s845
    %s863 = sphi 0, %s863
    %s865 = sphi 0, %s863
    %s866 = sphi 0, %s865
    %s880 = sphi 0, %s866
    %s884 = sphi 0, %s884
    %s886 = sphi 0, %s884
    %s887 = sphi 0, %s886
    %s901 = sphi 0, %s887
    %s905 = sphi 0, %s905
    %s907 = sphi 0, %s905
    %s908 = sphi 0, %s907
    %s922 = sphi 0, %s908
    %s926 = sphi 0, %s926
    %s928 = sphi 0, %s926
    %s929 = sphi 0, %s928
    %s943 = sphi 0, %s929
    %s947 = sphi 0, %s947
    %s949 = sphi 0, %s947
    %s950 = sphi 0, %s949
    %s964 = sphi 0, %s950
    %s970 = sphi 0, %s972
    %s973 = sphi 0, %s970
    %s974 = sphi 0, %s973
    %s990 = sphi 0, %s974
  $region4: #{_lambda_.1} parent=0 // loop_header_branch
    %92 = sbr.rel (%p90) target = $region8
  $region5: #{_lambda_.1} parent=0 // loop_body
    %s94 = ssub.s32 %s89, 1
    %s95 = ssub.s32 %s89, 2
    %s96 = sadd.s32 %s89, 1
    %s97 = ssub.s32 %s89, %s96
    %p98 = scmp.eq.s32.totalorder %s97, 0
    %s100 = sadd.s32 %s99, 1
    %s101 = scalar_select %p98, %s99, %s100
    %p104 = pneg %p98
    %p105 = scmp.eq.s32.totalorder %s89, 1
    %p106 = por %p104, %p105
    %p107 = scmp.ne.s32.totalorder %s99, %s102
    %p108 = scmp.eq.s32.totalorder %s89, 0
    %p109 = por %p107, %p108
    %p110 = scmp.ne.s32.totalorder %s99, %s102
    %p111 = scmp.eq.s32.totalorder %s94, 1
    %p112 = por %p110, %p111
    %p113 = scmp.ne.s32.totalorder %s102, %s103
    %p114 = scmp.eq.s32.totalorder %s94, 0
    %p115 = por %p113, %p114
    %p116 = scmp.ne.s32.totalorder %s102, %s103
    %p117 = scmp.eq.s32.totalorder %s95, 1
    %p118 = por %p116, %p117
    %p120 = scmp.ne.s32.totalorder %s103, %s119
    %p121 = scmp.eq.s32.totalorder %s95, 0
    %p122 = por %p120, %p121
    %s123 = ssub.s32 %s89, %s96
    %p124 = scmp.eq.s32.totalorder %s123, 0
    %s126 = sadd.s32 %s125, 1
    %s127 = scalar_select %p124, %s125, %s126
    %p130 = pneg %p124
    %p131 = scmp.eq.s32.totalorder %s89, 1
    %p132 = por %p130, %p131
    %p133 = scmp.ne.s32.totalorder %s125, %s128
    %p134 = scmp.eq.s32.totalorder %s89, 0
    %p135 = por %p133, %p134
    %p136 = scmp.ne.s32.totalorder %s125, %s128
    %p137 = scmp.eq.s32.totalorder %s94, 1
    %p138 = por %p136, %p137
    %p139 = scmp.ne.s32.totalorder %s128, %s129
    %p140 = scmp.eq.s32.totalorder %s94, 0
    %p141 = por %p139, %p140
    %p142 = scmp.ne.s32.totalorder %s128, %s129
    %p143 = scmp.eq.s32.totalorder %s95, 1
    %p144 = por %p142, %p143
    %p146 = scmp.ne.s32.totalorder %s129, %s145
    %p147 = scmp.eq.s32.totalorder %s95, 0
    %p148 = por %p146, %p147
    %s150 = sadd.s32 %s149, 1
    %p153 = scmp.eq.s32.totalorder %s89, 1
    %p154 = scmp.ne.s32.totalorder %s149, %s151
    %p155 = scmp.eq.s32.totalorder %s89, 0
    %p156 = por %p154, %p155
    %p157 = scmp.ne.s32.totalorder %s149, %s151
    %p158 = scmp.eq.s32.totalorder %s94, 1
    %p159 = por %p157, %p158
    %p160 = scmp.ne.s32.totalorder %s151, %s152
    %p161 = scmp.eq.s32.totalorder %s94, 0
    %p162 = por %p160, %p161
    %p163 = scmp.ne.s32.totalorder %s151, %s152
    %p164 = scmp.eq.s32.totalorder %s95, 1
    %p165 = por %p163, %p164
    %p167 = scmp.ne.s32.totalorder %s152, %s166
    %p168 = scmp.eq.s32.totalorder %s95, 0
    %p169 = por %p167, %p168
    %s171 = sadd.s32 %s170, 1
    %p174 = scmp.eq.s32.totalorder %s89, 1
    %p175 = scmp.ne.s32.totalorder %s170, %s172
    %p176 = scmp.eq.s32.totalorder %s89, 0
    %p177 = por %p175, %p176
    %p178 = scmp.ne.s32.totalorder %s170, %s172
    %p179 = scmp.eq.s32.totalorder %s94, 1
    %p180 = por %p178, %p179
    %p181 = scmp.ne.s32.totalorder %s172, %s173
    %p182 = scmp.eq.s32.totalorder %s94, 0
    %p183 = por %p181, %p182
    %p184 = scmp.ne.s32.totalorder %s172, %s173
    %p185 = scmp.eq.s32.totalorder %s95, 1
    %p186 = por %p184, %p185
    %p188 = scmp.ne.s32.totalorder %s173, %s187
    %p189 = scmp.eq.s32.totalorder %s95, 0
    %p190 = por %p188, %p189
    %s192 = sadd.s32 %s191, 1
    %p195 = scmp.eq.s32.totalorder %s89, 1
    %p196 = scmp.ne.s32.totalorder %s191, %s193
    %p197 = scmp.eq.s32.totalorder %s89, 0
    %p198 = por %p196, %p197
    %p199 = scmp.ne.s32.totalorder %s191, %s193
    %p200 = scmp.eq.s32.totalorder %s94, 1
    %p201 = por %p199, %p200
    %p202 = scmp.ne.s32.totalorder %s193, %s194
    %p203 = scmp.eq.s32.totalorder %s94, 0
    %p204 = por %p202, %p203
    %p205 = scmp.ne.s32.totalorder %s193, %s194
    %p206 = scmp.eq.s32.totalorder %s95, 1
    %p207 = por %p205, %p206
    %p209 = scmp.ne.s32.totalorder %s194, %s208
    %p210 = scmp.eq.s32.totalorder %s95, 0
    %p211 = por %p209, %p210
    %s213 = sadd.s32 %s212, 1
    %p216 = scmp.eq.s32.totalorder %s89, 1
    %p217 = scmp.ne.s32.totalorder %s212, %s214
    %p218 = scmp.eq.s32.totalorder %s89, 0
    %p219 = por %p217, %p218
    %p220 = scmp.ne.s32.totalorder %s212, %s214
    %p221 = scmp.eq.s32.totalorder %s94, 1
    %p222 = por %p220, %p221
    %p223 = scmp.ne.s32.totalorder %s214, %s215
    %p224 = scmp.eq.s32.totalorder %s94, 0
    %p225 = por %p223, %p224
    %p226 = scmp.ne.s32.totalorder %s214, %s215
    %p227 = scmp.eq.s32.totalorder %s95, 1
    %p228 = por %p226, %p227
    %p230 = scmp.ne.s32.totalorder %s215, %s229
    %p231 = scmp.eq.s32.totalorder %s95, 0
    %p232 = por %p230, %p231
    %s234 = sadd.s32 %s233, 1
    %p237 = scmp.eq.s32.totalorder %s89, 1
    %p238 = scmp.ne.s32.totalorder %s233, %s235
    %p239 = scmp.eq.s32.totalorder %s89, 0
    %p240 = por %p238, %p239
    %p241 = scmp.ne.s32.totalorder %s233, %s235
    %p242 = scmp.eq.s32.totalorder %s94, 1
    %p243 = por %p241, %p242
    %p244 = scmp.ne.s32.totalorder %s235, %s236
    %p245 = scmp.eq.s32.totalorder %s94, 0
    %p246 = por %p244, %p245
    %p247 = scmp.ne.s32.totalorder %s235, %s236
    %p248 = scmp.eq.s32.totalorder %s95, 1
    %p249 = por %p247, %p248
    %p251 = scmp.ne.s32.totalorder %s236, %s250
    %p252 = scmp.eq.s32.totalorder %s95, 0
    %p253 = por %p251, %p252
    %s255 = sadd.s32 %s254, 1
    %p258 = scmp.eq.s32.totalorder %s89, 1
    %p259 = scmp.ne.s32.totalorder %s254, %s256
    %p260 = scmp.eq.s32.totalorder %s89, 0
    %p261 = por %p259, %p260
    %p262 = scmp.ne.s32.totalorder %s254, %s256
    %p263 = scmp.eq.s32.totalorder %s94, 1
    %p264 = por %p262, %p263
    %p265 = scmp.ne.s32.totalorder %s256, %s257
    %p266 = scmp.eq.s32.totalorder %s94, 0
    %p267 = por %p265, %p266
    %p268 = scmp.ne.s32.totalorder %s256, %s257
    %p269 = scmp.eq.s32.totalorder %s95, 1
    %p270 = por %p268, %p269
    %p272 = scmp.ne.s32.totalorder %s257, %s271
    %p273 = scmp.eq.s32.totalorder %s95, 0
    %p274 = por %p272, %p273
    %s276 = sadd.s32 %s275, 1
    %p279 = scmp.eq.s32.totalorder %s89, 1
    %p280 = scmp.ne.s32.totalorder %s275, %s277
    %p281 = scmp.eq.s32.totalorder %s89, 0
    %p282 = por %p280, %p281
    %p283 = scmp.ne.s32.totalorder %s275, %s277
    %p284 = scmp.eq.s32.totalorder %s94, 1
    %p285 = por %p283, %p284
    %p286 = scmp.ne.s32.totalorder %s277, %s278
    %p287 = scmp.eq.s32.totalorder %s94, 0
    %p288 = por %p286, %p287
    %p289 = scmp.ne.s32.totalorder %s277, %s278
    %p290 = scmp.eq.s32.totalorder %s95, 1
    %p291 = por %p289, %p290
    %p293 = scmp.ne.s32.totalorder %s278, %s292
    %p294 = scmp.eq.s32.totalorder %s95, 0
    %p295 = por %p293, %p294
    %s297 = sadd.s32 %s296, 1
    %p300 = scmp.eq.s32.totalorder %s89, 1
    %p301 = scmp.ne.s32.totalorder %s296, %s298
    %p302 = scmp.eq.s32.totalorder %s89, 0
    %p303 = por %p301, %p302
    %p304 = scmp.ne.s32.totalorder %s296, %s298
    %p305 = scmp.eq.s32.totalorder %s94, 1
    %p306 = por %p304, %p305
    %p307 = scmp.ne.s32.totalorder %s298, %s299
    %p308 = scmp.eq.s32.totalorder %s94, 0
    %p309 = por %p307, %p308
    %p310 = scmp.ne.s32.totalorder %s298, %s299
    %p311 = scmp.eq.s32.totalorder %s95, 1
    %p312 = por %p310, %p311
    %p314 = scmp.ne.s32.totalorder %s299, %s313
    %p315 = scmp.eq.s32.totalorder %s95, 0
    %p316 = por %p314, %p315
    %s318 = sadd.s32 %s317, 1
    %p321 = scmp.eq.s32.totalorder %s89, 1
    %p322 = scmp.ne.s32.totalorder %s317, %s319
    %p323 = scmp.eq.s32.totalorder %s89, 0
    %p324 = por %p322, %p323
    %p325 = scmp.ne.s32.totalorder %s317, %s319
    %p326 = scmp.eq.s32.totalorder %s94, 1
    %p327 = por %p325, %p326
    %p328 = scmp.ne.s32.totalorder %s319, %s320
    %p329 = scmp.eq.s32.totalorder %s94, 0
    %p330 = por %p328, %p329
    %p331 = scmp.ne.s32.totalorder %s319, %s320
    %p332 = scmp.eq.s32.totalorder %s95, 1
    %p333 = por %p331, %p332
    %p335 = scmp.ne.s32.totalorder %s320, %s334
    %p336 = scmp.eq.s32.totalorder %s95, 0
    %p337 = por %p335, %p336
    %s339 = sadd.s32 %s338, 1
    %p342 = scmp.eq.s32.totalorder %s89, 1
    %p343 = scmp.ne.s32.totalorder %s338, %s340
    %p344 = scmp.eq.s32.totalorder %s89, 0
    %p345 = por %p343, %p344
    %p346 = scmp.ne.s32.totalorder %s338, %s340
    %p347 = scmp.eq.s32.totalorder %s94, 1
    %p348 = por %p346, %p347
    %p349 = scmp.ne.s32.totalorder %s340, %s341
    %p350 = scmp.eq.s32.totalorder %s94, 0
    %p351 = por %p349, %p350
    %p352 = scmp.ne.s32.totalorder %s340, %s341
    %p353 = scmp.eq.s32.totalorder %s95, 1
    %p354 = por %p352, %p353
    %p356 = scmp.ne.s32.totalorder %s341, %s355
    %p357 = scmp.eq.s32.totalorder %s95, 0
    %p358 = por %p356, %p357
    %s360 = sadd.s32 %s359, 1
    %p363 = scmp.eq.s32.totalorder %s89, 1
    %p364 = scmp.ne.s32.totalorder %s359, %s361
    %p365 = scmp.eq.s32.totalorder %s89, 0
    %p366 = por %p364, %p365
    %p367 = scmp.ne.s32.totalorder %s359, %s361
    %p368 = scmp.eq.s32.totalorder %s94, 1
    %p369 = por %p367, %p368
    %p370 = scmp.ne.s32.totalorder %s361, %s362
    %p371 = scmp.eq.s32.totalorder %s94, 0
    %p372 = por %p370, %p371
    %p373 = scmp.ne.s32.totalorder %s361, %s362
    %p374 = scmp.eq.s32.totalorder %s95, 1
    %p375 = por %p373, %p374
    %p377 = scmp.ne.s32.totalorder %s362, %s376
    %p378 = scmp.eq.s32.totalorder %s95, 0
    %p379 = por %p377, %p378
    %s381 = sadd.s32 %s380, 1
    %p384 = scmp.eq.s32.totalorder %s89, 1
    %p385 = scmp.ne.s32.totalorder %s380, %s382
    %p386 = scmp.eq.s32.totalorder %s89, 0
    %p387 = por %p385, %p386
    %p388 = scmp.ne.s32.totalorder %s380, %s382
    %p389 = scmp.eq.s32.totalorder %s94, 1
    %p390 = por %p388, %p389
    %p391 = scmp.ne.s32.totalorder %s382, %s383
    %p392 = scmp.eq.s32.totalorder %s94, 0
    %p393 = por %p391, %p392
    %p394 = scmp.ne.s32.totalorder %s382, %s383
    %p395 = scmp.eq.s32.totalorder %s95, 1
    %p396 = por %p394, %p395
    %p398 = scmp.ne.s32.totalorder %s383, %s397
    %p399 = scmp.eq.s32.totalorder %s95, 0
    %p400 = por %p398, %p399
    %s402 = sadd.s32 %s401, 1
    %p405 = scmp.eq.s32.totalorder %s89, 1
    %p406 = scmp.ne.s32.totalorder %s401, %s403
    %p407 = scmp.eq.s32.totalorder %s89, 0
    %p408 = por %p406, %p407
    %p409 = scmp.ne.s32.totalorder %s401, %s403
    %p410 = scmp.eq.s32.totalorder %s94, 1
    %p411 = por %p409, %p410
    %p412 = scmp.ne.s32.totalorder %s403, %s404
    %p413 = scmp.eq.s32.totalorder %s94, 0
    %p414 = por %p412, %p413
    %p415 = scmp.ne.s32.totalorder %s403, %s404
    %p416 = scmp.eq.s32.totalorder %s95, 1
    %p417 = por %p415, %p416
    %p419 = scmp.ne.s32.totalorder %s404, %s418
    %p420 = scmp.eq.s32.totalorder %s95, 0
    %p421 = por %p419, %p420
    %s423 = sadd.s32 %s422, 1
    %p426 = scmp.eq.s32.totalorder %s89, 1
    %p427 = scmp.ne.s32.totalorder %s422, %s424
    %p428 = scmp.eq.s32.totalorder %s89, 0
    %p429 = por %p427, %p428
    %p430 = scmp.ne.s32.totalorder %s422, %s424
    %p431 = scmp.eq.s32.totalorder %s94, 1
    %p432 = por %p430, %p431
    %p433 = scmp.ne.s32.totalorder %s424, %s425
    %p434 = scmp.eq.s32.totalorder %s94, 0
    %p435 = por %p433, %p434
    %p436 = scmp.ne.s32.totalorder %s424, %s425
    %p437 = scmp.eq.s32.totalorder %s95, 1
    %p438 = por %p436, %p437
    %p440 = scmp.ne.s32.totalorder %s425, %s439
    %p441 = scmp.eq.s32.totalorder %s95, 0
    %p442 = por %p440, %p441
    %s444 = sadd.s32 %s443, 1
    %p447 = scmp.eq.s32.totalorder %s89, 1
    %p448 = scmp.ne.s32.totalorder %s443, %s445
    %p449 = scmp.eq.s32.totalorder %s89, 0
    %p450 = por %p448, %p449
    %p451 = scmp.ne.s32.totalorder %s443, %s445
    %p452 = scmp.eq.s32.totalorder %s94, 1
    %p453 = por %p451, %p452
    %p454 = scmp.ne.s32.totalorder %s445, %s446
    %p455 = scmp.eq.s32.totalorder %s94, 0
    %p456 = por %p454, %p455
    %p457 = scmp.ne.s32.totalorder %s445, %s446
    %p458 = scmp.eq.s32.totalorder %s95, 1
    %p459 = por %p457, %p458
    %p461 = scmp.ne.s32.totalorder %s446, %s460
    %p462 = scmp.eq.s32.totalorder %s95, 0
    %p463 = por %p461, %p462
    %s465 = sadd.s32 %s464, 1
    %p468 = scmp.eq.s32.totalorder %s89, 1
    %p469 = scmp.ne.s32.totalorder %s464, %s466
    %p470 = scmp.eq.s32.totalorder %s89, 0
    %p471 = por %p469, %p470
    %p472 = scmp.ne.s32.totalorder %s464, %s466
    %p473 = scmp.eq.s32.totalorder %s94, 1
    %p474 = por %p472, %p473
    %p475 = scmp.ne.s32.totalorder %s466, %s467
    %p476 = scmp.eq.s32.totalorder %s94, 0
    %p477 = por %p475, %p476
    %p478 = scmp.ne.s32.totalorder %s466, %s467
    %p479 = scmp.eq.s32.totalorder %s95, 1
    %p480 = por %p478, %p479
    %p482 = scmp.ne.s32.totalorder %s467, %s481
    %p483 = scmp.eq.s32.totalorder %s95, 0
    %p484 = por %p482, %p483
    %s486 = sadd.s32 %s485, 1
    %p489 = scmp.eq.s32.totalorder %s89, 1
    %p490 = scmp.ne.s32.totalorder %s485, %s487
    %p491 = scmp.eq.s32.totalorder %s89, 0
    %p492 = por %p490, %p491
    %p493 = scmp.ne.s32.totalorder %s485, %s487
    %p494 = scmp.eq.s32.totalorder %s94, 1
    %p495 = por %p493, %p494
    %p496 = scmp.ne.s32.totalorder %s487, %s488
    %p497 = scmp.eq.s32.totalorder %s94, 0
    %p498 = por %p496, %p497
    %p499 = scmp.ne.s32.totalorder %s487, %s488
    %p500 = scmp.eq.s32.totalorder %s95, 1
    %p501 = por %p499, %p500
    %p503 = scmp.ne.s32.totalorder %s488, %s502
    %p504 = scmp.eq.s32.totalorder %s95, 0
    %p505 = por %p503, %p504
    %s507 = sadd.s32 %s506, 1
    %p510 = scmp.eq.s32.totalorder %s89, 1
    %p511 = scmp.ne.s32.totalorder %s506, %s508
    %p512 = scmp.eq.s32.totalorder %s89, 0
    %p513 = por %p511, %p512
    %p514 = scmp.ne.s32.totalorder %s506, %s508
    %p515 = scmp.eq.s32.totalorder %s94, 1
    %p516 = por %p514, %p515
    %p517 = scmp.ne.s32.totalorder %s508, %s509
    %p518 = scmp.eq.s32.totalorder %s94, 0
    %p519 = por %p517, %p518
    %p520 = scmp.ne.s32.totalorder %s508, %s509
    %p521 = scmp.eq.s32.totalorder %s95, 1
    %p522 = por %p520, %p521
    %p524 = scmp.ne.s32.totalorder %s509, %s523
    %p525 = scmp.eq.s32.totalorder %s95, 0
    %p526 = por %p524, %p525
    %s528 = sadd.s32 %s527, 1
    %p531 = scmp.eq.s32.totalorder %s89, 1
    %p532 = scmp.ne.s32.totalorder %s527, %s529
    %p533 = scmp.eq.s32.totalorder %s89, 0
    %p534 = por %p532, %p533
    %p535 = scmp.ne.s32.totalorder %s527, %s529
    %p536 = scmp.eq.s32.totalorder %s94, 1
    %p537 = por %p535, %p536
    %p538 = scmp.ne.s32.totalorder %s529, %s530
    %p539 = scmp.eq.s32.totalorder %s94, 0
    %p540 = por %p538, %p539
    %p541 = scmp.ne.s32.totalorder %s529, %s530
    %p542 = scmp.eq.s32.totalorder %s95, 1
    %p543 = por %p541, %p542
    %p545 = scmp.ne.s32.totalorder %s530, %s544
    %p546 = scmp.eq.s32.totalorder %s95, 0
    %p547 = por %p545, %p546
    %s549 = sadd.s32 %s548, 1
    %p552 = scmp.eq.s32.totalorder %s89, 1
    %p553 = scmp.ne.s32.totalorder %s548, %s550
    %p554 = scmp.eq.s32.totalorder %s89, 0
    %p555 = por %p553, %p554
    %p556 = scmp.ne.s32.totalorder %s548, %s550
    %p557 = scmp.eq.s32.totalorder %s94, 1
    %p558 = por %p556, %p557
    %p559 = scmp.ne.s32.totalorder %s550, %s551
    %p560 = scmp.eq.s32.totalorder %s94, 0
    %p561 = por %p559, %p560
    %p562 = scmp.ne.s32.totalorder %s550, %s551
    %p563 = scmp.eq.s32.totalorder %s95, 1
    %p564 = por %p562, %p563
    %p566 = scmp.ne.s32.totalorder %s551, %s565
    %p567 = scmp.eq.s32.totalorder %s95, 0
    %p568 = por %p566, %p567
    %s570 = sadd.s32 %s569, 1
    %p573 = scmp.eq.s32.totalorder %s89, 1
    %p574 = scmp.ne.s32.totalorder %s569, %s571
    %p575 = scmp.eq.s32.totalorder %s89, 0
    %p576 = por %p574, %p575
    %p577 = scmp.ne.s32.totalorder %s569, %s571
    %p578 = scmp.eq.s32.totalorder %s94, 1
    %p579 = por %p577, %p578
    %p580 = scmp.ne.s32.totalorder %s571, %s572
    %p581 = scmp.eq.s32.totalorder %s94, 0
    %p582 = por %p580, %p581
    %p583 = scmp.ne.s32.totalorder %s571, %s572
    %p584 = scmp.eq.s32.totalorder %s95, 1
    %p585 = por %p583, %p584
    %p587 = scmp.ne.s32.totalorder %s572, %s586
    %p588 = scmp.eq.s32.totalorder %s95, 0
    %p589 = por %p587, %p588
    %s591 = sadd.s32 %s590, 1
    %p594 = scmp.eq.s32.totalorder %s89, 1
    %p595 = scmp.ne.s32.totalorder %s590, %s592
    %p596 = scmp.eq.s32.totalorder %s89, 0
    %p597 = por %p595, %p596
    %p598 = scmp.ne.s32.totalorder %s590, %s592
    %p599 = scmp.eq.s32.totalorder %s94, 1
    %p600 = por %p598, %p599
    %p601 = scmp.ne.s32.totalorder %s592, %s593
    %p602 = scmp.eq.s32.totalorder %s94, 0
    %p603 = por %p601, %p602
    %p604 = scmp.ne.s32.totalorder %s592, %s593
    %p605 = scmp.eq.s32.totalorder %s95, 1
    %p606 = por %p604, %p605
    %p608 = scmp.ne.s32.totalorder %s593, %s607
    %p609 = scmp.eq.s32.totalorder %s95, 0
    %p610 = por %p608, %p609
    %s612 = sadd.s32 %s611, 1
    %p615 = scmp.eq.s32.totalorder %s89, 1
    %p616 = scmp.ne.s32.totalorder %s611, %s613
    %p617 = scmp.eq.s32.totalorder %s89, 0
    %p618 = por %p616, %p617
    %p619 = scmp.ne.s32.totalorder %s611, %s613
    %p620 = scmp.eq.s32.totalorder %s94, 1
    %p621 = por %p619, %p620
    %p622 = scmp.ne.s32.totalorder %s613, %s614
    %p623 = scmp.eq.s32.totalorder %s94, 0
    %p624 = por %p622, %p623
    %p625 = scmp.ne.s32.totalorder %s613, %s614
    %p626 = scmp.eq.s32.totalorder %s95, 1
    %p627 = por %p625, %p626
    %p629 = scmp.ne.s32.totalorder %s614, %s628
    %p630 = scmp.eq.s32.totalorder %s95, 0
    %p631 = por %p629, %p630
    %s633 = sadd.s32 %s632, 1
    %p636 = scmp.eq.s32.totalorder %s89, 1
    %p637 = scmp.ne.s32.totalorder %s632, %s634
    %p638 = scmp.eq.s32.totalorder %s89, 0
    %p639 = por %p637, %p638
    %p640 = scmp.ne.s32.totalorder %s632, %s634
    %p641 = scmp.eq.s32.totalorder %s94, 1
    %p642 = por %p640, %p641
    %p643 = scmp.ne.s32.totalorder %s634, %s635
    %p644 = scmp.eq.s32.totalorder %s94, 0
    %p645 = por %p643, %p644
    %p646 = scmp.ne.s32.totalorder %s634, %s635
    %p647 = scmp.eq.s32.totalorder %s95, 1
    %p648 = por %p646, %p647
    %p650 = scmp.ne.s32.totalorder %s635, %s649
    %p651 = scmp.eq.s32.totalorder %s95, 0
    %p652 = por %p650, %p651
    %s654 = sadd.s32 %s653, 1
    %p657 = scmp.eq.s32.totalorder %s89, 1
    %p658 = scmp.ne.s32.totalorder %s653, %s655
    %p659 = scmp.eq.s32.totalorder %s89, 0
    %p660 = por %p658, %p659
    %p661 = scmp.ne.s32.totalorder %s653, %s655
    %p662 = scmp.eq.s32.totalorder %s94, 1
    %p663 = por %p661, %p662
    %p664 = scmp.ne.s32.totalorder %s655, %s656
    %p665 = scmp.eq.s32.totalorder %s94, 0
    %p666 = por %p664, %p665
    %p667 = scmp.ne.s32.totalorder %s655, %s656
    %p668 = scmp.eq.s32.totalorder %s95, 1
    %p669 = por %p667, %p668
    %p671 = scmp.ne.s32.totalorder %s656, %s670
    %p672 = scmp.eq.s32.totalorder %s95, 0
    %p673 = por %p671, %p672
    %s675 = sadd.s32 %s674, 1
    %p678 = scmp.eq.s32.totalorder %s89, 1
    %p679 = scmp.ne.s32.totalorder %s674, %s676
    %p680 = scmp.eq.s32.totalorder %s89, 0
    %p681 = por %p679, %p680
    %p682 = scmp.ne.s32.totalorder %s674, %s676
    %p683 = scmp.eq.s32.totalorder %s94, 1
    %p684 = por %p682, %p683
    %p685 = scmp.ne.s32.totalorder %s676, %s677
    %p686 = scmp.eq.s32.totalorder %s94, 0
    %p687 = por %p685, %p686
    %p688 = scmp.ne.s32.totalorder %s676, %s677
    %p689 = scmp.eq.s32.totalorder %s95, 1
    %p690 = por %p688, %p689
    %p692 = scmp.ne.s32.totalorder %s677, %s691
    %p693 = scmp.eq.s32.totalorder %s95, 0
    %p694 = por %p692, %p693
    %s696 = sadd.s32 %s695, 1
    %p699 = scmp.eq.s32.totalorder %s89, 1
    %p700 = scmp.ne.s32.totalorder %s695, %s697
    %p701 = scmp.eq.s32.totalorder %s89, 0
    %p702 = por %p700, %p701
    %p703 = scmp.ne.s32.totalorder %s695, %s697
    %p704 = scmp.eq.s32.totalorder %s94, 1
    %p705 = por %p703, %p704
    %p706 = scmp.ne.s32.totalorder %s697, %s698
    %p707 = scmp.eq.s32.totalorder %s94, 0
    %p708 = por %p706, %p707
    %p709 = scmp.ne.s32.totalorder %s697, %s698
    %p710 = scmp.eq.s32.totalorder %s95, 1
    %p711 = por %p709, %p710
    %p713 = scmp.ne.s32.totalorder %s698, %s712
    %p714 = scmp.eq.s32.totalorder %s95, 0
    %p715 = por %p713, %p714
    %s717 = sadd.s32 %s716, 1
    %p720 = scmp.eq.s32.totalorder %s89, 1
    %p721 = scmp.ne.s32.totalorder %s716, %s718
    %p722 = scmp.eq.s32.totalorder %s89, 0
    %p723 = por %p721, %p722
    %p724 = scmp.ne.s32.totalorder %s716, %s718
    %p725 = scmp.eq.s32.totalorder %s94, 1
    %p726 = por %p724, %p725
    %p727 = scmp.ne.s32.totalorder %s718, %s719
    %p728 = scmp.eq.s32.totalorder %s94, 0
    %p729 = por %p727, %p728
    %p730 = scmp.ne.s32.totalorder %s718, %s719
    %p731 = scmp.eq.s32.totalorder %s95, 1
    %p732 = por %p730, %p731
    %p734 = scmp.ne.s32.totalorder %s719, %s733
    %p735 = scmp.eq.s32.totalorder %s95, 0
    %p736 = por %p734, %p735
    %s738 = sadd.s32 %s737, 1
    %p741 = scmp.eq.s32.totalorder %s89, 1
    %p742 = scmp.ne.s32.totalorder %s737, %s739
    %p743 = scmp.eq.s32.totalorder %s89, 0
    %p744 = por %p742, %p743
    %p745 = scmp.ne.s32.totalorder %s737, %s739
    %p746 = scmp.eq.s32.totalorder %s94, 1
    %p747 = por %p745, %p746
    %p748 = scmp.ne.s32.totalorder %s739, %s740
    %p749 = scmp.eq.s32.totalorder %s94, 0
    %p750 = por %p748, %p749
    %p751 = scmp.ne.s32.totalorder %s739, %s740
    %p752 = scmp.eq.s32.totalorder %s95, 1
    %p753 = por %p751, %p752
    %p755 = scmp.ne.s32.totalorder %s740, %s754
    %p756 = scmp.eq.s32.totalorder %s95, 0
    %p757 = por %p755, %p756
    %s759 = sadd.s32 %s758, 1
    %p762 = scmp.eq.s32.totalorder %s89, 1
    %p763 = scmp.ne.s32.totalorder %s758, %s760
    %p764 = scmp.eq.s32.totalorder %s89, 0
    %p765 = por %p763, %p764
    %p766 = scmp.ne.s32.totalorder %s758, %s760
    %p767 = scmp.eq.s32.totalorder %s94, 1
    %p768 = por %p766, %p767
    %p769 = scmp.ne.s32.totalorder %s760, %s761
    %p770 = scmp.eq.s32.totalorder %s94, 0
    %p771 = por %p769, %p770
    %p772 = scmp.ne.s32.totalorder %s760, %s761
    %p773 = scmp.eq.s32.totalorder %s95, 1
    %p774 = por %p772, %p773
    %p776 = scmp.ne.s32.totalorder %s761, %s775
    %p777 = scmp.eq.s32.totalorder %s95, 0
    %p778 = por %p776, %p777
    %s780 = sadd.s32 %s779, 1
    %p783 = scmp.eq.s32.totalorder %s89, 1
    %p784 = scmp.ne.s32.totalorder %s779, %s781
    %p785 = scmp.eq.s32.totalorder %s89, 0
    %p786 = por %p784, %p785
    %p787 = scmp.ne.s32.totalorder %s779, %s781
    %p788 = scmp.eq.s32.totalorder %s94, 1
    %p789 = por %p787, %p788
    %p790 = scmp.ne.s32.totalorder %s781, %s782
    %p791 = scmp.eq.s32.totalorder %s94, 0
    %p792 = por %p790, %p791
    %p793 = scmp.ne.s32.totalorder %s781, %s782
    %p794 = scmp.eq.s32.totalorder %s95, 1
    %p795 = por %p793, %p794
    %p797 = scmp.ne.s32.totalorder %s782, %s796
    %p798 = scmp.eq.s32.totalorder %s95, 0
    %p799 = por %p797, %p798
    %s801 = sadd.s32 %s800, 1
    %p804 = scmp.eq.s32.totalorder %s89, 1
    %p805 = scmp.ne.s32.totalorder %s800, %s802
    %p806 = scmp.eq.s32.totalorder %s89, 0
    %p807 = por %p805, %p806
    %p808 = scmp.ne.s32.totalorder %s800, %s802
    %p809 = scmp.eq.s32.totalorder %s94, 1
    %p810 = por %p808, %p809
    %p811 = scmp.ne.s32.totalorder %s802, %s803
    %p812 = scmp.eq.s32.totalorder %s94, 0
    %p813 = por %p811, %p812
    %p814 = scmp.ne.s32.totalorder %s802, %s803
    %p815 = scmp.eq.s32.totalorder %s95, 1
    %p816 = por %p814, %p815
    %p818 = scmp.ne.s32.totalorder %s803, %s817
    %p819 = scmp.eq.s32.totalorder %s95, 0
    %p820 = por %p818, %p819
    %s822 = sadd.s32 %s821, 1
    %p825 = scmp.eq.s32.totalorder %s89, 1
    %p826 = scmp.ne.s32.totalorder %s821, %s823
    %p827 = scmp.eq.s32.totalorder %s89, 0
    %p828 = por %p826, %p827
    %p829 = scmp.ne.s32.totalorder %s821, %s823
    %p830 = scmp.eq.s32.totalorder %s94, 1
    %p831 = por %p829, %p830
    %p832 = scmp.ne.s32.totalorder %s823, %s824
    %p833 = scmp.eq.s32.totalorder %s94, 0
    %p834 = por %p832, %p833
    %p835 = scmp.ne.s32.totalorder %s823, %s824
    %p836 = scmp.eq.s32.totalorder %s95, 1
    %p837 = por %p835, %p836
    %p839 = scmp.ne.s32.totalorder %s824, %s838
    %p840 = scmp.eq.s32.totalorder %s95, 0
    %p841 = por %p839, %p840
    %s843 = sadd.s32 %s842, 1
    %p846 = scmp.eq.s32.totalorder %s89, 1
    %p847 = scmp.ne.s32.totalorder %s842, %s844
    %p848 = scmp.eq.s32.totalorder %s89, 0
    %p849 = por %p847, %p848
    %p850 = scmp.ne.s32.totalorder %s842, %s844
    %p851 = scmp.eq.s32.totalorder %s94, 1
    %p852 = por %p850, %p851
    %p853 = scmp.ne.s32.totalorder %s844, %s845
    %p854 = scmp.eq.s32.totalorder %s94, 0
    %p855 = por %p853, %p854
    %p856 = scmp.ne.s32.totalorder %s844, %s845
    %p857 = scmp.eq.s32.totalorder %s95, 1
    %p858 = por %p856, %p857
    %p860 = scmp.ne.s32.totalorder %s845, %s859
    %p861 = scmp.eq.s32.totalorder %s95, 0
    %p862 = por %p860, %p861
    %s864 = sadd.s32 %s863, 1
    %p867 = scmp.eq.s32.totalorder %s89, 1
    %p868 = scmp.ne.s32.totalorder %s863, %s865
    %p869 = scmp.eq.s32.totalorder %s89, 0
    %p870 = por %p868, %p869
    %p871 = scmp.ne.s32.totalorder %s863, %s865
    %p872 = scmp.eq.s32.totalorder %s94, 1
    %p873 = por %p871, %p872
    %p874 = scmp.ne.s32.totalorder %s865, %s866
    %p875 = scmp.eq.s32.totalorder %s94, 0
    %p876 = por %p874, %p875
    %p877 = scmp.ne.s32.totalorder %s865, %s866
    %p878 = scmp.eq.s32.totalorder %s95, 1
    %p879 = por %p877, %p878
    %p881 = scmp.ne.s32.totalorder %s866, %s880
    %p882 = scmp.eq.s32.totalorder %s95, 0
    %p883 = por %p881, %p882
    %s885 = sadd.s32 %s884, 1
    %p888 = scmp.eq.s32.totalorder %s89, 1
    %p889 = scmp.ne.s32.totalorder %s884, %s886
    %p890 = scmp.eq.s32.totalorder %s89, 0
    %p891 = por %p889, %p890
    %p892 = scmp.ne.s32.totalorder %s884, %s886
    %p893 = scmp.eq.s32.totalorder %s94, 1
    %p894 = por %p892, %p893
    %p895 = scmp.ne.s32.totalorder %s886, %s887
    %p896 = scmp.eq.s32.totalorder %s94, 0
    %p897 = por %p895, %p896
    %p898 = scmp.ne.s32.totalorder %s886, %s887
    %p899 = scmp.eq.s32.totalorder %s95, 1
    %p900 = por %p898, %p899
    %p902 = scmp.ne.s32.totalorder %s887, %s901
    %p903 = scmp.eq.s32.totalorder %s95, 0
    %p904 = por %p902, %p903
    %s906 = sadd.s32 %s905, 1
    %p909 = scmp.eq.s32.totalorder %s89, 1
    %p910 = scmp.ne.s32.totalorder %s905, %s907
    %p911 = scmp.eq.s32.totalorder %s89, 0
    %p912 = por %p910, %p911
    %p913 = scmp.ne.s32.totalorder %s905, %s907
    %p914 = scmp.eq.s32.totalorder %s94, 1
    %p915 = por %p913, %p914
    %p916 = scmp.ne.s32.totalorder %s907, %s908
    %p917 = scmp.eq.s32.totalorder %s94, 0
    %p918 = por %p916, %p917
    %p919 = scmp.ne.s32.totalorder %s907, %s908
    %p920 = scmp.eq.s32.totalorder %s95, 1
    %p921 = por %p919, %p920
    %p923 = scmp.ne.s32.totalorder %s908, %s922
    %p924 = scmp.eq.s32.totalorder %s95, 0
    %p925 = por %p923, %p924
    %s927 = sadd.s32 %s926, 1
    %p930 = scmp.eq.s32.totalorder %s89, 1
    %p931 = scmp.ne.s32.totalorder %s926, %s928
    %p932 = scmp.eq.s32.totalorder %s89, 0
    %p933 = por %p931, %p932
    %p934 = scmp.ne.s32.totalorder %s926, %s928
    %p935 = scmp.eq.s32.totalorder %s94, 1
    %p936 = por %p934, %p935
    %p937 = scmp.ne.s32.totalorder %s928, %s929
    %p938 = scmp.eq.s32.totalorder %s94, 0
    %p939 = por %p937, %p938
    %p940 = scmp.ne.s32.totalorder %s928, %s929
    %p941 = scmp.eq.s32.totalorder %s95, 1
    %p942 = por %p940, %p941
    %p944 = scmp.ne.s32.totalorder %s929, %s943
    %p945 = scmp.eq.s32.totalorder %s95, 0
    %p946 = por %p944, %p945
    %s948 = sadd.s32 %s947, 1
    %p951 = scmp.eq.s32.totalorder %s89, 1
    %p952 = scmp.ne.s32.totalorder %s947, %s949
    %p953 = scmp.eq.s32.totalorder %s89, 0
    %p954 = por %p952, %p953
    %p955 = scmp.ne.s32.totalorder %s947, %s949
    %p956 = scmp.eq.s32.totalorder %s94, 1
    %p957 = por %p955, %p956
    %p958 = scmp.ne.s32.totalorder %s949, %s950
    %p959 = scmp.eq.s32.totalorder %s94, 0
    %p960 = por %p958, %p959
    %p961 = scmp.ne.s32.totalorder %s949, %s950
    %p962 = scmp.eq.s32.totalorder %s95, 1
    %p963 = por %p961, %p962
    %p965 = scmp.ne.s32.totalorder %s950, %s964
    %p966 = scmp.eq.s32.totalorder %s95, 0
    %p967 = por %p965, %p966
    %s968 = ssub.s32 %s89, %s96
    %p969 = scmp.eq.s32.totalorder %s968, 0
    %s971 = sadd.s32 %s970, 1
    %s972 = scalar_select %p969, %s970, %s971
    %p975 = pneg %p969
    %p976 = scmp.eq.s32.totalorder %s89, 1
    %p977 = por %p975, %p976
    %p978 = scmp.ne.s32.totalorder %s970, %s973
    %p979 = scmp.eq.s32.totalorder %s89, 0
    %p980 = por %p978, %p979
    %p981 = scmp.ne.s32.totalorder %s970, %s973
    %p982 = scmp.eq.s32.totalorder %s94, 1
    %p983 = por %p981, %p982
    %p984 = scmp.ne.s32.totalorder %s973, %s974
    %p985 = scmp.eq.s32.totalorder %s94, 0
    %p986 = por %p984, %p985
    %p987 = scmp.ne.s32.totalorder %s973, %s974
    %p988 = scmp.eq.s32.totalorder %s95, 1
    %p989 = por %p987, %p988
    %p991 = scmp.ne.s32.totalorder %s974, %s990
    %p992 = scmp.eq.s32.totalorder %s95, 0
    %p993 = por %p991, %p992
    %p994 = scmp.le.s32.totalorder 1, %s89
    %p995 = scmp.lt.s32.totalorder %s89, 3
    %p996 = pnand %p994, %p995
    %p997 = pneg %p996
    // Predicated region
    $region9: #{_lambda_.1} parent=5 // pred_check
      _
    $region10: #{_lambda_.1} parent=5 // pred_check_branch
      %999 = sbr.rel (%p996) target = $region12
    $region11: #{_lambda_.1} parent=5 // pred_region
      %s1000 = ssub.s32 %s89, 1
      // Predicated region
      $region13: #{_lambda_.1} parent=11 // pred_check
        %p1001 = pneg %p162
      $region14: #{_lambda_.1} parent=11 // pred_check_branch
        %1003 = sbr.rel (%p1001) target = $region16
      $region15: #{_lambda_.1} parent=11 // pred_region
        _
      $region16: #{_lambda_.1} parent=11 // pred_fallthru
        _
      // Predicated region
      $region17: #{_lambda_.1} parent=11 // pred_check
        %p1004 = pneg %p183
      $region18: #{_lambda_.1} parent=11 // pred_check_branch
        %1006 = sbr.rel (%p1004) target = $region20
      $region19: #{_lambda_.1} parent=11 // pred_region
        _
      $region20: #{_lambda_.1} parent=11 // pred_fallthru
        _
      // Predicated region
      $region21: #{_lambda_.1} parent=11 // pred_check
        %p1007 = pneg %p204
      $region22: #{_lambda_.1} parent=11 // pred_check_branch
        %1009 = sbr.rel (%p1007) target = $region24
      $region23: #{_lambda_.1} parent=11 // pred_region
        _
      $region24: #{_lambda_.1} parent=11 // pred_fallthru
        _
      // Predicated region
      $region25: #{_lambda_.1} parent=11 // pred_check
        %p1010 = pneg %p225
      $region26: #{_lambda_.1} parent=11 // pred_check_branch
        %1012 = sbr.rel (%p1010) target = $region28
      $region27: #{_lambda_.1} parent=11 // pred_region
        _
      $region28: #{_lambda_.1} parent=11 // pred_fallthru
        _
      // Predicated region
      $region29: #{_lambda_.1} parent=11 // pred_check
        %p1013 = pneg %p246
      $region30: #{_lambda_.1} parent=11 // pred_check_branch
        %1015 = sbr.rel (%p1013) target = $region32
      $region31: #{_lambda_.1} parent=11 // pred_region
        _
      $region32: #{_lambda_.1} parent=11 // pred_fallthru
        _
      // Predicated region
      $region33: #{_lambda_.1} parent=11 // pred_check
        %p1016 = pneg %p267
      $region34: #{_lambda_.1} parent=11 // pred_check_branch
        %1018 = sbr.rel (%p1016) target = $region36
      $region35: #{_lambda_.1} parent=11 // pred_region
        _
      $region36: #{_lambda_.1} parent=11 // pred_fallthru
        _
      // Predicated region
      $region37: #{_lambda_.1} parent=11 // pred_check
        %p1019 = pneg %p288
      $region38: #{_lambda_.1} parent=11 // pred_check_branch
        %1021 = sbr.rel (%p1019) target = $region40
      $region39: #{_lambda_.1} parent=11 // pred_region
        _
      $region40: #{_lambda_.1} parent=11 // pred_fallthru
        _
      // Predicated region
      $region41: #{_lambda_.1} parent=11 // pred_check
        %p1022 = pneg %p309
      $region42: #{_lambda_.1} parent=11 // pred_check_branch
        %1024 = sbr.rel (%p1022) target = $region44
      $region43: #{_lambda_.1} parent=11 // pred_region
        _
      $region44: #{_lambda_.1} parent=11 // pred_fallthru
        _
      // Predicated region
      $region45: #{_lambda_.1} parent=11 // pred_check
        %p1025 = pneg %p330
      $region46: #{_lambda_.1} parent=11 // pred_check_branch
        %1027 = sbr.rel (%p1025) target = $region48
      $region47: #{_lambda_.1} parent=11 // pred_region
        _
      $region48: #{_lambda_.1} parent=11 // pred_fallthru
        _
      // Predicated region
      $region49: #{_lambda_.1} parent=11 // pred_check
        %p1028 = pneg %p351
      $region50: #{_lambda_.1} parent=11 // pred_check_branch
        %1030 = sbr.rel (%p1028) target = $region52
      $region51: #{_lambda_.1} parent=11 // pred_region
        _
      $region52: #{_lambda_.1} parent=11 // pred_fallthru
        _
      // Predicated region
      $region53: #{_lambda_.1} parent=11 // pred_check
        %p1031 = pneg %p372
      $region54: #{_lambda_.1} parent=11 // pred_check_branch
        %1033 = sbr.rel (%p1031) target = $region56
      $region55: #{_lambda_.1} parent=11 // pred_region
        _
      $region56: #{_lambda_.1} parent=11 // pred_fallthru
        _
      // Predicated region
      $region57: #{_lambda_.1} parent=11 // pred_check
        %p1034 = pneg %p393
      $region58: #{_lambda_.1} parent=11 // pred_check_branch
        %1036 = sbr.rel (%p1034) target = $region60
      $region59: #{_lambda_.1} parent=11 // pred_region
        _
      $region60: #{_lambda_.1} parent=11 // pred_fallthru
        _
      // Predicated region
      $region61: #{_lambda_.1} parent=11 // pred_check
        %p1037 = pneg %p414
      $region62: #{_lambda_.1} parent=11 // pred_check_branch
        %1039 = sbr.rel (%p1037) target = $region64
      $region63: #{_lambda_.1} parent=11 // pred_region
        _
      $region64: #{_lambda_.1} parent=11 // pred_fallthru
        _
      // Predicated region
      $region65: #{_lambda_.1} parent=11 // pred_check
        %p1040 = pneg %p435
      $region66: #{_lambda_.1} parent=11 // pred_check_branch
        %1042 = sbr.rel (%p1040) target = $region68
      $region67: #{_lambda_.1} parent=11 // pred_region
        _
      $region68: #{_lambda_.1} parent=11 // pred_fallthru
        _
      // Predicated region
      $region69: #{_lambda_.1} parent=11 // pred_check
        %p1043 = pneg %p456
      $region70: #{_lambda_.1} parent=11 // pred_check_branch
        %1045 = sbr.rel (%p1043) target = $region72
      $region71: #{_lambda_.1} parent=11 // pred_region
        _
      $region72: #{_lambda_.1} parent=11 // pred_fallthru
        _
      // Predicated region
      $region73: #{_lambda_.1} parent=11 // pred_check
        %p1046 = pneg %p477
      $region74: #{_lambda_.1} parent=11 // pred_check_branch
        %1048 = sbr.rel (%p1046) target = $region76
      $region75: #{_lambda_.1} parent=11 // pred_region
        _
      $region76: #{_lambda_.1} parent=11 // pred_fallthru
        _
      // Predicated region
      $region77: #{_lambda_.1} parent=11 // pred_check
        %p1049 = pneg %p498
      $region78: #{_lambda_.1} parent=11 // pred_check_branch
        %1051 = sbr.rel (%p1049) target = $region80
      $region79: #{_lambda_.1} parent=11 // pred_region
        _
      $region80: #{_lambda_.1} parent=11 // pred_fallthru
        _
      // Predicated region
      $region81: #{_lambda_.1} parent=11 // pred_check
        %p1052 = pneg %p519
      $region82: #{_lambda_.1} parent=11 // pred_check_branch
        %1054 = sbr.rel (%p1052) target = $region84
      $region83: #{_lambda_.1} parent=11 // pred_region
        _
      $region84: #{_lambda_.1} parent=11 // pred_fallthru
        _
      // Predicated region
      $region85: #{_lambda_.1} parent=11 // pred_check
        %p1055 = pneg %p540
      $region86: #{_lambda_.1} parent=11 // pred_check_branch
        %1057 = sbr.rel (%p1055) target = $region88
      $region87: #{_lambda_.1} parent=11 // pred_region
        _
      $region88: #{_lambda_.1} parent=11 // pred_fallthru
        _
      // Predicated region
      $region89: #{_lambda_.1} parent=11 // pred_check
        %p1058 = pneg %p561
      $region90: #{_lambda_.1} parent=11 // pred_check_branch
        %1060 = sbr.rel (%p1058) target = $region92
      $region91: #{_lambda_.1} parent=11 // pred_region
        _
      $region92: #{_lambda_.1} parent=11 // pred_fallthru
        _
      // Predicated region
      $region93: #{_lambda_.1} parent=11 // pred_check
        %p1061 = pneg %p582
      $region94: #{_lambda_.1} parent=11 // pred_check_branch
        %1063 = sbr.rel (%p1061) target = $region96
      $region95: #{_lambda_.1} parent=11 // pred_region
        _
      $region96: #{_lambda_.1} parent=11 // pred_fallthru
        _
      // Predicated region
      $region97: #{_lambda_.1} parent=11 // pred_check
        %p1064 = pneg %p603
      $region98: #{_lambda_.1} parent=11 // pred_check_branch
        %1066 = sbr.rel (%p1064) target = $region100
      $region99: #{_lambda_.1} parent=11 // pred_region
        _
      $region100: #{_lambda_.1} parent=11 // pred_fallthru
        _
      // Predicated region
      $region101: #{_lambda_.1} parent=11 // pred_check
        %p1067 = pneg %p624
      $region102: #{_lambda_.1} parent=11 // pred_check_branch
        %1069 = sbr.rel (%p1067) target = $region104
      $region103: #{_lambda_.1} parent=11 // pred_region
        _
      $region104: #{_lambda_.1} parent=11 // pred_fallthru
        _
      // Predicated region
      $region105: #{_lambda_.1} parent=11 // pred_check
        %p1070 = pneg %p645
      $region106: #{_lambda_.1} parent=11 // pred_check_branch
        %1072 = sbr.rel (%p1070) target = $region108
      $region107: #{_lambda_.1} parent=11 // pred_region
        _
      $region108: #{_lambda_.1} parent=11 // pred_fallthru
        _
      // Predicated region
      $region109: #{_lambda_.1} parent=11 // pred_check
        %p1073 = pneg %p666
      $region110: #{_lambda_.1} parent=11 // pred_check_branch
        %1075 = sbr.rel (%p1073) target = $region112
      $region111: #{_lambda_.1} parent=11 // pred_region
        _
      $region112: #{_lambda_.1} parent=11 // pred_fallthru
        _
      // Predicated region
      $region113: #{_lambda_.1} parent=11 // pred_check
        %p1076 = pneg %p687
      $region114: #{_lambda_.1} parent=11 // pred_check_branch
        %1078 = sbr.rel (%p1076) target = $region116
      $region115: #{_lambda_.1} parent=11 // pred_region
        _
      $region116: #{_lambda_.1} parent=11 // pred_fallthru
        _
      // Predicated region
      $region117: #{_lambda_.1} parent=11 // pred_check
        %p1079 = pneg %p708
      $region118: #{_lambda_.1} parent=11 // pred_check_branch
        %1081 = sbr.rel (%p1079) target = $region120
      $region119: #{_lambda_.1} parent=11 // pred_region
        _
      $region120: #{_lambda_.1} parent=11 // pred_fallthru
        _
      // Predicated region
      $region121: #{_lambda_.1} parent=11 // pred_check
        %p1082 = pneg %p729
      $region122: #{_lambda_.1} parent=11 // pred_check_branch
        %1084 = sbr.rel (%p1082) target = $region124
      $region123: #{_lambda_.1} parent=11 // pred_region
        _
      $region124: #{_lambda_.1} parent=11 // pred_fallthru
        _
      // Predicated region
      $region125: #{_lambda_.1} parent=11 // pred_check
        %p1085 = pneg %p750
      $region126: #{_lambda_.1} parent=11 // pred_check_branch
        %1087 = sbr.rel (%p1085) target = $region128
      $region127: #{_lambda_.1} parent=11 // pred_region
        _
      $region128: #{_lambda_.1} parent=11 // pred_fallthru
        _
      // Predicated region
      $region129: #{_lambda_.1} parent=11 // pred_check
        %p1088 = pneg %p771
      $region130: #{_lambda_.1} parent=11 // pred_check_branch
        %1090 = sbr.rel (%p1088) target = $region132
      $region131: #{_lambda_.1} parent=11 // pred_region
        _
      $region132: #{_lambda_.1} parent=11 // pred_fallthru
        _
      // Predicated region
      $region133: #{_lambda_.1} parent=11 // pred_check
        %p1091 = pneg %p792
      $region134: #{_lambda_.1} parent=11 // pred_check_branch
        %1093 = sbr.rel (%p1091) target = $region136
      $region135: #{_lambda_.1} parent=11 // pred_region
        _
      $region136: #{_lambda_.1} parent=11 // pred_fallthru
        _
      // Predicated region
      $region137: #{_lambda_.1} parent=11 // pred_check
        %p1094 = pneg %p813
      $region138: #{_lambda_.1} parent=11 // pred_check_branch
        %1096 = sbr.rel (%p1094) target = $region140
      $region139: #{_lambda_.1} parent=11 // pred_region
        _
      $region140: #{_lambda_.1} parent=11 // pred_fallthru
        _
      // Predicated region
      $region141: #{_lambda_.1} parent=11 // pred_check
        %p1097 = pneg %p834
      $region142: #{_lambda_.1} parent=11 // pred_check_branch
        %1099 = sbr.rel (%p1097) target = $region144
      $region143: #{_lambda_.1} parent=11 // pred_region
        _
      $region144: #{_lambda_.1} parent=11 // pred_fallthru
        _
      // Predicated region
      $region145: #{_lambda_.1} parent=11 // pred_check
        %p1100 = pneg %p855
      $region146: #{_lambda_.1} parent=11 // pred_check_branch
        %1102 = sbr.rel (%p1100) target = $region148
      $region147: #{_lambda_.1} parent=11 // pred_region
        _
      $region148: #{_lambda_.1} parent=11 // pred_fallthru
        _
      // Predicated region
      $region149: #{_lambda_.1} parent=11 // pred_check
        %p1103 = pneg %p876
      $region150: #{_lambda_.1} parent=11 // pred_check_branch
        %1105 = sbr.rel (%p1103) target = $region152
      $region151: #{_lambda_.1} parent=11 // pred_region
        _
      $region152: #{_lambda_.1} parent=11 // pred_fallthru
        _
      // Predicated region
      $region153: #{_lambda_.1} parent=11 // pred_check
        %p1106 = pneg %p897
      $region154: #{_lambda_.1} parent=11 // pred_check_branch
        %1108 = sbr.rel (%p1106) target = $region156
      $region155: #{_lambda_.1} parent=11 // pred_region
        _
      $region156: #{_lambda_.1} parent=11 // pred_fallthru
        _
      // Predicated region
      $region157: #{_lambda_.1} parent=11 // pred_check
        %p1109 = pneg %p918
      $region158: #{_lambda_.1} parent=11 // pred_check_branch
        %1111 = sbr.rel (%p1109) target = $region160
      $region159: #{_lambda_.1} parent=11 // pred_region
        _
      $region160: #{_lambda_.1} parent=11 // pred_fallthru
        _
      // Predicated region
      $region161: #{_lambda_.1} parent=11 // pred_check
        %p1112 = pneg %p939
      $region162: #{_lambda_.1} parent=11 // pred_check_branch
        %1114 = sbr.rel (%p1112) target = $region164
      $region163: #{_lambda_.1} parent=11 // pred_region
        _
      $region164: #{_lambda_.1} parent=11 // pred_fallthru
        _
      // Predicated region
      $region165: #{_lambda_.1} parent=11 // pred_check
        %p1115 = pneg %p960
      $region166: #{_lambda_.1} parent=11 // pred_check_branch
        %1117 = sbr.rel (%p1115) target = $region168
      $region167: #{_lambda_.1} parent=11 // pred_region
        _
      $region168: #{_lambda_.1} parent=11 // pred_fallthru
        _
    $region12: #{_lambda_.1} parent=5 // pred_fallthru
      _
    %p1118 = scmp.lt.s32.totalorder %s89, 2
    // Predicated region
    $region169: #{_lambda_.1} parent=5 // pred_check
      %p1119 = pneg %p1118
    $region170: #{_lambda_.1} parent=5 // pred_check_branch
      %1121 = sbr.rel (%p1119) target = $region172
    $region171: #{_lambda_.1} parent=5 // pred_region
      // Predicated region
      $region173: #{_lambda_.1} parent=171 // pred_check
        %p1122 = pneg %p109
      $region174: #{_lambda_.1} parent=171 // pred_check_branch
        %1124 = sbr.rel (%p1122) target = $region176
      $region175: #{_lambda_.1} parent=171 // pred_region
        %s1125 = smul.u32 2, %s89
        %p1126 = scmp.lt.s32.totalorder %s1125, 3
        %s1127 = scalar_select %p1126, %s1125, 3
        %s1128 = smul.addr %s1127, 8
        %s1129 = scalar_lea.vmem %s1, %s1128
        %s1130 = smul.u32 2, %s89
      $region176: #{_lambda_.1} parent=171 // pred_fallthru
        _
      // Predicated region
      $region177: #{_lambda_.1} parent=171 // pred_check
        %p1131 = pneg %p135
      $region178: #{_lambda_.1} parent=171 // pred_check_branch
        %1133 = sbr.rel (%p1131) target = $region180
      $region179: #{_lambda_.1} parent=171 // pred_region
        %s1134 = smul.u32 2, %s89
        %p1135 = scmp.lt.s32.totalorder %s1134, 3
        %s1136 = scalar_select %p1135, %s1134, 3
        %s1137 = smul.addr %s1136, 8
        %s1138 = scalar_lea.vmem %s3, %s1137
        %s1139 = smul.u32 2, %s89
      $region180: #{_lambda_.1} parent=171 // pred_fallthru
        _
    $region172: #{_lambda_.1} parent=5 // pred_fallthru
      _
    %p1140 = scmp.le.s32.totalorder 1, %s89
    %p1141 = scmp.lt.s32.totalorder %s89, 3
    %p1142 = pnand %p1140, %p1141
    %p1143 = pneg %p1142
    // Predicated region
    $region181: #{_lambda_.1} parent=5 // pred_check
      _
    $region182: #{_lambda_.1} parent=5 // pred_check_branch
      %1145 = sbr.rel (%p1142) target = $region184
    $region183: #{_lambda_.1} parent=5 // pred_region
      %s1146 = ssub.s32 %s89, 1
      %s1147 = smul.u32 2, %s94
      %p1148 = scmp.lt.s32.totalorder %s1147, 3
      %s1149 = scalar_select %p1148, %s1147, 3
      %s1150 = smul.addr %s1149, 8
      %s1151 = scalar_lea.vmem %s1, %s1150
      %p1152 = pneg %p115
      %p1153 = pneg %p112
      %s1154 = smul.u32 2, %s94
      %p1155 = scmp.lt.s32.totalorder %s1154, 3
      %s1156 = scalar_select %p1155, %s1154, 3
      %s1157 = smul.addr %s1156, 8
      %s1158 = scalar_lea.vmem %s3, %s1157
      %p1159 = pneg %p141
      %p1160 = pneg %p138
      %p1161 = pneg %p162
      %p1162 = pneg %p159
      %p1163 = pneg %p183
      %p1164 = pneg %p180
      %p1165 = pneg %p204
      %p1166 = pneg %p201
      %p1167 = pneg %p225
      %p1168 = pneg %p222
      %p1169 = pneg %p246
      %p1170 = pneg %p243
      %p1171 = pneg %p267
      %p1172 = pneg %p264
      %p1173 = pneg %p288
      %p1174 = pneg %p285
      %p1175 = pneg %p309
      %p1176 = pneg %p306
      %p1177 = pneg %p330
      %p1178 = pneg %p327
      %p1179 = pneg %p351
      %p1180 = pneg %p348
      %p1181 = pneg %p372
      %p1182 = pneg %p369
      %p1183 = pneg %p393
      %p1184 = pneg %p390
      %p1185 = pneg %p414
      %p1186 = pneg %p411
      %p1187 = pneg %p435
      %p1188 = pneg %p432
      %p1189 = pneg %p456
      %p1190 = pneg %p453
      %p1191 = pneg %p477
      %p1192 = pneg %p474
      %p1193 = pneg %p498
      %p1194 = pneg %p495
      %p1195 = pneg %p519
      %p1196 = pneg %p516
      %p1197 = pneg %p540
      %p1198 = pneg %p537
      %p1199 = pneg %p561
      %p1200 = pneg %p558
      %p1201 = pneg %p582
      %p1202 = pneg %p579
      %p1203 = pneg %p603
      %p1204 = pneg %p600
      %p1205 = pneg %p624
      %p1206 = pneg %p621
      %p1207 = pneg %p645
      %p1208 = pneg %p642
      %p1209 = pneg %p666
      %p1210 = pneg %p663
      %p1211 = pneg %p687
      %p1212 = pneg %p684
      %p1213 = pneg %p708
      %p1214 = pneg %p705
      %p1215 = pneg %p729
      %p1216 = pneg %p726
      %p1217 = pneg %p750
      %p1218 = pneg %p747
      %p1219 = pneg %p771
      %p1220 = pneg %p768
      %p1221 = pneg %p792
      %p1222 = pneg %p789
      %p1223 = pneg %p813
      %p1224 = pneg %p810
      %p1225 = pneg %p834
      %p1226 = pneg %p831
      %p1227 = pneg %p855
      %p1228 = pneg %p852
      %p1229 = pneg %p876
      %p1230 = pneg %p873
      %p1231 = pneg %p897
      %p1232 = pneg %p894
      %p1233 = pneg %p918
      %p1234 = pneg %p915
      %p1235 = pneg %p939
      %p1236 = pneg %p936
      %p1237 = pneg %p960
      %p1238 = pneg %p957
      %p1239 = pneg %p986
      %p1240 = pneg %p983
      %s1241 = smul.u32 2, %s94
      %p1242 = scmp.lt.s32.totalorder %s1241, 3
      %s1243 = scalar_select %p1242, %s1241, 3
      %s1244 = smul.addr %s1243, 8
      %s1245 = scalar_lea.vmem %s83, %s1244
      %s1246 = smul.u32 2, %s94
      %p1247 = scmp.lt.s32.totalorder %s1246, 3
      %s1248 = scalar_select %p1247, %s1246, 3
      %s1249 = smul.addr %s1248, 8
      %s1250 = scalar_lea.vmem %s1, %s1249
      %s1251 = smul.u32 2, %s94
      %s1252 = smul.u32 2, %s94
      %p1253 = scmp.lt.s32.totalorder %s1252, 3
      %s1254 = scalar_select %p1253, %s1252, 3
      %s1255 = smul.addr %s1254, 8
      %s1256 = scalar_lea.vmem %s3, %s1255
      %s1257 = smul.u32 2, %s94
      %s1258 = smul.u32 2, %s94
      %p1259 = scmp.lt.s32.totalorder %s1258, 3
      %s1260 = scalar_select %p1259, %s1258, 3
      %s1261 = smul.addr %s1260, 8
      %s1262 = scalar_lea.vmem %s83, %s1261
      %s1263 = smul.u32 2, %s94
      %v1265 = vld [vmem:[%s1250] sm:$0xff]
      %v1266 = vld [vmem:[%s1250 + $0x8] sm:$0xff]
      %v1267 = vld [vmem:[%s1256] sm:$0xff]
      %v1268 = vld [vmem:[%s1256 + $0x8] sm:$0xff]
      %v1269 = vld [vmem:[%s5] sm:$0xff]
      %v1270 = vld [vmem:[%s5 + $0x8] sm:$0xff]
      %s1271 = scalar_lea.vmem %s5, 16
      %v1272 = vld [vmem:[%s1271] sm:$0xff]
      %v1273 = vld [vmem:[%s1271 + $0x8] sm:$0xff]
      %vm1274 = vcmask 130048
      %v1276 = vsel %vm1274, %v1272, 0
      %v1279 = vsel %vm1274, %v1273, 0
      %1281 = vmatprep.subr.mxu0 0.0
      %1282 = vmatpush1.msra.mxu0 0.0
      %1283 = vmatprep.subr.mxu0 0.0
      %1284 = vmatpush1.msra.mxu0 0.0
      %1285 = vmatprep.subr.mxu0 0.0
      %1286 = vmatpush1.msra.mxu0 0.0
      %1287 = vmatprep.subr.mxu0 0.0
      %1288 = vmatpush1.msra.mxu0 0.0
      %1289 = vmatprep.subr.mxu0 0.0
      %1290 = vmatpush1.msra.mxu0 0.0
      %1291 = vmatprep.subr.mxu0 0.0
      %1292 = vmatpush1.msra.mxu0 0.0
      %1293 = vmatprep.subr.mxu0 0.0
      %1294 = vmatpush1.msra.mxu0 0.0
      %1295 = vmatprep.subr.mxu0 0.0
      %1296 = vmatpush1.msra.mxu0 0.0
      %1297 = vmatprep.subr.mxu0 0.0
      %1298 = vmatpush1.msra.mxu0 0.0
      %1299 = vmatprep.subr.mxu0 0.0
      %1300 = vmatpush1.msra.mxu0 0.0
      %1301 = vmatprep.subr.mxu0 0.0
      %1302 = vmatpush1.msra.mxu0 0.0
      %1303 = vmatprep.subr.mxu0 0.0
      %1304 = vmatpush1.msra.mxu0 0.0
      %1305 = vmatprep.subr.mxu0 0.0
      %1306 = vmatpush1.msra.mxu0 0.0
      %1307 = vmatprep.subr.mxu0 0.0
      %1308 = vmatpush1.msra.mxu0 0.0
      %1309 = vmatprep.subr.mxu0 0.0
      %1310 = vmatpush1.msra.mxu0 %v1266
      %1311 = vmatprep.subr.mxu0 0.0
      %1312 = vmatpush1.msra.mxu0 %v1265
      %1313 = vmatprep.subr.mxu0 0.0
      %1314 = vmatpush2.msra.mxu0 0.0
      %1315 = vmatprep.subr.mxu0 0.0
      %1316 = vmatpush2.msra.mxu0 0.0
      %1317 = vmatprep.subr.mxu0 0.0
      %1318 = vmatpush2.msra.mxu0 0.0
      %1319 = vmatprep.subr.mxu0 0.0
      %1320 = vmatpush2.msra.mxu0 0.0
      %1321 = vmatprep.subr.mxu0 0.0
      %1322 = vmatpush2.msra.mxu0 0.0
      %1323 = vmatprep.subr.mxu0 0.0
      %1324 = vmatpush2.msra.mxu0 0.0
      %1325 = vmatprep.subr.mxu0 0.0
      %1326 = vmatpush2.msra.mxu0 0.0
      %1327 = vmatprep.subr.mxu0 0.0
      %1328 = vmatpush2.msra.mxu0 0.0
      %1329 = vmatprep.subr.mxu0 0.0
      %1330 = vmatpush2.msra.mxu0 0.0
      %1331 = vmatprep.subr.mxu0 0.0
      %1332 = vmatpush2.msra.mxu0 0.0
      %1333 = vmatprep.subr.mxu0 0.0
      %1334 = vmatpush2.msra.mxu0 0.0
      %1335 = vmatprep.subr.mxu0 0.0
      %1336 = vmatpush2.msra.mxu0 0.0
      %1337 = vmatprep.subr.mxu0 0.0
      %1338 = vmatpush2.msra.mxu0 0.0
      %1339 = vmatprep.subr.mxu0 0.0
      %1340 = vmatpush2.msra.mxu0 0.0
      %1341 = vmatprep.subr.mxu0 0.0
      %1342 = vmatpush2.msra.mxu0 0.0
      %1343 = vmatprep.subr.mxu0 0.0
      %1344 = vmatpush2.msra.mxu0 0.0
      %1345 = vmatprep.mubr.f32.mxu0 0.0
      %1346 = vmatmul.mubr.f32.gmra.mxu0 %v1276
      %v1347 = vpop.f32.mrf.mxu0
      %v1348 = vadd.f32 0.0, %v1347
      %v1349 = vpop.f32.mrf.mxu0
      %1350 = vmatprep.mubr.f32.mxu0 0.0
      %1351 = vmatmul.mubr.f32.gmra.mxu0 %v1279
      %v1352 = vpop.f32.mrf.mxu0
      %v1353 = vadd.f32 0.0, %v1352
      %v1354 = vpop.f32.mrf.mxu0
      %1355 = vdwg.mxu0
      %v1357 = vsel %vm1274, %v1269, 0
      %v1360 = vsel %vm1274, %v1270, 0
      %1362 = vmatprep.subr.mxu0 0.0
      %1363 = vmatpush1.msra.mxu0 0.0
      %1364 = vmatprep.subr.mxu0 0.0
      %1365 = vmatpush1.msra.mxu0 0.0
      %1366 = vmatprep.subr.mxu0 0.0
      %1367 = vmatpush1.msra.mxu0 0.0
      %1368 = vmatprep.subr.mxu0 0.0
      %1369 = vmatpush1.msra.mxu0 0.0
      %1370 = vmatprep.subr.mxu0 0.0
      %1371 = vmatpush1.msra.mxu0 0.0
      %1372 = vmatprep.subr.mxu0 0.0
      %1373 = vmatpush1.msra.mxu0 0.0
      %1374 = vmatprep.subr.mxu0 0.0
      %1375 = vmatpush1.msra.mxu0 0.0
      %1376 = vmatprep.subr.mxu0 0.0
      %1377 = vmatpush1.msra.mxu0 0.0
      %1378 = vmatprep.subr.mxu0 0.0
      %1379 = vmatpush1.msra.mxu0 0.0
      %1380 = vmatprep.subr.mxu0 0.0
      %1381 = vmatpush1.msra.mxu0 0.0
      %1382 = vmatprep.subr.mxu0 0.0
      %1383 = vmatpush1.msra.mxu0 0.0
      %1384 = vmatprep.subr.mxu0 0.0
      %1385 = vmatpush1.msra.mxu0 0.0
      %1386 = vmatprep.subr.mxu0 0.0
      %1387 = vmatpush1.msra.mxu0 0.0
      %1388 = vmatprep.subr.mxu0 0.0
      %1389 = vmatpush1.msra.mxu0 0.0
      %1390 = vmatprep.subr.mxu0 0.0
      %1391 = vmatpush1.msra.mxu0 %v1266
      %1392 = vmatprep.subr.mxu0 0.0
      %1393 = vmatpush1.msra.mxu0 %v1265
      %1394 = vmatprep.subr.mxu0 0.0
      %1395 = vmatpush2.msra.mxu0 0.0
      %1396 = vmatprep.subr.mxu0 0.0
      %1397 = vmatpush2.msra.mxu0 0.0
      %1398 = vmatprep.subr.mxu0 0.0
      %1399 = vmatpush2.msra.mxu0 0.0
      %1400 = vmatprep.subr.mxu0 0.0
      %1401 = vmatpush2.msra.mxu0 0.0
      %1402 = vmatprep.subr.mxu0 0.0
      %1403 = vmatpush2.msra.mxu0 0.0
      %1404 = vmatprep.subr.mxu0 0.0
      %1405 = vmatpush2.msra.mxu0 0.0
      %1406 = vmatprep.subr.mxu0 0.0
      %1407 = vmatpush2.msra.mxu0 0.0
      %1408 = vmatprep.subr.mxu0 0.0
      %1409 = vmatpush2.msra.mxu0 0.0
      %1410 = vmatprep.subr.mxu0 0.0
      %1411 = vmatpush2.msra.mxu0 0.0
      %1412 = vmatprep.subr.mxu0 0.0
      %1413 = vmatpush2.msra.mxu0 0.0
      %1414 = vmatprep.subr.mxu0 0.0
      %1415 = vmatpush2.msra.mxu0 0.0
      %1416 = vmatprep.subr.mxu0 0.0
      %1417 = vmatpush2.msra.mxu0 0.0
      %1418 = vmatprep.subr.mxu0 0.0
      %1419 = vmatpush2.msra.mxu0 0.0
      %1420 = vmatprep.subr.mxu0 0.0
      %1421 = vmatpush2.msra.mxu0 0.0
      %1422 = vmatprep.subr.mxu0 0.0
      %1423 = vmatpush2.msra.mxu0 0.0
      %1424 = vmatprep.subr.mxu0 0.0
      %1425 = vmatpush2.msra.mxu0 0.0
      %1426 = vmatprep.mubr.f32.mxu0 0.0
      %1427 = vmatmul.mubr.f32.gmra.mxu0 %v1357
      %v1428 = vpop.f32.mrf.mxu0
      %v1429 = vadd.f32 %v1348, %v1428
      %v1430 = vpop.f32.mrf.mxu0
      %1431 = vmatprep.mubr.f32.mxu0 0.0
      %1432 = vmatmul.mubr.f32.gmra.mxu0 %v1360
      %v1433 = vpop.f32.mrf.mxu0
      %v1434 = vadd.f32 %v1353, %v1433
      %v1435 = vpop.f32.mrf.mxu0
      %1436 = vdwg.mxu0
      %v1437 = vrcp.pop 2.0
      %v1438 = vmul.f32 %v1429, %v1437
      %v1439 = vmul.f32 %v1434, %v1437
      %v1440 = vsub.f32 %v1265, %v1438
      %v1441 = vsub.f32 %v1266, %v1439
      %v1442 = vld [vmem:[%s13] sm:$0xff]
      %v1443 = vld [vmem:[%s13 + $0x8] sm:$0xff]
      %v1444 = vld [vmem:[%s7] sm:$0xf]
      %v1445 = vld [vmem:[%s7 + $0x4] sm:$0xf]
      %v1446 = vpack.c.bf16 %v1441, %v1440
      %v1449 = vunpack.c.l.b16 %v1444
      %v1450 = vunpack.c.l.b16 %v1445
      %v1451 = vpack.c.b16 %v1450, %v1449
      %v1453 = vsel %vm1274, %v1451, 0
      %1455 = vmatprep.subr.bf16.mxu0 0
      %1456 = vmatpush1.bf16.msra.mxu0 0
      %1457 = vmatprep.subr.bf16.mxu0 0
      %1458 = vmatpush1.bf16.msra.mxu0 0
      %1459 = vmatprep.subr.bf16.mxu0 0
      %1460 = vmatpush1.bf16.msra.mxu0 0
      %1461 = vmatprep.subr.bf16.mxu0 0
      %1462 = vmatpush1.bf16.msra.mxu0 0
      %1463 = vmatprep.subr.bf16.mxu0 0
      %1464 = vmatpush1.bf16.msra.mxu0 0
      %1465 = vmatprep.subr.bf16.mxu0 0
      %1466 = vmatpush1.bf16.msra.mxu0 0
      %1467 = vmatprep.subr.bf16.mxu0 0
      %1468 = vmatpush1.bf16.msra.mxu0 0
      %1469 = vmatprep.subr.bf16.mxu0 0
      %1470 = vmatpush1.bf16.msra.mxu0 %v1446
      %1471 = vmatprep.subr.bf16.mxu0 0
      %1472 = vmatpush2.bf16.msra.mxu0 0
      %1473 = vmatprep.subr.bf16.mxu0 0
      %1474 = vmatpush2.bf16.msra.mxu0 0
      %1475 = vmatprep.subr.bf16.mxu0 0
      %1476 = vmatpush2.bf16.msra.mxu0 0
      %1477 = vmatprep.subr.bf16.mxu0 0
      %1478 = vmatpush2.bf16.msra.mxu0 0
      %1479 = vmatprep.subr.bf16.mxu0 0
      %1480 = vmatpush2.bf16.msra.mxu0 0
      %1481 = vmatprep.subr.bf16.mxu0 0
      %1482 = vmatpush2.bf16.msra.mxu0 0
      %1483 = vmatprep.subr.bf16.mxu0 0
      %1484 = vmatpush2.bf16.msra.mxu0 0
      %1485 = vmatprep.subr.bf16.mxu0 0
      %1486 = vmatpush2.bf16.msra.mxu0 0
      %1487 = vmatprep.mubr.bf16.mxu0 0
      %1488 = vmatmul.mubr.bf16.gmra.mxu0 %v1453
      %v1489 = vpop.f32.mrf.mxu0
      %v1490 = vadd.f32 0.0, %v1489
      %v1491 = vpop.f32.mrf.mxu0
      %v1492 = vpop.f32.mrf.mxu0
      %v1493 = vadd.f32 0.0, %v1492
      %v1494 = vpop.f32.mrf.mxu0
      %1495 = vdwg.mxu0
      %v1496 = vld [vmem:[%s9] sm:$0x3]
      %v1497 = vpack.c.bf16 %v1493, %v1490
      %vm1498 = vcmask 31744
      %v1500 = vsel %vm1498, %v1497, 0
      %vm1502 = vcmask 1041408
      %v1504 = vsel %vm1502, %v1496, 0
      %1506 = vmatprep.subr.bf16.mxu0 0
      %1507 = vmatpush1.bf16.msra.mxu0 0
      %1508 = vmatprep.subr.bf16.mxu0 0
      %1509 = vmatpush1.bf16.msra.mxu0 0
      %1510 = vmatprep.subr.bf16.mxu0 0
      %1511 = vmatpush1.bf16.msra.mxu0 0
      %1512 = vmatprep.subr.bf16.mxu0 0
      %1513 = vmatpush1.bf16.msra.mxu0 0
      %1514 = vmatprep.subr.bf16.mxu0 0
      %1515 = vmatpush1.bf16.msra.mxu0 0
      %1516 = vmatprep.subr.bf16.mxu0 0
      %1517 = vmatpush1.bf16.msra.mxu0 0
      %1518 = vmatprep.subr.bf16.mxu0 0
      %1519 = vmatpush1.bf16.msra.mxu0 0
      %1520 = vmatprep.subr.bf16.mxu0 0
      %1521 = vmatpush1.bf16.msra.mxu0 %v1504
      %1522 = vmatprep.subr.bf16.mxu0 0
      %1523 = vmatpush2.bf16.msra.mxu0 0
      %1524 = vmatprep.subr.bf16.mxu0 0
      %1525 = vmatpush2.bf16.msra.mxu0 0
      %1526 = vmatprep.subr.bf16.mxu0 0
      %1527 = vmatpush2.bf16.msra.mxu0 0
      %1528 = vmatprep.subr.bf16.mxu0 0
      %1529 = vmatpush2.bf16.msra.mxu0 0
      %1530 = vmatprep.subr.bf16.mxu0 0
      %1531 = vmatpush2.bf16.msra.mxu0 0
      %1532 = vmatprep.subr.bf16.mxu0 0
      %1533 = vmatpush2.bf16.msra.mxu0 0
      %1534 = vmatprep.subr.bf16.mxu0 0
      %1535 = vmatpush2.bf16.msra.mxu0 0
      %1536 = vmatprep.subr.bf16.mxu0 0
      %1537 = vmatpush2.bf16.msra.mxu0 0
      %1538 = vmatprep.mubr.bf16.mxu0 0
      %1539 = vmatmul.mubr.bf16.gmra.mxu0 %v1500
      %v1540 = vpop.f32.mrf.mxu0
      %v1541 = vadd.f32 0.0, %v1540
      %v1542 = vpop.f32.mrf.mxu0
      %v1543 = vpop.f32.mrf.mxu0
      %v1544 = vadd.f32 0.0, %v1543
      %v1545 = vpop.f32.mrf.mxu0
      %1546 = vdwg.mxu0
      %v1547 = vadd.f32 %v1442, %v1541
      %v1548 = vadd.f32 %v1443, %v1544
      %s1549 = scalar_lea.vmem %s9, 2
      %v1550 = vld [vmem:[%s1549] sm:$0x3]
      %v1552 = vsel %vm1498, %v1446, 0
      %v1555 = vsel %vm1502, %v1550, 0
      %1557 = vmatprep.subr.bf16.mxu0 0
      %1558 = vmatpush1.bf16.msra.mxu0 0
      %1559 = vmatprep.subr.bf16.mxu0 0
      %1560 = vmatpush1.bf16.msra.mxu0 0
      %1561 = vmatprep.subr.bf16.mxu0 0
      %1562 = vmatpush1.bf16.msra.mxu0 0
      %1563 = vmatprep.subr.bf16.mxu0 0
      %1564 = vmatpush1.bf16.msra.mxu0 0
      %1565 = vmatprep.subr.bf16.mxu0 0
      %1566 = vmatpush1.bf16.msra.mxu0 0
      %1567 = vmatprep.subr.bf16.mxu0 0
      %1568 = vmatpush1.bf16.msra.mxu0 0
      %1569 = vmatprep.subr.bf16.mxu0 0
      %1570 = vmatpush1.bf16.msra.mxu0 0
      %1571 = vmatprep.subr.bf16.mxu0 0
      %1572 = vmatpush1.bf16.msra.mxu0 %v1555
      %1573 = vmatprep.subr.bf16.mxu0 0
      %1574 = vmatpush2.bf16.msra.mxu0 0
      %1575 = vmatprep.subr.bf16.mxu0 0
      %1576 = vmatpush2.bf16.msra.mxu0 0
      %1577 = vmatprep.subr.bf16.mxu0 0
      %1578 = vmatpush2.bf16.msra.mxu0 0
      %1579 = vmatprep.subr.bf16.mxu0 0
      %1580 = vmatpush2.bf16.msra.mxu0 0
      %1581 = vmatprep.subr.bf16.mxu0 0
      %1582 = vmatpush2.bf16.msra.mxu0 0
      %1583 = vmatprep.subr.bf16.mxu0 0
      %1584 = vmatpush2.bf16.msra.mxu0 0
      %1585 = vmatprep.subr.bf16.mxu0 0
      %1586 = vmatpush2.bf16.msra.mxu0 0
      %1587 = vmatprep.subr.bf16.mxu0 0
      %1588 = vmatpush2.bf16.msra.mxu0 0
      %1589 = vmatprep.mubr.bf16.mxu0 0
      %1590 = vmatmul.mubr.bf16.gmra.mxu0 %v1552
      %v1591 = vpop.f32.mrf.mxu0
      %v1592 = vadd.f32 0.0, %v1591
      %v1593 = vpop.f32.mrf.mxu0
      %v1594 = vpop.f32.mrf.mxu0
      %v1595 = vadd.f32 0.0, %v1594
      %v1596 = vpop.f32.mrf.mxu0
      %1597 = vdwg.mxu0
      %v1598 = vadd.f32 %v1547, %v1592
      %v1599 = vadd.f32 %v1548, %v1595
      %s1600 = scalar_lea.vmem %s7, 16
      %v1601 = vld [vmem:[%s1600] sm:$0xf]
      %v1602 = vld [vmem:[%s1600 + $0x4] sm:$0xf]
      %v1605 = vunpack.c.l.b16 %v1601
      %v1606 = vunpack.c.l.b16 %v1602
      %v1607 = vpack.c.b16 %v1606, %v1605
      %v1609 = vsel %vm1274, %v1607, 0
      %1611 = vmatprep.subr.bf16.mxu0 0
      %1612 = vmatpush1.bf16.msra.mxu0 0
      %1613 = vmatprep.subr.bf16.mxu0 0
      %1614 = vmatpush1.bf16.msra.mxu0 0
      %1615 = vmatprep.subr.bf16.mxu0 0
      %1616 = vmatpush1.bf16.msra.mxu0 0
      %1617 = vmatprep.subr.bf16.mxu0 0
      %1618 = vmatpush1.bf16.msra.mxu0 0
      %1619 = vmatprep.subr.bf16.mxu0 0
      %1620 = vmatpush1.bf16.msra.mxu0 0
      %1621 = vmatprep.subr.bf16.mxu0 0
      %1622 = vmatpush1.bf16.msra.mxu0 0
      %1623 = vmatprep.subr.bf16.mxu0 0
      %1624 = vmatpush1.bf16.msra.mxu0 0
      %1625 = vmatprep.subr.bf16.mxu0 0
      %1626 = vmatpush1.bf16.msra.mxu0 %v1446
      %1627 = vmatprep.subr.bf16.mxu0 0
      %1628 = vmatpush2.bf16.msra.mxu0 0
      %1629 = vmatprep.subr.bf16.mxu0 0
      %1630 = vmatpush2.bf16.msra.mxu0 0
      %1631 = vmatprep.subr.bf16.mxu0 0
      %1632 = vmatpush2.bf16.msra.mxu0 0
      %1633 = vmatprep.subr.bf16.mxu0 0
      %1634 = vmatpush2.bf16.msra.mxu0 0
      %1635 = vmatprep.subr.bf16.mxu0 0
      %1636 = vmatpush2.bf16.msra.mxu0 0
      %1637 = vmatprep.subr.bf16.mxu0 0
      %1638 = vmatpush2.bf16.msra.mxu0 0
      %1639 = vmatprep.subr.bf16.mxu0 0
      %1640 = vmatpush2.bf16.msra.mxu0 0
      %1641 = vmatprep.subr.bf16.mxu0 0
      %1642 = vmatpush2.bf16.msra.mxu0 0
      %1643 = vmatprep.mubr.bf16.mxu0 0
      %1644 = vmatmul.mubr.bf16.gmra.mxu0 %v1609
      %v1645 = vpop.f32.mrf.mxu0
      %v1646 = vadd.f32 0.0, %v1645
      %v1647 = vpop.f32.mrf.mxu0
      %v1648 = vpop.f32.mrf.mxu0
      %v1649 = vadd.f32 0.0, %v1648
      %v1650 = vpop.f32.mrf.mxu0
      %1651 = vdwg.mxu0
      %s1652 = scalar_lea.vmem %s9, 4
      %v1653 = vld [vmem:[%s1652] sm:$0x3]
      %v1654 = vpack.c.bf16 %v1649, %v1646
      %v1656 = vsel %vm1498, %v1654, 0
      %v1659 = vsel %vm1502, %v1653, 0
      %1661 = vmatprep.subr.bf16.mxu0 0
      %1662 = vmatpush1.bf16.msra.mxu0 0
      %1663 = vmatprep.subr.bf16.mxu0 0
      %1664 = vmatpush1.bf16.msra.mxu0 0
      %1665 = vmatprep.subr.bf16.mxu0 0
      %1666 = vmatpush1.bf16.msra.mxu0 0
      %1667 = vmatprep.subr.bf16.mxu0 0
      %1668 = vmatpush1.bf16.msra.mxu0 0
      %1669 = vmatprep.subr.bf16.mxu0 0
      %1670 = vmatpush1.bf16.msra.mxu0 0
      %1671 = vmatprep.subr.bf16.mxu0 0
      %1672 = vmatpush1.bf16.msra.mxu0 0
      %1673 = vmatprep.subr.bf16.mxu0 0
      %1674 = vmatpush1.bf16.msra.mxu0 0
      %1675 = vmatprep.subr.bf16.mxu0 0
      %1676 = vmatpush1.bf16.msra.mxu0 %v1659
      %1677 = vmatprep.subr.bf16.mxu0 0
      %1678 = vmatpush2.bf16.msra.mxu0 0
      %1679 = vmatprep.subr.bf16.mxu0 0
      %1680 = vmatpush2.bf16.msra.mxu0 0
      %1681 = vmatprep.subr.bf16.mxu0 0
      %1682 = vmatpush2.bf16.msra.mxu0 0
      %1683 = vmatprep.subr.bf16.mxu0 0
      %1684 = vmatpush2.bf16.msra.mxu0 0
      %1685 = vmatprep.subr.bf16.mxu0 0
      %1686 = vmatpush2.bf16.msra.mxu0 0
      %1687 = vmatprep.subr.bf16.mxu0 0
      %1688 = vmatpush2.bf16.msra.mxu0 0
      %1689 = vmatprep.subr.bf16.mxu0 0
      %1690 = vmatpush2.bf16.msra.mxu0 0
      %1691 = vmatprep.subr.bf16.mxu0 0
      %1692 = vmatpush2.bf16.msra.mxu0 0
      %1693 = vmatprep.mubr.bf16.mxu0 0
      %1694 = vmatmul.mubr.bf16.gmra.mxu0 %v1656
      %v1695 = vpop.f32.mrf.mxu0
      %v1696 = vadd.f32 0.0, %v1695
      %v1697 = vpop.f32.mrf.mxu0
      %v1698 = vpop.f32.mrf.mxu0
      %v1699 = vadd.f32 0.0, %v1698
      %v1700 = vpop.f32.mrf.mxu0
      %1701 = vdwg.mxu0
      %v1702 = vadd.f32 %v1598, %v1696
      %v1703 = vadd.f32 %v1599, %v1699
      %v1704 = vld [vmem:[%s11] sm:$0x3]
      %v1705 = vpack.c.bf16 %v1268, %v1267
      %v1707 = vsel %vm1498, %v1705, 0
      %v1710 = vsel %vm1502, %v1704, 0
      %1712 = vmatprep.subr.bf16.mxu0 0
      %1713 = vmatpush1.bf16.msra.mxu0 0
      %1714 = vmatprep.subr.bf16.mxu0 0
      %1715 = vmatpush1.bf16.msra.mxu0 0
      %1716 = vmatprep.subr.bf16.mxu0 0
      %1717 = vmatpush1.bf16.msra.mxu0 0
      %1718 = vmatprep.subr.bf16.mxu0 0
      %1719 = vmatpush1.bf16.msra.mxu0 0
      %1720 = vmatprep.subr.bf16.mxu0 0
      %1721 = vmatpush1.bf16.msra.mxu0 0
      %1722 = vmatprep.subr.bf16.mxu0 0
      %1723 = vmatpush1.bf16.msra.mxu0 0
      %1724 = vmatprep.subr.bf16.mxu0 0
      %1725 = vmatpush1.bf16.msra.mxu0 0
      %1726 = vmatprep.subr.bf16.mxu0 0
      %1727 = vmatpush1.bf16.msra.mxu0 %v1710
      %1728 = vmatprep.subr.bf16.mxu0 0
      %1729 = vmatpush2.bf16.msra.mxu0 0
      %1730 = vmatprep.subr.bf16.mxu0 0
      %1731 = vmatpush2.bf16.msra.mxu0 0
      %1732 = vmatprep.subr.bf16.mxu0 0
      %1733 = vmatpush2.bf16.msra.mxu0 0
      %1734 = vmatprep.subr.bf16.mxu0 0
      %1735 = vmatpush2.bf16.msra.mxu0 0
      %1736 = vmatprep.subr.bf16.mxu0 0
      %1737 = vmatpush2.bf16.msra.mxu0 0
      %1738 = vmatprep.subr.bf16.mxu0 0
      %1739 = vmatpush2.bf16.msra.mxu0 0
      %1740 = vmatprep.subr.bf16.mxu0 0
      %1741 = vmatpush2.bf16.msra.mxu0 0
      %1742 = vmatprep.subr.bf16.mxu0 0
      %1743 = vmatpush2.bf16.msra.mxu0 0
      %1744 = vmatprep.mubr.bf16.mxu0 0
      %1745 = vmatmul.mubr.bf16.gmra.mxu0 %v1707
      %v1746 = vpop.f32.mrf.mxu0
      %v1747 = vadd.f32 0.0, %v1746
      %v1748 = vpop.f32.mrf.mxu0
      %v1749 = vpop.f32.mrf.mxu0
      %v1750 = vadd.f32 0.0, %v1749
      %v1751 = vpop.f32.mrf.mxu0
      %1752 = vdwg.mxu0
      %v1753 = vadd.f32 %v1702, %v1747
      %v1754 = vadd.f32 %v1703, %v1750
      %v1755 = vld [vmem:[%s51] sm:$0x1]
      %v1756 = vld [vmem:[%s53] sm:$0x1]
      %1757 = vmatprep.subr.mxu0 0.0
      %1758 = vmatpush1.msra.mxu0 0.0
      %1759 = vmatprep.subr.mxu0 0.0
      %1760 = vmatpush1.msra.mxu0 0.0
      %1761 = vmatprep.subr.mxu0 0.0
      %1762 = vmatpush1.msra.mxu0 0.0
      %1763 = vmatprep.subr.mxu0 0.0
      %1764 = vmatpush1.msra.mxu0 0.0
      %1765 = vmatprep.subr.mxu0 0.0
      %1766 = vmatpush1.msra.mxu0 0.0
      %1767 = vmatprep.subr.mxu0 0.0
      %1768 = vmatpush1.msra.mxu0 0.0
      %1769 = vmatprep.subr.mxu0 0.0
      %1770 = vmatpush1.msra.mxu0 0.0
      %1771 = vmatprep.subr.mxu0 0.0
      %1772 = vmatpush1.msra.mxu0 0.0
      %1773 = vmatprep.subr.mxu0 0.0
      %1774 = vmatpush1.msra.mxu0 0.0
      %1775 = vmatprep.subr.mxu0 0.0
      %1776 = vmatpush1.msra.mxu0 0.0
      %1777 = vmatprep.subr.mxu0 0.0
      %1778 = vmatpush1.msra.mxu0 0.0
      %1779 = vmatprep.subr.mxu0 0.0
      %1780 = vmatpush1.msra.mxu0 0.0
      %1781 = vmatprep.subr.mxu0 0.0
      %1782 = vmatpush1.msra.mxu0 0.0
      %1783 = vmatprep.subr.mxu0 0.0
      %1784 = vmatpush1.msra.mxu0 0.0
      %1785 = vmatprep.subr.mxu0 0.0
      %1786 = vmatpush1.msra.mxu0 %v1754
      %1787 = vmatprep.subr.mxu0 0.0
      %1788 = vmatpush1.msra.mxu0 %v1753
      %1789 = vmatprep.subr.mxu0 0.0
      %1790 = vmatpush2.msra.mxu0 0.0
      %1791 = vmatprep.subr.mxu0 0.0
      %1792 = vmatpush2.msra.mxu0 0.0
      %1793 = vmatprep.subr.mxu0 0.0
      %1794 = vmatpush2.msra.mxu0 0.0
      %1795 = vmatprep.subr.mxu0 0.0
      %1796 = vmatpush2.msra.mxu0 0.0
      %1797 = vmatprep.subr.mxu0 0.0
      %1798 = vmatpush2.msra.mxu0 0.0
      %1799 = vmatprep.subr.mxu0 0.0
      %1800 = vmatpush2.msra.mxu0 0.0
      %1801 = vmatprep.subr.mxu0 0.0
      %1802 = vmatpush2.msra.mxu0 0.0
      %1803 = vmatprep.subr.mxu0 0.0
      %1804 = vmatpush2.msra.mxu0 0.0
      %1805 = vmatprep.subr.mxu0 0.0
      %1806 = vmatpush2.msra.mxu0 0.0
      %1807 = vmatprep.subr.mxu0 0.0
      %1808 = vmatpush2.msra.mxu0 0.0
      %1809 = vmatprep.subr.mxu0 0.0
      %1810 = vmatpush2.msra.mxu0 0.0
      %1811 = vmatprep.subr.mxu0 0.0
      %1812 = vmatpush2.msra.mxu0 0.0
      %1813 = vmatprep.subr.mxu0 0.0
      %1814 = vmatpush2.msra.mxu0 0.0
      %1815 = vmatprep.subr.mxu0 0.0
      %1816 = vmatpush2.msra.mxu0 0.0
      %1817 = vmatprep.subr.mxu0 0.0
      %1818 = vmatpush2.msra.mxu0 0.0
      %1819 = vmatprep.subr.mxu0 0.0
      %1820 = vmatpush2.msra.mxu0 0.0
      %1821 = vmatprep.mubr.f32.mxu0 0.0
      %1822 = vmatmul.mubr.f32.gmra.mxu0 %v1357
      %v1823 = vpop.f32.mrf.mxu0
      %v1824 = vadd.f32 0.0, %v1823
      %v1825 = vpop.f32.mrf.mxu0
      %1826 = vmatprep.mubr.f32.mxu0 0.0
      %1827 = vmatmul.mubr.f32.gmra.mxu0 %v1360
      %v1828 = vpop.f32.mrf.mxu0
      %v1829 = vadd.f32 0.0, %v1828
      %v1830 = vpop.f32.mrf.mxu0
      %1831 = vdwg.mxu0
      %v1832 = vsub.f32 %v1753, %v1824
      %v1833 = vsub.f32 %v1754, %v1829
      %v1834 = vld [vmem:[%s15] sm:$0xf]
      %v1835 = vld [vmem:[%s15 + $0x4] sm:$0x1]
      %v1836 = vpack.c.bf16 %v1833, %v1832
      %v1839 = vunpack.c.l.b16 %v1834
      %v1840 = vunpack.c.l.b16 %v1835
      %v1841 = vpack.c.b16 %v1840, %v1839
      %v1843 = vsel %vm1274, %v1841, 0
      %1845 = vmatprep.subr.bf16.mxu0 0
      %1846 = vmatpush1.bf16.msra.mxu0 0
      %1847 = vmatprep.subr.bf16.mxu0 0
      %1848 = vmatpush1.bf16.msra.mxu0 0
      %1849 = vmatprep.subr.bf16.mxu0 0
      %1850 = vmatpush1.bf16.msra.mxu0 0
      %1851 = vmatprep.subr.bf16.mxu0 0
      %1852 = vmatpush1.bf16.msra.mxu0 0
      %1853 = vmatprep.subr.bf16.mxu0 0
      %1854 = vmatpush1.bf16.msra.mxu0 0
      %1855 = vmatprep.subr.bf16.mxu0 0
      %1856 = vmatpush1.bf16.msra.mxu0 0
      %1857 = vmatprep.subr.bf16.mxu0 0
      %1858 = vmatpush1.bf16.msra.mxu0 0
      %1859 = vmatprep.subr.bf16.mxu0 0
      %1860 = vmatpush1.bf16.msra.mxu0 %v1836
      %1861 = vmatprep.subr.bf16.mxu0 0
      %1862 = vmatpush2.bf16.msra.mxu0 0
      %1863 = vmatprep.subr.bf16.mxu0 0
      %1864 = vmatpush2.bf16.msra.mxu0 0
      %1865 = vmatprep.subr.bf16.mxu0 0
      %1866 = vmatpush2.bf16.msra.mxu0 0
      %1867 = vmatprep.subr.bf16.mxu0 0
      %1868 = vmatpush2.bf16.msra.mxu0 0
      %1869 = vmatprep.subr.bf16.mxu0 0
      %1870 = vmatpush2.bf16.msra.mxu0 0
      %1871 = vmatprep.subr.bf16.mxu0 0
      %1872 = vmatpush2.bf16.msra.mxu0 0
      %1873 = vmatprep.subr.bf16.mxu0 0
      %1874 = vmatpush2.bf16.msra.mxu0 0
      %1875 = vmatprep.subr.bf16.mxu0 0
      %1876 = vmatpush2.bf16.msra.mxu0 0
      %1877 = vmatprep.mubr.bf16.mxu0 0
      %1878 = vmatmul.mubr.bf16.gmra.mxu0 %v1843
      %v1879 = vpop.f32.mrf.mxu0
      %v1880 = vadd.f32 0.0, %v1879
      %v1881 = vpop.f32.mrf.mxu0
      %v1882 = vpop.f32.mrf.mxu0
      %v1883 = vadd.f32 0.0, %v1882
      %v1884 = vpop.f32.mrf.mxu0
      %1885 = vdwg.mxu0
      %v1886 = vld [vmem:[%s17] sm:$0xf]
      %v1887 = vld [vmem:[%s17 + $0x4] sm:$0xf]
      %v1888 = vld [vmem:[%s17 + $0x8] sm:$0xf]
      %v1889 = vld [vmem:[%s17 + $0xc] sm:$0xf]
      %v1890 = vpack.c.bf16 %v1883, %v1880
      %s1891 = scalar_lea.vmem %s15, 8
      %v1892 = vld [vmem:[%s1891] sm:$0xf]
      %v1893 = vld [vmem:[%s1891 + $0x4] sm:$0x1]
      %v1896 = vunpack.c.l.b16 %v1892
      %v1897 = vunpack.c.l.b16 %v1893
      %v1898 = vpack.c.b16 %v1897, %v1896
      %v1900 = vsel %vm1274, %v1898, 0
      %1902 = vmatprep.subr.bf16.mxu0 0
      %1903 = vmatpush1.bf16.msra.mxu0 0
      %1904 = vmatprep.subr.bf16.mxu0 0
      %1905 = vmatpush1.bf16.msra.mxu0 0
      %1906 = vmatprep.subr.bf16.mxu0 0
      %1907 = vmatpush1.bf16.msra.mxu0 0
      %1908 = vmatprep.subr.bf16.mxu0 0
      %1909 = vmatpush1.bf16.msra.mxu0 0
      %1910 = vmatprep.subr.bf16.mxu0 0
      %1911 = vmatpush1.bf16.msra.mxu0 0
      %1912 = vmatprep.subr.bf16.mxu0 0
      %1913 = vmatpush1.bf16.msra.mxu0 0
      %1914 = vmatprep.subr.bf16.mxu0 0
      %1915 = vmatpush1.bf16.msra.mxu0 0
      %1916 = vmatprep.subr.bf16.mxu0 0
      %1917 = vmatpush1.bf16.msra.mxu0 %v1836
      %1918 = vmatprep.subr.bf16.mxu0 0
      %1919 = vmatpush2.bf16.msra.mxu0 0
      %1920 = vmatprep.subr.bf16.mxu0 0
      %1921 = vmatpush2.bf16.msra.mxu0 0
      %1922 = vmatprep.subr.bf16.mxu0 0
      %1923 = vmatpush2.bf16.msra.mxu0 0
      %1924 = vmatprep.subr.bf16.mxu0 0
      %1925 = vmatpush2.bf16.msra.mxu0 0
      %1926 = vmatprep.subr.bf16.mxu0 0
      %1927 = vmatpush2.bf16.msra.mxu0 0
      %1928 = vmatprep.subr.bf16.mxu0 0
      %1929 = vmatpush2.bf16.msra.mxu0 0
      %1930 = vmatprep.subr.bf16.mxu0 0
      %1931 = vmatpush2.bf16.msra.mxu0 0
      %1932 = vmatprep.subr.bf16.mxu0 0
      %1933 = vmatpush2.bf16.msra.mxu0 0
      %1934 = vmatprep.mubr.bf16.mxu0 0
      %1935 = vmatmul.mubr.bf16.gmra.mxu0 %v1900
      %v1936 = vpop.f32.mrf.mxu0
      %v1937 = vadd.f32 0.0, %v1936
      %v1938 = vpop.f32.mrf.mxu0
      %v1939 = vpop.f32.mrf.mxu0
      %v1940 = vadd.f32 0.0, %v1939
      %v1941 = vpop.f32.mrf.mxu0
      %1942 = vdwg.mxu0
      %s1943 = scalar_lea.vmem %s17, 16
      %v1944 = vld [vmem:[%s1943] sm:$0xf]
      %v1945 = vld [vmem:[%s1943 + $0x4] sm:$0xf]
      %v1946 = vld [vmem:[%s1943 + $0x8] sm:$0xf]
      %v1947 = vld [vmem:[%s1943 + $0xc] sm:$0xf]
      %v1948 = vpack.c.bf16 %v1940, %v1937
      %v1953 = vunpack.c.l.b16 %v1944
      %v1954 = vunpack.c.l.b16 %v1945
      %v1955 = vunpack.c.l.b16 %v1946
      %v1956 = vunpack.c.l.b16 %v1947
      %v1957 = vpack.c.b16 %v1954, %v1953
      %v1958 = vpack.c.b16 %v1956, %v1955
      %vm1961 = vcmask 261120
      %v1963 = vsel %vm1961, %v1948, 0
      %1965 = vmatprep.subr.bf16.mxu0 0
      %1966 = vmatpush1.bf16.msra.mxu0 0
      %1967 = vmatprep.subr.bf16.mxu0 0
      %1968 = vmatpush1.bf16.msra.mxu0 0
      %1969 = vmatprep.subr.bf16.mxu0 0
      %1970 = vmatpush1.bf16.msra.mxu0 0
      %1971 = vmatprep.subr.bf16.mxu0 0
      %1972 = vmatpush1.bf16.msra.mxu0 0
      %1973 = vmatprep.subr.bf16.mxu0 0
      %1974 = vmatpush1.bf16.msra.mxu0 0
      %1975 = vmatprep.subr.bf16.mxu0 0
      %1976 = vmatpush1.bf16.msra.mxu0 0
      %1977 = vmatprep.subr.bf16.mxu0 0
      %1978 = vmatpush1.bf16.msra.mxu0 %v1958
      %1979 = vmatprep.subr.bf16.mxu0 0
      %1980 = vmatpush1.bf16.msra.mxu0 %v1957
      %1981 = vmatprep.subr.bf16.mxu0 0
      %1982 = vmatpush2.bf16.msra.mxu0 0
      %1983 = vmatprep.subr.bf16.mxu0 0
      %1984 = vmatpush2.bf16.msra.mxu0 0
      %1985 = vmatprep.subr.bf16.mxu0 0
      %1986 = vmatpush2.bf16.msra.mxu0 0
      %1987 = vmatprep.subr.bf16.mxu0 0
      %1988 = vmatpush2.bf16.msra.mxu0 0
      %1989 = vmatprep.subr.bf16.mxu0 0
      %1990 = vmatpush2.bf16.msra.mxu0 0
      %1991 = vmatprep.subr.bf16.mxu0 0
      %1992 = vmatpush2.bf16.msra.mxu0 0
      %1993 = vmatprep.subr.bf16.mxu0 0
      %1994 = vmatpush2.bf16.msra.mxu0 0
      %1995 = vmatprep.subr.bf16.mxu0 0
      %1996 = vmatpush2.bf16.msra.mxu0 0
      %1997 = vmatprep.mubr.bf16.mxu0 0
      %1998 = vmatmul.mubr.bf16.gmra.mxu0 %v1963
      %v1999 = vpop.f32.mrf.mxu0
      %v2000 = vadd.f32 0.0, %v1999
      %v2001 = vpop.f32.mrf.mxu0
      %v2002 = vpop.f32.mrf.mxu0
      %v2003 = vadd.f32 0.0, %v2002
      %v2004 = vpop.f32.mrf.mxu0
      %2005 = vdwg.mxu0
      %v2010 = vunpack.c.l.b16 %v1886
      %v2011 = vunpack.c.l.b16 %v1887
      %v2012 = vunpack.c.l.b16 %v1888
      %v2013 = vunpack.c.l.b16 %v1889
      %v2014 = vpack.c.b16 %v2011, %v2010
      %v2015 = vpack.c.b16 %v2013, %v2012
      %v2019 = vsel %vm1961, %v1890, 0
      %2021 = vmatprep.subr.bf16.mxu0 0
      %2022 = vmatpush1.bf16.msra.mxu0 0
      %2023 = vmatprep.subr.bf16.mxu0 0
      %2024 = vmatpush1.bf16.msra.mxu0 0
      %2025 = vmatprep.subr.bf16.mxu0 0
      %2026 = vmatpush1.bf16.msra.mxu0 0
      %2027 = vmatprep.subr.bf16.mxu0 0
      %2028 = vmatpush1.bf16.msra.mxu0 0
      %2029 = vmatprep.subr.bf16.mxu0 0
      %2030 = vmatpush1.bf16.msra.mxu0 0
      %2031 = vmatprep.subr.bf16.mxu0 0
      %2032 = vmatpush1.bf16.msra.mxu0 0
      %2033 = vmatprep.subr.bf16.mxu0 0
      %2034 = vmatpush1.bf16.msra.mxu0 %v2015
      %2035 = vmatprep.subr.bf16.mxu0 0
      %2036 = vmatpush1.bf16.msra.mxu0 %v2014
      %2037 = vmatprep.subr.bf16.mxu0 0
      %2038 = vmatpush2.bf16.msra.mxu0 0
      %2039 = vmatprep.subr.bf16.mxu0 0
      %2040 = vmatpush2.bf16.msra.mxu0 0
      %2041 = vmatprep.subr.bf16.mxu0 0
      %2042 = vmatpush2.bf16.msra.mxu0 0
      %2043 = vmatprep.subr.bf16.mxu0 0
      %2044 = vmatpush2.bf16.msra.mxu0 0
      %2045 = vmatprep.subr.bf16.mxu0 0
      %2046 = vmatpush2.bf16.msra.mxu0 0
      %2047 = vmatprep.subr.bf16.mxu0 0
      %2048 = vmatpush2.bf16.msra.mxu0 0
      %2049 = vmatprep.subr.bf16.mxu0 0
      %2050 = vmatpush2.bf16.msra.mxu0 0
      %2051 = vmatprep.subr.bf16.mxu0 0
      %2052 = vmatpush2.bf16.msra.mxu0 0
      %2053 = vmatprep.mubr.bf16.mxu0 0
      %2054 = vmatmul.mubr.bf16.gmra.mxu0 %v2019
      %v2055 = vpop.f32.mrf.mxu0
      %v2056 = vadd.f32 %v2000, %v2055
      %v2057 = vpop.f32.mrf.mxu0
      %v2058 = vpop.f32.mrf.mxu0
      %v2059 = vadd.f32 %v2003, %v2058
      %v2060 = vpop.f32.mrf.mxu0
      %2061 = vdwg.mxu0
      %v2062 = vld [vmem:[%s19] sm:$0x1]
      %v2064 = vlaneseq
      %v2065 = vshrl.u32 %v2064, 7
      %v2066 = vsub.s32 0, %v2065
      %v2067 = vrot.slane %v2062, %v2066
      %v2069 = vadd.f32 %v2056, %v2067
      %v2070 = vadd.f32 %v2059, %v2067
      %v2071 = vtanh.pop %v2069
      %v2072 = vtanh.pop %v2070
      %v2073 = vld [vmem:[%s21] sm:$0xf]
      %v2074 = vld [vmem:[%s21 + $0x4] sm:$0x1]
      %v2075 = vpack.c.bf16 %v2072, %v2071
      %v2078 = vunpack.c.l.b16 %v2073
      %v2079 = vunpack.c.l.b16 %v2074
      %v2080 = vpack.c.b16 %v2079, %v2078
      %vm2081 = vcmask 72704
      %v2083 = vsel %vm2081, %v2080, 0
      %vm2085 = vcmask 1043456
      %vm2086 = vcmask 1044480
      %v2087 = vsel %vm2085, 4294967295, 65535
      %v2088 = vsel %vm2086, %v2087, 0
      %v2090 = vand.u32 %v2075, %v2088
      %2092 = vmatprep.subr.bf16.mxu0 0
      %2093 = vmatpush1.bf16.msra.mxu0 0
      %2094 = vmatprep.subr.bf16.mxu0 0
      %2095 = vmatpush1.bf16.msra.mxu0 0
      %2096 = vmatprep.subr.bf16.mxu0 0
      %2097 = vmatpush1.bf16.msra.mxu0 0
      %2098 = vmatprep.subr.bf16.mxu0 0
      %2099 = vmatpush1.bf16.msra.mxu0 0
      %2100 = vmatprep.subr.bf16.mxu0 0
      %2101 = vmatpush1.bf16.msra.mxu0 0
      %2102 = vmatprep.subr.bf16.mxu0 0
      %2103 = vmatpush1.bf16.msra.mxu0 0
      %2104 = vmatprep.subr.bf16.mxu0 0
      %2105 = vmatpush1.bf16.msra.mxu0 0
      %2106 = vmatprep.subr.bf16.mxu0 0
      %2107 = vmatpush1.bf16.msra.mxu0 %v2090
      %2108 = vmatprep.subr.bf16.mxu0 0
      %2109 = vmatpush2.bf16.msra.mxu0 0
      %2110 = vmatprep.subr.bf16.mxu0 0
      %2111 = vmatpush2.bf16.msra.mxu0 0
      %2112 = vmatprep.subr.bf16.mxu0 0
      %2113 = vmatpush2.bf16.msra.mxu0 0
      %2114 = vmatprep.subr.bf16.mxu0 0
      %2115 = vmatpush2.bf16.msra.mxu0 0
      %2116 = vmatprep.subr.bf16.mxu0 0
      %2117 = vmatpush2.bf16.msra.mxu0 0
      %2118 = vmatprep.subr.bf16.mxu0 0
      %2119 = vmatpush2.bf16.msra.mxu0 0
      %2120 = vmatprep.subr.bf16.mxu0 0
      %2121 = vmatpush2.bf16.msra.mxu0 0
      %2122 = vmatprep.subr.bf16.mxu0 0
      %2123 = vmatpush2.bf16.msra.mxu0 0
      %2124 = vmatprep.mubr.bf16.mxu0 0
      %2125 = vmatmul.mubr.bf16.gmra.mxu0 %v2083
      %v2126 = vpop.f32.mrf.mxu0
      %v2127 = vadd.f32 0.0, %v2126
      %v2128 = vpop.f32.mrf.mxu0
      %v2129 = vpop.f32.mrf.mxu0
      %v2130 = vadd.f32 0.0, %v2129
      %v2131 = vpop.f32.mrf.mxu0
      %2132 = vdwg.mxu0
      %v2133 = vld [vmem:[%s23] sm:$0xf]
      %v2134 = vld [vmem:[%s23 + $0x4] sm:$0xf]
      %v2135 = vld [vmem:[%s23 + $0x8] sm:$0xf]
      %v2136 = vld [vmem:[%s23 + $0xc] sm:$0xf]
      %v2137 = vpack.c.bf16 %v2130, %v2127
      %s2138 = scalar_lea.vmem %s21, 8
      %v2139 = vld [vmem:[%s2138] sm:$0xf]
      %v2140 = vld [vmem:[%s2138 + $0x4] sm:$0x1]
      %v2143 = vunpack.c.l.b16 %v2139
      %v2144 = vunpack.c.l.b16 %v2140
      %v2145 = vpack.c.b16 %v2144, %v2143
      %v2147 = vsel %vm2081, %v2145, 0
      %2149 = vmatprep.subr.bf16.mxu0 0
      %2150 = vmatpush1.bf16.msra.mxu0 0
      %2151 = vmatprep.subr.bf16.mxu0 0
      %2152 = vmatpush1.bf16.msra.mxu0 0
      %2153 = vmatprep.subr.bf16.mxu0 0
      %2154 = vmatpush1.bf16.msra.mxu0 0
      %2155 = vmatprep.subr.bf16.mxu0 0
      %2156 = vmatpush1.bf16.msra.mxu0 0
      %2157 = vmatprep.subr.bf16.mxu0 0
      %2158 = vmatpush1.bf16.msra.mxu0 0
      %2159 = vmatprep.subr.bf16.mxu0 0
      %2160 = vmatpush1.bf16.msra.mxu0 0
      %2161 = vmatprep.subr.bf16.mxu0 0
      %2162 = vmatpush1.bf16.msra.mxu0 0
      %2163 = vmatprep.subr.bf16.mxu0 0
      %2164 = vmatpush1.bf16.msra.mxu0 %v2090
      %2165 = vmatprep.subr.bf16.mxu0 0
      %2166 = vmatpush2.bf16.msra.mxu0 0
      %2167 = vmatprep.subr.bf16.mxu0 0
      %2168 = vmatpush2.bf16.msra.mxu0 0
      %2169 = vmatprep.subr.bf16.mxu0 0
      %2170 = vmatpush2.bf16.msra.mxu0 0
      %2171 = vmatprep.subr.bf16.mxu0 0
      %2172 = vmatpush2.bf16.msra.mxu0 0
      %2173 = vmatprep.subr.bf16.mxu0 0
      %2174 = vmatpush2.bf16.msra.mxu0 0
      %2175 = vmatprep.subr.bf16.mxu0 0
      %2176 = vmatpush2.bf16.msra.mxu0 0
      %2177 = vmatprep.subr.bf16.mxu0 0
      %2178 = vmatpush2.bf16.msra.mxu0 0
      %2179 = vmatprep.subr.bf16.mxu0 0
      %2180 = vmatpush2.bf16.msra.mxu0 0
      %2181 = vmatprep.mubr.bf16.mxu0 0
      %2182 = vmatmul.mubr.bf16.gmra.mxu0 %v2147
      %v2183 = vpop.f32.mrf.mxu0
      %v2184 = vadd.f32 0.0, %v2183
      %v2185 = vpop.f32.mrf.mxu0
      %v2186 = vpop.f32.mrf.mxu0
      %v2187 = vadd.f32 0.0, %v2186
      %v2188 = vpop.f32.mrf.mxu0
      %2189 = vdwg.mxu0
      %s2190 = scalar_lea.vmem %s23, 16
      %v2191 = vld [vmem:[%s2190] sm:$0xf]
      %v2192 = vld [vmem:[%s2190 + $0x4] sm:$0xf]
      %v2193 = vld [vmem:[%s2190 + $0x8] sm:$0xf]
      %v2194 = vld [vmem:[%s2190 + $0xc] sm:$0xf]
      %v2195 = vpack.c.bf16 %v2187, %v2184
      %v2200 = vunpack.c.l.b16 %v2191
      %v2201 = vunpack.c.l.b16 %v2192
      %v2202 = vunpack.c.l.b16 %v2193
      %v2203 = vunpack.c.l.b16 %v2194
      %v2204 = vpack.c.b16 %v2201, %v2200
      %v2205 = vpack.c.b16 %v2203, %v2202
      %v2209 = vsel %vm1961, %v2195, 0
      %2211 = vmatprep.subr.bf16.mxu0 0
      %2212 = vmatpush1.bf16.msra.mxu0 0
      %2213 = vmatprep.subr.bf16.mxu0 0
      %2214 = vmatpush1.bf16.msra.mxu0 0
      %2215 = vmatprep.subr.bf16.mxu0 0
      %2216 = vmatpush1.bf16.msra.mxu0 0
      %2217 = vmatprep.subr.bf16.mxu0 0
      %2218 = vmatpush1.bf16.msra.mxu0 0
      %2219 = vmatprep.subr.bf16.mxu0 0
      %2220 = vmatpush1.bf16.msra.mxu0 0
      %2221 = vmatprep.subr.bf16.mxu0 0
      %2222 = vmatpush1.bf16.msra.mxu0 0
      %2223 = vmatprep.subr.bf16.mxu0 0
      %2224 = vmatpush1.bf16.msra.mxu0 %v2205
      %2225 = vmatprep.subr.bf16.mxu0 0
      %2226 = vmatpush1.bf16.msra.mxu0 %v2204
      %2227 = vmatprep.subr.bf16.mxu0 0
      %2228 = vmatpush2.bf16.msra.mxu0 0
      %2229 = vmatprep.subr.bf16.mxu0 0
      %2230 = vmatpush2.bf16.msra.mxu0 0
      %2231 = vmatprep.subr.bf16.mxu0 0
      %2232 = vmatpush2.bf16.msra.mxu0 0
      %2233 = vmatprep.subr.bf16.mxu0 0
      %2234 = vmatpush2.bf16.msra.mxu0 0
      %2235 = vmatprep.subr.bf16.mxu0 0
      %2236 = vmatpush2.bf16.msra.mxu0 0
      %2237 = vmatprep.subr.bf16.mxu0 0
      %2238 = vmatpush2.bf16.msra.mxu0 0
      %2239 = vmatprep.subr.bf16.mxu0 0
      %2240 = vmatpush2.bf16.msra.mxu0 0
      %2241 = vmatprep.subr.bf16.mxu0 0
      %2242 = vmatpush2.bf16.msra.mxu0 0
      %2243 = vmatprep.mubr.bf16.mxu0 0
      %2244 = vmatmul.mubr.bf16.gmra.mxu0 %v2209
      %v2245 = vpop.f32.mrf.mxu0
      %v2246 = vadd.f32 0.0, %v2245
      %v2247 = vpop.f32.mrf.mxu0
      %v2248 = vpop.f32.mrf.mxu0
      %v2249 = vadd.f32 0.0, %v2248
      %v2250 = vpop.f32.mrf.mxu0
      %2251 = vdwg.mxu0
      %v2256 = vunpack.c.l.b16 %v2133
      %v2257 = vunpack.c.l.b16 %v2134
      %v2258 = vunpack.c.l.b16 %v2135
      %v2259 = vunpack.c.l.b16 %v2136
      %v2260 = vpack.c.b16 %v2257, %v2256
      %v2261 = vpack.c.b16 %v2259, %v2258
      %v2265 = vsel %vm1961, %v2137, 0
      %2267 = vmatprep.subr.bf16.mxu0 0
      %2268 = vmatpush1.bf16.msra.mxu0 0
      %2269 = vmatprep.subr.bf16.mxu0 0
      %2270 = vmatpush1.bf16.msra.mxu0 0
      %2271 = vmatprep.subr.bf16.mxu0 0
      %2272 = vmatpush1.bf16.msra.mxu0 0
      %2273 = vmatprep.subr.bf16.mxu0 0
      %2274 = vmatpush1.bf16.msra.mxu0 0
      %2275 = vmatprep.subr.bf16.mxu0 0
      %2276 = vmatpush1.bf16.msra.mxu0 0
      %2277 = vmatprep.subr.bf16.mxu0 0
      %2278 = vmatpush1.bf16.msra.mxu0 0
      %2279 = vmatprep.subr.bf16.mxu0 0
      %2280 = vmatpush1.bf16.msra.mxu0 %v2261
      %2281 = vmatprep.subr.bf16.mxu0 0
      %2282 = vmatpush1.bf16.msra.mxu0 %v2260
      %2283 = vmatprep.subr.bf16.mxu0 0
      %2284 = vmatpush2.bf16.msra.mxu0 0
      %2285 = vmatprep.subr.bf16.mxu0 0
      %2286 = vmatpush2.bf16.msra.mxu0 0
      %2287 = vmatprep.subr.bf16.mxu0 0
      %2288 = vmatpush2.bf16.msra.mxu0 0
      %2289 = vmatprep.subr.bf16.mxu0 0
      %2290 = vmatpush2.bf16.msra.mxu0 0
      %2291 = vmatprep.subr.bf16.mxu0 0
      %2292 = vmatpush2.bf16.msra.mxu0 0
      %2293 = vmatprep.subr.bf16.mxu0 0
      %2294 = vmatpush2.bf16.msra.mxu0 0
      %2295 = vmatprep.subr.bf16.mxu0 0
      %2296 = vmatpush2.bf16.msra.mxu0 0
      %2297 = vmatprep.subr.bf16.mxu0 0
      %2298 = vmatpush2.bf16.msra.mxu0 0
      %2299 = vmatprep.mubr.bf16.mxu0 0
      %2300 = vmatmul.mubr.bf16.gmra.mxu0 %v2265
      %v2301 = vpop.f32.mrf.mxu0
      %v2302 = vadd.f32 %v2246, %v2301
      %v2303 = vpop.f32.mrf.mxu0
      %v2304 = vpop.f32.mrf.mxu0
      %v2305 = vadd.f32 %v2249, %v2304
      %v2306 = vpop.f32.mrf.mxu0
      %2307 = vdwg.mxu0
      %s2308 = scalar_lea.vmem %s21, 16
      %v2309 = vld [vmem:[%s2308] sm:$0xf]
      %v2310 = vld [vmem:[%s2308 + $0x4] sm:$0x1]
      %v2313 = vunpack.c.l.b16 %v2309
      %v2314 = vunpack.c.l.b16 %v2310
      %v2315 = vpack.c.b16 %v2314, %v2313
      %v2317 = vsel %vm2081, %v2315, 0
      %2319 = vmatprep.subr.bf16.mxu0 0
      %2320 = vmatpush1.bf16.msra.mxu0 0
      %2321 = vmatprep.subr.bf16.mxu0 0
      %2322 = vmatpush1.bf16.msra.mxu0 0
      %2323 = vmatprep.subr.bf16.mxu0 0
      %2324 = vmatpush1.bf16.msra.mxu0 0
      %2325 = vmatprep.subr.bf16.mxu0 0
      %2326 = vmatpush1.bf16.msra.mxu0 0
      %2327 = vmatprep.subr.bf16.mxu0 0
      %2328 = vmatpush1.bf16.msra.mxu0 0
      %2329 = vmatprep.subr.bf16.mxu0 0
      %2330 = vmatpush1.bf16.msra.mxu0 0
      %2331 = vmatprep.subr.bf16.mxu0 0
      %2332 = vmatpush1.bf16.msra.mxu0 0
      %2333 = vmatprep.subr.bf16.mxu0 0
      %2334 = vmatpush1.bf16.msra.mxu0 %v2090
      %2335 = vmatprep.subr.bf16.mxu0 0
      %2336 = vmatpush2.bf16.msra.mxu0 0
      %2337 = vmatprep.subr.bf16.mxu0 0
      %2338 = vmatpush2.bf16.msra.mxu0 0
      %2339 = vmatprep.subr.bf16.mxu0 0
      %2340 = vmatpush2.bf16.msra.mxu0 0
      %2341 = vmatprep.subr.bf16.mxu0 0
      %2342 = vmatpush2.bf16.msra.mxu0 0
      %2343 = vmatprep.subr.bf16.mxu0 0
      %2344 = vmatpush2.bf16.msra.mxu0 0
      %2345 = vmatprep.subr.bf16.mxu0 0
      %2346 = vmatpush2.bf16.msra.mxu0 0
      %2347 = vmatprep.subr.bf16.mxu0 0
      %2348 = vmatpush2.bf16.msra.mxu0 0
      %2349 = vmatprep.subr.bf16.mxu0 0
      %2350 = vmatpush2.bf16.msra.mxu0 0
      %2351 = vmatprep.mubr.bf16.mxu0 0
      %2352 = vmatmul.mubr.bf16.gmra.mxu0 %v2317
      %v2353 = vpop.f32.mrf.mxu0
      %v2354 = vadd.f32 0.0, %v2353
      %v2355 = vpop.f32.mrf.mxu0
      %v2356 = vpop.f32.mrf.mxu0
      %v2357 = vadd.f32 0.0, %v2356
      %v2358 = vpop.f32.mrf.mxu0
      %2359 = vdwg.mxu0
      %s2360 = scalar_lea.vmem %s23, 32
      %v2361 = vld [vmem:[%s2360] sm:$0xf]
      %v2362 = vld [vmem:[%s2360 + $0x4] sm:$0xf]
      %v2363 = vld [vmem:[%s2360 + $0x8] sm:$0xf]
      %v2364 = vld [vmem:[%s2360 + $0xc] sm:$0xf]
      %v2365 = vpack.c.bf16 %v2357, %v2354
      %v2370 = vunpack.c.l.b16 %v2361
      %v2371 = vunpack.c.l.b16 %v2362
      %v2372 = vunpack.c.l.b16 %v2363
      %v2373 = vunpack.c.l.b16 %v2364
      %v2374 = vpack.c.b16 %v2371, %v2370
      %v2375 = vpack.c.b16 %v2373, %v2372
      %v2379 = vsel %vm1961, %v2365, 0
      %2381 = vmatprep.subr.bf16.mxu0 0
      %2382 = vmatpush1.bf16.msra.mxu0 0
      %2383 = vmatprep.subr.bf16.mxu0 0
      %2384 = vmatpush1.bf16.msra.mxu0 0
      %2385 = vmatprep.subr.bf16.mxu0 0
      %2386 = vmatpush1.bf16.msra.mxu0 0
      %2387 = vmatprep.subr.bf16.mxu0 0
      %2388 = vmatpush1.bf16.msra.mxu0 0
      %2389 = vmatprep.subr.bf16.mxu0 0
      %2390 = vmatpush1.bf16.msra.mxu0 0
      %2391 = vmatprep.subr.bf16.mxu0 0
      %2392 = vmatpush1.bf16.msra.mxu0 0
      %2393 = vmatprep.subr.bf16.mxu0 0
      %2394 = vmatpush1.bf16.msra.mxu0 %v2375
      %2395 = vmatprep.subr.bf16.mxu0 0
      %2396 = vmatpush1.bf16.msra.mxu0 %v2374
      %2397 = vmatprep.subr.bf16.mxu0 0
      %2398 = vmatpush2.bf16.msra.mxu0 0
      %2399 = vmatprep.subr.bf16.mxu0 0
      %2400 = vmatpush2.bf16.msra.mxu0 0
      %2401 = vmatprep.subr.bf16.mxu0 0
      %2402 = vmatpush2.bf16.msra.mxu0 0
      %2403 = vmatprep.subr.bf16.mxu0 0
      %2404 = vmatpush2.bf16.msra.mxu0 0
      %2405 = vmatprep.subr.bf16.mxu0 0
      %2406 = vmatpush2.bf16.msra.mxu0 0
      %2407 = vmatprep.subr.bf16.mxu0 0
      %2408 = vmatpush2.bf16.msra.mxu0 0
      %2409 = vmatprep.subr.bf16.mxu0 0
      %2410 = vmatpush2.bf16.msra.mxu0 0
      %2411 = vmatprep.subr.bf16.mxu0 0
      %2412 = vmatpush2.bf16.msra.mxu0 0
      %2413 = vmatprep.mubr.bf16.mxu0 0
      %2414 = vmatmul.mubr.bf16.gmra.mxu0 %v2379
      %v2415 = vpop.f32.mrf.mxu0
      %v2416 = vadd.f32 0.0, %v2415
      %v2417 = vpop.f32.mrf.mxu0
      %v2418 = vpop.f32.mrf.mxu0
      %v2419 = vadd.f32 0.0, %v2418
      %v2420 = vpop.f32.mrf.mxu0
      %2421 = vdwg.mxu0
      %v2422 = vadd.f32 %v2302, %v2416
      %v2423 = vadd.f32 %v2305, %v2419
      %s2424 = scalar_lea.vmem %s21, 24
      %v2425 = vld [vmem:[%s2424] sm:$0xf]
      %v2426 = vld [vmem:[%s2424 + $0x4] sm:$0x1]
      %v2429 = vunpack.c.l.b16 %v2425
      %v2430 = vunpack.c.l.b16 %v2426
      %v2431 = vpack.c.b16 %v2430, %v2429
      %v2433 = vsel %vm2081, %v2431, 0
      %2435 = vmatprep.subr.bf16.mxu0 0
      %2436 = vmatpush1.bf16.msra.mxu0 0
      %2437 = vmatprep.subr.bf16.mxu0 0
      %2438 = vmatpush1.bf16.msra.mxu0 0
      %2439 = vmatprep.subr.bf16.mxu0 0
      %2440 = vmatpush1.bf16.msra.mxu0 0
      %2441 = vmatprep.subr.bf16.mxu0 0
      %2442 = vmatpush1.bf16.msra.mxu0 0
      %2443 = vmatprep.subr.bf16.mxu0 0
      %2444 = vmatpush1.bf16.msra.mxu0 0
      %2445 = vmatprep.subr.bf16.mxu0 0
      %2446 = vmatpush1.bf16.msra.mxu0 0
      %2447 = vmatprep.subr.bf16.mxu0 0
      %2448 = vmatpush1.bf16.msra.mxu0 0
      %2449 = vmatprep.subr.bf16.mxu0 0
      %2450 = vmatpush1.bf16.msra.mxu0 %v2090
      %2451 = vmatprep.subr.bf16.mxu0 0
      %2452 = vmatpush2.bf16.msra.mxu0 0
      %2453 = vmatprep.subr.bf16.mxu0 0
      %2454 = vmatpush2.bf16.msra.mxu0 0
      %2455 = vmatprep.subr.bf16.mxu0 0
      %2456 = vmatpush2.bf16.msra.mxu0 0
      %2457 = vmatprep.subr.bf16.mxu0 0
      %2458 = vmatpush2.bf16.msra.mxu0 0
      %2459 = vmatprep.subr.bf16.mxu0 0
      %2460 = vmatpush2.bf16.msra.mxu0 0
      %2461 = vmatprep.subr.bf16.mxu0 0
      %2462 = vmatpush2.bf16.msra.mxu0 0
      %2463 = vmatprep.subr.bf16.mxu0 0
      %2464 = vmatpush2.bf16.msra.mxu0 0
      %2465 = vmatprep.subr.bf16.mxu0 0
      %2466 = vmatpush2.bf16.msra.mxu0 0
      %2467 = vmatprep.mubr.bf16.mxu0 0
      %2468 = vmatmul.mubr.bf16.gmra.mxu0 %v2433
      %v2469 = vpop.f32.mrf.mxu0
      %v2470 = vadd.f32 0.0, %v2469
      %v2471 = vpop.f32.mrf.mxu0
      %v2472 = vpop.f32.mrf.mxu0
      %v2473 = vadd.f32 0.0, %v2472
      %v2474 = vpop.f32.mrf.mxu0
      %2475 = vdwg.mxu0
      %s2476 = scalar_lea.vmem %s23, 48
      %v2477 = vld [vmem:[%s2476] sm:$0xf]
      %v2478 = vld [vmem:[%s2476 + $0x4] sm:$0xf]
      %v2479 = vld [vmem:[%s2476 + $0x8] sm:$0xf]
      %v2480 = vld [vmem:[%s2476 + $0xc] sm:$0xf]
      %v2481 = vpack.c.bf16 %v2473, %v2470
      %v2486 = vunpack.c.l.b16 %v2477
      %v2487 = vunpack.c.l.b16 %v2478
      %v2488 = vunpack.c.l.b16 %v2479
      %v2489 = vunpack.c.l.b16 %v2480
      %v2490 = vpack.c.b16 %v2487, %v2486
      %v2491 = vpack.c.b16 %v2489, %v2488
      %v2495 = vsel %vm1961, %v2481, 0
      %2497 = vmatprep.subr.bf16.mxu0 0
      %2498 = vmatpush1.bf16.msra.mxu0 0
      %2499 = vmatprep.subr.bf16.mxu0 0
      %2500 = vmatpush1.bf16.msra.mxu0 0
      %2501 = vmatprep.subr.bf16.mxu0 0
      %2502 = vmatpush1.bf16.msra.mxu0 0
      %2503 = vmatprep.subr.bf16.mxu0 0
      %2504 = vmatpush1.bf16.msra.mxu0 0
      %2505 = vmatprep.subr.bf16.mxu0 0
      %2506 = vmatpush1.bf16.msra.mxu0 0
      %2507 = vmatprep.subr.bf16.mxu0 0
      %2508 = vmatpush1.bf16.msra.mxu0 0
      %2509 = vmatprep.subr.bf16.mxu0 0
      %2510 = vmatpush1.bf16.msra.mxu0 %v2491
      %2511 = vmatprep.subr.bf16.mxu0 0
      %2512 = vmatpush1.bf16.msra.mxu0 %v2490
      %2513 = vmatprep.subr.bf16.mxu0 0
      %2514 = vmatpush2.bf16.msra.mxu0 0
      %2515 = vmatprep.subr.bf16.mxu0 0
      %2516 = vmatpush2.bf16.msra.mxu0 0
      %2517 = vmatprep.subr.bf16.mxu0 0
      %2518 = vmatpush2.bf16.msra.mxu0 0
      %2519 = vmatprep.subr.bf16.mxu0 0
      %2520 = vmatpush2.bf16.msra.mxu0 0
      %2521 = vmatprep.subr.bf16.mxu0 0
      %2522 = vmatpush2.bf16.msra.mxu0 0
      %2523 = vmatprep.subr.bf16.mxu0 0
      %2524 = vmatpush2.bf16.msra.mxu0 0
      %2525 = vmatprep.subr.bf16.mxu0 0
      %2526 = vmatpush2.bf16.msra.mxu0 0
      %2527 = vmatprep.subr.bf16.mxu0 0
      %2528 = vmatpush2.bf16.msra.mxu0 0
      %2529 = vmatprep.mubr.bf16.mxu0 0
      %2530 = vmatmul.mubr.bf16.gmra.mxu0 %v2495
      %v2531 = vpop.f32.mrf.mxu0
      %v2532 = vadd.f32 0.0, %v2531
      %v2533 = vpop.f32.mrf.mxu0
      %v2534 = vpop.f32.mrf.mxu0
      %v2535 = vadd.f32 0.0, %v2534
      %v2536 = vpop.f32.mrf.mxu0
      %2537 = vdwg.mxu0
      %v2538 = vadd.f32 %v2422, %v2532
      %v2539 = vadd.f32 %v2423, %v2535
      %s2540 = scalar_lea.vmem %s21, 32
      %v2541 = vld [vmem:[%s2540] sm:$0xf]
      %v2542 = vld [vmem:[%s2540 + $0x4] sm:$0x1]
      %v2545 = vunpack.c.l.b16 %v2541
      %v2546 = vunpack.c.l.b16 %v2542
      %v2547 = vpack.c.b16 %v2546, %v2545
      %v2549 = vsel %vm2081, %v2547, 0
      %2551 = vmatprep.subr.bf16.mxu0 0
      %2552 = vmatpush1.bf16.msra.mxu0 0
      %2553 = vmatprep.subr.bf16.mxu0 0
      %2554 = vmatpush1.bf16.msra.mxu0 0
      %2555 = vmatprep.subr.bf16.mxu0 0
      %2556 = vmatpush1.bf16.msra.mxu0 0
      %2557 = vmatprep.subr.bf16.mxu0 0
      %2558 = vmatpush1.bf16.msra.mxu0 0
      %2559 = vmatprep.subr.bf16.mxu0 0
      %2560 = vmatpush1.bf16.msra.mxu0 0
      %2561 = vmatprep.subr.bf16.mxu0 0
      %2562 = vmatpush1.bf16.msra.mxu0 0
      %2563 = vmatprep.subr.bf16.mxu0 0
      %2564 = vmatpush1.bf16.msra.mxu0 0
      %2565 = vmatprep.subr.bf16.mxu0 0
      %2566 = vmatpush1.bf16.msra.mxu0 %v2090
      %2567 = vmatprep.subr.bf16.mxu0 0
      %2568 = vmatpush2.bf16.msra.mxu0 0
      %2569 = vmatprep.subr.bf16.mxu0 0
      %2570 = vmatpush2.bf16.msra.mxu0 0
      %2571 = vmatprep.subr.bf16.mxu0 0
      %2572 = vmatpush2.bf16.msra.mxu0 0
      %2573 = vmatprep.subr.bf16.mxu0 0
      %2574 = vmatpush2.bf16.msra.mxu0 0
      %2575 = vmatprep.subr.bf16.mxu0 0
      %2576 = vmatpush2.bf16.msra.mxu0 0
      %2577 = vmatprep.subr.bf16.mxu0 0
      %2578 = vmatpush2.bf16.msra.mxu0 0
      %2579 = vmatprep.subr.bf16.mxu0 0
      %2580 = vmatpush2.bf16.msra.mxu0 0
      %2581 = vmatprep.subr.bf16.mxu0 0
      %2582 = vmatpush2.bf16.msra.mxu0 0
      %2583 = vmatprep.mubr.bf16.mxu0 0
      %2584 = vmatmul.mubr.bf16.gmra.mxu0 %v2549
      %v2585 = vpop.f32.mrf.mxu0
      %v2586 = vadd.f32 0.0, %v2585
      %v2587 = vpop.f32.mrf.mxu0
      %v2588 = vpop.f32.mrf.mxu0
      %v2589 = vadd.f32 0.0, %v2588
      %v2590 = vpop.f32.mrf.mxu0
      %2591 = vdwg.mxu0
      %s2592 = scalar_lea.vmem %s23, 64
      %v2593 = vld [vmem:[%s2592] sm:$0xf]
      %v2594 = vld [vmem:[%s2592 + $0x4] sm:$0xf]
      %v2595 = vld [vmem:[%s2592 + $0x8] sm:$0xf]
      %v2596 = vld [vmem:[%s2592 + $0xc] sm:$0xf]
      %v2597 = vpack.c.bf16 %v2589, %v2586
      %v2602 = vunpack.c.l.b16 %v2593
      %v2603 = vunpack.c.l.b16 %v2594
      %v2604 = vunpack.c.l.b16 %v2595
      %v2605 = vunpack.c.l.b16 %v2596
      %v2606 = vpack.c.b16 %v2603, %v2602
      %v2607 = vpack.c.b16 %v2605, %v2604
      %v2611 = vsel %vm1961, %v2597, 0
      %2613 = vmatprep.subr.bf16.mxu0 0
      %2614 = vmatpush1.bf16.msra.mxu0 0
      %2615 = vmatprep.subr.bf16.mxu0 0
      %2616 = vmatpush1.bf16.msra.mxu0 0
      %2617 = vmatprep.subr.bf16.mxu0 0
      %2618 = vmatpush1.bf16.msra.mxu0 0
      %2619 = vmatprep.subr.bf16.mxu0 0
      %2620 = vmatpush1.bf16.msra.mxu0 0
      %2621 = vmatprep.subr.bf16.mxu0 0
      %2622 = vmatpush1.bf16.msra.mxu0 0
      %2623 = vmatprep.subr.bf16.mxu0 0
      %2624 = vmatpush1.bf16.msra.mxu0 0
      %2625 = vmatprep.subr.bf16.mxu0 0
      %2626 = vmatpush1.bf16.msra.mxu0 %v2607
      %2627 = vmatprep.subr.bf16.mxu0 0
      %2628 = vmatpush1.bf16.msra.mxu0 %v2606
      %2629 = vmatprep.subr.bf16.mxu0 0
      %2630 = vmatpush2.bf16.msra.mxu0 0
      %2631 = vmatprep.subr.bf16.mxu0 0
      %2632 = vmatpush2.bf16.msra.mxu0 0
      %2633 = vmatprep.subr.bf16.mxu0 0
      %2634 = vmatpush2.bf16.msra.mxu0 0
      %2635 = vmatprep.subr.bf16.mxu0 0
      %2636 = vmatpush2.bf16.msra.mxu0 0
      %2637 = vmatprep.subr.bf16.mxu0 0
      %2638 = vmatpush2.bf16.msra.mxu0 0
      %2639 = vmatprep.subr.bf16.mxu0 0
      %2640 = vmatpush2.bf16.msra.mxu0 0
      %2641 = vmatprep.subr.bf16.mxu0 0
      %2642 = vmatpush2.bf16.msra.mxu0 0
      %2643 = vmatprep.subr.bf16.mxu0 0
      %2644 = vmatpush2.bf16.msra.mxu0 0
      %2645 = vmatprep.mubr.bf16.mxu0 0
      %2646 = vmatmul.mubr.bf16.gmra.mxu0 %v2611
      %v2647 = vpop.f32.mrf.mxu0
      %v2648 = vadd.f32 0.0, %v2647
      %v2649 = vpop.f32.mrf.mxu0
      %v2650 = vpop.f32.mrf.mxu0
      %v2651 = vadd.f32 0.0, %v2650
      %v2652 = vpop.f32.mrf.mxu0
      %2653 = vdwg.mxu0
      %v2654 = vadd.f32 %v2538, %v2648
      %v2655 = vadd.f32 %v2539, %v2651
      %s2656 = scalar_lea.vmem %s21, 40
      %v2657 = vld [vmem:[%s2656] sm:$0xf]
      %v2658 = vld [vmem:[%s2656 + $0x4] sm:$0x1]
      %v2661 = vunpack.c.l.b16 %v2657
      %v2662 = vunpack.c.l.b16 %v2658
      %v2663 = vpack.c.b16 %v2662, %v2661
      %v2665 = vsel %vm2081, %v2663, 0
      %2667 = vmatprep.subr.bf16.mxu0 0
      %2668 = vmatpush1.bf16.msra.mxu0 0
      %2669 = vmatprep.subr.bf16.mxu0 0
      %2670 = vmatpush1.bf16.msra.mxu0 0
      %2671 = vmatprep.subr.bf16.mxu0 0
      %2672 = vmatpush1.bf16.msra.mxu0 0
      %2673 = vmatprep.subr.bf16.mxu0 0
      %2674 = vmatpush1.bf16.msra.mxu0 0
      %2675 = vmatprep.subr.bf16.mxu0 0
      %2676 = vmatpush1.bf16.msra.mxu0 0
      %2677 = vmatprep.subr.bf16.mxu0 0
      %2678 = vmatpush1.bf16.msra.mxu0 0
      %2679 = vmatprep.subr.bf16.mxu0 0
      %2680 = vmatpush1.bf16.msra.mxu0 0
      %2681 = vmatprep.subr.bf16.mxu0 0
      %2682 = vmatpush1.bf16.msra.mxu0 %v2090
      %2683 = vmatprep.subr.bf16.mxu0 0
      %2684 = vmatpush2.bf16.msra.mxu0 0
      %2685 = vmatprep.subr.bf16.mxu0 0
      %2686 = vmatpush2.bf16.msra.mxu0 0
      %2687 = vmatprep.subr.bf16.mxu0 0
      %2688 = vmatpush2.bf16.msra.mxu0 0
      %2689 = vmatprep.subr.bf16.mxu0 0
      %2690 = vmatpush2.bf16.msra.mxu0 0
      %2691 = vmatprep.subr.bf16.mxu0 0
      %2692 = vmatpush2.bf16.msra.mxu0 0
      %2693 = vmatprep.subr.bf16.mxu0 0
      %2694 = vmatpush2.bf16.msra.mxu0 0
      %2695 = vmatprep.subr.bf16.mxu0 0
      %2696 = vmatpush2.bf16.msra.mxu0 0
      %2697 = vmatprep.subr.bf16.mxu0 0
      %2698 = vmatpush2.bf16.msra.mxu0 0
      %2699 = vmatprep.mubr.bf16.mxu0 0
      %2700 = vmatmul.mubr.bf16.gmra.mxu0 %v2665
      %v2701 = vpop.f32.mrf.mxu0
      %v2702 = vadd.f32 0.0, %v2701
      %v2703 = vpop.f32.mrf.mxu0
      %v2704 = vpop.f32.mrf.mxu0
      %v2705 = vadd.f32 0.0, %v2704
      %v2706 = vpop.f32.mrf.mxu0
      %2707 = vdwg.mxu0
      %s2708 = scalar_lea.vmem %s23, 80
      %v2709 = vld [vmem:[%s2708] sm:$0xf]
      %v2710 = vld [vmem:[%s2708 + $0x4] sm:$0xf]
      %v2711 = vld [vmem:[%s2708 + $0x8] sm:$0xf]
      %v2712 = vld [vmem:[%s2708 + $0xc] sm:$0xf]
      %v2713 = vpack.c.bf16 %v2705, %v2702
      %v2718 = vunpack.c.l.b16 %v2709
      %v2719 = vunpack.c.l.b16 %v2710
      %v2720 = vunpack.c.l.b16 %v2711
      %v2721 = vunpack.c.l.b16 %v2712
      %v2722 = vpack.c.b16 %v2719, %v2718
      %v2723 = vpack.c.b16 %v2721, %v2720
      %v2727 = vsel %vm1961, %v2713, 0
      %2729 = vmatprep.subr.bf16.mxu0 0
      %2730 = vmatpush1.bf16.msra.mxu0 0
      %2731 = vmatprep.subr.bf16.mxu0 0
      %2732 = vmatpush1.bf16.msra.mxu0 0
      %2733 = vmatprep.subr.bf16.mxu0 0
      %2734 = vmatpush1.bf16.msra.mxu0 0
      %2735 = vmatprep.subr.bf16.mxu0 0
      %2736 = vmatpush1.bf16.msra.mxu0 0
      %2737 = vmatprep.subr.bf16.mxu0 0
      %2738 = vmatpush1.bf16.msra.mxu0 0
      %2739 = vmatprep.subr.bf16.mxu0 0
      %2740 = vmatpush1.bf16.msra.mxu0 0
      %2741 = vmatprep.subr.bf16.mxu0 0
      %2742 = vmatpush1.bf16.msra.mxu0 %v2723
      %2743 = vmatprep.subr.bf16.mxu0 0
      %2744 = vmatpush1.bf16.msra.mxu0 %v2722
      %2745 = vmatprep.subr.bf16.mxu0 0
      %2746 = vmatpush2.bf16.msra.mxu0 0
      %2747 = vmatprep.subr.bf16.mxu0 0
      %2748 = vmatpush2.bf16.msra.mxu0 0
      %2749 = vmatprep.subr.bf16.mxu0 0
      %2750 = vmatpush2.bf16.msra.mxu0 0
      %2751 = vmatprep.subr.bf16.mxu0 0
      %2752 = vmatpush2.bf16.msra.mxu0 0
      %2753 = vmatprep.subr.bf16.mxu0 0
      %2754 = vmatpush2.bf16.msra.mxu0 0
      %2755 = vmatprep.subr.bf16.mxu0 0
      %2756 = vmatpush2.bf16.msra.mxu0 0
      %2757 = vmatprep.subr.bf16.mxu0 0
      %2758 = vmatpush2.bf16.msra.mxu0 0
      %2759 = vmatprep.subr.bf16.mxu0 0
      %2760 = vmatpush2.bf16.msra.mxu0 0
      %2761 = vmatprep.mubr.bf16.mxu0 0
      %2762 = vmatmul.mubr.bf16.gmra.mxu0 %v2727
      %v2763 = vpop.f32.mrf.mxu0
      %v2764 = vadd.f32 0.0, %v2763
      %v2765 = vpop.f32.mrf.mxu0
      %v2766 = vpop.f32.mrf.mxu0
      %v2767 = vadd.f32 0.0, %v2766
      %v2768 = vpop.f32.mrf.mxu0
      %2769 = vdwg.mxu0
      %v2770 = vadd.f32 %v2654, %v2764
      %v2771 = vadd.f32 %v2655, %v2767
      %s2772 = scalar_lea.vmem %s21, 48
      %v2773 = vld [vmem:[%s2772] sm:$0xf]
      %v2774 = vld [vmem:[%s2772 + $0x4] sm:$0x1]
      %v2777 = vunpack.c.l.b16 %v2773
      %v2778 = vunpack.c.l.b16 %v2774
      %v2779 = vpack.c.b16 %v2778, %v2777
      %v2781 = vsel %vm2081, %v2779, 0
      %2783 = vmatprep.subr.bf16.mxu0 0
      %2784 = vmatpush1.bf16.msra.mxu0 0
      %2785 = vmatprep.subr.bf16.mxu0 0
      %2786 = vmatpush1.bf16.msra.mxu0 0
      %2787 = vmatprep.subr.bf16.mxu0 0
      %2788 = vmatpush1.bf16.msra.mxu0 0
      %2789 = vmatprep.subr.bf16.mxu0 0
      %2790 = vmatpush1.bf16.msra.mxu0 0
      %2791 = vmatprep.subr.bf16.mxu0 0
      %2792 = vmatpush1.bf16.msra.mxu0 0
      %2793 = vmatprep.subr.bf16.mxu0 0
      %2794 = vmatpush1.bf16.msra.mxu0 0
      %2795 = vmatprep.subr.bf16.mxu0 0
      %2796 = vmatpush1.bf16.msra.mxu0 0
      %2797 = vmatprep.subr.bf16.mxu0 0
      %2798 = vmatpush1.bf16.msra.mxu0 %v2090
      %2799 = vmatprep.subr.bf16.mxu0 0
      %2800 = vmatpush2.bf16.msra.mxu0 0
      %2801 = vmatprep.subr.bf16.mxu0 0
      %2802 = vmatpush2.bf16.msra.mxu0 0
      %2803 = vmatprep.subr.bf16.mxu0 0
      %2804 = vmatpush2.bf16.msra.mxu0 0
      %2805 = vmatprep.subr.bf16.mxu0 0
      %2806 = vmatpush2.bf16.msra.mxu0 0
      %2807 = vmatprep.subr.bf16.mxu0 0
      %2808 = vmatpush2.bf16.msra.mxu0 0
      %2809 = vmatprep.subr.bf16.mxu0 0
      %2810 = vmatpush2.bf16.msra.mxu0 0
      %2811 = vmatprep.subr.bf16.mxu0 0
      %2812 = vmatpush2.bf16.msra.mxu0 0
      %2813 = vmatprep.subr.bf16.mxu0 0
      %2814 = vmatpush2.bf16.msra.mxu0 0
      %2815 = vmatprep.mubr.bf16.mxu0 0
      %2816 = vmatmul.mubr.bf16.gmra.mxu0 %v2781
      %v2817 = vpop.f32.mrf.mxu0
      %v2818 = vadd.f32 0.0, %v2817
      %v2819 = vpop.f32.mrf.mxu0
      %v2820 = vpop.f32.mrf.mxu0
      %v2821 = vadd.f32 0.0, %v2820
      %v2822 = vpop.f32.mrf.mxu0
      %2823 = vdwg.mxu0
      %s2824 = scalar_lea.vmem %s23, 96
      %v2825 = vld [vmem:[%s2824] sm:$0xf]
      %v2826 = vld [vmem:[%s2824 + $0x4] sm:$0xf]
      %v2827 = vld [vmem:[%s2824 + $0x8] sm:$0xf]
      %v2828 = vld [vmem:[%s2824 + $0xc] sm:$0xf]
      %v2829 = vpack.c.bf16 %v2821, %v2818
      %v2834 = vunpack.c.l.b16 %v2825
      %v2835 = vunpack.c.l.b16 %v2826
      %v2836 = vunpack.c.l.b16 %v2827
      %v2837 = vunpack.c.l.b16 %v2828
      %v2838 = vpack.c.b16 %v2835, %v2834
      %v2839 = vpack.c.b16 %v2837, %v2836
      %v2843 = vsel %vm1961, %v2829, 0
      %2845 = vmatprep.subr.bf16.mxu0 0
      %2846 = vmatpush1.bf16.msra.mxu0 0
      %2847 = vmatprep.subr.bf16.mxu0 0
      %2848 = vmatpush1.bf16.msra.mxu0 0
      %2849 = vmatprep.subr.bf16.mxu0 0
      %2850 = vmatpush1.bf16.msra.mxu0 0
      %2851 = vmatprep.subr.bf16.mxu0 0
      %2852 = vmatpush1.bf16.msra.mxu0 0
      %2853 = vmatprep.subr.bf16.mxu0 0
      %2854 = vmatpush1.bf16.msra.mxu0 0
      %2855 = vmatprep.subr.bf16.mxu0 0
      %2856 = vmatpush1.bf16.msra.mxu0 0
      %2857 = vmatprep.subr.bf16.mxu0 0
      %2858 = vmatpush1.bf16.msra.mxu0 %v2839
      %2859 = vmatprep.subr.bf16.mxu0 0
      %2860 = vmatpush1.bf16.msra.mxu0 %v2838
      %2861 = vmatprep.subr.bf16.mxu0 0
      %2862 = vmatpush2.bf16.msra.mxu0 0
      %2863 = vmatprep.subr.bf16.mxu0 0
      %2864 = vmatpush2.bf16.msra.mxu0 0
      %2865 = vmatprep.subr.bf16.mxu0 0
      %2866 = vmatpush2.bf16.msra.mxu0 0
      %2867 = vmatprep.subr.bf16.mxu0 0
      %2868 = vmatpush2.bf16.msra.mxu0 0
      %2869 = vmatprep.subr.bf16.mxu0 0
      %2870 = vmatpush2.bf16.msra.mxu0 0
      %2871 = vmatprep.subr.bf16.mxu0 0
      %2872 = vmatpush2.bf16.msra.mxu0 0
      %2873 = vmatprep.subr.bf16.mxu0 0
      %2874 = vmatpush2.bf16.msra.mxu0 0
      %2875 = vmatprep.subr.bf16.mxu0 0
      %2876 = vmatpush2.bf16.msra.mxu0 0
      %2877 = vmatprep.mubr.bf16.mxu0 0
      %2878 = vmatmul.mubr.bf16.gmra.mxu0 %v2843
      %v2879 = vpop.f32.mrf.mxu0
      %v2880 = vadd.f32 0.0, %v2879
      %v2881 = vpop.f32.mrf.mxu0
      %v2882 = vpop.f32.mrf.mxu0
      %v2883 = vadd.f32 0.0, %v2882
      %v2884 = vpop.f32.mrf.mxu0
      %2885 = vdwg.mxu0
      %v2886 = vadd.f32 %v2770, %v2880
      %v2887 = vadd.f32 %v2771, %v2883
      %s2888 = scalar_lea.vmem %s21, 56
      %v2889 = vld [vmem:[%s2888] sm:$0xf]
      %v2890 = vld [vmem:[%s2888 + $0x4] sm:$0x1]
      %v2893 = vunpack.c.l.b16 %v2889
      %v2894 = vunpack.c.l.b16 %v2890
      %v2895 = vpack.c.b16 %v2894, %v2893
      %v2897 = vsel %vm2081, %v2895, 0
      %2899 = vmatprep.subr.bf16.mxu0 0
      %2900 = vmatpush1.bf16.msra.mxu0 0
      %2901 = vmatprep.subr.bf16.mxu0 0
      %2902 = vmatpush1.bf16.msra.mxu0 0
      %2903 = vmatprep.subr.bf16.mxu0 0
      %2904 = vmatpush1.bf16.msra.mxu0 0
      %2905 = vmatprep.subr.bf16.mxu0 0
      %2906 = vmatpush1.bf16.msra.mxu0 0
      %2907 = vmatprep.subr.bf16.mxu0 0
      %2908 = vmatpush1.bf16.msra.mxu0 0
      %2909 = vmatprep.subr.bf16.mxu0 0
      %2910 = vmatpush1.bf16.msra.mxu0 0
      %2911 = vmatprep.subr.bf16.mxu0 0
      %2912 = vmatpush1.bf16.msra.mxu0 0
      %2913 = vmatprep.subr.bf16.mxu0 0
      %2914 = vmatpush1.bf16.msra.mxu0 %v2090
      %2915 = vmatprep.subr.bf16.mxu0 0
      %2916 = vmatpush2.bf16.msra.mxu0 0
      %2917 = vmatprep.subr.bf16.mxu0 0
      %2918 = vmatpush2.bf16.msra.mxu0 0
      %2919 = vmatprep.subr.bf16.mxu0 0
      %2920 = vmatpush2.bf16.msra.mxu0 0
      %2921 = vmatprep.subr.bf16.mxu0 0
      %2922 = vmatpush2.bf16.msra.mxu0 0
      %2923 = vmatprep.subr.bf16.mxu0 0
      %2924 = vmatpush2.bf16.msra.mxu0 0
      %2925 = vmatprep.subr.bf16.mxu0 0
      %2926 = vmatpush2.bf16.msra.mxu0 0
      %2927 = vmatprep.subr.bf16.mxu0 0
      %2928 = vmatpush2.bf16.msra.mxu0 0
      %2929 = vmatprep.subr.bf16.mxu0 0
      %2930 = vmatpush2.bf16.msra.mxu0 0
      %2931 = vmatprep.mubr.bf16.mxu0 0
      %2932 = vmatmul.mubr.bf16.gmra.mxu0 %v2897
      %v2933 = vpop.f32.mrf.mxu0
      %v2934 = vadd.f32 0.0, %v2933
      %v2935 = vpop.f32.mrf.mxu0
      %v2936 = vpop.f32.mrf.mxu0
      %v2937 = vadd.f32 0.0, %v2936
      %v2938 = vpop.f32.mrf.mxu0
      %2939 = vdwg.mxu0
      %s2940 = scalar_lea.vmem %s23, 112
      %v2941 = vld [vmem:[%s2940] sm:$0xf]
      %v2942 = vld [vmem:[%s2940 + $0x4] sm:$0xf]
      %v2943 = vld [vmem:[%s2940 + $0x8] sm:$0xf]
      %v2944 = vld [vmem:[%s2940 + $0xc] sm:$0xf]
      %v2945 = vpack.c.bf16 %v2937, %v2934
      %v2950 = vunpack.c.l.b16 %v2941
      %v2951 = vunpack.c.l.b16 %v2942
      %v2952 = vunpack.c.l.b16 %v2943
      %v2953 = vunpack.c.l.b16 %v2944
      %v2954 = vpack.c.b16 %v2951, %v2950
      %v2955 = vpack.c.b16 %v2953, %v2952
      %v2959 = vsel %vm1961, %v2945, 0
      %2961 = vmatprep.subr.bf16.mxu0 0
      %2962 = vmatpush1.bf16.msra.mxu0 0
      %2963 = vmatprep.subr.bf16.mxu0 0
      %2964 = vmatpush1.bf16.msra.mxu0 0
      %2965 = vmatprep.subr.bf16.mxu0 0
      %2966 = vmatpush1.bf16.msra.mxu0 0
      %2967 = vmatprep.subr.bf16.mxu0 0
      %2968 = vmatpush1.bf16.msra.mxu0 0
      %2969 = vmatprep.subr.bf16.mxu0 0
      %2970 = vmatpush1.bf16.msra.mxu0 0
      %2971 = vmatprep.subr.bf16.mxu0 0
      %2972 = vmatpush1.bf16.msra.mxu0 0
      %2973 = vmatprep.subr.bf16.mxu0 0
      %2974 = vmatpush1.bf16.msra.mxu0 %v2955
      %2975 = vmatprep.subr.bf16.mxu0 0
      %2976 = vmatpush1.bf16.msra.mxu0 %v2954
      %2977 = vmatprep.subr.bf16.mxu0 0
      %2978 = vmatpush2.bf16.msra.mxu0 0
      %2979 = vmatprep.subr.bf16.mxu0 0
      %2980 = vmatpush2.bf16.msra.mxu0 0
      %2981 = vmatprep.subr.bf16.mxu0 0
      %2982 = vmatpush2.bf16.msra.mxu0 0
      %2983 = vmatprep.subr.bf16.mxu0 0
      %2984 = vmatpush2.bf16.msra.mxu0 0
      %2985 = vmatprep.subr.bf16.mxu0 0
      %2986 = vmatpush2.bf16.msra.mxu0 0
      %2987 = vmatprep.subr.bf16.mxu0 0
      %2988 = vmatpush2.bf16.msra.mxu0 0
      %2989 = vmatprep.subr.bf16.mxu0 0
      %2990 = vmatpush2.bf16.msra.mxu0 0
      %2991 = vmatprep.subr.bf16.mxu0 0
      %2992 = vmatpush2.bf16.msra.mxu0 0
      %2993 = vmatprep.mubr.bf16.mxu0 0
      %2994 = vmatmul.mubr.bf16.gmra.mxu0 %v2959
      %v2995 = vpop.f32.mrf.mxu0
      %v2996 = vadd.f32 0.0, %v2995
      %v2997 = vpop.f32.mrf.mxu0
      %v2998 = vpop.f32.mrf.mxu0
      %v2999 = vadd.f32 0.0, %v2998
      %v3000 = vpop.f32.mrf.mxu0
      %3001 = vdwg.mxu0
      %v3002 = vadd.f32 %v2886, %v2996
      %v3003 = vadd.f32 %v2887, %v2999
      %s3004 = scalar_lea.vmem %s21, 64
      %v3005 = vld [vmem:[%s3004] sm:$0xf]
      %v3006 = vld [vmem:[%s3004 + $0x4] sm:$0x1]
      %v3009 = vunpack.c.l.b16 %v3005
      %v3010 = vunpack.c.l.b16 %v3006
      %v3011 = vpack.c.b16 %v3010, %v3009
      %v3013 = vsel %vm2081, %v3011, 0
      %3015 = vmatprep.subr.bf16.mxu0 0
      %3016 = vmatpush1.bf16.msra.mxu0 0
      %3017 = vmatprep.subr.bf16.mxu0 0
      %3018 = vmatpush1.bf16.msra.mxu0 0
      %3019 = vmatprep.subr.bf16.mxu0 0
      %3020 = vmatpush1.bf16.msra.mxu0 0
      %3021 = vmatprep.subr.bf16.mxu0 0
      %3022 = vmatpush1.bf16.msra.mxu0 0
      %3023 = vmatprep.subr.bf16.mxu0 0
      %3024 = vmatpush1.bf16.msra.mxu0 0
      %3025 = vmatprep.subr.bf16.mxu0 0
      %3026 = vmatpush1.bf16.msra.mxu0 0
      %3027 = vmatprep.subr.bf16.mxu0 0
      %3028 = vmatpush1.bf16.msra.mxu0 0
      %3029 = vmatprep.subr.bf16.mxu0 0
      %3030 = vmatpush1.bf16.msra.mxu0 %v2090
      %3031 = vmatprep.subr.bf16.mxu0 0
      %3032 = vmatpush2.bf16.msra.mxu0 0
      %3033 = vmatprep.subr.bf16.mxu0 0
      %3034 = vmatpush2.bf16.msra.mxu0 0
      %3035 = vmatprep.subr.bf16.mxu0 0
      %3036 = vmatpush2.bf16.msra.mxu0 0
      %3037 = vmatprep.subr.bf16.mxu0 0
      %3038 = vmatpush2.bf16.msra.mxu0 0
      %3039 = vmatprep.subr.bf16.mxu0 0
      %3040 = vmatpush2.bf16.msra.mxu0 0
      %3041 = vmatprep.subr.bf16.mxu0 0
      %3042 = vmatpush2.bf16.msra.mxu0 0
      %3043 = vmatprep.subr.bf16.mxu0 0
      %3044 = vmatpush2.bf16.msra.mxu0 0
      %3045 = vmatprep.subr.bf16.mxu0 0
      %3046 = vmatpush2.bf16.msra.mxu0 0
      %3047 = vmatprep.mubr.bf16.mxu0 0
      %3048 = vmatmul.mubr.bf16.gmra.mxu0 %v3013
      %v3049 = vpop.f32.mrf.mxu0
      %v3050 = vadd.f32 0.0, %v3049
      %v3051 = vpop.f32.mrf.mxu0
      %v3052 = vpop.f32.mrf.mxu0
      %v3053 = vadd.f32 0.0, %v3052
      %v3054 = vpop.f32.mrf.mxu0
      %3055 = vdwg.mxu0
      %s3056 = scalar_lea.vmem %s23, 128
      %v3057 = vld [vmem:[%s3056] sm:$0xf]
      %v3058 = vld [vmem:[%s3056 + $0x4] sm:$0xf]
      %v3059 = vld [vmem:[%s3056 + $0x8] sm:$0xf]
      %v3060 = vld [vmem:[%s3056 + $0xc] sm:$0xf]
      %v3061 = vpack.c.bf16 %v3053, %v3050
      %v3066 = vunpack.c.l.b16 %v3057
      %v3067 = vunpack.c.l.b16 %v3058
      %v3068 = vunpack.c.l.b16 %v3059
      %v3069 = vunpack.c.l.b16 %v3060
      %v3070 = vpack.c.b16 %v3067, %v3066
      %v3071 = vpack.c.b16 %v3069, %v3068
      %v3075 = vsel %vm1961, %v3061, 0
      %3077 = vmatprep.subr.bf16.mxu0 0
      %3078 = vmatpush1.bf16.msra.mxu0 0
      %3079 = vmatprep.subr.bf16.mxu0 0
      %3080 = vmatpush1.bf16.msra.mxu0 0
      %3081 = vmatprep.subr.bf16.mxu0 0
      %3082 = vmatpush1.bf16.msra.mxu0 0
      %3083 = vmatprep.subr.bf16.mxu0 0
      %3084 = vmatpush1.bf16.msra.mxu0 0
      %3085 = vmatprep.subr.bf16.mxu0 0
      %3086 = vmatpush1.bf16.msra.mxu0 0
      %3087 = vmatprep.subr.bf16.mxu0 0
      %3088 = vmatpush1.bf16.msra.mxu0 0
      %3089 = vmatprep.subr.bf16.mxu0 0
      %3090 = vmatpush1.bf16.msra.mxu0 %v3071
      %3091 = vmatprep.subr.bf16.mxu0 0
      %3092 = vmatpush1.bf16.msra.mxu0 %v3070
      %3093 = vmatprep.subr.bf16.mxu0 0
      %3094 = vmatpush2.bf16.msra.mxu0 0
      %3095 = vmatprep.subr.bf16.mxu0 0
      %3096 = vmatpush2.bf16.msra.mxu0 0
      %3097 = vmatprep.subr.bf16.mxu0 0
      %3098 = vmatpush2.bf16.msra.mxu0 0
      %3099 = vmatprep.subr.bf16.mxu0 0
      %3100 = vmatpush2.bf16.msra.mxu0 0
      %3101 = vmatprep.subr.bf16.mxu0 0
      %3102 = vmatpush2.bf16.msra.mxu0 0
      %3103 = vmatprep.subr.bf16.mxu0 0
      %3104 = vmatpush2.bf16.msra.mxu0 0
      %3105 = vmatprep.subr.bf16.mxu0 0
      %3106 = vmatpush2.bf16.msra.mxu0 0
      %3107 = vmatprep.subr.bf16.mxu0 0
      %3108 = vmatpush2.bf16.msra.mxu0 0
      %3109 = vmatprep.mubr.bf16.mxu0 0
      %3110 = vmatmul.mubr.bf16.gmra.mxu0 %v3075
      %v3111 = vpop.f32.mrf.mxu0
      %v3112 = vadd.f32 0.0, %v3111
      %v3113 = vpop.f32.mrf.mxu0
      %v3114 = vpop.f32.mrf.mxu0
      %v3115 = vadd.f32 0.0, %v3114
      %v3116 = vpop.f32.mrf.mxu0
      %3117 = vdwg.mxu0
      %v3118 = vadd.f32 %v3002, %v3112
      %v3119 = vadd.f32 %v3003, %v3115
      %v3120 = vld [vmem:[%s25] sm:$0x1]
      %v3122 = vlaneseq
      %v3123 = vshrl.u32 %v3122, 7
      %v3124 = vsub.s32 0, %v3123
      %v3125 = vrot.slane %v3120, %v3124
      %v3127 = vadd.f32 %v3118, %v3125
      %v3128 = vadd.f32 %v3119, %v3125
      %v3129 = vtanh.pop %v3127
      %v3130 = vtanh.pop %v3128
      %v3131 = vadd.f32 %v3129, %v2071
      %v3132 = vadd.f32 %v3130, %v2072
      %v3133 = vsel %vm1961, %v3131, 0.0
      %3134 = vadd.xlane.f32.xlu0 %v3133
      %v3135 = vpop.xlane.xlu0 %3134
      %vm3136 = vcmask 253952
      %v3137 = vsel %vm3136, %v3132, 0.0
      %3138 = vadd.xlane.f32.xlu0 %v3137
      %v3139 = vpop.xlane.xlu0 %3138
      %v3140 = vrcp.pop 32.0
      %v3141 = vmul.f32 %v3135, %v3140
      %v3142 = vmul.f32 %v3139, %v3140
      %v3143 = vsub.f32 %v3131, %v3141
      %v3144 = vsub.f32 %v3132, %v3142
      %v3145 = vmul.f32 %v3143, %v3143
      %v3146 = vmul.f32 %v3144, %v3144
      %v3147 = vsel %vm1961, %v3145, 0.0
      %3148 = vadd.xlane.f32.xlu0 %v3147
      %v3149 = vpop.xlane.xlu0 %3148
      %v3150 = vsel %vm3136, %v3146, 0.0
      %3151 = vadd.xlane.f32.xlu0 %v3150
      %v3152 = vpop.xlane.xlu0 %3151
      %v3153 = vmul.f32 %v3149, %v3140
      %v3154 = vmul.f32 %v3152, %v3140
      %v3155 = vadd.f32 %v3153, 1e-05
      %v3156 = vadd.f32 %v3154, 1e-05
      %v3157 = vrsqrt.pop %v3155
      %v3158 = vrsqrt.pop %v3156
      %v3159 = vmul.f32 %v3143, %v3157
      %v3160 = vmul.f32 %v3144, %v3158
      %v3162 = vlaneseq
      %v3163 = vshrl.u32 %v3162, 7
      %v3164 = vsub.s32 0, %v3163
      %v3165 = vrot.slane %v1755, %v3164
      %v3167 = vmul.f32 %v3159, %v3165
      %v3168 = vmul.f32 %v3160, %v3165
      %v3170 = vlaneseq
      %v3171 = vshrl.u32 %v3170, 7
      %v3172 = vsub.s32 0, %v3171
      %v3173 = vrot.slane %v1756, %v3172
      %v3175 = vadd.f32 %v3167, %v3173
      %v3176 = vadd.f32 %v3168, %v3173
      %v3177 = vld [vmem:[%s27] sm:$0xf]
      %v3178 = vld [vmem:[%s27 + $0x4] sm:$0xf]
      %v3179 = vld [vmem:[%s29] sm:$0xf]
      %v3180 = vld [vmem:[%s29 + $0x4] sm:$0xf]
      %v3181 = vld [vmem:[%s29 + $0x8] sm:$0xf]
      %v3182 = vld [vmem:[%s29 + $0xc] sm:$0xf]
      %v3183 = vpack.c.bf16 %v3176, %v3175
      %v3188 = vunpack.c.l.b16 %v3179
      %v3189 = vunpack.c.l.b16 %v3180
      %v3190 = vunpack.c.l.b16 %v3181
      %v3191 = vunpack.c.l.b16 %v3182
      %v3192 = vpack.c.b16 %v3189, %v3188
      %v3193 = vpack.c.b16 %v3191, %v3190
      %v3197 = vsel %vm1961, %v3183, 0
      %3199 = vmatprep.subr.bf16.mxu0 0
      %3200 = vmatpush1.bf16.msra.mxu0 0
      %3201 = vmatprep.subr.bf16.mxu0 0
      %3202 = vmatpush1.bf16.msra.mxu0 0
      %3203 = vmatprep.subr.bf16.mxu0 0
      %3204 = vmatpush1.bf16.msra.mxu0 0
      %3205 = vmatprep.subr.bf16.mxu0 0
      %3206 = vmatpush1.bf16.msra.mxu0 0
      %3207 = vmatprep.subr.bf16.mxu0 0
      %3208 = vmatpush1.bf16.msra.mxu0 0
      %3209 = vmatprep.subr.bf16.mxu0 0
      %3210 = vmatpush1.bf16.msra.mxu0 0
      %3211 = vmatprep.subr.bf16.mxu0 0
      %3212 = vmatpush1.bf16.msra.mxu0 %v3193
      %3213 = vmatprep.subr.bf16.mxu0 0
      %3214 = vmatpush1.bf16.msra.mxu0 %v3192
      %3215 = vmatprep.subr.bf16.mxu0 0
      %3216 = vmatpush2.bf16.msra.mxu0 0
      %3217 = vmatprep.subr.bf16.mxu0 0
      %3218 = vmatpush2.bf16.msra.mxu0 0
      %3219 = vmatprep.subr.bf16.mxu0 0
      %3220 = vmatpush2.bf16.msra.mxu0 0
      %3221 = vmatprep.subr.bf16.mxu0 0
      %3222 = vmatpush2.bf16.msra.mxu0 0
      %3223 = vmatprep.subr.bf16.mxu0 0
      %3224 = vmatpush2.bf16.msra.mxu0 0
      %3225 = vmatprep.subr.bf16.mxu0 0
      %3226 = vmatpush2.bf16.msra.mxu0 0
      %3227 = vmatprep.subr.bf16.mxu0 0
      %3228 = vmatpush2.bf16.msra.mxu0 0
      %3229 = vmatprep.subr.bf16.mxu0 0
      %3230 = vmatpush2.bf16.msra.mxu0 0
      %3231 = vmatprep.mubr.bf16.mxu0 0
      %3232 = vmatmul.mubr.bf16.gmra.mxu0 %v3197
      %v3233 = vpop.f32.mrf.mxu0
      %v3234 = vadd.f32 0.0, %v3233
      %v3235 = vpop.f32.mrf.mxu0
      %v3236 = vpop.f32.mrf.mxu0
      %v3237 = vadd.f32 0.0, %v3236
      %v3238 = vpop.f32.mrf.mxu0
      %3239 = vdwg.mxu0
      %v3240 = vpack.c.bf16 %v3237, %v3234
      %s3241 = scalar_lea.vmem %s27, 8
      %v3242 = vld [vmem:[%s3241] sm:$0xf]
      %v3243 = vld [vmem:[%s3241 + $0x4] sm:$0xf]
      %s3244 = scalar_lea.vmem %s29, 16
      %v3245 = vld [vmem:[%s3244] sm:$0xf]
      %v3246 = vld [vmem:[%s3244 + $0x4] sm:$0xf]
      %v3247 = vld [vmem:[%s3244 + $0x8] sm:$0xf]
      %v3248 = vld [vmem:[%s3244 + $0xc] sm:$0xf]
      %v3253 = vunpack.c.l.b16 %v3245
      %v3254 = vunpack.c.l.b16 %v3246
      %v3255 = vunpack.c.l.b16 %v3247
      %v3256 = vunpack.c.l.b16 %v3248
      %v3257 = vpack.c.b16 %v3254, %v3253
      %v3258 = vpack.c.b16 %v3256, %v3255
      %3261 = vmatprep.subr.bf16.mxu0 0
      %3262 = vmatpush1.bf16.msra.mxu0 0
      %3263 = vmatprep.subr.bf16.mxu0 0
      %3264 = vmatpush1.bf16.msra.mxu0 0
      %3265 = vmatprep.subr.bf16.mxu0 0
      %3266 = vmatpush1.bf16.msra.mxu0 0
      %3267 = vmatprep.subr.bf16.mxu0 0
      %3268 = vmatpush1.bf16.msra.mxu0 0
      %3269 = vmatprep.subr.bf16.mxu0 0
      %3270 = vmatpush1.bf16.msra.mxu0 0
      %3271 = vmatprep.subr.bf16.mxu0 0
      %3272 = vmatpush1.bf16.msra.mxu0 0
      %3273 = vmatprep.subr.bf16.mxu0 0
      %3274 = vmatpush1.bf16.msra.mxu0 %v3258
      %3275 = vmatprep.subr.bf16.mxu0 0
      %3276 = vmatpush1.bf16.msra.mxu0 %v3257
      %3277 = vmatprep.subr.bf16.mxu0 0
      %3278 = vmatpush2.bf16.msra.mxu0 0
      %3279 = vmatprep.subr.bf16.mxu0 0
      %3280 = vmatpush2.bf16.msra.mxu0 0
      %3281 = vmatprep.subr.bf16.mxu0 0
      %3282 = vmatpush2.bf16.msra.mxu0 0
      %3283 = vmatprep.subr.bf16.mxu0 0
      %3284 = vmatpush2.bf16.msra.mxu0 0
      %3285 = vmatprep.subr.bf16.mxu0 0
      %3286 = vmatpush2.bf16.msra.mxu0 0
      %3287 = vmatprep.subr.bf16.mxu0 0
      %3288 = vmatpush2.bf16.msra.mxu0 0
      %3289 = vmatprep.subr.bf16.mxu0 0
      %3290 = vmatpush2.bf16.msra.mxu0 0
      %3291 = vmatprep.subr.bf16.mxu0 0
      %3292 = vmatpush2.bf16.msra.mxu0 0
      %3293 = vmatprep.mubr.bf16.mxu0 0
      %3294 = vmatmul.mubr.bf16.gmra.mxu0 %v3197
      %v3295 = vpop.f32.mrf.mxu0
      %v3296 = vadd.f32 0.0, %v3295
      %v3297 = vpop.f32.mrf.mxu0
      %v3298 = vpop.f32.mrf.mxu0
      %v3299 = vadd.f32 0.0, %v3298
      %v3300 = vpop.f32.mrf.mxu0
      %3301 = vdwg.mxu0
      %v3302 = vpack.c.bf16 %v3299, %v3296
      %v3305 = vunpack.c.l.b16 %v3242
      %v3306 = vunpack.c.l.b16 %v3243
      %v3307 = vpack.c.b16 %v3306, %v3305
      %v3309 = vsel %vm2081, %v3307, 0
      %v3312 = vand.u32 %v3302, %v2088
      %3314 = vmatprep.subr.bf16.mxu0 0
      %3315 = vmatpush1.bf16.msra.mxu0 0
      %3316 = vmatprep.subr.bf16.mxu0 0
      %3317 = vmatpush1.bf16.msra.mxu0 0
      %3318 = vmatprep.subr.bf16.mxu0 0
      %3319 = vmatpush1.bf16.msra.mxu0 0
      %3320 = vmatprep.subr.bf16.mxu0 0
      %3321 = vmatpush1.bf16.msra.mxu0 0
      %3322 = vmatprep.subr.bf16.mxu0 0
      %3323 = vmatpush1.bf16.msra.mxu0 0
      %3324 = vmatprep.subr.bf16.mxu0 0
      %3325 = vmatpush1.bf16.msra.mxu0 0
      %3326 = vmatprep.subr.bf16.mxu0 0
      %3327 = vmatpush1.bf16.msra.mxu0 0
      %3328 = vmatprep.subr.bf16.mxu0 0
      %3329 = vmatpush1.bf16.msra.mxu0 %v3312
      %3330 = vmatprep.subr.bf16.mxu0 0
      %3331 = vmatpush2.bf16.msra.mxu0 0
      %3332 = vmatprep.subr.bf16.mxu0 0
      %3333 = vmatpush2.bf16.msra.mxu0 0
      %3334 = vmatprep.subr.bf16.mxu0 0
      %3335 = vmatpush2.bf16.msra.mxu0 0
      %3336 = vmatprep.subr.bf16.mxu0 0
      %3337 = vmatpush2.bf16.msra.mxu0 0
      %3338 = vmatprep.subr.bf16.mxu0 0
      %3339 = vmatpush2.bf16.msra.mxu0 0
      %3340 = vmatprep.subr.bf16.mxu0 0
      %3341 = vmatpush2.bf16.msra.mxu0 0
      %3342 = vmatprep.subr.bf16.mxu0 0
      %3343 = vmatpush2.bf16.msra.mxu0 0
      %3344 = vmatprep.subr.bf16.mxu0 0
      %3345 = vmatpush2.bf16.msra.mxu0 0
      %3346 = vmatprep.mubr.bf16.mxu0 0
      %3347 = vmatmul.mubr.bf16.gmra.mxu0 %v3309
      %v3348 = vpop.f32.mrf.mxu0
      %v3349 = vadd.f32 0.0, %v3348
      %v3350 = vpop.f32.mrf.mxu0
      %v3351 = vpop.f32.mrf.mxu0
      %v3352 = vadd.f32 0.0, %v3351
      %v3353 = vpop.f32.mrf.mxu0
      %3354 = vdwg.mxu0
      %v3357 = vunpack.c.l.b16 %v3177
      %v3358 = vunpack.c.l.b16 %v3178
      %v3359 = vpack.c.b16 %v3358, %v3357
      %v3361 = vsel %vm2081, %v3359, 0
      %v3364 = vand.u32 %v3240, %v2088
      %3366 = vmatprep.subr.bf16.mxu0 0
      %3367 = vmatpush1.bf16.msra.mxu0 0
      %3368 = vmatprep.subr.bf16.mxu0 0
      %3369 = vmatpush1.bf16.msra.mxu0 0
      %3370 = vmatprep.subr.bf16.mxu0 0
      %3371 = vmatpush1.bf16.msra.mxu0 0
      %3372 = vmatprep.subr.bf16.mxu0 0
      %3373 = vmatpush1.bf16.msra.mxu0 0
      %3374 = vmatprep.subr.bf16.mxu0 0
      %3375 = vmatpush1.bf16.msra.mxu0 0
      %3376 = vmatprep.subr.bf16.mxu0 0
      %3377 = vmatpush1.bf16.msra.mxu0 0
      %3378 = vmatprep.subr.bf16.mxu0 0
      %3379 = vmatpush1.bf16.msra.mxu0 0
      %3380 = vmatprep.subr.bf16.mxu0 0
      %3381 = vmatpush1.bf16.msra.mxu0 %v3364
      %3382 = vmatprep.subr.bf16.mxu0 0
      %3383 = vmatpush2.bf16.msra.mxu0 0
      %3384 = vmatprep.subr.bf16.mxu0 0
      %3385 = vmatpush2.bf16.msra.mxu0 0
      %3386 = vmatprep.subr.bf16.mxu0 0
      %3387 = vmatpush2.bf16.msra.mxu0 0
      %3388 = vmatprep.subr.bf16.mxu0 0
      %3389 = vmatpush2.bf16.msra.mxu0 0
      %3390 = vmatprep.subr.bf16.mxu0 0
      %3391 = vmatpush2.bf16.msra.mxu0 0
      %3392 = vmatprep.subr.bf16.mxu0 0
      %3393 = vmatpush2.bf16.msra.mxu0 0
      %3394 = vmatprep.subr.bf16.mxu0 0
      %3395 = vmatpush2.bf16.msra.mxu0 0
      %3396 = vmatprep.subr.bf16.mxu0 0
      %3397 = vmatpush2.bf16.msra.mxu0 0
      %3398 = vmatprep.mubr.bf16.mxu0 0
      %3399 = vmatmul.mubr.bf16.gmra.mxu0 %v3361
      %v3400 = vpop.f32.mrf.mxu0
      %v3401 = vadd.f32 %v3349, %v3400
      %v3402 = vpop.f32.mrf.mxu0
      %v3403 = vpop.f32.mrf.mxu0
      %v3404 = vadd.f32 %v3352, %v3403
      %v3405 = vpop.f32.mrf.mxu0
      %3406 = vdwg.mxu0
      %v3407 = vld [vmem:[%s31] sm:$0x1]
      %v3409 = vlaneseq
      %v3410 = vshrl.u32 %v3409, 7
      %v3411 = vsub.s32 0, %v3410
      %v3412 = vrot.slane %v3407, %v3411
      %v3414 = vadd.f32 %v3401, %v3412
      %v3415 = vadd.f32 %v3404, %v3412
      %v3416 = vtanh.pop %v3414
      %v3417 = vtanh.pop %v3415
      %v3418 = vadd.f32 %v3416, %v1832
      %v3419 = vadd.f32 %v3417, %v1833
      %v3420 = vsel %vm1961, %v3418, 0.0
      %3421 = vadd.xlane.f32.xlu0 %v3420
      %v3422 = vpop.xlane.xlu0 %3421
      %v3423 = vsel %vm1961, %v3419, 0.0
      %3424 = vadd.xlane.f32.xlu0 %v3423
      %v3425 = vpop.xlane.xlu0 %3424
      %v3426 = vmul.f32 %v3422, %v3140
      %v3427 = vmul.f32 %v3425, %v3140
      %v3428 = vsub.f32 %v3418, %v3426
      %v3429 = vsub.f32 %v3419, %v3427
      %v3430 = vmul.f32 %v3428, %v3428
      %v3431 = vmul.f32 %v3429, %v3429
      %v3432 = vsel %vm1961, %v3430, 0.0
      %3433 = vadd.xlane.f32.xlu0 %v3432
      %v3434 = vpop.xlane.xlu0 %3433
      %v3435 = vsel %vm1961, %v3431, 0.0
      %3436 = vadd.xlane.f32.xlu0 %v3435
      %v3437 = vpop.xlane.xlu0 %3436
      %v3438 = vmul.f32 %v3434, %v3140
      %v3439 = vmul.f32 %v3437, %v3140
      %v3440 = vadd.f32 %v3438, 1e-05
      %v3441 = vadd.f32 %v3439, 1e-05
      %v3442 = vrsqrt.pop %v3440
      %v3443 = vrsqrt.pop %v3441
      %v3444 = vmul.f32 %v3428, %v3442
      %v3445 = vmul.f32 %v3429, %v3443
      %v3446 = vmul.f32 %v3444, %v3165
      %v3447 = vmul.f32 %v3445, %v3165
      %v3448 = vadd.f32 %v3446, %v3173
      %v3449 = vadd.f32 %v3447, %v3173
      %v3450 = vld [vmem:[%s55] sm:$0xf]
      %v3451 = vld [vmem:[%s55 + $0x4] sm:$0xf]
      %v3452 = vld [vmem:[%s55 + $0x8] sm:$0xf]
      %v3453 = vld [vmem:[%s55 + $0xc] sm:$0xf]
      %v3454 = vpack.c.bf16 %v3449, %v3448
      %3455 = vmatprep.subr.mxu0 0.0
      %3456 = vmatpush1.msra.mxu0 0.0
      %3457 = vmatprep.subr.mxu0 0.0
      %3458 = vmatpush1.msra.mxu0 0.0
      %3459 = vmatprep.subr.mxu0 0.0
      %3460 = vmatpush1.msra.mxu0 0.0
      %3461 = vmatprep.subr.mxu0 0.0
      %3462 = vmatpush1.msra.mxu0 0.0
      %3463 = vmatprep.subr.mxu0 0.0
      %3464 = vmatpush1.msra.mxu0 0.0
      %3465 = vmatprep.subr.mxu0 0.0
      %3466 = vmatpush1.msra.mxu0 0.0
      %3467 = vmatprep.subr.mxu0 0.0
      %3468 = vmatpush1.msra.mxu0 0.0
      %3469 = vmatprep.subr.mxu0 0.0
      %3470 = vmatpush1.msra.mxu0 0.0
      %3471 = vmatprep.subr.mxu0 0.0
      %3472 = vmatpush1.msra.mxu0 0.0
      %3473 = vmatprep.subr.mxu0 0.0
      %3474 = vmatpush1.msra.mxu0 0.0
      %3475 = vmatprep.subr.mxu0 0.0
      %3476 = vmatpush1.msra.mxu0 0.0
      %3477 = vmatprep.subr.mxu0 0.0
      %3478 = vmatpush1.msra.mxu0 0.0
      %3479 = vmatprep.subr.mxu0 0.0
      %3480 = vmatpush1.msra.mxu0 0.0
      %3481 = vmatprep.subr.mxu0 0.0
      %3482 = vmatpush1.msra.mxu0 0.0
      %3483 = vmatprep.subr.mxu0 0.0
      %3484 = vmatpush1.msra.mxu0 %v1754
      %3485 = vmatprep.subr.mxu0 0.0
      %3486 = vmatpush1.msra.mxu0 %v1753
      %3487 = vmatprep.subr.mxu0 0.0
      %3488 = vmatpush2.msra.mxu0 0.0
      %3489 = vmatprep.subr.mxu0 0.0
      %3490 = vmatpush2.msra.mxu0 0.0
      %3491 = vmatprep.subr.mxu0 0.0
      %3492 = vmatpush2.msra.mxu0 0.0
      %3493 = vmatprep.subr.mxu0 0.0
      %3494 = vmatpush2.msra.mxu0 0.0
      %3495 = vmatprep.subr.mxu0 0.0
      %3496 = vmatpush2.msra.mxu0 0.0
      %3497 = vmatprep.subr.mxu0 0.0
      %3498 = vmatpush2.msra.mxu0 0.0
      %3499 = vmatprep.subr.mxu0 0.0
      %3500 = vmatpush2.msra.mxu0 0.0
      %3501 = vmatprep.subr.mxu0 0.0
      %3502 = vmatpush2.msra.mxu0 0.0
      %3503 = vmatprep.subr.mxu0 0.0
      %3504 = vmatpush2.msra.mxu0 0.0
      %3505 = vmatprep.subr.mxu0 0.0
      %3506 = vmatpush2.msra.mxu0 0.0
      %3507 = vmatprep.subr.mxu0 0.0
      %3508 = vmatpush2.msra.mxu0 0.0
      %3509 = vmatprep.subr.mxu0 0.0
      %3510 = vmatpush2.msra.mxu0 0.0
      %3511 = vmatprep.subr.mxu0 0.0
      %3512 = vmatpush2.msra.mxu0 0.0
      %3513 = vmatprep.subr.mxu0 0.0
      %3514 = vmatpush2.msra.mxu0 0.0
      %3515 = vmatprep.subr.mxu0 0.0
      %3516 = vmatpush2.msra.mxu0 0.0
      %3517 = vmatprep.subr.mxu0 0.0
      %3518 = vmatpush2.msra.mxu0 0.0
      %3519 = vmatprep.mubr.f32.mxu0 0.0
      %3520 = vmatmul.mubr.f32.gmra.mxu0 %v1276
      %v3521 = vpop.f32.mrf.mxu0
      %v3522 = vadd.f32 0.0, %v3521
      %v3523 = vpop.f32.mrf.mxu0
      %3524 = vmatprep.mubr.f32.mxu0 0.0
      %3525 = vmatmul.mubr.f32.gmra.mxu0 %v1279
      %v3526 = vpop.f32.mrf.mxu0
      %v3527 = vadd.f32 0.0, %v3526
      %v3528 = vpop.f32.mrf.mxu0
      %3529 = vdwg.mxu0
      %v3530 = vsub.f32 %v1753, %v3522
      %v3531 = vsub.f32 %v1754, %v3527
      %v3532 = vld [vmem:[%s33] sm:$0x7]
      %v3533 = vpack.c.bf16 %v3531, %v3530
      %v3535 = vsel %vm1274, %v3532, 0
      %3537 = vmatprep.subr.bf16.mxu0 0
      %3538 = vmatpush1.bf16.msra.mxu0 0
      %3539 = vmatprep.subr.bf16.mxu0 0
      %3540 = vmatpush1.bf16.msra.mxu0 0
      %3541 = vmatprep.subr.bf16.mxu0 0
      %3542 = vmatpush1.bf16.msra.mxu0 0
      %3543 = vmatprep.subr.bf16.mxu0 0
      %3544 = vmatpush1.bf16.msra.mxu0 0
      %3545 = vmatprep.subr.bf16.mxu0 0
      %3546 = vmatpush1.bf16.msra.mxu0 0
      %3547 = vmatprep.subr.bf16.mxu0 0
      %3548 = vmatpush1.bf16.msra.mxu0 0
      %3549 = vmatprep.subr.bf16.mxu0 0
      %3550 = vmatpush1.bf16.msra.mxu0 0
      %3551 = vmatprep.subr.bf16.mxu0 0
      %3552 = vmatpush1.bf16.msra.mxu0 %v3533
      %3553 = vmatprep.subr.bf16.mxu0 0
      %3554 = vmatpush2.bf16.msra.mxu0 0
      %3555 = vmatprep.subr.bf16.mxu0 0
      %3556 = vmatpush2.bf16.msra.mxu0 0
      %3557 = vmatprep.subr.bf16.mxu0 0
      %3558 = vmatpush2.bf16.msra.mxu0 0
      %3559 = vmatprep.subr.bf16.mxu0 0
      %3560 = vmatpush2.bf16.msra.mxu0 0
      %3561 = vmatprep.subr.bf16.mxu0 0
      %3562 = vmatpush2.bf16.msra.mxu0 0
      %3563 = vmatprep.subr.bf16.mxu0 0
      %3564 = vmatpush2.bf16.msra.mxu0 0
      %3565 = vmatprep.subr.bf16.mxu0 0
      %3566 = vmatpush2.bf16.msra.mxu0 0
      %3567 = vmatprep.subr.bf16.mxu0 0
      %3568 = vmatpush2.bf16.msra.mxu0 0
      %3569 = vmatprep.mubr.bf16.mxu0 0
      %3570 = vmatmul.mubr.bf16.gmra.mxu0 %v3535
      %v3571 = vpop.f32.mrf.mxu0
      %v3572 = vadd.f32 0.0, %v3571
      %v3573 = vpop.f32.mrf.mxu0
      %v3574 = vpop.f32.mrf.mxu0
      %v3575 = vpop.f32.mrf.mxu0
      %3576 = vdwg.mxu0
      %v3577 = vld [vmem:[%s35] sm:$0xf]
      %v3578 = vld [vmem:[%s35 + $0x4] sm:$0xf]
      %v3579 = vld [vmem:[%s35 + $0x8] sm:$0xf]
      %v3580 = vld [vmem:[%s35 + $0xc] sm:$0xf]
      %v3581 = vpack.c.bf16 %v3572, %v3572
      %s3582 = scalar_lea.vmem %s33, 4
      %v3583 = vld [vmem:[%s3582] sm:$0x7]
      %v3585 = vsel %vm1274, %v3583, 0
      %3587 = vmatprep.subr.bf16.mxu0 0
      %3588 = vmatpush1.bf16.msra.mxu0 0
      %3589 = vmatprep.subr.bf16.mxu0 0
      %3590 = vmatpush1.bf16.msra.mxu0 0
      %3591 = vmatprep.subr.bf16.mxu0 0
      %3592 = vmatpush1.bf16.msra.mxu0 0
      %3593 = vmatprep.subr.bf16.mxu0 0
      %3594 = vmatpush1.bf16.msra.mxu0 0
      %3595 = vmatprep.subr.bf16.mxu0 0
      %3596 = vmatpush1.bf16.msra.mxu0 0
      %3597 = vmatprep.subr.bf16.mxu0 0
      %3598 = vmatpush1.bf16.msra.mxu0 0
      %3599 = vmatprep.subr.bf16.mxu0 0
      %3600 = vmatpush1.bf16.msra.mxu0 0
      %3601 = vmatprep.subr.bf16.mxu0 0
      %3602 = vmatpush1.bf16.msra.mxu0 %v3533
      %3603 = vmatprep.subr.bf16.mxu0 0
      %3604 = vmatpush2.bf16.msra.mxu0 0
      %3605 = vmatprep.subr.bf16.mxu0 0
      %3606 = vmatpush2.bf16.msra.mxu0 0
      %3607 = vmatprep.subr.bf16.mxu0 0
      %3608 = vmatpush2.bf16.msra.mxu0 0
      %3609 = vmatprep.subr.bf16.mxu0 0
      %3610 = vmatpush2.bf16.msra.mxu0 0
      %3611 = vmatprep.subr.bf16.mxu0 0
      %3612 = vmatpush2.bf16.msra.mxu0 0
      %3613 = vmatprep.subr.bf16.mxu0 0
      %3614 = vmatpush2.bf16.msra.mxu0 0
      %3615 = vmatprep.subr.bf16.mxu0 0
      %3616 = vmatpush2.bf16.msra.mxu0 0
      %3617 = vmatprep.subr.bf16.mxu0 0
      %3618 = vmatpush2.bf16.msra.mxu0 0
      %3619 = vmatprep.mubr.bf16.mxu0 0
      %3620 = vmatmul.mubr.bf16.gmra.mxu0 %v3585
      %v3621 = vpop.f32.mrf.mxu0
      %v3622 = vadd.f32 0.0, %v3621
      %v3623 = vpop.f32.mrf.mxu0
      %v3624 = vpop.f32.mrf.mxu0
      %v3625 = vpop.f32.mrf.mxu0
      %3626 = vdwg.mxu0
      %s3627 = scalar_lea.vmem %s35, 16
      %v3628 = vld [vmem:[%s3627] sm:$0xf]
      %v3629 = vld [vmem:[%s3627 + $0x4] sm:$0xf]
      %v3630 = vld [vmem:[%s3627 + $0x8] sm:$0xf]
      %v3631 = vld [vmem:[%s3627 + $0xc] sm:$0xf]
      %v3632 = vpack.c.bf16 %v3622, %v3622
      %v3637 = vunpack.c.l.b16 %v3628
      %v3638 = vunpack.c.l.b16 %v3629
      %v3639 = vunpack.c.l.b16 %v3630
      %v3640 = vunpack.c.l.b16 %v3631
      %v3641 = vpack.c.b16 %v3638, %v3637
      %v3642 = vpack.c.b16 %v3640, %v3639
      %v3646 = vsel %vm1961, %v3632, 0
      %3648 = vmatprep.subr.bf16.mxu0 0
      %3649 = vmatpush1.bf16.msra.mxu0 0
      %3650 = vmatprep.subr.bf16.mxu0 0
      %3651 = vmatpush1.bf16.msra.mxu0 0
      %3652 = vmatprep.subr.bf16.mxu0 0
      %3653 = vmatpush1.bf16.msra.mxu0 0
      %3654 = vmatprep.subr.bf16.mxu0 0
      %3655 = vmatpush1.bf16.msra.mxu0 0
      %3656 = vmatprep.subr.bf16.mxu0 0
      %3657 = vmatpush1.bf16.msra.mxu0 0
      %3658 = vmatprep.subr.bf16.mxu0 0
      %3659 = vmatpush1.bf16.msra.mxu0 0
      %3660 = vmatprep.subr.bf16.mxu0 0
      %3661 = vmatpush1.bf16.msra.mxu0 %v3642
      %3662 = vmatprep.subr.bf16.mxu0 0
      %3663 = vmatpush1.bf16.msra.mxu0 %v3641
      %3664 = vmatprep.subr.bf16.mxu0 0
      %3665 = vmatpush2.bf16.msra.mxu0 0
      %3666 = vmatprep.subr.bf16.mxu0 0
      %3667 = vmatpush2.bf16.msra.mxu0 0
      %3668 = vmatprep.subr.bf16.mxu0 0
      %3669 = vmatpush2.bf16.msra.mxu0 0
      %3670 = vmatprep.subr.bf16.mxu0 0
      %3671 = vmatpush2.bf16.msra.mxu0 0
      %3672 = vmatprep.subr.bf16.mxu0 0
      %3673 = vmatpush2.bf16.msra.mxu0 0
      %3674 = vmatprep.subr.bf16.mxu0 0
      %3675 = vmatpush2.bf16.msra.mxu0 0
      %3676 = vmatprep.subr.bf16.mxu0 0
      %3677 = vmatpush2.bf16.msra.mxu0 0
      %3678 = vmatprep.subr.bf16.mxu0 0
      %3679 = vmatpush2.bf16.msra.mxu0 0
      %3680 = vmatprep.mubr.bf16.mxu0 0
      %3681 = vmatmul.mubr.bf16.gmra.mxu0 %v3646
      %v3682 = vpop.f32.mrf.mxu0
      %v3683 = vadd.f32 0.0, %v3682
      %v3684 = vpop.f32.mrf.mxu0
      %v3685 = vpop.f32.mrf.mxu0
      %v3686 = vpop.f32.mrf.mxu0
      %3687 = vdwg.mxu0
      %v3692 = vunpack.c.l.b16 %v3577
      %v3693 = vunpack.c.l.b16 %v3578
      %v3694 = vunpack.c.l.b16 %v3579
      %v3695 = vunpack.c.l.b16 %v3580
      %v3696 = vpack.c.b16 %v3693, %v3692
      %v3697 = vpack.c.b16 %v3695, %v3694
      %v3701 = vsel %vm1961, %v3581, 0
      %3703 = vmatprep.subr.bf16.mxu0 0
      %3704 = vmatpush1.bf16.msra.mxu0 0
      %3705 = vmatprep.subr.bf16.mxu0 0
      %3706 = vmatpush1.bf16.msra.mxu0 0
      %3707 = vmatprep.subr.bf16.mxu0 0
      %3708 = vmatpush1.bf16.msra.mxu0 0
      %3709 = vmatprep.subr.bf16.mxu0 0
      %3710 = vmatpush1.bf16.msra.mxu0 0
      %3711 = vmatprep.subr.bf16.mxu0 0
      %3712 = vmatpush1.bf16.msra.mxu0 0
      %3713 = vmatprep.subr.bf16.mxu0 0
      %3714 = vmatpush1.bf16.msra.mxu0 0
      %3715 = vmatprep.subr.bf16.mxu0 0
      %3716 = vmatpush1.bf16.msra.mxu0 %v3697
      %3717 = vmatprep.subr.bf16.mxu0 0
      %3718 = vmatpush1.bf16.msra.mxu0 %v3696
      %3719 = vmatprep.subr.bf16.mxu0 0
      %3720 = vmatpush2.bf16.msra.mxu0 0
      %3721 = vmatprep.subr.bf16.mxu0 0
      %3722 = vmatpush2.bf16.msra.mxu0 0
      %3723 = vmatprep.subr.bf16.mxu0 0
      %3724 = vmatpush2.bf16.msra.mxu0 0
      %3725 = vmatprep.subr.bf16.mxu0 0
      %3726 = vmatpush2.bf16.msra.mxu0 0
      %3727 = vmatprep.subr.bf16.mxu0 0
      %3728 = vmatpush2.bf16.msra.mxu0 0
      %3729 = vmatprep.subr.bf16.mxu0 0
      %3730 = vmatpush2.bf16.msra.mxu0 0
      %3731 = vmatprep.subr.bf16.mxu0 0
      %3732 = vmatpush2.bf16.msra.mxu0 0
      %3733 = vmatprep.subr.bf16.mxu0 0
      %3734 = vmatpush2.bf16.msra.mxu0 0
      %3735 = vmatprep.mubr.bf16.mxu0 0
      %3736 = vmatmul.mubr.bf16.gmra.mxu0 %v3701
      %v3737 = vpop.f32.mrf.mxu0
      %v3738 = vadd.f32 %v3683, %v3737
      %v3739 = vpop.f32.mrf.mxu0
      %v3740 = vpop.f32.mrf.mxu0
      %v3741 = vpop.f32.mrf.mxu0
      %3742 = vdwg.mxu0
      %s3743 = scalar_lea.vmem %s33, 8
      %v3744 = vld [vmem:[%s3743] sm:$0x7]
      %v3746 = vsel %vm1274, %v3744, 0
      %3748 = vmatprep.subr.bf16.mxu0 0
      %3749 = vmatpush1.bf16.msra.mxu0 0
      %3750 = vmatprep.subr.bf16.mxu0 0
      %3751 = vmatpush1.bf16.msra.mxu0 0
      %3752 = vmatprep.subr.bf16.mxu0 0
      %3753 = vmatpush1.bf16.msra.mxu0 0
      %3754 = vmatprep.subr.bf16.mxu0 0
      %3755 = vmatpush1.bf16.msra.mxu0 0
      %3756 = vmatprep.subr.bf16.mxu0 0
      %3757 = vmatpush1.bf16.msra.mxu0 0
      %3758 = vmatprep.subr.bf16.mxu0 0
      %3759 = vmatpush1.bf16.msra.mxu0 0
      %3760 = vmatprep.subr.bf16.mxu0 0
      %3761 = vmatpush1.bf16.msra.mxu0 0
      %3762 = vmatprep.subr.bf16.mxu0 0
      %3763 = vmatpush1.bf16.msra.mxu0 %v3533
      %3764 = vmatprep.subr.bf16.mxu0 0
      %3765 = vmatpush2.bf16.msra.mxu0 0
      %3766 = vmatprep.subr.bf16.mxu0 0
      %3767 = vmatpush2.bf16.msra.mxu0 0
      %3768 = vmatprep.subr.bf16.mxu0 0
      %3769 = vmatpush2.bf16.msra.mxu0 0
      %3770 = vmatprep.subr.bf16.mxu0 0
      %3771 = vmatpush2.bf16.msra.mxu0 0
      %3772 = vmatprep.subr.bf16.mxu0 0
      %3773 = vmatpush2.bf16.msra.mxu0 0
      %3774 = vmatprep.subr.bf16.mxu0 0
      %3775 = vmatpush2.bf16.msra.mxu0 0
      %3776 = vmatprep.subr.bf16.mxu0 0
      %3777 = vmatpush2.bf16.msra.mxu0 0
      %3778 = vmatprep.subr.bf16.mxu0 0
      %3779 = vmatpush2.bf16.msra.mxu0 0
      %3780 = vmatprep.mubr.bf16.mxu0 0
      %3781 = vmatmul.mubr.bf16.gmra.mxu0 %v3746
      %v3782 = vpop.f32.mrf.mxu0
      %v3783 = vadd.f32 0.0, %v3782
      %v3784 = vpop.f32.mrf.mxu0
      %v3785 = vpop.f32.mrf.mxu0
      %v3786 = vpop.f32.mrf.mxu0
      %3787 = vdwg.mxu0
      %s3788 = scalar_lea.vmem %s35, 32
      %v3789 = vld [vmem:[%s3788] sm:$0xf]
      %v3790 = vld [vmem:[%s3788 + $0x4] sm:$0xf]
      %v3791 = vld [vmem:[%s3788 + $0x8] sm:$0xf]
      %v3792 = vld [vmem:[%s3788 + $0xc] sm:$0xf]
      %v3793 = vpack.c.bf16 %v3783, %v3783
      %v3798 = vunpack.c.l.b16 %v3789
      %v3799 = vunpack.c.l.b16 %v3790
      %v3800 = vunpack.c.l.b16 %v3791
      %v3801 = vunpack.c.l.b16 %v3792
      %v3802 = vpack.c.b16 %v3799, %v3798
      %v3803 = vpack.c.b16 %v3801, %v3800
      %v3807 = vsel %vm1961, %v3793, 0
      %3809 = vmatprep.subr.bf16.mxu0 0
      %3810 = vmatpush1.bf16.msra.mxu0 0
      %3811 = vmatprep.subr.bf16.mxu0 0
      %3812 = vmatpush1.bf16.msra.mxu0 0
      %3813 = vmatprep.subr.bf16.mxu0 0
      %3814 = vmatpush1.bf16.msra.mxu0 0
      %3815 = vmatprep.subr.bf16.mxu0 0
      %3816 = vmatpush1.bf16.msra.mxu0 0
      %3817 = vmatprep.subr.bf16.mxu0 0
      %3818 = vmatpush1.bf16.msra.mxu0 0
      %3819 = vmatprep.subr.bf16.mxu0 0
      %3820 = vmatpush1.bf16.msra.mxu0 0
      %3821 = vmatprep.subr.bf16.mxu0 0
      %3822 = vmatpush1.bf16.msra.mxu0 %v3803
      %3823 = vmatprep.subr.bf16.mxu0 0
      %3824 = vmatpush1.bf16.msra.mxu0 %v3802
      %3825 = vmatprep.subr.bf16.mxu0 0
      %3826 = vmatpush2.bf16.msra.mxu0 0
      %3827 = vmatprep.subr.bf16.mxu0 0
      %3828 = vmatpush2.bf16.msra.mxu0 0
      %3829 = vmatprep.subr.bf16.mxu0 0
      %3830 = vmatpush2.bf16.msra.mxu0 0
      %3831 = vmatprep.subr.bf16.mxu0 0
      %3832 = vmatpush2.bf16.msra.mxu0 0
      %3833 = vmatprep.subr.bf16.mxu0 0
      %3834 = vmatpush2.bf16.msra.mxu0 0
      %3835 = vmatprep.subr.bf16.mxu0 0
      %3836 = vmatpush2.bf16.msra.mxu0 0
      %3837 = vmatprep.subr.bf16.mxu0 0
      %3838 = vmatpush2.bf16.msra.mxu0 0
      %3839 = vmatprep.subr.bf16.mxu0 0
      %3840 = vmatpush2.bf16.msra.mxu0 0
      %3841 = vmatprep.mubr.bf16.mxu0 0
      %3842 = vmatmul.mubr.bf16.gmra.mxu0 %v3807
      %v3843 = vpop.f32.mrf.mxu0
      %v3844 = vadd.f32 0.0, %v3843
      %v3845 = vpop.f32.mrf.mxu0
      %v3846 = vpop.f32.mrf.mxu0
      %v3847 = vpop.f32.mrf.mxu0
      %3848 = vdwg.mxu0
      %v3849 = vadd.f32 %v3738, %v3844
      %s3850 = scalar_lea.vmem %s33, 12
      %v3851 = vld [vmem:[%s3850] sm:$0x7]
      %v3853 = vsel %vm1274, %v3851, 0
      %3855 = vmatprep.subr.bf16.mxu0 0
      %3856 = vmatpush1.bf16.msra.mxu0 0
      %3857 = vmatprep.subr.bf16.mxu0 0
      %3858 = vmatpush1.bf16.msra.mxu0 0
      %3859 = vmatprep.subr.bf16.mxu0 0
      %3860 = vmatpush1.bf16.msra.mxu0 0
      %3861 = vmatprep.subr.bf16.mxu0 0
      %3862 = vmatpush1.bf16.msra.mxu0 0
      %3863 = vmatprep.subr.bf16.mxu0 0
      %3864 = vmatpush1.bf16.msra.mxu0 0
      %3865 = vmatprep.subr.bf16.mxu0 0
      %3866 = vmatpush1.bf16.msra.mxu0 0
      %3867 = vmatprep.subr.bf16.mxu0 0
      %3868 = vmatpush1.bf16.msra.mxu0 0
      %3869 = vmatprep.subr.bf16.mxu0 0
      %3870 = vmatpush1.bf16.msra.mxu0 %v3533
      %3871 = vmatprep.subr.bf16.mxu0 0
      %3872 = vmatpush2.bf16.msra.mxu0 0
      %3873 = vmatprep.subr.bf16.mxu0 0
      %3874 = vmatpush2.bf16.msra.mxu0 0
      %3875 = vmatprep.subr.bf16.mxu0 0
      %3876 = vmatpush2.bf16.msra.mxu0 0
      %3877 = vmatprep.subr.bf16.mxu0 0
      %3878 = vmatpush2.bf16.msra.mxu0 0
      %3879 = vmatprep.subr.bf16.mxu0 0
      %3880 = vmatpush2.bf16.msra.mxu0 0
      %3881 = vmatprep.subr.bf16.mxu0 0
      %3882 = vmatpush2.bf16.msra.mxu0 0
      %3883 = vmatprep.subr.bf16.mxu0 0
      %3884 = vmatpush2.bf16.msra.mxu0 0
      %3885 = vmatprep.subr.bf16.mxu0 0
      %3886 = vmatpush2.bf16.msra.mxu0 0
      %3887 = vmatprep.mubr.bf16.mxu0 0
      %3888 = vmatmul.mubr.bf16.gmra.mxu0 %v3853
      %v3889 = vpop.f32.mrf.mxu0
      %v3890 = vadd.f32 0.0, %v3889
      %v3891 = vpop.f32.mrf.mxu0
      %v3892 = vpop.f32.mrf.mxu0
      %v3893 = vpop.f32.mrf.mxu0
      %3894 = vdwg.mxu0
      %s3895 = scalar_lea.vmem %s35, 48
      %v3896 = vld [vmem:[%s3895] sm:$0xf]
      %v3897 = vld [vmem:[%s3895 + $0x4] sm:$0xf]
      %v3898 = vld [vmem:[%s3895 + $0x8] sm:$0xf]
      %v3899 = vld [vmem:[%s3895 + $0xc] sm:$0xf]
      %v3900 = vpack.c.bf16 %v3890, %v3890
      %v3905 = vunpack.c.l.b16 %v3896
      %v3906 = vunpack.c.l.b16 %v3897
      %v3907 = vunpack.c.l.b16 %v3898
      %v3908 = vunpack.c.l.b16 %v3899
      %v3909 = vpack.c.b16 %v3906, %v3905
      %v3910 = vpack.c.b16 %v3908, %v3907
      %v3914 = vsel %vm1961, %v3900, 0
      %3916 = vmatprep.subr.bf16.mxu0 0
      %3917 = vmatpush1.bf16.msra.mxu0 0
      %3918 = vmatprep.subr.bf16.mxu0 0
      %3919 = vmatpush1.bf16.msra.mxu0 0
      %3920 = vmatprep.subr.bf16.mxu0 0
      %3921 = vmatpush1.bf16.msra.mxu0 0
      %3922 = vmatprep.subr.bf16.mxu0 0
      %3923 = vmatpush1.bf16.msra.mxu0 0
      %3924 = vmatprep.subr.bf16.mxu0 0
      %3925 = vmatpush1.bf16.msra.mxu0 0
      %3926 = vmatprep.subr.bf16.mxu0 0
      %3927 = vmatpush1.bf16.msra.mxu0 0
      %3928 = vmatprep.subr.bf16.mxu0 0
      %3929 = vmatpush1.bf16.msra.mxu0 %v3910
      %3930 = vmatprep.subr.bf16.mxu0 0
      %3931 = vmatpush1.bf16.msra.mxu0 %v3909
      %3932 = vmatprep.subr.bf16.mxu0 0
      %3933 = vmatpush2.bf16.msra.mxu0 0
      %3934 = vmatprep.subr.bf16.mxu0 0
      %3935 = vmatpush2.bf16.msra.mxu0 0
      %3936 = vmatprep.subr.bf16.mxu0 0
      %3937 = vmatpush2.bf16.msra.mxu0 0
      %3938 = vmatprep.subr.bf16.mxu0 0
      %3939 = vmatpush2.bf16.msra.mxu0 0
      %3940 = vmatprep.subr.bf16.mxu0 0
      %3941 = vmatpush2.bf16.msra.mxu0 0
      %3942 = vmatprep.subr.bf16.mxu0 0
      %3943 = vmatpush2.bf16.msra.mxu0 0
      %3944 = vmatprep.subr.bf16.mxu0 0
      %3945 = vmatpush2.bf16.msra.mxu0 0
      %3946 = vmatprep.subr.bf16.mxu0 0
      %3947 = vmatpush2.bf16.msra.mxu0 0
      %3948 = vmatprep.mubr.bf16.mxu0 0
      %3949 = vmatmul.mubr.bf16.gmra.mxu0 %v3914
      %v3950 = vpop.f32.mrf.mxu0
      %v3951 = vadd.f32 0.0, %v3950
      %v3952 = vpop.f32.mrf.mxu0
      %v3953 = vpop.f32.mrf.mxu0
      %v3954 = vpop.f32.mrf.mxu0
      %3955 = vdwg.mxu0
      %v3956 = vadd.f32 %v3849, %v3951
      %v3957 = vld [vmem:[%s37] sm:$0x1]
      %v3959 = vlaneseq
      %v3960 = vshrl.u32 %v3959, 7
      %v3961 = vsub.s32 0, %v3960
      %v3962 = vrot.slane %v3957, %v3961
      %v3964 = vadd.f32 %v3956, %v3962
      %v3965 = vtanh.pop %v3964
      %v3966 = vld [vmem:[%s39] sm:$0x7]
      %v3967 = vpack.c.bf16 %v3965, %v3965
      %vm3968 = vcmask 39936
      %v3970 = vsel %vm3968, %v3966, 0
      %vm3972 = vcmask 1042432
      %v3973 = vsel %vm1502, 4294967295, 65535
      %v3974 = vsel %vm3972, %v3973, 0
      %v3976 = vand.u32 %v3967, %v3974
      %3978 = vmatprep.subr.bf16.mxu0 0
      %3979 = vmatpush1.bf16.msra.mxu0 0
      %3980 = vmatprep.subr.bf16.mxu0 0
      %3981 = vmatpush1.bf16.msra.mxu0 0
      %3982 = vmatprep.subr.bf16.mxu0 0
      %3983 = vmatpush1.bf16.msra.mxu0 0
      %3984 = vmatprep.subr.bf16.mxu0 0
      %3985 = vmatpush1.bf16.msra.mxu0 0
      %3986 = vmatprep.subr.bf16.mxu0 0
      %3987 = vmatpush1.bf16.msra.mxu0 0
      %3988 = vmatprep.subr.bf16.mxu0 0
      %3989 = vmatpush1.bf16.msra.mxu0 0
      %3990 = vmatprep.subr.bf16.mxu0 0
      %3991 = vmatpush1.bf16.msra.mxu0 0
      %3992 = vmatprep.subr.bf16.mxu0 0
      %3993 = vmatpush1.bf16.msra.mxu0 %v3976
      %3994 = vmatprep.subr.bf16.mxu0 0
      %3995 = vmatpush2.bf16.msra.mxu0 0
      %3996 = vmatprep.subr.bf16.mxu0 0
      %3997 = vmatpush2.bf16.msra.mxu0 0
      %3998 = vmatprep.subr.bf16.mxu0 0
      %3999 = vmatpush2.bf16.msra.mxu0 0
      %4000 = vmatprep.subr.bf16.mxu0 0
      %4001 = vmatpush2.bf16.msra.mxu0 0
      %4002 = vmatprep.subr.bf16.mxu0 0
      %4003 = vmatpush2.bf16.msra.mxu0 0
      %4004 = vmatprep.subr.bf16.mxu0 0
      %4005 = vmatpush2.bf16.msra.mxu0 0
      %4006 = vmatprep.subr.bf16.mxu0 0
      %4007 = vmatpush2.bf16.msra.mxu0 0
      %4008 = vmatprep.subr.bf16.mxu0 0
      %4009 = vmatpush2.bf16.msra.mxu0 0
      %4010 = vmatprep.mubr.bf16.mxu0 0
      %4011 = vmatmul.mubr.bf16.gmra.mxu0 %v3970
      %v4012 = vpop.f32.mrf.mxu0
      %v4013 = vadd.f32 0.0, %v4012
      %v4014 = vpop.f32.mrf.mxu0
      %v4015 = vpop.f32.mrf.mxu0
      %v4016 = vpop.f32.mrf.mxu0
      %4017 = vdwg.mxu0
      %v4018 = vld [vmem:[%s41] sm:$0xf]
      %v4019 = vld [vmem:[%s41 + $0x4] sm:$0xf]
      %v4020 = vld [vmem:[%s41 + $0x8] sm:$0xf]
      %v4021 = vld [vmem:[%s41 + $0xc] sm:$0xf]
      %v4022 = vpack.c.bf16 %v4013, %v4013
      %s4023 = scalar_lea.vmem %s39, 4
      %v4024 = vld [vmem:[%s4023] sm:$0x7]
      %v4026 = vsel %vm3968, %v4024, 0
      %4028 = vmatprep.subr.bf16.mxu0 0
      %4029 = vmatpush1.bf16.msra.mxu0 0
      %4030 = vmatprep.subr.bf16.mxu0 0
      %4031 = vmatpush1.bf16.msra.mxu0 0
      %4032 = vmatprep.subr.bf16.mxu0 0
      %4033 = vmatpush1.bf16.msra.mxu0 0
      %4034 = vmatprep.subr.bf16.mxu0 0
      %4035 = vmatpush1.bf16.msra.mxu0 0
      %4036 = vmatprep.subr.bf16.mxu0 0
      %4037 = vmatpush1.bf16.msra.mxu0 0
      %4038 = vmatprep.subr.bf16.mxu0 0
      %4039 = vmatpush1.bf16.msra.mxu0 0
      %4040 = vmatprep.subr.bf16.mxu0 0
      %4041 = vmatpush1.bf16.msra.mxu0 0
      %4042 = vmatprep.subr.bf16.mxu0 0
      %4043 = vmatpush1.bf16.msra.mxu0 %v3976
      %4044 = vmatprep.subr.bf16.mxu0 0
      %4045 = vmatpush2.bf16.msra.mxu0 0
      %4046 = vmatprep.subr.bf16.mxu0 0
      %4047 = vmatpush2.bf16.msra.mxu0 0
      %4048 = vmatprep.subr.bf16.mxu0 0
      %4049 = vmatpush2.bf16.msra.mxu0 0
      %4050 = vmatprep.subr.bf16.mxu0 0
      %4051 = vmatpush2.bf16.msra.mxu0 0
      %4052 = vmatprep.subr.bf16.mxu0 0
      %4053 = vmatpush2.bf16.msra.mxu0 0
      %4054 = vmatprep.subr.bf16.mxu0 0
      %4055 = vmatpush2.bf16.msra.mxu0 0
      %4056 = vmatprep.subr.bf16.mxu0 0
      %4057 = vmatpush2.bf16.msra.mxu0 0
      %4058 = vmatprep.subr.bf16.mxu0 0
      %4059 = vmatpush2.bf16.msra.mxu0 0
      %4060 = vmatprep.mubr.bf16.mxu0 0
      %4061 = vmatmul.mubr.bf16.gmra.mxu0 %v4026
      %v4062 = vpop.f32.mrf.mxu0
      %v4063 = vadd.f32 0.0, %v4062
      %v4064 = vpop.f32.mrf.mxu0
      %v4065 = vpop.f32.mrf.mxu0
      %v4066 = vpop.f32.mrf.mxu0
      %4067 = vdwg.mxu0
      %s4068 = scalar_lea.vmem %s41, 16
      %v4069 = vld [vmem:[%s4068] sm:$0xf]
      %v4070 = vld [vmem:[%s4068 + $0x4] sm:$0xf]
      %v4071 = vld [vmem:[%s4068 + $0x8] sm:$0xf]
      %v4072 = vld [vmem:[%s4068 + $0xc] sm:$0xf]
      %v4073 = vpack.c.bf16 %v4063, %v4063
      %v4078 = vunpack.c.l.b16 %v4069
      %v4079 = vunpack.c.l.b16 %v4070
      %v4080 = vunpack.c.l.b16 %v4071
      %v4081 = vunpack.c.l.b16 %v4072
      %v4082 = vpack.c.b16 %v4079, %v4078
      %v4083 = vpack.c.b16 %v4081, %v4080
      %v4087 = vsel %vm1961, %v4073, 0
      %4089 = vmatprep.subr.bf16.mxu0 0
      %4090 = vmatpush1.bf16.msra.mxu0 0
      %4091 = vmatprep.subr.bf16.mxu0 0
      %4092 = vmatpush1.bf16.msra.mxu0 0
      %4093 = vmatprep.subr.bf16.mxu0 0
      %4094 = vmatpush1.bf16.msra.mxu0 0
      %4095 = vmatprep.subr.bf16.mxu0 0
      %4096 = vmatpush1.bf16.msra.mxu0 0
      %4097 = vmatprep.subr.bf16.mxu0 0
      %4098 = vmatpush1.bf16.msra.mxu0 0
      %4099 = vmatprep.subr.bf16.mxu0 0
      %4100 = vmatpush1.bf16.msra.mxu0 0
      %4101 = vmatprep.subr.bf16.mxu0 0
      %4102 = vmatpush1.bf16.msra.mxu0 %v4083
      %4103 = vmatprep.subr.bf16.mxu0 0
      %4104 = vmatpush1.bf16.msra.mxu0 %v4082
      %4105 = vmatprep.subr.bf16.mxu0 0
      %4106 = vmatpush2.bf16.msra.mxu0 0
      %4107 = vmatprep.subr.bf16.mxu0 0
      %4108 = vmatpush2.bf16.msra.mxu0 0
      %4109 = vmatprep.subr.bf16.mxu0 0
      %4110 = vmatpush2.bf16.msra.mxu0 0
      %4111 = vmatprep.subr.bf16.mxu0 0
      %4112 = vmatpush2.bf16.msra.mxu0 0
      %4113 = vmatprep.subr.bf16.mxu0 0
      %4114 = vmatpush2.bf16.msra.mxu0 0
      %4115 = vmatprep.subr.bf16.mxu0 0
      %4116 = vmatpush2.bf16.msra.mxu0 0
      %4117 = vmatprep.subr.bf16.mxu0 0
      %4118 = vmatpush2.bf16.msra.mxu0 0
      %4119 = vmatprep.subr.bf16.mxu0 0
      %4120 = vmatpush2.bf16.msra.mxu0 0
      %4121 = vmatprep.mubr.bf16.mxu0 0
      %4122 = vmatmul.mubr.bf16.gmra.mxu0 %v4087
      %v4123 = vpop.f32.mrf.mxu0
      %v4124 = vadd.f32 0.0, %v4123
      %v4125 = vpop.f32.mrf.mxu0
      %v4126 = vpop.f32.mrf.mxu0
      %v4127 = vpop.f32.mrf.mxu0
      %4128 = vdwg.mxu0
      %v4133 = vunpack.c.l.b16 %v4018
      %v4134 = vunpack.c.l.b16 %v4019
      %v4135 = vunpack.c.l.b16 %v4020
      %v4136 = vunpack.c.l.b16 %v4021
      %v4137 = vpack.c.b16 %v4134, %v4133
      %v4138 = vpack.c.b16 %v4136, %v4135
      %v4142 = vsel %vm1961, %v4022, 0
      %4144 = vmatprep.subr.bf16.mxu0 0
      %4145 = vmatpush1.bf16.msra.mxu0 0
      %4146 = vmatprep.subr.bf16.mxu0 0
      %4147 = vmatpush1.bf16.msra.mxu0 0
      %4148 = vmatprep.subr.bf16.mxu0 0
      %4149 = vmatpush1.bf16.msra.mxu0 0
      %4150 = vmatprep.subr.bf16.mxu0 0
      %4151 = vmatpush1.bf16.msra.mxu0 0
      %4152 = vmatprep.subr.bf16.mxu0 0
      %4153 = vmatpush1.bf16.msra.mxu0 0
      %4154 = vmatprep.subr.bf16.mxu0 0
      %4155 = vmatpush1.bf16.msra.mxu0 0
      %4156 = vmatprep.subr.bf16.mxu0 0
      %4157 = vmatpush1.bf16.msra.mxu0 %v4138
      %4158 = vmatprep.subr.bf16.mxu0 0
      %4159 = vmatpush1.bf16.msra.mxu0 %v4137
      %4160 = vmatprep.subr.bf16.mxu0 0
      %4161 = vmatpush2.bf16.msra.mxu0 0
      %4162 = vmatprep.subr.bf16.mxu0 0
      %4163 = vmatpush2.bf16.msra.mxu0 0
      %4164 = vmatprep.subr.bf16.mxu0 0
      %4165 = vmatpush2.bf16.msra.mxu0 0
      %4166 = vmatprep.subr.bf16.mxu0 0
      %4167 = vmatpush2.bf16.msra.mxu0 0
      %4168 = vmatprep.subr.bf16.mxu0 0
      %4169 = vmatpush2.bf16.msra.mxu0 0
      %4170 = vmatprep.subr.bf16.mxu0 0
      %4171 = vmatpush2.bf16.msra.mxu0 0
      %4172 = vmatprep.subr.bf16.mxu0 0
      %4173 = vmatpush2.bf16.msra.mxu0 0
      %4174 = vmatprep.subr.bf16.mxu0 0
      %4175 = vmatpush2.bf16.msra.mxu0 0
      %4176 = vmatprep.mubr.bf16.mxu0 0
      %4177 = vmatmul.mubr.bf16.gmra.mxu0 %v4142
      %v4178 = vpop.f32.mrf.mxu0
      %v4179 = vadd.f32 %v4124, %v4178
      %v4180 = vpop.f32.mrf.mxu0
      %v4181 = vpop.f32.mrf.mxu0
      %v4182 = vpop.f32.mrf.mxu0
      %4183 = vdwg.mxu0
      %s4184 = scalar_lea.vmem %s39, 8
      %v4185 = vld [vmem:[%s4184] sm:$0x7]
      %v4187 = vsel %vm3968, %v4185, 0
      %4189 = vmatprep.subr.bf16.mxu0 0
      %4190 = vmatpush1.bf16.msra.mxu0 0
      %4191 = vmatprep.subr.bf16.mxu0 0
      %4192 = vmatpush1.bf16.msra.mxu0 0
      %4193 = vmatprep.subr.bf16.mxu0 0
      %4194 = vmatpush1.bf16.msra.mxu0 0
      %4195 = vmatprep.subr.bf16.mxu0 0
      %4196 = vmatpush1.bf16.msra.mxu0 0
      %4197 = vmatprep.subr.bf16.mxu0 0
      %4198 = vmatpush1.bf16.msra.mxu0 0
      %4199 = vmatprep.subr.bf16.mxu0 0
      %4200 = vmatpush1.bf16.msra.mxu0 0
      %4201 = vmatprep.subr.bf16.mxu0 0
      %4202 = vmatpush1.bf16.msra.mxu0 0
      %4203 = vmatprep.subr.bf16.mxu0 0
      %4204 = vmatpush1.bf16.msra.mxu0 %v3976
      %4205 = vmatprep.subr.bf16.mxu0 0
      %4206 = vmatpush2.bf16.msra.mxu0 0
      %4207 = vmatprep.subr.bf16.mxu0 0
      %4208 = vmatpush2.bf16.msra.mxu0 0
      %4209 = vmatprep.subr.bf16.mxu0 0
      %4210 = vmatpush2.bf16.msra.mxu0 0
      %4211 = vmatprep.subr.bf16.mxu0 0
      %4212 = vmatpush2.bf16.msra.mxu0 0
      %4213 = vmatprep.subr.bf16.mxu0 0
      %4214 = vmatpush2.bf16.msra.mxu0 0
      %4215 = vmatprep.subr.bf16.mxu0 0
      %4216 = vmatpush2.bf16.msra.mxu0 0
      %4217 = vmatprep.subr.bf16.mxu0 0
      %4218 = vmatpush2.bf16.msra.mxu0 0
      %4219 = vmatprep.subr.bf16.mxu0 0
      %4220 = vmatpush2.bf16.msra.mxu0 0
      %4221 = vmatprep.mubr.bf16.mxu0 0
      %4222 = vmatmul.mubr.bf16.gmra.mxu0 %v4187
      %v4223 = vpop.f32.mrf.mxu0
      %v4224 = vadd.f32 0.0, %v4223
      %v4225 = vpop.f32.mrf.mxu0
      %v4226 = vpop.f32.mrf.mxu0
      %v4227 = vpop.f32.mrf.mxu0
      %4228 = vdwg.mxu0
      %s4229 = scalar_lea.vmem %s41, 32
      %v4230 = vld [vmem:[%s4229] sm:$0xf]
      %v4231 = vld [vmem:[%s4229 + $0x4] sm:$0xf]
      %v4232 = vld [vmem:[%s4229 + $0x8] sm:$0xf]
      %v4233 = vld [vmem:[%s4229 + $0xc] sm:$0xf]
      %v4234 = vpack.c.bf16 %v4224, %v4224
      %v4239 = vunpack.c.l.b16 %v4230
      %v4240 = vunpack.c.l.b16 %v4231
      %v4241 = vunpack.c.l.b16 %v4232
      %v4242 = vunpack.c.l.b16 %v4233
      %v4243 = vpack.c.b16 %v4240, %v4239
      %v4244 = vpack.c.b16 %v4242, %v4241
      %v4248 = vsel %vm1961, %v4234, 0
      %4250 = vmatprep.subr.bf16.mxu0 0
      %4251 = vmatpush1.bf16.msra.mxu0 0
      %4252 = vmatprep.subr.bf16.mxu0 0
      %4253 = vmatpush1.bf16.msra.mxu0 0
      %4254 = vmatprep.subr.bf16.mxu0 0
      %4255 = vmatpush1.bf16.msra.mxu0 0
      %4256 = vmatprep.subr.bf16.mxu0 0
      %4257 = vmatpush1.bf16.msra.mxu0 0
      %4258 = vmatprep.subr.bf16.mxu0 0
      %4259 = vmatpush1.bf16.msra.mxu0 0
      %4260 = vmatprep.subr.bf16.mxu0 0
      %4261 = vmatpush1.bf16.msra.mxu0 0
      %4262 = vmatprep.subr.bf16.mxu0 0
      %4263 = vmatpush1.bf16.msra.mxu0 %v4244
      %4264 = vmatprep.subr.bf16.mxu0 0
      %4265 = vmatpush1.bf16.msra.mxu0 %v4243
      %4266 = vmatprep.subr.bf16.mxu0 0
      %4267 = vmatpush2.bf16.msra.mxu0 0
      %4268 = vmatprep.subr.bf16.mxu0 0
      %4269 = vmatpush2.bf16.msra.mxu0 0
      %4270 = vmatprep.subr.bf16.mxu0 0
      %4271 = vmatpush2.bf16.msra.mxu0 0
      %4272 = vmatprep.subr.bf16.mxu0 0
      %4273 = vmatpush2.bf16.msra.mxu0 0
      %4274 = vmatprep.subr.bf16.mxu0 0
      %4275 = vmatpush2.bf16.msra.mxu0 0
      %4276 = vmatprep.subr.bf16.mxu0 0
      %4277 = vmatpush2.bf16.msra.mxu0 0
      %4278 = vmatprep.subr.bf16.mxu0 0
      %4279 = vmatpush2.bf16.msra.mxu0 0
      %4280 = vmatprep.subr.bf16.mxu0 0
      %4281 = vmatpush2.bf16.msra.mxu0 0
      %4282 = vmatprep.mubr.bf16.mxu0 0
      %4283 = vmatmul.mubr.bf16.gmra.mxu0 %v4248
      %v4284 = vpop.f32.mrf.mxu0
      %v4285 = vadd.f32 0.0, %v4284
      %v4286 = vpop.f32.mrf.mxu0
      %v4287 = vpop.f32.mrf.mxu0
      %v4288 = vpop.f32.mrf.mxu0
      %4289 = vdwg.mxu0
      %v4290 = vadd.f32 %v4179, %v4285
      %s4291 = scalar_lea.vmem %s39, 12
      %v4292 = vld [vmem:[%s4291] sm:$0x7]
      %v4294 = vsel %vm3968, %v4292, 0
      %4296 = vmatprep.subr.bf16.mxu0 0
      %4297 = vmatpush1.bf16.msra.mxu0 0
      %4298 = vmatprep.subr.bf16.mxu0 0
      %4299 = vmatpush1.bf16.msra.mxu0 0
      %4300 = vmatprep.subr.bf16.mxu0 0
      %4301 = vmatpush1.bf16.msra.mxu0 0
      %4302 = vmatprep.subr.bf16.mxu0 0
      %4303 = vmatpush1.bf16.msra.mxu0 0
      %4304 = vmatprep.subr.bf16.mxu0 0
      %4305 = vmatpush1.bf16.msra.mxu0 0
      %4306 = vmatprep.subr.bf16.mxu0 0
      %4307 = vmatpush1.bf16.msra.mxu0 0
      %4308 = vmatprep.subr.bf16.mxu0 0
      %4309 = vmatpush1.bf16.msra.mxu0 0
      %4310 = vmatprep.subr.bf16.mxu0 0
      %4311 = vmatpush1.bf16.msra.mxu0 %v3976
      %4312 = vmatprep.subr.bf16.mxu0 0
      %4313 = vmatpush2.bf16.msra.mxu0 0
      %4314 = vmatprep.subr.bf16.mxu0 0
      %4315 = vmatpush2.bf16.msra.mxu0 0
      %4316 = vmatprep.subr.bf16.mxu0 0
      %4317 = vmatpush2.bf16.msra.mxu0 0
      %4318 = vmatprep.subr.bf16.mxu0 0
      %4319 = vmatpush2.bf16.msra.mxu0 0
      %4320 = vmatprep.subr.bf16.mxu0 0
      %4321 = vmatpush2.bf16.msra.mxu0 0
      %4322 = vmatprep.subr.bf16.mxu0 0
      %4323 = vmatpush2.bf16.msra.mxu0 0
      %4324 = vmatprep.subr.bf16.mxu0 0
      %4325 = vmatpush2.bf16.msra.mxu0 0
      %4326 = vmatprep.subr.bf16.mxu0 0
      %4327 = vmatpush2.bf16.msra.mxu0 0
      %4328 = vmatprep.mubr.bf16.mxu0 0
      %4329 = vmatmul.mubr.bf16.gmra.mxu0 %v4294
      %v4330 = vpop.f32.mrf.mxu0
      %v4331 = vadd.f32 0.0, %v4330
      %v4332 = vpop.f32.mrf.mxu0
      %v4333 = vpop.f32.mrf.mxu0
      %v4334 = vpop.f32.mrf.mxu0
      %4335 = vdwg.mxu0
      %s4336 = scalar_lea.vmem %s41, 48
      %v4337 = vld [vmem:[%s4336] sm:$0xf]
      %v4338 = vld [vmem:[%s4336 + $0x4] sm:$0xf]
      %v4339 = vld [vmem:[%s4336 + $0x8] sm:$0xf]
      %v4340 = vld [vmem:[%s4336 + $0xc] sm:$0xf]
      %v4341 = vpack.c.bf16 %v4331, %v4331
      %v4346 = vunpack.c.l.b16 %v4337
      %v4347 = vunpack.c.l.b16 %v4338
      %v4348 = vunpack.c.l.b16 %v4339
      %v4349 = vunpack.c.l.b16 %v4340
      %v4350 = vpack.c.b16 %v4347, %v4346
      %v4351 = vpack.c.b16 %v4349, %v4348
      %v4355 = vsel %vm1961, %v4341, 0
      %4357 = vmatprep.subr.bf16.mxu0 0
      %4358 = vmatpush1.bf16.msra.mxu0 0
      %4359 = vmatprep.subr.bf16.mxu0 0
      %4360 = vmatpush1.bf16.msra.mxu0 0
      %4361 = vmatprep.subr.bf16.mxu0 0
      %4362 = vmatpush1.bf16.msra.mxu0 0
      %4363 = vmatprep.subr.bf16.mxu0 0
      %4364 = vmatpush1.bf16.msra.mxu0 0
      %4365 = vmatprep.subr.bf16.mxu0 0
      %4366 = vmatpush1.bf16.msra.mxu0 0
      %4367 = vmatprep.subr.bf16.mxu0 0
      %4368 = vmatpush1.bf16.msra.mxu0 0
      %4369 = vmatprep.subr.bf16.mxu0 0
      %4370 = vmatpush1.bf16.msra.mxu0 %v4351
      %4371 = vmatprep.subr.bf16.mxu0 0
      %4372 = vmatpush1.bf16.msra.mxu0 %v4350
      %4373 = vmatprep.subr.bf16.mxu0 0
      %4374 = vmatpush2.bf16.msra.mxu0 0
      %4375 = vmatprep.subr.bf16.mxu0 0
      %4376 = vmatpush2.bf16.msra.mxu0 0
      %4377 = vmatprep.subr.bf16.mxu0 0
      %4378 = vmatpush2.bf16.msra.mxu0 0
      %4379 = vmatprep.subr.bf16.mxu0 0
      %4380 = vmatpush2.bf16.msra.mxu0 0
      %4381 = vmatprep.subr.bf16.mxu0 0
      %4382 = vmatpush2.bf16.msra.mxu0 0
      %4383 = vmatprep.subr.bf16.mxu0 0
      %4384 = vmatpush2.bf16.msra.mxu0 0
      %4385 = vmatprep.subr.bf16.mxu0 0
      %4386 = vmatpush2.bf16.msra.mxu0 0
      %4387 = vmatprep.subr.bf16.mxu0 0
      %4388 = vmatpush2.bf16.msra.mxu0 0
      %4389 = vmatprep.mubr.bf16.mxu0 0
      %4390 = vmatmul.mubr.bf16.gmra.mxu0 %v4355
      %v4391 = vpop.f32.mrf.mxu0
      %v4392 = vadd.f32 0.0, %v4391
      %v4393 = vpop.f32.mrf.mxu0
      %v4394 = vpop.f32.mrf.mxu0
      %v4395 = vpop.f32.mrf.mxu0
      %4396 = vdwg.mxu0
      %v4397 = vadd.f32 %v4290, %v4392
      %s4398 = scalar_lea.vmem %s39, 16
      %v4399 = vld [vmem:[%s4398] sm:$0x7]
      %v4401 = vsel %vm3968, %v4399, 0
      %4403 = vmatprep.subr.bf16.mxu0 0
      %4404 = vmatpush1.bf16.msra.mxu0 0
      %4405 = vmatprep.subr.bf16.mxu0 0
      %4406 = vmatpush1.bf16.msra.mxu0 0
      %4407 = vmatprep.subr.bf16.mxu0 0
      %4408 = vmatpush1.bf16.msra.mxu0 0
      %4409 = vmatprep.subr.bf16.mxu0 0
      %4410 = vmatpush1.bf16.msra.mxu0 0
      %4411 = vmatprep.subr.bf16.mxu0 0
      %4412 = vmatpush1.bf16.msra.mxu0 0
      %4413 = vmatprep.subr.bf16.mxu0 0
      %4414 = vmatpush1.bf16.msra.mxu0 0
      %4415 = vmatprep.subr.bf16.mxu0 0
      %4416 = vmatpush1.bf16.msra.mxu0 0
      %4417 = vmatprep.subr.bf16.mxu0 0
      %4418 = vmatpush1.bf16.msra.mxu0 %v3976
      %4419 = vmatprep.subr.bf16.mxu0 0
      %4420 = vmatpush2.bf16.msra.mxu0 0
      %4421 = vmatprep.subr.bf16.mxu0 0
      %4422 = vmatpush2.bf16.msra.mxu0 0
      %4423 = vmatprep.subr.bf16.mxu0 0
      %4424 = vmatpush2.bf16.msra.mxu0 0
      %4425 = vmatprep.subr.bf16.mxu0 0
      %4426 = vmatpush2.bf16.msra.mxu0 0
      %4427 = vmatprep.subr.bf16.mxu0 0
      %4428 = vmatpush2.bf16.msra.mxu0 0
      %4429 = vmatprep.subr.bf16.mxu0 0
      %4430 = vmatpush2.bf16.msra.mxu0 0
      %4431 = vmatprep.subr.bf16.mxu0 0
      %4432 = vmatpush2.bf16.msra.mxu0 0
      %4433 = vmatprep.subr.bf16.mxu0 0
      %4434 = vmatpush2.bf16.msra.mxu0 0
      %4435 = vmatprep.mubr.bf16.mxu0 0
      %4436 = vmatmul.mubr.bf16.gmra.mxu0 %v4401
      %v4437 = vpop.f32.mrf.mxu0
      %v4438 = vadd.f32 0.0, %v4437
      %v4439 = vpop.f32.mrf.mxu0
      %v4440 = vpop.f32.mrf.mxu0
      %v4441 = vpop.f32.mrf.mxu0
      %4442 = vdwg.mxu0
      %s4443 = scalar_lea.vmem %s41, 64
      %v4444 = vld [vmem:[%s4443] sm:$0xf]
      %v4445 = vld [vmem:[%s4443 + $0x4] sm:$0xf]
      %v4446 = vld [vmem:[%s4443 + $0x8] sm:$0xf]
      %v4447 = vld [vmem:[%s4443 + $0xc] sm:$0xf]
      %v4448 = vpack.c.bf16 %v4438, %v4438
      %v4453 = vunpack.c.l.b16 %v4444
      %v4454 = vunpack.c.l.b16 %v4445
      %v4455 = vunpack.c.l.b16 %v4446
      %v4456 = vunpack.c.l.b16 %v4447
      %v4457 = vpack.c.b16 %v4454, %v4453
      %v4458 = vpack.c.b16 %v4456, %v4455
      %v4462 = vsel %vm1961, %v4448, 0
      %4464 = vmatprep.subr.bf16.mxu0 0
      %4465 = vmatpush1.bf16.msra.mxu0 0
      %4466 = vmatprep.subr.bf16.mxu0 0
      %4467 = vmatpush1.bf16.msra.mxu0 0
      %4468 = vmatprep.subr.bf16.mxu0 0
      %4469 = vmatpush1.bf16.msra.mxu0 0
      %4470 = vmatprep.subr.bf16.mxu0 0
      %4471 = vmatpush1.bf16.msra.mxu0 0
      %4472 = vmatprep.subr.bf16.mxu0 0
      %4473 = vmatpush1.bf16.msra.mxu0 0
      %4474 = vmatprep.subr.bf16.mxu0 0
      %4475 = vmatpush1.bf16.msra.mxu0 0
      %4476 = vmatprep.subr.bf16.mxu0 0
      %4477 = vmatpush1.bf16.msra.mxu0 %v4458
      %4478 = vmatprep.subr.bf16.mxu0 0
      %4479 = vmatpush1.bf16.msra.mxu0 %v4457
      %4480 = vmatprep.subr.bf16.mxu0 0
      %4481 = vmatpush2.bf16.msra.mxu0 0
      %4482 = vmatprep.subr.bf16.mxu0 0
      %4483 = vmatpush2.bf16.msra.mxu0 0
      %4484 = vmatprep.subr.bf16.mxu0 0
      %4485 = vmatpush2.bf16.msra.mxu0 0
      %4486 = vmatprep.subr.bf16.mxu0 0
      %4487 = vmatpush2.bf16.msra.mxu0 0
      %4488 = vmatprep.subr.bf16.mxu0 0
      %4489 = vmatpush2.bf16.msra.mxu0 0
      %4490 = vmatprep.subr.bf16.mxu0 0
      %4491 = vmatpush2.bf16.msra.mxu0 0
      %4492 = vmatprep.subr.bf16.mxu0 0
      %4493 = vmatpush2.bf16.msra.mxu0 0
      %4494 = vmatprep.subr.bf16.mxu0 0
      %4495 = vmatpush2.bf16.msra.mxu0 0
      %4496 = vmatprep.mubr.bf16.mxu0 0
      %4497 = vmatmul.mubr.bf16.gmra.mxu0 %v4462
      %v4498 = vpop.f32.mrf.mxu0
      %v4499 = vadd.f32 0.0, %v4498
      %v4500 = vpop.f32.mrf.mxu0
      %v4501 = vpop.f32.mrf.mxu0
      %v4502 = vpop.f32.mrf.mxu0
      %4503 = vdwg.mxu0
      %v4504 = vadd.f32 %v4397, %v4499
      %v4505 = vld [vmem:[%s43] sm:$0x1]
      %v4507 = vlaneseq
      %v4508 = vshrl.u32 %v4507, 7
      %v4509 = vsub.s32 0, %v4508
      %v4510 = vrot.slane %v4505, %v4509
      %v4512 = vadd.f32 %v4504, %v4510
      %v4513 = vtanh.pop %v4512
      %v4514 = vadd.f32 %v4513, %v3965
      %vm4515 = vcmask 258048
      %v4516 = vsel %vm4515, %v4514, 0.0
      %4517 = vadd.xlane.f32.xlu0 %v4516
      %v4518 = vpop.xlane.xlu0 %4517
      %v4519 = vmul.f32 %v4518, %v3140
      %v4520 = vsub.f32 %v4514, %v4519
      %v4521 = vmul.f32 %v4520, %v4520
      %v4522 = vsel %vm4515, %v4521, 0.0
      %4523 = vadd.xlane.f32.xlu0 %v4522
      %v4524 = vpop.xlane.xlu0 %4523
      %v4525 = vmul.f32 %v4524, %v3140
      %v4526 = vadd.f32 %v4525, 1e-05
      %v4527 = vrsqrt.pop %v4526
      %v4528 = vmul.f32 %v4520, %v4527
      %v4529 = vmul.f32 %v4528, %v3165
      %v4530 = vadd.f32 %v4529, %v3173
      %v4531 = vld [vmem:[%s45] sm:$0xf]
      %v4532 = vld [vmem:[%s45 + $0x4] sm:$0xf]
      %v4533 = vld [vmem:[%s47] sm:$0xf]
      %v4534 = vld [vmem:[%s47 + $0x4] sm:$0xf]
      %v4535 = vld [vmem:[%s47 + $0x8] sm:$0xf]
      %v4536 = vld [vmem:[%s47 + $0xc] sm:$0xf]
      %v4537 = vpack.c.bf16 %v4530, %v4530
      %v4542 = vunpack.c.l.b16 %v4533
      %v4543 = vunpack.c.l.b16 %v4534
      %v4544 = vunpack.c.l.b16 %v4535
      %v4545 = vunpack.c.l.b16 %v4536
      %v4546 = vpack.c.b16 %v4543, %v4542
      %v4547 = vpack.c.b16 %v4545, %v4544
      %v4551 = vsel %vm1961, %v4537, 0
      %4553 = vmatprep.subr.bf16.mxu0 0
      %4554 = vmatpush1.bf16.msra.mxu0 0
      %4555 = vmatprep.subr.bf16.mxu0 0
      %4556 = vmatpush1.bf16.msra.mxu0 0
      %4557 = vmatprep.subr.bf16.mxu0 0
      %4558 = vmatpush1.bf16.msra.mxu0 0
      %4559 = vmatprep.subr.bf16.mxu0 0
      %4560 = vmatpush1.bf16.msra.mxu0 0
      %4561 = vmatprep.subr.bf16.mxu0 0
      %4562 = vmatpush1.bf16.msra.mxu0 0
      %4563 = vmatprep.subr.bf16.mxu0 0
      %4564 = vmatpush1.bf16.msra.mxu0 0
      %4565 = vmatprep.subr.bf16.mxu0 0
      %4566 = vmatpush1.bf16.msra.mxu0 %v4547
      %4567 = vmatprep.subr.bf16.mxu0 0
      %4568 = vmatpush1.bf16.msra.mxu0 %v4546
      %4569 = vmatprep.subr.bf16.mxu0 0
      %4570 = vmatpush2.bf16.msra.mxu0 0
      %4571 = vmatprep.subr.bf16.mxu0 0
      %4572 = vmatpush2.bf16.msra.mxu0 0
      %4573 = vmatprep.subr.bf16.mxu0 0
      %4574 = vmatpush2.bf16.msra.mxu0 0
      %4575 = vmatprep.subr.bf16.mxu0 0
      %4576 = vmatpush2.bf16.msra.mxu0 0
      %4577 = vmatprep.subr.bf16.mxu0 0
      %4578 = vmatpush2.bf16.msra.mxu0 0
      %4579 = vmatprep.subr.bf16.mxu0 0
      %4580 = vmatpush2.bf16.msra.mxu0 0
      %4581 = vmatprep.subr.bf16.mxu0 0
      %4582 = vmatpush2.bf16.msra.mxu0 0
      %4583 = vmatprep.subr.bf16.mxu0 0
      %4584 = vmatpush2.bf16.msra.mxu0 0
      %4585 = vmatprep.mubr.bf16.mxu0 0
      %4586 = vmatmul.mubr.bf16.gmra.mxu0 %v4551
      %v4587 = vpop.f32.mrf.mxu0
      %v4588 = vadd.f32 0.0, %v4587
      %v4589 = vpop.f32.mrf.mxu0
      %v4590 = vpop.f32.mrf.mxu0
      %v4591 = vpop.f32.mrf.mxu0
      %4592 = vdwg.mxu0
      %v4593 = vpack.c.bf16 %v4588, %v4588
      %s4594 = scalar_lea.vmem %s45, 8
      %v4595 = vld [vmem:[%s4594] sm:$0xf]
      %v4596 = vld [vmem:[%s4594 + $0x4] sm:$0xf]
      %s4597 = scalar_lea.vmem %s47, 16
      %v4598 = vld [vmem:[%s4597] sm:$0xf]
      %v4599 = vld [vmem:[%s4597 + $0x4] sm:$0xf]
      %v4600 = vld [vmem:[%s4597 + $0x8] sm:$0xf]
      %v4601 = vld [vmem:[%s4597 + $0xc] sm:$0xf]
      %v4606 = vunpack.c.l.b16 %v4598
      %v4607 = vunpack.c.l.b16 %v4599
      %v4608 = vunpack.c.l.b16 %v4600
      %v4609 = vunpack.c.l.b16 %v4601
      %v4610 = vpack.c.b16 %v4607, %v4606
      %v4611 = vpack.c.b16 %v4609, %v4608
      %4614 = vmatprep.subr.bf16.mxu0 0
      %4615 = vmatpush1.bf16.msra.mxu0 0
      %4616 = vmatprep.subr.bf16.mxu0 0
      %4617 = vmatpush1.bf16.msra.mxu0 0
      %4618 = vmatprep.subr.bf16.mxu0 0
      %4619 = vmatpush1.bf16.msra.mxu0 0
      %4620 = vmatprep.subr.bf16.mxu0 0
      %4621 = vmatpush1.bf16.msra.mxu0 0
      %4622 = vmatprep.subr.bf16.mxu0 0
      %4623 = vmatpush1.bf16.msra.mxu0 0
      %4624 = vmatprep.subr.bf16.mxu0 0
      %4625 = vmatpush1.bf16.msra.mxu0 0
      %4626 = vmatprep.subr.bf16.mxu0 0
      %4627 = vmatpush1.bf16.msra.mxu0 %v4611
      %4628 = vmatprep.subr.bf16.mxu0 0
      %4629 = vmatpush1.bf16.msra.mxu0 %v4610
      %4630 = vmatprep.subr.bf16.mxu0 0
      %4631 = vmatpush2.bf16.msra.mxu0 0
      %4632 = vmatprep.subr.bf16.mxu0 0
      %4633 = vmatpush2.bf16.msra.mxu0 0
      %4634 = vmatprep.subr.bf16.mxu0 0
      %4635 = vmatpush2.bf16.msra.mxu0 0
      %4636 = vmatprep.subr.bf16.mxu0 0
      %4637 = vmatpush2.bf16.msra.mxu0 0
      %4638 = vmatprep.subr.bf16.mxu0 0
      %4639 = vmatpush2.bf16.msra.mxu0 0
      %4640 = vmatprep.subr.bf16.mxu0 0
      %4641 = vmatpush2.bf16.msra.mxu0 0
      %4642 = vmatprep.subr.bf16.mxu0 0
      %4643 = vmatpush2.bf16.msra.mxu0 0
      %4644 = vmatprep.subr.bf16.mxu0 0
      %4645 = vmatpush2.bf16.msra.mxu0 0
      %4646 = vmatprep.mubr.bf16.mxu0 0
      %4647 = vmatmul.mubr.bf16.gmra.mxu0 %v4551
      %v4648 = vpop.f32.mrf.mxu0
      %v4649 = vadd.f32 0.0, %v4648
      %v4650 = vpop.f32.mrf.mxu0
      %v4651 = vpop.f32.mrf.mxu0
      %v4652 = vpop.f32.mrf.mxu0
      %4653 = vdwg.mxu0
      %v4654 = vpack.c.bf16 %v4649, %v4649
      %v4657 = vunpack.c.l.b16 %v4595
      %v4658 = vunpack.c.l.b16 %v4596
      %v4659 = vpack.c.b16 %v4658, %v4657
      %v4661 = vsel %vm3968, %v4659, 0
      %v4664 = vand.u32 %v4654, %v3974
      %4666 = vmatprep.subr.bf16.mxu0 0
      %4667 = vmatpush1.bf16.msra.mxu0 0
      %4668 = vmatprep.subr.bf16.mxu0 0
      %4669 = vmatpush1.bf16.msra.mxu0 0
      %4670 = vmatprep.subr.bf16.mxu0 0
      %4671 = vmatpush1.bf16.msra.mxu0 0
      %4672 = vmatprep.subr.bf16.mxu0 0
      %4673 = vmatpush1.bf16.msra.mxu0 0
      %4674 = vmatprep.subr.bf16.mxu0 0
      %4675 = vmatpush1.bf16.msra.mxu0 0
      %4676 = vmatprep.subr.bf16.mxu0 0
      %4677 = vmatpush1.bf16.msra.mxu0 0
      %4678 = vmatprep.subr.bf16.mxu0 0
      %4679 = vmatpush1.bf16.msra.mxu0 0
      %4680 = vmatprep.subr.bf16.mxu0 0
      %4681 = vmatpush1.bf16.msra.mxu0 %v4664
      %4682 = vmatprep.subr.bf16.mxu0 0
      %4683 = vmatpush2.bf16.msra.mxu0 0
      %4684 = vmatprep.subr.bf16.mxu0 0
      %4685 = vmatpush2.bf16.msra.mxu0 0
      %4686 = vmatprep.subr.bf16.mxu0 0
      %4687 = vmatpush2.bf16.msra.mxu0 0
      %4688 = vmatprep.subr.bf16.mxu0 0
      %4689 = vmatpush2.bf16.msra.mxu0 0
      %4690 = vmatprep.subr.bf16.mxu0 0
      %4691 = vmatpush2.bf16.msra.mxu0 0
      %4692 = vmatprep.subr.bf16.mxu0 0
      %4693 = vmatpush2.bf16.msra.mxu0 0
      %4694 = vmatprep.subr.bf16.mxu0 0
      %4695 = vmatpush2.bf16.msra.mxu0 0
      %4696 = vmatprep.subr.bf16.mxu0 0
      %4697 = vmatpush2.bf16.msra.mxu0 0
      %4698 = vmatprep.mubr.bf16.mxu0 0
      %4699 = vmatmul.mubr.bf16.gmra.mxu0 %v4661
      %v4700 = vpop.f32.mrf.mxu0
      %v4701 = vadd.f32 0.0, %v4700
      %v4702 = vpop.f32.mrf.mxu0
      %v4703 = vpop.f32.mrf.mxu0
      %v4704 = vadd.f32 0.0, %v4703
      %v4705 = vpop.f32.mrf.mxu0
      %4706 = vdwg.mxu0
      %v4709 = vunpack.c.l.b16 %v4531
      %v4710 = vunpack.c.l.b16 %v4532
      %v4711 = vpack.c.b16 %v4710, %v4709
      %v4713 = vsel %vm3968, %v4711, 0
      %v4716 = vand.u32 %v4593, %v3974
      %4718 = vmatprep.subr.bf16.mxu0 0
      %4719 = vmatpush1.bf16.msra.mxu0 0
      %4720 = vmatprep.subr.bf16.mxu0 0
      %4721 = vmatpush1.bf16.msra.mxu0 0
      %4722 = vmatprep.subr.bf16.mxu0 0
      %4723 = vmatpush1.bf16.msra.mxu0 0
      %4724 = vmatprep.subr.bf16.mxu0 0
      %4725 = vmatpush1.bf16.msra.mxu0 0
      %4726 = vmatprep.subr.bf16.mxu0 0
      %4727 = vmatpush1.bf16.msra.mxu0 0
      %4728 = vmatprep.subr.bf16.mxu0 0
      %4729 = vmatpush1.bf16.msra.mxu0 0
      %4730 = vmatprep.subr.bf16.mxu0 0
      %4731 = vmatpush1.bf16.msra.mxu0 0
      %4732 = vmatprep.subr.bf16.mxu0 0
      %4733 = vmatpush1.bf16.msra.mxu0 %v4716
      %4734 = vmatprep.subr.bf16.mxu0 0
      %4735 = vmatpush2.bf16.msra.mxu0 0
      %4736 = vmatprep.subr.bf16.mxu0 0
      %4737 = vmatpush2.bf16.msra.mxu0 0
      %4738 = vmatprep.subr.bf16.mxu0 0
      %4739 = vmatpush2.bf16.msra.mxu0 0
      %4740 = vmatprep.subr.bf16.mxu0 0
      %4741 = vmatpush2.bf16.msra.mxu0 0
      %4742 = vmatprep.subr.bf16.mxu0 0
      %4743 = vmatpush2.bf16.msra.mxu0 0
      %4744 = vmatprep.subr.bf16.mxu0 0
      %4745 = vmatpush2.bf16.msra.mxu0 0
      %4746 = vmatprep.subr.bf16.mxu0 0
      %4747 = vmatpush2.bf16.msra.mxu0 0
      %4748 = vmatprep.subr.bf16.mxu0 0
      %4749 = vmatpush2.bf16.msra.mxu0 0
      %4750 = vmatprep.mubr.bf16.mxu0 0
      %4751 = vmatmul.mubr.bf16.gmra.mxu0 %v4713
      %v4752 = vpop.f32.mrf.mxu0
      %v4753 = vadd.f32 %v4701, %v4752
      %v4754 = vpop.f32.mrf.mxu0
      %v4755 = vpop.f32.mrf.mxu0
      %v4756 = vadd.f32 %v4704, %v4755
      %v4757 = vpop.f32.mrf.mxu0
      %4758 = vdwg.mxu0
      %s4759 = scalar_lea.vmem %s45, 16
      %v4760 = vld [vmem:[%s4759] sm:$0xf]
      %v4761 = vld [vmem:[%s4759 + $0x4] sm:$0xf]
      %s4762 = scalar_lea.vmem %s47, 32
      %v4763 = vld [vmem:[%s4762] sm:$0xf]
      %v4764 = vld [vmem:[%s4762 + $0x4] sm:$0xf]
      %v4765 = vld [vmem:[%s4762 + $0x8] sm:$0xf]
      %v4766 = vld [vmem:[%s4762 + $0xc] sm:$0xf]
      %v4771 = vunpack.c.l.b16 %v4763
      %v4772 = vunpack.c.l.b16 %v4764
      %v4773 = vunpack.c.l.b16 %v4765
      %v4774 = vunpack.c.l.b16 %v4766
      %v4775 = vpack.c.b16 %v4772, %v4771
      %v4776 = vpack.c.b16 %v4774, %v4773
      %4779 = vmatprep.subr.bf16.mxu0 0
      %4780 = vmatpush1.bf16.msra.mxu0 0
      %4781 = vmatprep.subr.bf16.mxu0 0
      %4782 = vmatpush1.bf16.msra.mxu0 0
      %4783 = vmatprep.subr.bf16.mxu0 0
      %4784 = vmatpush1.bf16.msra.mxu0 0
      %4785 = vmatprep.subr.bf16.mxu0 0
      %4786 = vmatpush1.bf16.msra.mxu0 0
      %4787 = vmatprep.subr.bf16.mxu0 0
      %4788 = vmatpush1.bf16.msra.mxu0 0
      %4789 = vmatprep.subr.bf16.mxu0 0
      %4790 = vmatpush1.bf16.msra.mxu0 0
      %4791 = vmatprep.subr.bf16.mxu0 0
      %4792 = vmatpush1.bf16.msra.mxu0 %v4776
      %4793 = vmatprep.subr.bf16.mxu0 0
      %4794 = vmatpush1.bf16.msra.mxu0 %v4775
      %4795 = vmatprep.subr.bf16.mxu0 0
      %4796 = vmatpush2.bf16.msra.mxu0 0
      %4797 = vmatprep.subr.bf16.mxu0 0
      %4798 = vmatpush2.bf16.msra.mxu0 0
      %4799 = vmatprep.subr.bf16.mxu0 0
      %4800 = vmatpush2.bf16.msra.mxu0 0
      %4801 = vmatprep.subr.bf16.mxu0 0
      %4802 = vmatpush2.bf16.msra.mxu0 0
      %4803 = vmatprep.subr.bf16.mxu0 0
      %4804 = vmatpush2.bf16.msra.mxu0 0
      %4805 = vmatprep.subr.bf16.mxu0 0
      %4806 = vmatpush2.bf16.msra.mxu0 0
      %4807 = vmatprep.subr.bf16.mxu0 0
      %4808 = vmatpush2.bf16.msra.mxu0 0
      %4809 = vmatprep.subr.bf16.mxu0 0
      %4810 = vmatpush2.bf16.msra.mxu0 0
      %4811 = vmatprep.mubr.bf16.mxu0 0
      %4812 = vmatmul.mubr.bf16.gmra.mxu0 %v4551
      %v4813 = vpop.f32.mrf.mxu0
      %v4814 = vadd.f32 0.0, %v4813
      %v4815 = vpop.f32.mrf.mxu0
      %v4816 = vpop.f32.mrf.mxu0
      %v4817 = vpop.f32.mrf.mxu0
      %4818 = vdwg.mxu0
      %v4819 = vpack.c.bf16 %v4814, %v4814
      %v4822 = vunpack.c.l.b16 %v4760
      %v4823 = vunpack.c.l.b16 %v4761
      %v4824 = vpack.c.b16 %v4823, %v4822
      %v4826 = vsel %vm3968, %v4824, 0
      %v4829 = vand.u32 %v4819, %v3974
      %4831 = vmatprep.subr.bf16.mxu0 0
      %4832 = vmatpush1.bf16.msra.mxu0 0
      %4833 = vmatprep.subr.bf16.mxu0 0
      %4834 = vmatpush1.bf16.msra.mxu0 0
      %4835 = vmatprep.subr.bf16.mxu0 0
      %4836 = vmatpush1.bf16.msra.mxu0 0
      %4837 = vmatprep.subr.bf16.mxu0 0
      %4838 = vmatpush1.bf16.msra.mxu0 0
      %4839 = vmatprep.subr.bf16.mxu0 0
      %4840 = vmatpush1.bf16.msra.mxu0 0
      %4841 = vmatprep.subr.bf16.mxu0 0
      %4842 = vmatpush1.bf16.msra.mxu0 0
      %4843 = vmatprep.subr.bf16.mxu0 0
      %4844 = vmatpush1.bf16.msra.mxu0 0
      %4845 = vmatprep.subr.bf16.mxu0 0
      %4846 = vmatpush1.bf16.msra.mxu0 %v4829
      %4847 = vmatprep.subr.bf16.mxu0 0
      %4848 = vmatpush2.bf16.msra.mxu0 0
      %4849 = vmatprep.subr.bf16.mxu0 0
      %4850 = vmatpush2.bf16.msra.mxu0 0
      %4851 = vmatprep.subr.bf16.mxu0 0
      %4852 = vmatpush2.bf16.msra.mxu0 0
      %4853 = vmatprep.subr.bf16.mxu0 0
      %4854 = vmatpush2.bf16.msra.mxu0 0
      %4855 = vmatprep.subr.bf16.mxu0 0
      %4856 = vmatpush2.bf16.msra.mxu0 0
      %4857 = vmatprep.subr.bf16.mxu0 0
      %4858 = vmatpush2.bf16.msra.mxu0 0
      %4859 = vmatprep.subr.bf16.mxu0 0
      %4860 = vmatpush2.bf16.msra.mxu0 0
      %4861 = vmatprep.subr.bf16.mxu0 0
      %4862 = vmatpush2.bf16.msra.mxu0 0
      %4863 = vmatprep.mubr.bf16.mxu0 0
      %4864 = vmatmul.mubr.bf16.gmra.mxu0 %v4826
      %v4865 = vpop.f32.mrf.mxu0
      %v4866 = vadd.f32 0.0, %v4865
      %v4867 = vpop.f32.mrf.mxu0
      %v4868 = vpop.f32.mrf.mxu0
      %v4869 = vadd.f32 0.0, %v4868
      %v4870 = vpop.f32.mrf.mxu0
      %4871 = vdwg.mxu0
      %v4872 = vadd.f32 %v4753, %v4866
      %v4873 = vadd.f32 %v4756, %v4869
      %s4874 = scalar_lea.vmem %s45, 24
      %v4875 = vld [vmem:[%s4874] sm:$0xf]
      %v4876 = vld [vmem:[%s4874 + $0x4] sm:$0xf]
      %s4877 = scalar_lea.vmem %s47, 48
      %v4878 = vld [vmem:[%s4877] sm:$0xf]
      %v4879 = vld [vmem:[%s4877 + $0x4] sm:$0xf]
      %v4880 = vld [vmem:[%s4877 + $0x8] sm:$0xf]
      %v4881 = vld [vmem:[%s4877 + $0xc] sm:$0xf]
      %v4886 = vunpack.c.l.b16 %v4878
      %v4887 = vunpack.c.l.b16 %v4879
      %v4888 = vunpack.c.l.b16 %v4880
      %v4889 = vunpack.c.l.b16 %v4881
      %v4890 = vpack.c.b16 %v4887, %v4886
      %v4891 = vpack.c.b16 %v4889, %v4888
      %4894 = vmatprep.subr.bf16.mxu0 0
      %4895 = vmatpush1.bf16.msra.mxu0 0
      %4896 = vmatprep.subr.bf16.mxu0 0
      %4897 = vmatpush1.bf16.msra.mxu0 0
      %4898 = vmatprep.subr.bf16.mxu0 0
      %4899 = vmatpush1.bf16.msra.mxu0 0
      %4900 = vmatprep.subr.bf16.mxu0 0
      %4901 = vmatpush1.bf16.msra.mxu0 0
      %4902 = vmatprep.subr.bf16.mxu0 0
      %4903 = vmatpush1.bf16.msra.mxu0 0
      %4904 = vmatprep.subr.bf16.mxu0 0
      %4905 = vmatpush1.bf16.msra.mxu0 0
      %4906 = vmatprep.subr.bf16.mxu0 0
      %4907 = vmatpush1.bf16.msra.mxu0 %v4891
      %4908 = vmatprep.subr.bf16.mxu0 0
      %4909 = vmatpush1.bf16.msra.mxu0 %v4890
      %4910 = vmatprep.subr.bf16.mxu0 0
      %4911 = vmatpush2.bf16.msra.mxu0 0
      %4912 = vmatprep.subr.bf16.mxu0 0
      %4913 = vmatpush2.bf16.msra.mxu0 0
      %4914 = vmatprep.subr.bf16.mxu0 0
      %4915 = vmatpush2.bf16.msra.mxu0 0
      %4916 = vmatprep.subr.bf16.mxu0 0
      %4917 = vmatpush2.bf16.msra.mxu0 0
      %4918 = vmatprep.subr.bf16.mxu0 0
      %4919 = vmatpush2.bf16.msra.mxu0 0
      %4920 = vmatprep.subr.bf16.mxu0 0
      %4921 = vmatpush2.bf16.msra.mxu0 0
      %4922 = vmatprep.subr.bf16.mxu0 0
      %4923 = vmatpush2.bf16.msra.mxu0 0
      %4924 = vmatprep.subr.bf16.mxu0 0
      %4925 = vmatpush2.bf16.msra.mxu0 0
      %4926 = vmatprep.mubr.bf16.mxu0 0
      %4927 = vmatmul.mubr.bf16.gmra.mxu0 %v4551
      %v4928 = vpop.f32.mrf.mxu0
      %v4929 = vadd.f32 0.0, %v4928
      %v4930 = vpop.f32.mrf.mxu0
      %v4931 = vpop.f32.mrf.mxu0
      %v4932 = vpop.f32.mrf.mxu0
      %4933 = vdwg.mxu0
      %v4934 = vpack.c.bf16 %v4929, %v4929
      %v4937 = vunpack.c.l.b16 %v4875
      %v4938 = vunpack.c.l.b16 %v4876
      %v4939 = vpack.c.b16 %v4938, %v4937
      %v4941 = vsel %vm3968, %v4939, 0
      %v4944 = vand.u32 %v4934, %v3974
      %4946 = vmatprep.subr.bf16.mxu0 0
      %4947 = vmatpush1.bf16.msra.mxu0 0
      %4948 = vmatprep.subr.bf16.mxu0 0
      %4949 = vmatpush1.bf16.msra.mxu0 0
      %4950 = vmatprep.subr.bf16.mxu0 0
      %4951 = vmatpush1.bf16.msra.mxu0 0
      %4952 = vmatprep.subr.bf16.mxu0 0
      %4953 = vmatpush1.bf16.msra.mxu0 0
      %4954 = vmatprep.subr.bf16.mxu0 0
      %4955 = vmatpush1.bf16.msra.mxu0 0
      %4956 = vmatprep.subr.bf16.mxu0 0
      %4957 = vmatpush1.bf16.msra.mxu0 0
      %4958 = vmatprep.subr.bf16.mxu0 0
      %4959 = vmatpush1.bf16.msra.mxu0 0
      %4960 = vmatprep.subr.bf16.mxu0 0
      %4961 = vmatpush1.bf16.msra.mxu0 %v4944
      %4962 = vmatprep.subr.bf16.mxu0 0
      %4963 = vmatpush2.bf16.msra.mxu0 0
      %4964 = vmatprep.subr.bf16.mxu0 0
      %4965 = vmatpush2.bf16.msra.mxu0 0
      %4966 = vmatprep.subr.bf16.mxu0 0
      %4967 = vmatpush2.bf16.msra.mxu0 0
      %4968 = vmatprep.subr.bf16.mxu0 0
      %4969 = vmatpush2.bf16.msra.mxu0 0
      %4970 = vmatprep.subr.bf16.mxu0 0
      %4971 = vmatpush2.bf16.msra.mxu0 0
      %4972 = vmatprep.subr.bf16.mxu0 0
      %4973 = vmatpush2.bf16.msra.mxu0 0
      %4974 = vmatprep.subr.bf16.mxu0 0
      %4975 = vmatpush2.bf16.msra.mxu0 0
      %4976 = vmatprep.subr.bf16.mxu0 0
      %4977 = vmatpush2.bf16.msra.mxu0 0
      %4978 = vmatprep.mubr.bf16.mxu0 0
      %4979 = vmatmul.mubr.bf16.gmra.mxu0 %v4941
      %v4980 = vpop.f32.mrf.mxu0
      %v4981 = vadd.f32 0.0, %v4980
      %v4982 = vpop.f32.mrf.mxu0
      %v4983 = vpop.f32.mrf.mxu0
      %v4984 = vadd.f32 0.0, %v4983
      %v4985 = vpop.f32.mrf.mxu0
      %4986 = vdwg.mxu0
      %v4987 = vadd.f32 %v4872, %v4981
      %v4988 = vadd.f32 %v4873, %v4984
      %v4989 = vld [vmem:[%s49] sm:$0x1]
      %v4991 = vlaneseq
      %v4992 = vshrl.u32 %v4991, 7
      %v4993 = vsub.s32 0, %v4992
      %v4994 = vrot.slane %v4989, %v4993
      %v4996 = vadd.f32 %v4987, %v4994
      %v4997 = vadd.f32 %v4988, %v4994
      %v4998 = vtanh.pop %v4996
      %v4999 = vtanh.pop %v4997
      %v5000 = vadd.f32 %v4998, %v3530
      %v5001 = vadd.f32 %v4999, %v3531
      %v5002 = vsel %vm1961, %v5000, 0.0
      %5003 = vadd.xlane.f32.xlu0 %v5002
      %v5004 = vpop.xlane.xlu0 %5003
      %v5005 = vsel %vm1961, %v5001, 0.0
      %5006 = vadd.xlane.f32.xlu0 %v5005
      %v5007 = vpop.xlane.xlu0 %5006
      %v5008 = vmul.f32 %v5004, %v3140
      %v5009 = vmul.f32 %v5007, %v3140
      %v5010 = vsub.f32 %v5000, %v5008
      %v5011 = vsub.f32 %v5001, %v5009
      %v5012 = vmul.f32 %v5010, %v5010
      %v5013 = vmul.f32 %v5011, %v5011
      %v5014 = vsel %vm1961, %v5012, 0.0
      %5015 = vadd.xlane.f32.xlu0 %v5014
      %v5016 = vpop.xlane.xlu0 %5015
      %v5017 = vsel %vm1961, %v5013, 0.0
      %5018 = vadd.xlane.f32.xlu0 %v5017
      %v5019 = vpop.xlane.xlu0 %5018
      %v5020 = vmul.f32 %v5016, %v3140
      %v5021 = vmul.f32 %v5019, %v3140
      %v5022 = vadd.f32 %v5020, 1e-05
      %v5023 = vadd.f32 %v5021, 1e-05
      %v5024 = vrsqrt.pop %v5022
      %v5025 = vrsqrt.pop %v5023
      %v5026 = vmul.f32 %v5010, %v5024
      %v5027 = vmul.f32 %v5011, %v5025
      %v5028 = vmul.f32 %v5026, %v3165
      %v5029 = vmul.f32 %v5027, %v3165
      %v5030 = vadd.f32 %v5028, %v3173
      %v5031 = vadd.f32 %v5029, %v3173
      %s5032 = scalar_lea.vmem %s55, 16
      %v5033 = vld [vmem:[%s5032] sm:$0xf]
      %v5034 = vld [vmem:[%s5032 + $0x4] sm:$0xf]
      %v5035 = vld [vmem:[%s5032 + $0x8] sm:$0xf]
      %v5036 = vld [vmem:[%s5032 + $0xc] sm:$0xf]
      %v5037 = vpack.c.bf16 %v5031, %v5030
      %v5042 = vunpack.c.l.b16 %v5033
      %v5043 = vunpack.c.l.b16 %v5034
      %v5044 = vunpack.c.l.b16 %v5035
      %v5045 = vunpack.c.l.b16 %v5036
      %v5046 = vpack.c.b16 %v5043, %v5042
      %v5047 = vpack.c.b16 %v5045, %v5044
      %v5051 = vsel %vm1961, %v5037, 0
      %5053 = vmatprep.subr.bf16.mxu0 0
      %5054 = vmatpush1.bf16.msra.mxu0 0
      %5055 = vmatprep.subr.bf16.mxu0 0
      %5056 = vmatpush1.bf16.msra.mxu0 0
      %5057 = vmatprep.subr.bf16.mxu0 0
      %5058 = vmatpush1.bf16.msra.mxu0 0
      %5059 = vmatprep.subr.bf16.mxu0 0
      %5060 = vmatpush1.bf16.msra.mxu0 0
      %5061 = vmatprep.subr.bf16.mxu0 0
      %5062 = vmatpush1.bf16.msra.mxu0 0
      %5063 = vmatprep.subr.bf16.mxu0 0
      %5064 = vmatpush1.bf16.msra.mxu0 0
      %5065 = vmatprep.subr.bf16.mxu0 0
      %5066 = vmatpush1.bf16.msra.mxu0 %v5047
      %5067 = vmatprep.subr.bf16.mxu0 0
      %5068 = vmatpush1.bf16.msra.mxu0 %v5046
      %5069 = vmatprep.subr.bf16.mxu0 0
      %5070 = vmatpush2.bf16.msra.mxu0 0
      %5071 = vmatprep.subr.bf16.mxu0 0
      %5072 = vmatpush2.bf16.msra.mxu0 0
      %5073 = vmatprep.subr.bf16.mxu0 0
      %5074 = vmatpush2.bf16.msra.mxu0 0
      %5075 = vmatprep.subr.bf16.mxu0 0
      %5076 = vmatpush2.bf16.msra.mxu0 0
      %5077 = vmatprep.subr.bf16.mxu0 0
      %5078 = vmatpush2.bf16.msra.mxu0 0
      %5079 = vmatprep.subr.bf16.mxu0 0
      %5080 = vmatpush2.bf16.msra.mxu0 0
      %5081 = vmatprep.subr.bf16.mxu0 0
      %5082 = vmatpush2.bf16.msra.mxu0 0
      %5083 = vmatprep.subr.bf16.mxu0 0
      %5084 = vmatpush2.bf16.msra.mxu0 0
      %5085 = vmatprep.mubr.bf16.mxu0 0
      %5086 = vmatmul.mubr.bf16.gmra.mxu0 %v5051
      %v5087 = vpop.f32.mrf.mxu0
      %v5088 = vadd.f32 0.0, %v5087
      %v5089 = vpop.f32.mrf.mxu0
      %v5090 = vpop.f32.mrf.mxu0
      %v5091 = vadd.f32 0.0, %v5090
      %v5092 = vpop.f32.mrf.mxu0
      %5093 = vdwg.mxu0
      %v5098 = vunpack.c.l.b16 %v3450
      %v5099 = vunpack.c.l.b16 %v3451
      %v5100 = vunpack.c.l.b16 %v3452
      %v5101 = vunpack.c.l.b16 %v3453
      %v5102 = vpack.c.b16 %v5099, %v5098
      %v5103 = vpack.c.b16 %v5101, %v5100
      %v5107 = vsel %vm1961, %v3454, 0
      %5109 = vmatprep.subr.bf16.mxu0 0
      %5110 = vmatpush1.bf16.msra.mxu0 0
      %5111 = vmatprep.subr.bf16.mxu0 0
      %5112 = vmatpush1.bf16.msra.mxu0 0
      %5113 = vmatprep.subr.bf16.mxu0 0
      %5114 = vmatpush1.bf16.msra.mxu0 0
      %5115 = vmatprep.subr.bf16.mxu0 0
      %5116 = vmatpush1.bf16.msra.mxu0 0
      %5117 = vmatprep.subr.bf16.mxu0 0
      %5118 = vmatpush1.bf16.msra.mxu0 0
      %5119 = vmatprep.subr.bf16.mxu0 0
      %5120 = vmatpush1.bf16.msra.mxu0 0
      %5121 = vmatprep.subr.bf16.mxu0 0
      %5122 = vmatpush1.bf16.msra.mxu0 %v5103
      %5123 = vmatprep.subr.bf16.mxu0 0
      %5124 = vmatpush1.bf16.msra.mxu0 %v5102
      %5125 = vmatprep.subr.bf16.mxu0 0
      %5126 = vmatpush2.bf16.msra.mxu0 0
      %5127 = vmatprep.subr.bf16.mxu0 0
      %5128 = vmatpush2.bf16.msra.mxu0 0
      %5129 = vmatprep.subr.bf16.mxu0 0
      %5130 = vmatpush2.bf16.msra.mxu0 0
      %5131 = vmatprep.subr.bf16.mxu0 0
      %5132 = vmatpush2.bf16.msra.mxu0 0
      %5133 = vmatprep.subr.bf16.mxu0 0
      %5134 = vmatpush2.bf16.msra.mxu0 0
      %5135 = vmatprep.subr.bf16.mxu0 0
      %5136 = vmatpush2.bf16.msra.mxu0 0
      %5137 = vmatprep.subr.bf16.mxu0 0
      %5138 = vmatpush2.bf16.msra.mxu0 0
      %5139 = vmatprep.subr.bf16.mxu0 0
      %5140 = vmatpush2.bf16.msra.mxu0 0
      %5141 = vmatprep.mubr.bf16.mxu0 0
      %5142 = vmatmul.mubr.bf16.gmra.mxu0 %v5107
      %v5143 = vpop.f32.mrf.mxu0
      %v5144 = vadd.f32 %v5088, %v5143
      %v5145 = vpop.f32.mrf.mxu0
      %v5146 = vpop.f32.mrf.mxu0
      %v5147 = vadd.f32 %v5091, %v5146
      %v5148 = vpop.f32.mrf.mxu0
      %5149 = vdwg.mxu0
      %v5150 = vld [vmem:[%s57] sm:$0x1]
      %v5152 = vlaneseq
      %v5153 = vshrl.u32 %v5152, 7
      %v5154 = vsub.s32 0, %v5153
      %v5155 = vrot.slane %v5150, %v5154
      %v5157 = vadd.f32 %v5144, %v5155
      %v5158 = vadd.f32 %v5147, %v5155
      %v5159 = vld [vmem:[%s59] sm:$0x1]
      %v5160 = vld [vmem:[%s61] sm:$0x1]
      %v5161 = vsel %vm1961, %v5157, 0.0
      %5162 = vadd.xlane.f32.xlu0 %v5161
      %v5163 = vpop.xlane.xlu0 %5162
      %v5164 = vsel %vm1961, %v5158, 0.0
      %5165 = vadd.xlane.f32.xlu0 %v5164
      %v5166 = vpop.xlane.xlu0 %5165
      %v5167 = vmul.f32 %v5163, %v3140
      %v5168 = vmul.f32 %v5166, %v3140
      %v5169 = vsub.f32 %v5157, %v5167
      %v5170 = vsub.f32 %v5158, %v5168
      %v5171 = vmul.f32 %v5169, %v5169
      %v5172 = vmul.f32 %v5170, %v5170
      %v5173 = vsel %vm1961, %v5171, 0.0
      %5174 = vadd.xlane.f32.xlu0 %v5173
      %v5175 = vpop.xlane.xlu0 %5174
      %v5176 = vsel %vm1961, %v5172, 0.0
      %5177 = vadd.xlane.f32.xlu0 %v5176
      %v5178 = vpop.xlane.xlu0 %5177
      %v5179 = vmul.f32 %v5175, %v3140
      %v5180 = vmul.f32 %v5178, %v3140
      %v5181 = vadd.f32 %v5179, 1e-05
      %v5182 = vadd.f32 %v5180, 1e-05
      %v5183 = vrsqrt.pop %v5181
      %v5184 = vrsqrt.pop %v5182
      %v5185 = vmul.f32 %v5169, %v5183
      %v5186 = vmul.f32 %v5170, %v5184
      %v5188 = vlaneseq
      %v5189 = vshrl.u32 %v5188, 7
      %v5190 = vsub.s32 0, %v5189
      %v5191 = vrot.slane %v5159, %v5190
      %v5193 = vmul.f32 %v5185, %v5191
      %v5194 = vmul.f32 %v5186, %v5191
      %v5196 = vlaneseq
      %v5197 = vshrl.u32 %v5196, 7
      %v5198 = vsub.s32 0, %v5197
      %v5199 = vrot.slane %v5160, %v5198
      %v5201 = vadd.f32 %v5193, %v5199
      %v5202 = vadd.f32 %v5194, %v5199
      %v5203 = vld [vmem:[%s63] sm:$0xf]
      %v5204 = vld [vmem:[%s63 + $0x4] sm:$0xf]
      %v5205 = vld [vmem:[%s63 + $0x8] sm:$0xf]
      %v5206 = vld [vmem:[%s63 + $0xc] sm:$0xf]
      %v5207 = vpack.c.bf16 %v5202, %v5201
      %v5208 = vld [vmem:[%s65] sm:$0x1]
      %v5210 = vlaneseq
      %v5211 = vshrl.u32 %v5210, 7
      %v5212 = vsub.s32 0, %v5211
      %v5213 = vrot.slane %v5208, %v5212
      %v5219 = vunpack.c.l.b16 %v5203
      %v5220 = vunpack.c.l.b16 %v5204
      %v5221 = vunpack.c.l.b16 %v5205
      %v5222 = vunpack.c.l.b16 %v5206
      %v5223 = vpack.c.b16 %v5220, %v5219
      %v5224 = vpack.c.b16 %v5222, %v5221
      %v5228 = vsel %vm1961, %v5207, 0
      %5230 = vmatprep.subr.bf16.mxu0 0
      %5231 = vmatpush1.bf16.msra.mxu0 0
      %5232 = vmatprep.subr.bf16.mxu0 0
      %5233 = vmatpush1.bf16.msra.mxu0 0
      %5234 = vmatprep.subr.bf16.mxu0 0
      %5235 = vmatpush1.bf16.msra.mxu0 0
      %5236 = vmatprep.subr.bf16.mxu0 0
      %5237 = vmatpush1.bf16.msra.mxu0 0
      %5238 = vmatprep.subr.bf16.mxu0 0
      %5239 = vmatpush1.bf16.msra.mxu0 0
      %5240 = vmatprep.subr.bf16.mxu0 0
      %5241 = vmatpush1.bf16.msra.mxu0 0
      %5242 = vmatprep.subr.bf16.mxu0 0
      %5243 = vmatpush1.bf16.msra.mxu0 %v5224
      %5244 = vmatprep.subr.bf16.mxu0 0
      %5245 = vmatpush1.bf16.msra.mxu0 %v5223
      %5246 = vmatprep.subr.bf16.mxu0 0
      %5247 = vmatpush2.bf16.msra.mxu0 0
      %5248 = vmatprep.subr.bf16.mxu0 0
      %5249 = vmatpush2.bf16.msra.mxu0 0
      %5250 = vmatprep.subr.bf16.mxu0 0
      %5251 = vmatpush2.bf16.msra.mxu0 0
      %5252 = vmatprep.subr.bf16.mxu0 0
      %5253 = vmatpush2.bf16.msra.mxu0 0
      %5254 = vmatprep.subr.bf16.mxu0 0
      %5255 = vmatpush2.bf16.msra.mxu0 0
      %5256 = vmatprep.subr.bf16.mxu0 0
      %5257 = vmatpush2.bf16.msra.mxu0 0
      %5258 = vmatprep.subr.bf16.mxu0 0
      %5259 = vmatpush2.bf16.msra.mxu0 0
      %5260 = vmatprep.subr.bf16.mxu0 0
      %5261 = vmatpush2.bf16.msra.mxu0 0
      %5262 = vmatprep.mubr.bf16.mxu0 0
      %5263 = vmatmul.mubr.bf16.gmra.mxu0 %v5228
      %v5264 = vpop.f32.mrf.mxu0
      %v5265 = vadd.f32 %v5213, %v5264
      %v5266 = vpop.f32.mrf.mxu0
      %v5267 = vpop.f32.mrf.mxu0
      %v5268 = vadd.f32 %v5213, %v5267
      %v5269 = vpop.f32.mrf.mxu0
      %5270 = vdwg.mxu0
      %v5271 = vld [vmem:[%s67] sm:$0xf]
      %v5272 = vld [vmem:[%s67 + $0x4] sm:$0xf]
      %v5273 = vld [vmem:[%s67 + $0x8] sm:$0xf]
      %v5274 = vld [vmem:[%s67 + $0xc] sm:$0xf]
      %v5275 = vld [vmem:[%s67 + $0x10] sm:$0xf]
      %v5276 = vld [vmem:[%s67 + $0x14] sm:$0xf]
      %v5277 = vld [vmem:[%s67 + $0x18] sm:$0xf]
      %v5278 = vld [vmem:[%s67 + $0x1c] sm:$0xf]
      %v5279 = vld [vmem:[%s67 + $0x20] sm:$0xf]
      %v5280 = vld [vmem:[%s67 + $0x24] sm:$0xf]
      %v5281 = vld [vmem:[%s67 + $0x28] sm:$0xf]
      %v5282 = vld [vmem:[%s67 + $0x2c] sm:$0xf]
      %v5283 = vld [vmem:[%s67 + $0x30] sm:$0xf]
      %v5284 = vld [vmem:[%s67 + $0x34] sm:$0xf]
      %v5285 = vld [vmem:[%s67 + $0x38] sm:$0xf]
      %v5286 = vld [vmem:[%s67 + $0x3c] sm:$0xf]
      %v5287 = vpack.c.bf16 %v5268, %v5265
      %v5288 = vld [vmem:[%s69] sm:$0x1]
      %v5290 = vlaneseq
      %v5291 = vshrl.u32 %v5290, 7
      %v5292 = vsub.s32 0, %v5291
      %v5293 = vrot.slane %v5288, %v5292
      %v5311 = vunpack.c.l.b16 %v5271
      %v5312 = vunpack.c.l.b16 %v5272
      %v5313 = vunpack.c.l.b16 %v5273
      %v5314 = vunpack.c.l.b16 %v5274
      %v5315 = vunpack.c.l.b16 %v5275
      %v5316 = vunpack.c.l.b16 %v5276
      %v5317 = vunpack.c.l.b16 %v5277
      %v5318 = vunpack.c.l.b16 %v5278
      %v5319 = vunpack.c.l.b16 %v5279
      %v5320 = vunpack.c.l.b16 %v5280
      %v5321 = vunpack.c.l.b16 %v5281
      %v5322 = vunpack.c.l.b16 %v5282
      %v5323 = vunpack.c.l.b16 %v5283
      %v5324 = vunpack.c.l.b16 %v5284
      %v5325 = vunpack.c.l.b16 %v5285
      %v5326 = vunpack.c.l.b16 %v5286
      %v5327 = vpack.c.b16 %v5312, %v5311
      %v5328 = vpack.c.b16 %v5314, %v5313
      %v5329 = vpack.c.b16 %v5316, %v5315
      %v5330 = vpack.c.b16 %v5318, %v5317
      %v5331 = vpack.c.b16 %v5320, %v5319
      %v5332 = vpack.c.b16 %v5322, %v5321
      %v5333 = vpack.c.b16 %v5324, %v5323
      %v5334 = vpack.c.b16 %v5326, %v5325
      %5343 = vmatprep.subr.bf16.mxu0 0
      %5344 = vmatpush1.bf16.msra.mxu0 %v5334
      %5345 = vmatprep.subr.bf16.mxu0 0
      %5346 = vmatpush1.bf16.msra.mxu0 %v5333
      %5347 = vmatprep.subr.bf16.mxu0 0
      %5348 = vmatpush1.bf16.msra.mxu0 %v5332
      %5349 = vmatprep.subr.bf16.mxu0 0
      %5350 = vmatpush1.bf16.msra.mxu0 %v5331
      %5351 = vmatprep.subr.bf16.mxu0 0
      %5352 = vmatpush1.bf16.msra.mxu0 %v5330
      %5353 = vmatprep.subr.bf16.mxu0 0
      %5354 = vmatpush1.bf16.msra.mxu0 %v5329
      %5355 = vmatprep.subr.bf16.mxu0 0
      %5356 = vmatpush1.bf16.msra.mxu0 %v5328
      %5357 = vmatprep.subr.bf16.mxu0 0
      %5358 = vmatpush1.bf16.msra.mxu0 %v5327
      %5359 = vmatprep.subr.bf16.mxu0 0
      %5360 = vmatpush2.bf16.msra.mxu0 0
      %5361 = vmatprep.subr.bf16.mxu0 0
      %5362 = vmatpush2.bf16.msra.mxu0 0
      %5363 = vmatprep.subr.bf16.mxu0 0
      %5364 = vmatpush2.bf16.msra.mxu0 0
      %5365 = vmatprep.subr.bf16.mxu0 0
      %5366 = vmatpush2.bf16.msra.mxu0 0
      %5367 = vmatprep.subr.bf16.mxu0 0
      %5368 = vmatpush2.bf16.msra.mxu0 0
      %5369 = vmatprep.subr.bf16.mxu0 0
      %5370 = vmatpush2.bf16.msra.mxu0 0
      %5371 = vmatprep.subr.bf16.mxu0 0
      %5372 = vmatpush2.bf16.msra.mxu0 0
      %5373 = vmatprep.subr.bf16.mxu0 0
      %5374 = vmatpush2.bf16.msra.mxu0 0
      %5375 = vmatprep.mubr.bf16.mxu0 0
      %5376 = vmatmul.mubr.bf16.gmra.mxu0 %v5287
      %v5377 = vpop.f32.mrf.mxu0
      %v5378 = vadd.f32 %v5293, %v5377
      %v5379 = vpop.f32.mrf.mxu0
      %v5380 = vpop.f32.mrf.mxu0
      %v5381 = vadd.f32 %v5293, %v5380
      %v5382 = vpop.f32.mrf.mxu0
      %5383 = vdwg.mxu0
      %v5384 = vadd.f32 %v5157, %v5378
      %v5385 = vadd.f32 %v5158, %v5381
      %v5386 = vld [vmem:[%s71] sm:$0x1]
      %v5387 = vld [vmem:[%s73] sm:$0x1]
      %v5388 = vsel %vm1961, %v5384, 0.0
      %5389 = vadd.xlane.f32.xlu0 %v5388
      %v5390 = vpop.xlane.xlu0 %5389
      %v5391 = vsel %vm1961, %v5385, 0.0
      %5392 = vadd.xlane.f32.xlu0 %v5391
      %v5393 = vpop.xlane.xlu0 %5392
      %v5394 = vmul.f32 %v5390, %v3140
      %v5395 = vmul.f32 %v5393, %v3140
      %v5396 = vsub.f32 %v5384, %v5394
      %v5397 = vsub.f32 %v5385, %v5395
      %v5398 = vmul.f32 %v5396, %v5396
      %v5399 = vmul.f32 %v5397, %v5397
      %v5400 = vsel %vm1961, %v5398, 0.0
      %5401 = vadd.xlane.f32.xlu0 %v5400
      %v5402 = vpop.xlane.xlu0 %5401
      %v5403 = vsel %vm1961, %v5399, 0.0
      %5404 = vadd.xlane.f32.xlu0 %v5403
      %v5405 = vpop.xlane.xlu0 %5404
      %v5406 = vmul.f32 %v5402, %v3140
      %v5407 = vmul.f32 %v5405, %v3140
      %v5408 = vadd.f32 %v5406, 1e-05
      %v5409 = vadd.f32 %v5407, 1e-05
      %v5410 = vrsqrt.pop %v5408
      %v5411 = vrsqrt.pop %v5409
      %v5412 = vmul.f32 %v5396, %v5410
      %v5413 = vmul.f32 %v5397, %v5411
      %v5415 = vlaneseq
      %v5416 = vshrl.u32 %v5415, 7
      %v5417 = vsub.s32 0, %v5416
      %v5418 = vrot.slane %v5386, %v5417
      %v5420 = vmul.f32 %v5412, %v5418
      %v5421 = vmul.f32 %v5413, %v5418
      %v5423 = vlaneseq
      %v5424 = vshrl.u32 %v5423, 7
      %v5425 = vsub.s32 0, %v5424
      %v5426 = vrot.slane %v5387, %v5425
      %v5428 = vadd.f32 %v5420, %v5426
      %v5429 = vadd.f32 %v5421, %v5426
      %v5430 = vld [vmem:[%s75] sm:$0xf]
      %v5431 = vld [vmem:[%s75 + $0x4] sm:$0xf]
      %v5432 = vld [vmem:[%s75 + $0x8] sm:$0xf]
      %v5433 = vld [vmem:[%s75 + $0xc] sm:$0xf]
      %v5434 = vpack.c.bf16 %v5429, %v5428
      %v5435 = vld [vmem:[%s77] sm:$0x1]
      %v5437 = vlaneseq
      %v5438 = vshrl.u32 %v5437, 7
      %v5439 = vsub.s32 0, %v5438
      %v5440 = vrot.slane %v5435, %v5439
      %v5446 = vunpack.c.l.b16 %v5430
      %v5447 = vunpack.c.l.b16 %v5431
      %v5448 = vunpack.c.l.b16 %v5432
      %v5449 = vunpack.c.l.b16 %v5433
      %v5450 = vpack.c.b16 %v5447, %v5446
      %v5451 = vpack.c.b16 %v5449, %v5448
      %v5455 = vsel %vm1961, %v5434, 0
      %5457 = vmatprep.subr.bf16.mxu0 0
      %5458 = vmatpush1.bf16.msra.mxu0 0
      %5459 = vmatprep.subr.bf16.mxu0 0
      %5460 = vmatpush1.bf16.msra.mxu0 0
      %5461 = vmatprep.subr.bf16.mxu0 0
      %5462 = vmatpush1.bf16.msra.mxu0 0
      %5463 = vmatprep.subr.bf16.mxu0 0
      %5464 = vmatpush1.bf16.msra.mxu0 0
      %5465 = vmatprep.subr.bf16.mxu0 0
      %5466 = vmatpush1.bf16.msra.mxu0 0
      %5467 = vmatprep.subr.bf16.mxu0 0
      %5468 = vmatpush1.bf16.msra.mxu0 0
      %5469 = vmatprep.subr.bf16.mxu0 0
      %5470 = vmatpush1.bf16.msra.mxu0 %v5451
      %5471 = vmatprep.subr.bf16.mxu0 0
      %5472 = vmatpush1.bf16.msra.mxu0 %v5450
      %5473 = vmatprep.subr.bf16.mxu0 0
      %5474 = vmatpush2.bf16.msra.mxu0 0
      %5475 = vmatprep.subr.bf16.mxu0 0
      %5476 = vmatpush2.bf16.msra.mxu0 0
      %5477 = vmatprep.subr.bf16.mxu0 0
      %5478 = vmatpush2.bf16.msra.mxu0 0
      %5479 = vmatprep.subr.bf16.mxu0 0
      %5480 = vmatpush2.bf16.msra.mxu0 0
      %5481 = vmatprep.subr.bf16.mxu0 0
      %5482 = vmatpush2.bf16.msra.mxu0 0
      %5483 = vmatprep.subr.bf16.mxu0 0
      %5484 = vmatpush2.bf16.msra.mxu0 0
      %5485 = vmatprep.subr.bf16.mxu0 0
      %5486 = vmatpush2.bf16.msra.mxu0 0
      %5487 = vmatprep.subr.bf16.mxu0 0
      %5488 = vmatpush2.bf16.msra.mxu0 0
      %5489 = vmatprep.mubr.bf16.mxu0 0
      %5490 = vmatmul.mubr.bf16.gmra.mxu0 %v5455
      %v5491 = vpop.f32.mrf.mxu0
      %v5492 = vadd.f32 %v5440, %v5491
      %v5493 = vpop.f32.mrf.mxu0
      %v5494 = vpop.f32.mrf.mxu0
      %v5495 = vadd.f32 %v5440, %v5494
      %v5496 = vpop.f32.mrf.mxu0
      %5497 = vdwg.mxu0
      %v5498 = vadd.f32 %v5492, %v1438
      %v5499 = vadd.f32 %v5495, %v1439
      %v5500 = vld [vmem:[%s79] sm:$0x3]
      %v5501 = vpack.c.bf16 %v5499, %v5498
      %v5502 = vld [vmem:[%s81] sm:$0x1]
      %v5504 = vlaneseq
      %v5505 = vshrl.u32 %v5504, 7
      %v5506 = vsub.s32 0, %v5505
      %v5507 = vrot.slane %v5502, %v5506
      %v5510 = vsel %vm1498, %v5501, 0
      %v5513 = vsel %vm1502, %v5500, 0
      %5515 = vmatprep.subr.bf16.mxu0 0
      %5516 = vmatpush1.bf16.msra.mxu0 0
      %5517 = vmatprep.subr.bf16.mxu0 0
      %5518 = vmatpush1.bf16.msra.mxu0 0
      %5519 = vmatprep.subr.bf16.mxu0 0
      %5520 = vmatpush1.bf16.msra.mxu0 0
      %5521 = vmatprep.subr.bf16.mxu0 0
      %5522 = vmatpush1.bf16.msra.mxu0 0
      %5523 = vmatprep.subr.bf16.mxu0 0
      %5524 = vmatpush1.bf16.msra.mxu0 0
      %5525 = vmatprep.subr.bf16.mxu0 0
      %5526 = vmatpush1.bf16.msra.mxu0 0
      %5527 = vmatprep.subr.bf16.mxu0 0
      %5528 = vmatpush1.bf16.msra.mxu0 0
      %5529 = vmatprep.subr.bf16.mxu0 0
      %5530 = vmatpush1.bf16.msra.mxu0 %v5513
      %5531 = vmatprep.subr.bf16.mxu0 0
      %5532 = vmatpush2.bf16.msra.mxu0 0
      %5533 = vmatprep.subr.bf16.mxu0 0
      %5534 = vmatpush2.bf16.msra.mxu0 0
      %5535 = vmatprep.subr.bf16.mxu0 0
      %5536 = vmatpush2.bf16.msra.mxu0 0
      %5537 = vmatprep.subr.bf16.mxu0 0
      %5538 = vmatpush2.bf16.msra.mxu0 0
      %5539 = vmatprep.subr.bf16.mxu0 0
      %5540 = vmatpush2.bf16.msra.mxu0 0
      %5541 = vmatprep.subr.bf16.mxu0 0
      %5542 = vmatpush2.bf16.msra.mxu0 0
      %5543 = vmatprep.subr.bf16.mxu0 0
      %5544 = vmatpush2.bf16.msra.mxu0 0
      %5545 = vmatprep.subr.bf16.mxu0 0
      %5546 = vmatpush2.bf16.msra.mxu0 0
      %5547 = vmatprep.mubr.bf16.mxu0 0
      %5548 = vmatmul.mubr.bf16.gmra.mxu0 %v5510
      %v5549 = vpop.f32.mrf.mxu0
      %v5550 = vadd.f32 %v5507, %v5549
      %v5551 = vpop.f32.mrf.mxu0
      %v5552 = vpop.f32.mrf.mxu0
      %v5553 = vadd.f32 %v5507, %v5552
      %v5554 = vpop.f32.mrf.mxu0
      %5555 = vdwg.mxu0
      %5556 = vst [vmem:[%s1262] sm:$0xff] %v5550
      %5557 = vst [vmem:[%s1262 + $0x8] sm:$0xff] %v5553
      %s5558 = smul.u32 2, %s94
      %p5559 = scmp.lt.s32.totalorder %s5558, 3
      %s5560 = scalar_select %p5559, %s5558, 3
      %s5561 = smul.addr %s5560, 8
      %s5562 = scalar_lea.vmem %s83, %s5561
      // Predicated region
      $region185: #{_lambda_.1} parent=183 // pred_check
        %p5563 = pneg %p983
      $region186: #{_lambda_.1} parent=183 // pred_check_branch
        %5565 = sbr.rel (%p5563) target = $region188
      $region187: #{_lambda_.1} parent=183 // pred_region
        %s5566 = smul.u32 2, %s94
      $region188: #{_lambda_.1} parent=183 // pred_fallthru
        _
    $region184: #{_lambda_.1} parent=5 // pred_fallthru
      _
    %p5567 = scmp.le.s32.totalorder 2, %s89
    // Predicated region
    $region189: #{_lambda_.1} parent=5 // pred_check
      %p5568 = pneg %p5567
    $region190: #{_lambda_.1} parent=5 // pred_check_branch
      %5570 = sbr.rel (%p5568) target = $region192
    $region191: #{_lambda_.1} parent=5 // pred_region
      %s5571 = ssub.s32 %s89, 2
      // Predicated region
      $region193: #{_lambda_.1} parent=191 // pred_check
        %p5572 = pneg %p989
      $region194: #{_lambda_.1} parent=191 // pred_check_branch
        %5574 = sbr.rel (%p5572) target = $region196
      $region195: #{_lambda_.1} parent=191 // pred_region
        %s5575 = smul.u32 2, %s95
        %p5576 = scmp.lt.s32.totalorder %s5575, 3
        %s5577 = scalar_select %p5576, %s5575, 3
        %s5578 = smul.addr %s5577, 8
        %s5579 = scalar_lea.vmem %s83, %s5578
      $region196: #{_lambda_.1} parent=191 // pred_fallthru
        _
    $region192: #{_lambda_.1} parent=5 // pred_fallthru
      _
  $region6: #{_lambda_.1} parent=0 // loop_footer
    %s93 = sadd.s32 1, %s89
  $region7: #{_lambda_.1} parent=0 // loop_footer_branch
    %88 = sbr.rel target = $region3
  $region8: #{_lambda_.1} parent=0 // loop_exit
    _

</llo_original>
